<compile_context>
chip_gen: v7x
topology: tpu7x:2x2x1
jax: 0.10.0
libtpu: 0.0.40
codegen_flags: <defaults>
</compile_context>

<pallas_src>
import functools

import jax
import jax.numpy as jnp
from jax import lax
from jax.experimental import pallas as pl
from jax.experimental.pallas import tpu as pltpu


def _fused_reveal_kernel(t1_ref, mask_ref, w1_ref, b1_ref, w2_ref, b2_ref,
                         w3_ref, b3_ref, o_ref, h1_ref, h2_ref, *, H, W):
    # t1_ref:   (R, 9)       layer-1 tap matrix for one image (R = H*(W+2))
    # mask_ref: (R, 1)       1.0 everywhere except the two padded columns (0.0)
    # w1_ref:   (9, C)       b1_ref: (1, C)
    # w2_ref:   (9, C, C)    b2_ref: (1, C)
    # w3_ref:   (9, 1, C)    b3_ref: (1, 1)
    # o_ref:    (R, 1)       sigmoid output over the column-extended grid
    # h1_ref/h2_ref: ((H+4)*(W+2), C) VMEM-resident padded activations (guard+border rows)
    Wp = W + 2
    R = H * Wp
    C = w1_ref.shape[-1]

    # Zero the guard / padded-row bands of the VMEM-resident activations (every step:
    # safe under megacore batch splitting; interior rows are fully rewritten below).
    band = jnp.zeros((2 * Wp, C), dtype=jnp.float32)
    h1_ref[pl.ds(0, 2 * Wp), :] = band
    h1_ref[pl.ds(2 * Wp + R, 2 * Wp), :] = band
    h2_ref[pl.ds(0, 2 * Wp), :] = band
    h2_ref[pl.ds(2 * Wp + R, 2 * Wp), :] = band

    mask = mask_ref[...]                                   # (R, 1)

    # ---- layer 1: taps folded into K -> single (R, 9) x (9, C) MXU matmul -------------
    h1 = jnp.dot(t1_ref[...], w1_ref[...], preferred_element_type=jnp.float32)
    h1 = jnp.maximum(h1 + b1_ref[...], 0.0) * mask
    h1_ref[pl.ds(2 * Wp, R), :] = h1

    # ---- layer 2: 9 accumulating (R, C) x (C, C) MXU matmuls over row-shifted views ----
    acc = jnp.zeros((R, C), dtype=jnp.float32)
    for k in range(9):
        dy, dx = divmod(k, 3)
        start = (dy + 1) * Wp + dx - 1                     # static row offset
        acc = acc + jnp.dot(h1_ref[pl.ds(start, R), :], w2_ref[k],
                            preferred_element_type=jnp.float32)
    h2 = jnp.maximum(acc + b2_ref[...], 0.0) * mask
    h2_ref[pl.ds(2 * Wp, R), :] = h2

    # ---- layer 3 (Cout=1): VPU multiply-accumulate + one lane reduction ---------------
    # out[p] = sum_k sum_c h2_pad[p+off_k, c] * w3[k, c]  (no MXU: N=1 matmuls waste it)
    acc3 = jnp.zeros((R, C), dtype=jnp.float32)
    for k in range(9):
        dy, dx = divmod(k, 3)
        start = (dy + 1) * Wp + dx - 1
        acc3 = acc3 + h2_ref[pl.ds(start, R), :] * w3_ref[k]      # (R,C) * (1,C)
    out = jnp.sum(acc3, axis=-1, keepdims=True) + b3_ref[...]     # XLU channel reduce
    o_ref[...] = jax.nn.sigmoid(out)


def reveal_network(container_nchw, params):
    """Fused Pallas forward pass. container_nchw: (N, 1, H, W) float32 (PyTorch layout)."""
    x = container_nchw[:, 0, :, :]                         # Cin == 1 -> (N, H, W)
    N, H, W = x.shape
    Wp = W + 2
    R = H * Wp
    TOTAL = (H + 4) * Wp
    C = params["w1"].shape[-1]

    # Glue: layer-1 tap matrix over the column-extended output grid (im2col, Cin=1).
    xp = jnp.pad(x, ((0, 0), (1, 1), (2, 2)))              # (N, H+2, W+4)
    taps = [xp[:, dy:dy + H, dx:dx + Wp] for dy in range(3) for dx in range(3)]
    t1 = jnp.stack(taps, axis=-1).reshape(N, R, 9)         # (N, R, 9)

    # Glue: column mask (0 at the two padded columns of the extended grid).
    col = jnp.arange(R, dtype=jnp.int32) % Wp
    mask = ((col != 0) & (col != Wp - 1)).astype(jnp.float32).reshape(R, 1)

    w1 = params["w1"].reshape(9, C)
    b1 = params["b1"].reshape(1, C)
    w2 = params["w2"].reshape(9, C, C)
    b2 = params["b2"].reshape(1, C)
    w3 = params["w3"].reshape(9, C).reshape(9, 1, C)       # (1, C) rows for VPU broadcast
    b3 = params["b3"].reshape(1, 1)

    flops_per_img = 2 * R * 9 * C + 9 * 2 * R * C * C + 2 * R * 9 * C + R * C
    bytes_accessed = (N * R * 9 * 4 + R * 4 + (9 * C + C + 9 * C * C + C + 9 * C + 1) * 4
                      + N * R * 4)
    cost = pl.CostEstimate(flops=N * flops_per_img,
                           transcendentals=N * R,
                           bytes_accessed=bytes_accessed)

    kernel = functools.partial(_fused_reveal_kernel, H=H, W=W)
    out_flat = pl.pallas_call(
        kernel,
        out_shape=jax.ShapeDtypeStruct((N, R, 1), jnp.float32),
        grid=(N,),
        in_specs=[
            pl.BlockSpec((None, R, 9), lambda n: (n, 0, 0)),     # tap matrix (per image)
            pl.BlockSpec((R, 1), lambda n: (0, 0)),              # column mask
            pl.BlockSpec((9, C), lambda n: (0, 0)),              # w1
            pl.BlockSpec((1, C), lambda n: (0, 0)),              # b1
            pl.BlockSpec((9, C, C), lambda n: (0, 0, 0)),        # w2
            pl.BlockSpec((1, C), lambda n: (0, 0)),              # b2
            pl.BlockSpec((9, 1, C), lambda n: (0, 0, 0)),        # w3 (rows)
            pl.BlockSpec((1, 1), lambda n: (0, 0)),              # b3
        ],
        out_specs=pl.BlockSpec((None, R, 1), lambda n: (n, 0, 0)),
        scratch_shapes=[
            pltpu.VMEM((TOTAL, C), jnp.float32),   # padded layer-1 activations (VMEM only)
            pltpu.VMEM((TOTAL, C), jnp.float32),   # padded layer-2 activations (VMEM only)
        ],
        compiler_params=pltpu.CompilerParams(dimension_semantics=("parallel",)),
        cost_estimate=cost,
    )(t1, mask, w1, b1, w2, b2, w3, b3)

    # (N, R, 1) -> (N, H, W+2) -> drop the two padded columns -> NCHW with C=1.
    out = out_flat.reshape(N, H, Wp)[:, :, 1:1 + W]
    return out[:, None, :, :]


def reveal_network_ref(container_nchw, params):
    """Pure-JAX reference (XLA conv) for the correctness check."""
    x = jnp.transpose(container_nchw, (0, 2, 3, 1))

    def conv(a, w, b):
        y = lax.conv_general_dilated(a, w, (1, 1), "SAME",
                                     dimension_numbers=("NHWC", "HWIO", "NHWC"))
        return y + b

    x = jax.nn.relu(conv(x, params["w1"], params["b1"]))
    x = jax.nn.relu(conv(x, params["w2"], params["b2"]))
    x = jax.nn.sigmoid(conv(x, params["w3"], params["b3"]))
    return jnp.transpose(x, (0, 3, 1, 2))


def init_params(key):
    """Deterministic synthetic parameters with the nn.Conv2d shapes (HWIO layout here)."""
    ks = jax.random.split(key, 6)

    def w(k, shape):
        return 0.1 * jax.random.normal(k, shape, jnp.float32)

    return {
        "w1": w(ks[0], (3, 3, 1, 64)),  "b1": w(ks[1], (64,)),
        "w2": w(ks[2], (3, 3, 64, 64)), "b2": w(ks[3], (64,)),
        "w3": w(ks[4], (3, 3, 64, 1)),  "b3": w(ks[5], (1,)),
    }


if __name__ == "__main__":
    key = jax.random.PRNGKey(0)
    k_x, k_p = jax.random.split(key)

    # Same semantics as the PyTorch module: single-channel "container" image, NCHW.
    container = jax.random.uniform(k_x, (2, 1, 16, 16), dtype=jnp.float32)
    params = init_params(k_p)

    out = jax.block_until_ready(reveal_network(container, params))
    ref = jax.block_until_ready(reveal_network_ref(container, params))

    assert out.shape == (2, 1, 16, 16) and out.dtype == jnp.float32
    max_err = float(jnp.max(jnp.abs(out - ref)))
    assert max_err < 5e-3, f"mismatch vs reference: {max_err}"
    print("KERNEL_OK")
</pallas_src>

<mosaic_0001>
module attributes {stable_mosaic.version = 11 : i64} {
  func.func @_fused_reveal_kernel(%arg0: i32, %arg1: memref<1x288x9xf32, #tpu.memory_space<vmem>>, %arg2: memref<288x1xf32, #tpu.memory_space<vmem>>, %arg3: memref<9x64xf32, #tpu.memory_space<vmem>>, %arg4: memref<1x64xf32, #tpu.memory_space<vmem>>, %arg5: memref<9x64x64xf32, #tpu.memory_space<vmem>>, %arg6: memref<1x64xf32, #tpu.memory_space<vmem>>, %arg7: memref<9x1x64xf32, #tpu.memory_space<vmem>>, %arg8: memref<1x1xf32, #tpu.memory_space<vmem>>, %arg9: memref<1x288x1xf32, #tpu.memory_space<vmem>>, %arg10: memref<360x64xf32, #tpu.memory_space<vmem>>, %arg11: memref<360x64xf32, #tpu.memory_space<vmem>>) attributes {dimension_semantics = [#tpu.dimension_semantics<parallel>], iteration_bounds = array<i64: 2>, scalar_prefetch = 0 : i64, scratch_operands = 2 : i64, tpu.core_type = #tpu.core_type<tc>, window_params = [{transform_indices = @transform_0, window_bounds = array<i64: 1, 288, 9>}, {pipeline_mode = #tpu.pipeline_mode<synchronous>, transform_indices = @transform_1, window_bounds = array<i64: 288, 1>}, {pipeline_mode = #tpu.pipeline_mode<synchronous>, transform_indices = @transform_2, window_bounds = array<i64: 9, 64>}, {pipeline_mode = #tpu.pipeline_mode<synchronous>, transform_indices = @transform_3, window_bounds = array<i64: 1, 64>}, {pipeline_mode = #tpu.pipeline_mode<synchronous>, transform_indices = @transform_4, window_bounds = array<i64: 9, 64, 64>}, {pipeline_mode = #tpu.pipeline_mode<synchronous>, transform_indices = @transform_5, window_bounds = array<i64: 1, 64>}, {pipeline_mode = #tpu.pipeline_mode<synchronous>, transform_indices = @transform_6, window_bounds = array<i64: 9, 1, 64>}, {pipeline_mode = #tpu.pipeline_mode<synchronous>, transform_indices = @transform_7, window_bounds = array<i64: 1, 1>}, {transform_indices = @transform_8, window_bounds = array<i64: 1, 288, 1>}]} {
    %cst = arith.constant 0.000000e+00 : f32
    %0 = vector.broadcast %cst : f32 to vector<36x64xf32>
    %c0 = arith.constant 0 : index
    %c0_0 = arith.constant 0 : index
    %1 = vector.load %arg10[%c0, %c0_0] : memref<360x64xf32, #tpu.memory_space<vmem>>, vector<36x64xf32>
    tpu.vector_store %arg10[%c0, %c0_0], %0 {strides = array<i32>} : memref<360x64xf32, #tpu.memory_space<vmem>>, vector<36x64xf32>,
    %c324 = arith.constant 324 : index
    %c0_1 = arith.constant 0 : index
    %2 = vector.load %arg10[%c324, %c0_1] : memref<360x64xf32, #tpu.memory_space<vmem>>, vector<36x64xf32>
    tpu.vector_store %arg10[%c324, %c0_1], %0 {strides = array<i32>} : memref<360x64xf32, #tpu.memory_space<vmem>>, vector<36x64xf32>,
    %c0_2 = arith.constant 0 : index
    %c0_3 = arith.constant 0 : index
    %3 = vector.load %arg11[%c0_2, %c0_3] : memref<360x64xf32, #tpu.memory_space<vmem>>, vector<36x64xf32>
    tpu.vector_store %arg11[%c0_2, %c0_3], %0 {strides = array<i32>} : memref<360x64xf32, #tpu.memory_space<vmem>>, vector<36x64xf32>,
    %c324_4 = arith.constant 324 : index
    %c0_5 = arith.constant 0 : index
    %4 = vector.load %arg11[%c324_4, %c0_5] : memref<360x64xf32, #tpu.memory_space<vmem>>, vector<36x64xf32>
    tpu.vector_store %arg11[%c324_4, %c0_5], %0 {strides = array<i32>} : memref<360x64xf32, #tpu.memory_space<vmem>>, vector<36x64xf32>,
    %c0_6 = arith.constant 0 : index
    %c0_7 = arith.constant 0 : index
    %5 = vector.load %arg2[%c0_6, %c0_7] : memref<288x1xf32, #tpu.memory_space<vmem>>, vector<288x1xf32>
    %c0_8 = arith.constant 0 : index
    %c0_9 = arith.constant 0 : index
    %c0_10 = arith.constant 0 : index
    %6 = vector.load %arg1[%c0_8, %c0_9, %c0_10] : memref<1x288x9xf32, #tpu.memory_space<vmem>>, vector<1x288x9xf32>
    %7 = vector.shape_cast %6 : vector<1x288x9xf32> to vector<288x9xf32>
    %c0_11 = arith.constant 0 : index
    %c0_12 = arith.constant 0 : index
    %8 = vector.load %arg3[%c0_11, %c0_12] : memref<9x64xf32, #tpu.memory_space<vmem>>, vector<9x64xf32>
    %cst_13 = arith.constant dense<0.000000e+00> : vector<288x64xf32>
    %9 = tpu.matmul %7, %8, %cst_13 {dimension_numbers = #tpu.dot_dimension_numbers<[1], [0], [0], [1], [0, 0, 1, 1], [], []>} : vector<288x9xf32>, vector<9x64xf32>, vector<288x64xf32> -> vector<288x64xf32>
    %c0_14 = arith.constant 0 : index
    %c0_15 = arith.constant 0 : index
    %10 = vector.load %arg4[%c0_14, %c0_15] : memref<1x64xf32, #tpu.memory_space<vmem>>, vector<1x64xf32>
    %11 = vector.broadcast %10 : vector<1x64xf32> to vector<288x64xf32>
    %12 = arith.addf %9, %11 : vector<288x64xf32>
    %cst_16 = arith.constant 0.000000e+00 : f32
    %13 = vector.broadcast %cst_16 : f32 to vector<288x64xf32>
    %14 = arith.maximumf %12, %13 : vector<288x64xf32>
    %15 = vector.broadcast %5 : vector<288x1xf32> to vector<288x64xf32>
    %16 = arith.mulf %14, %15 : vector<288x64xf32>
    %c36 = arith.constant 36 : index
    %c0_17 = arith.constant 0 : index
    %17 = vector.load %arg10[%c36, %c0_17] : memref<360x64xf32, #tpu.memory_space<vmem>>, vector<288x64xf32>
    tpu.vector_store %arg10[%c36, %c0_17], %16 {strides = array<i32>} : memref<360x64xf32, #tpu.memory_space<vmem>>, vector<288x64xf32>,
    %cst_18 = arith.constant 0.000000e+00 : f32
    %18 = vector.broadcast %cst_18 : f32 to vector<288x64xf32>
    %c17 = arith.constant 17 : index
    %c0_19 = arith.constant 0 : index
    %19 = vector.load %arg10[%c17, %c0_19] : memref<360x64xf32, #tpu.memory_space<vmem>>, vector<288x64xf32>
    %c0_20 = arith.constant 0 : index
    %c0_21 = arith.constant 0 : index
    %c0_22 = arith.constant 0 : index
    %20 = vector.load %arg5[%c0_20, %c0_21, %c0_22] : memref<9x64x64xf32, #tpu.memory_space<vmem>>, vector<1x64x64xf32>
    %21 = vector.shape_cast %20 : vector<1x64x64xf32> to vector<64x64xf32>
    %cst_23 = arith.constant dense<0.000000e+00> : vector<288x64xf32>
    %22 = tpu.matmul %19, %21, %cst_23 {dimension_numbers = #tpu.dot_dimension_numbers<[1], [0], [0], [1], [0, 0, 1, 1], [], []>} : vector<288x64xf32>, vector<64x64xf32>, vector<288x64xf32> -> vector<288x64xf32>
    %23 = arith.addf %18, %22 : vector<288x64xf32>
    %c18 = arith.constant 18 : index
    %c0_24 = arith.constant 0 : index
    %24 = vector.load %arg10[%c18, %c0_24] : memref<360x64xf32, #tpu.memory_space<vmem>>, vector<288x64xf32>
    %c1 = arith.constant 1 : index
    %c0_25 = arith.constant 0 : index
    %c0_26 = arith.constant 0 : index
    %25 = vector.load %arg5[%c1, %c0_25, %c0_26] : memref<9x64x64xf32, #tpu.memory_space<vmem>>, vector<1x64x64xf32>
    %26 = vector.shape_cast %25 : vector<1x64x64xf32> to vector<64x64xf32>
    %cst_27 = arith.constant dense<0.000000e+00> : vector<288x64xf32>
    %27 = tpu.matmul %24, %26, %cst_27 {dimension_numbers = #tpu.dot_dimension_numbers<[1], [0], [0], [1], [0, 0, 1, 1], [], []>} : vector<288x64xf32>, vector<64x64xf32>, vector<288x64xf32> -> vector<288x64xf32>
    %28 = arith.addf %23, %27 : vector<288x64xf32>
    %c19 = arith.constant 19 : index
    %c0_28 = arith.constant 0 : index
    %29 = vector.load %arg10[%c19, %c0_28] : memref<360x64xf32, #tpu.memory_space<vmem>>, vector<288x64xf32>
    %c2 = arith.constant 2 : index
    %c0_29 = arith.constant 0 : index
    %c0_30 = arith.constant 0 : index
    %30 = vector.load %arg5[%c2, %c0_29, %c0_30] : memref<9x64x64xf32, #tpu.memory_space<vmem>>, vector<1x64x64xf32>
    %31 = vector.shape_cast %30 : vector<1x64x64xf32> to vector<64x64xf32>
    %cst_31 = arith.constant dense<0.000000e+00> : vector<288x64xf32>
    %32 = tpu.matmul %29, %31, %cst_31 {dimension_numbers = #tpu.dot_dimension_numbers<[1], [0], [0], [1], [0, 0, 1, 1], [], []>} : vector<288x64xf32>, vector<64x64xf32>, vector<288x64xf32> -> vector<288x64xf32>
    %33 = arith.addf %28, %32 : vector<288x64xf32>
    %c35 = arith.constant 35 : index
    %c0_32 = arith.constant 0 : index
    %34 = vector.load %arg10[%c35, %c0_32] : memref<360x64xf32, #tpu.memory_space<vmem>>, vector<288x64xf32>
    %c3 = arith.constant 3 : index
    %c0_33 = arith.constant 0 : index
    %c0_34 = arith.constant 0 : index
    %35 = vector.load %arg5[%c3, %c0_33, %c0_34] : memref<9x64x64xf32, #tpu.memory_space<vmem>>, vector<1x64x64xf32>
    %36 = vector.shape_cast %35 : vector<1x64x64xf32> to vector<64x64xf32>
    %cst_35 = arith.constant dense<0.000000e+00> : vector<288x64xf32>
    %37 = tpu.matmul %34, %36, %cst_35 {dimension_numbers = #tpu.dot_dimension_numbers<[1], [0], [0], [1], [0, 0, 1, 1], [], []>} : vector<288x64xf32>, vector<64x64xf32>, vector<288x64xf32> -> vector<288x64xf32>
    %38 = arith.addf %33, %37 : vector<288x64xf32>
    %c36_36 = arith.constant 36 : index
    %c0_37 = arith.constant 0 : index
    %39 = vector.load %arg10[%c36_36, %c0_37] : memref<360x64xf32, #tpu.memory_space<vmem>>, vector<288x64xf32>
    %c4 = arith.constant 4 : index
    %c0_38 = arith.constant 0 : index
    %c0_39 = arith.constant 0 : index
    %40 = vector.load %arg5[%c4, %c0_38, %c0_39] : memref<9x64x64xf32, #tpu.memory_space<vmem>>, vector<1x64x64xf32>
    %41 = vector.shape_cast %40 : vector<1x64x64xf32> to vector<64x64xf32>
    %cst_40 = arith.constant dense<0.000000e+00> : vector<288x64xf32>
    %42 = tpu.matmul %39, %41, %cst_40 {dimension_numbers = #tpu.dot_dimension_numbers<[1], [0], [0], [1], [0, 0, 1, 1], [], []>} : vector<288x64xf32>, vector<64x64xf32>, vector<288x64xf32> -> vector<288x64xf32>
    %43 = arith.addf %38, %42 : vector<288x64xf32>
    %c37 = arith.constant 37 : index
    %c0_41 = arith.constant 0 : index
    %44 = vector.load %arg10[%c37, %c0_41] : memref<360x64xf32, #tpu.memory_space<vmem>>, vector<288x64xf32>
    %c5 = arith.constant 5 : index
    %c0_42 = arith.constant 0 : index
    %c0_43 = arith.constant 0 : index
    %45 = vector.load %arg5[%c5, %c0_42, %c0_43] : memref<9x64x64xf32, #tpu.memory_space<vmem>>, vector<1x64x64xf32>
    %46 = vector.shape_cast %45 : vector<1x64x64xf32> to vector<64x64xf32>
    %cst_44 = arith.constant dense<0.000000e+00> : vector<288x64xf32>
    %47 = tpu.matmul %44, %46, %cst_44 {dimension_numbers = #tpu.dot_dimension_numbers<[1], [0], [0], [1], [0, 0, 1, 1], [], []>} : vector<288x64xf32>, vector<64x64xf32>, vector<288x64xf32> -> vector<288x64xf32>
    %48 = arith.addf %43, %47 : vector<288x64xf32>
    %c53 = arith.constant 53 : index
    %c0_45 = arith.constant 0 : index
    %49 = vector.load %arg10[%c53, %c0_45] : memref<360x64xf32, #tpu.memory_space<vmem>>, vector<288x64xf32>
    %c6 = arith.constant 6 : index
    %c0_46 = arith.constant 0 : index
    %c0_47 = arith.constant 0 : index
    %50 = vector.load %arg5[%c6, %c0_46, %c0_47] : memref<9x64x64xf32, #tpu.memory_space<vmem>>, vector<1x64x64xf32>
    %51 = vector.shape_cast %50 : vector<1x64x64xf32> to vector<64x64xf32>
    %cst_48 = arith.constant dense<0.000000e+00> : vector<288x64xf32>
    %52 = tpu.matmul %49, %51, %cst_48 {dimension_numbers = #tpu.dot_dimension_numbers<[1], [0], [0], [1], [0, 0, 1, 1], [], []>} : vector<288x64xf32>, vector<64x64xf32>, vector<288x64xf32> -> vector<288x64xf32>
    %53 = arith.addf %48, %52 : vector<288x64xf32>
    %c54 = arith.constant 54 : index
    %c0_49 = arith.constant 0 : index
    %54 = vector.load %arg10[%c54, %c0_49] : memref<360x64xf32, #tpu.memory_space<vmem>>, vector<288x64xf32>
    %c7 = arith.constant 7 : index
    %c0_50 = arith.constant 0 : index
    %c0_51 = arith.constant 0 : index
    %55 = vector.load %arg5[%c7, %c0_50, %c0_51] : memref<9x64x64xf32, #tpu.memory_space<vmem>>, vector<1x64x64xf32>
    %56 = vector.shape_cast %55 : vector<1x64x64xf32> to vector<64x64xf32>
    %cst_52 = arith.constant dense<0.000000e+00> : vector<288x64xf32>
    %57 = tpu.matmul %54, %56, %cst_52 {dimension_numbers = #tpu.dot_dimension_numbers<[1], [0], [0], [1], [0, 0, 1, 1], [], []>} : vector<288x64xf32>, vector<64x64xf32>, vector<288x64xf32> -> vector<288x64xf32>
    %58 = arith.addf %53, %57 : vector<288x64xf32>
    %c55 = arith.constant 55 : index
    %c0_53 = arith.constant 0 : index
    %59 = vector.load %arg10[%c55, %c0_53] : memref<360x64xf32, #tpu.memory_space<vmem>>, vector<288x64xf32>
    %c8 = arith.constant 8 : index
    %c0_54 = arith.constant 0 : index
    %c0_55 = arith.constant 0 : index
    %60 = vector.load %arg5[%c8, %c0_54, %c0_55] : memref<9x64x64xf32, #tpu.memory_space<vmem>>, vector<1x64x64xf32>
    %61 = vector.shape_cast %60 : vector<1x64x64xf32> to vector<64x64xf32>
    %cst_56 = arith.constant dense<0.000000e+00> : vector<288x64xf32>
    %62 = tpu.matmul %59, %61, %cst_56 {dimension_numbers = #tpu.dot_dimension_numbers<[1], [0], [0], [1], [0, 0, 1, 1], [], []>} : vector<288x64xf32>, vector<64x64xf32>, vector<288x64xf32> -> vector<288x64xf32>
    %63 = arith.addf %58, %62 : vector<288x64xf32>
    %c0_57 = arith.constant 0 : index
    %c0_58 = arith.constant 0 : index
    %64 = vector.load %arg6[%c0_57, %c0_58] : memref<1x64xf32, #tpu.memory_space<vmem>>, vector<1x64xf32>
    %65 = vector.broadcast %64 : vector<1x64xf32> to vector<288x64xf32>
    %66 = arith.addf %63, %65 : vector<288x64xf32>
    %cst_59 = arith.constant 0.000000e+00 : f32
    %67 = vector.broadcast %cst_59 : f32 to vector<288x64xf32>
    %68 = arith.maximumf %66, %67 : vector<288x64xf32>
    %69 = vector.broadcast %5 : vector<288x1xf32> to vector<288x64xf32>
    %70 = arith.mulf %68, %69 : vector<288x64xf32>
    %c36_60 = arith.constant 36 : index
    %c0_61 = arith.constant 0 : index
    %71 = vector.load %arg11[%c36_60, %c0_61] : memref<360x64xf32, #tpu.memory_space<vmem>>, vector<288x64xf32>
    tpu.vector_store %arg11[%c36_60, %c0_61], %70 {strides = array<i32>} : memref<360x64xf32, #tpu.memory_space<vmem>>, vector<288x64xf32>,
    %cst_62 = arith.constant 0.000000e+00 : f32
    %72 = vector.broadcast %cst_62 : f32 to vector<288x64xf32>
    %c17_63 = arith.constant 17 : index
    %c0_64 = arith.constant 0 : index
    %73 = vector.load %arg11[%c17_63, %c0_64] : memref<360x64xf32, #tpu.memory_space<vmem>>, vector<288x64xf32>
    %c0_65 = arith.constant 0 : index
    %c0_66 = arith.constant 0 : index
    %c0_67 = arith.constant 0 : index
    %74 = vector.load %arg7[%c0_65, %c0_66, %c0_67] : memref<9x1x64xf32, #tpu.memory_space<vmem>>, vector<1x1x64xf32>
    %75 = vector.shape_cast %74 : vector<1x1x64xf32> to vector<1x64xf32>
    %76 = vector.broadcast %75 : vector<1x64xf32> to vector<288x64xf32>
    %77 = arith.mulf %73, %76 : vector<288x64xf32>
    %78 = arith.addf %72, %77 : vector<288x64xf32>
    %c18_68 = arith.constant 18 : index
    %c0_69 = arith.constant 0 : index
    %79 = vector.load %arg11[%c18_68, %c0_69] : memref<360x64xf32, #tpu.memory_space<vmem>>, vector<288x64xf32>
    %c1_70 = arith.constant 1 : index
    %c0_71 = arith.constant 0 : index
    %c0_72 = arith.constant 0 : index
    %80 = vector.load %arg7[%c1_70, %c0_71, %c0_72] : memref<9x1x64xf32, #tpu.memory_space<vmem>>, vector<1x1x64xf32>
    %81 = vector.shape_cast %80 : vector<1x1x64xf32> to vector<1x64xf32>
    %82 = vector.broadcast %81 : vector<1x64xf32> to vector<288x64xf32>
    %83 = arith.mulf %79, %82 : vector<288x64xf32>
    %84 = arith.addf %78, %83 : vector<288x64xf32>
    %c19_73 = arith.constant 19 : index
    %c0_74 = arith.constant 0 : index
    %85 = vector.load %arg11[%c19_73, %c0_74] : memref<360x64xf32, #tpu.memory_space<vmem>>, vector<288x64xf32>
    %c2_75 = arith.constant 2 : index
    %c0_76 = arith.constant 0 : index
    %c0_77 = arith.constant 0 : index
    %86 = vector.load %arg7[%c2_75, %c0_76, %c0_77] : memref<9x1x64xf32, #tpu.memory_space<vmem>>, vector<1x1x64xf32>
    %87 = vector.shape_cast %86 : vector<1x1x64xf32> to vector<1x64xf32>
    %88 = vector.broadcast %87 : vector<1x64xf32> to vector<288x64xf32>
    %89 = arith.mulf %85, %88 : vector<288x64xf32>
    %90 = arith.addf %84, %89 : vector<288x64xf32>
    %c35_78 = arith.constant 35 : index
    %c0_79 = arith.constant 0 : index
    %91 = vector.load %arg11[%c35_78, %c0_79] : memref<360x64xf32, #tpu.memory_space<vmem>>, vector<288x64xf32>
    %c3_80 = arith.constant 3 : index
    %c0_81 = arith.constant 0 : index
    %c0_82 = arith.constant 0 : index
    %92 = vector.load %arg7[%c3_80, %c0_81, %c0_82] : memref<9x1x64xf32, #tpu.memory_space<vmem>>, vector<1x1x64xf32>
    %93 = vector.shape_cast %92 : vector<1x1x64xf32> to vector<1x64xf32>
    %94 = vector.broadcast %93 : vector<1x64xf32> to vector<288x64xf32>
    %95 = arith.mulf %91, %94 : vector<288x64xf32>
    %96 = arith.addf %90, %95 : vector<288x64xf32>
    %c36_83 = arith.constant 36 : index
    %c0_84 = arith.constant 0 : index
    %97 = vector.load %arg11[%c36_83, %c0_84] : memref<360x64xf32, #tpu.memory_space<vmem>>, vector<288x64xf32>
    %c4_85 = arith.constant 4 : index
    %c0_86 = arith.constant 0 : index
    %c0_87 = arith.constant 0 : index
    %98 = vector.load %arg7[%c4_85, %c0_86, %c0_87] : memref<9x1x64xf32, #tpu.memory_space<vmem>>, vector<1x1x64xf32>
    %99 = vector.shape_cast %98 : vector<1x1x64xf32> to vector<1x64xf32>
    %100 = vector.broadcast %99 : vector<1x64xf32> to vector<288x64xf32>
    %101 = arith.mulf %97, %100 : vector<288x64xf32>
    %102 = arith.addf %96, %101 : vector<288x64xf32>
    %c37_88 = arith.constant 37 : index
    %c0_89 = arith.constant 0 : index
    %103 = vector.load %arg11[%c37_88, %c0_89] : memref<360x64xf32, #tpu.memory_space<vmem>>, vector<288x64xf32>
    %c5_90 = arith.constant 5 : index
    %c0_91 = arith.constant 0 : index
    %c0_92 = arith.constant 0 : index
    %104 = vector.load %arg7[%c5_90, %c0_91, %c0_92] : memref<9x1x64xf32, #tpu.memory_space<vmem>>, vector<1x1x64xf32>
    %105 = vector.shape_cast %104 : vector<1x1x64xf32> to vector<1x64xf32>
    %106 = vector.broadcast %105 : vector<1x64xf32> to vector<288x64xf32>
    %107 = arith.mulf %103, %106 : vector<288x64xf32>
    %108 = arith.addf %102, %107 : vector<288x64xf32>
    %c53_93 = arith.constant 53 : index
    %c0_94 = arith.constant 0 : index
    %109 = vector.load %arg11[%c53_93, %c0_94] : memref<360x64xf32, #tpu.memory_space<vmem>>, vector<288x64xf32>
    %c6_95 = arith.constant 6 : index
    %c0_96 = arith.constant 0 : index
    %c0_97 = arith.constant 0 : index
    %110 = vector.load %arg7[%c6_95, %c0_96, %c0_97] : memref<9x1x64xf32, #tpu.memory_space<vmem>>, vector<1x1x64xf32>
    %111 = vector.shape_cast %110 : vector<1x1x64xf32> to vector<1x64xf32>
    %112 = vector.broadcast %111 : vector<1x64xf32> to vector<288x64xf32>
    %113 = arith.mulf %109, %112 : vector<288x64xf32>
    %114 = arith.addf %108, %113 : vector<288x64xf32>
    %c54_98 = arith.constant 54 : index
    %c0_99 = arith.constant 0 : index
    %115 = vector.load %arg11[%c54_98, %c0_99] : memref<360x64xf32, #tpu.memory_space<vmem>>, vector<288x64xf32>
    %c7_100 = arith.constant 7 : index
    %c0_101 = arith.constant 0 : index
    %c0_102 = arith.constant 0 : index
    %116 = vector.load %arg7[%c7_100, %c0_101, %c0_102] : memref<9x1x64xf32, #tpu.memory_space<vmem>>, vector<1x1x64xf32>
    %117 = vector.shape_cast %116 : vector<1x1x64xf32> to vector<1x64xf32>
    %118 = vector.broadcast %117 : vector<1x64xf32> to vector<288x64xf32>
    %119 = arith.mulf %115, %118 : vector<288x64xf32>
    %120 = arith.addf %114, %119 : vector<288x64xf32>
    %c55_103 = arith.constant 55 : index
    %c0_104 = arith.constant 0 : index
    %121 = vector.load %arg11[%c55_103, %c0_104] : memref<360x64xf32, #tpu.memory_space<vmem>>, vector<288x64xf32>
    %c8_105 = arith.constant 8 : index
    %c0_106 = arith.constant 0 : index
    %c0_107 = arith.constant 0 : index
    %122 = vector.load %arg7[%c8_105, %c0_106, %c0_107] : memref<9x1x64xf32, #tpu.memory_space<vmem>>, vector<1x1x64xf32>
    %123 = vector.shape_cast %122 : vector<1x1x64xf32> to vector<1x64xf32>
    %124 = vector.broadcast %123 : vector<1x64xf32> to vector<288x64xf32>
    %125 = arith.mulf %121, %124 : vector<288x64xf32>
    %126 = arith.addf %120, %125 : vector<288x64xf32>
    %cst_108 = arith.constant dense<0.000000e+00> : vector<288xf32>
    %127 = vector.multi_reduction <add>, %126, %cst_108 [1] : vector<288x64xf32> to vector<288xf32>
    %128 = vector.shape_cast %127 : vector<288xf32> to vector<288x1xf32>
    %c0_109 = arith.constant 0 : index
    %c0_110 = arith.constant 0 : index
    %129 = vector.load %arg8[%c0_109, %c0_110] : memref<1x1xf32, #tpu.memory_space<vmem>>, vector<1x1xf32>
    %130 = vector.broadcast %129 : vector<1x1xf32> to vector<288x1xf32>
    %131 = arith.addf %128, %130 : vector<288x1xf32>
    %132 = arith.negf %131 : vector<288x1xf32>
    %133 = math.exp %132 : vector<288x1xf32>
    %cst_111 = arith.constant 1.000000e+00 : f32
    %134 = vector.broadcast %cst_111 : f32 to vector<288x1xf32>
    %135 = arith.addf %134, %133 : vector<288x1xf32>
    %136 = arith.divf %134, %135 : vector<288x1xf32>
    %c0_112 = arith.constant 0 : index
    %c0_113 = arith.constant 0 : index
    %c0_114 = arith.constant 0 : index
    %137 = vector.load %arg9[%c0_112, %c0_113, %c0_114] : memref<1x288x1xf32, #tpu.memory_space<vmem>>, vector<1x288x1xf32>
    %138 = vector.shape_cast %137 : vector<1x288x1xf32> to vector<288x1xf32>
    %139 = vector.shape_cast %136 : vector<288x1xf32> to vector<1x288x1xf32>
    tpu.vector_store %arg9[%c0_112, %c0_113, %c0_114], %139 {strides = array<i32>} : memref<1x288x1xf32, #tpu.memory_space<vmem>>, vector<1x288x1xf32>,
    return
  }
  func.func @transform_0(%arg0: i32) -> (i32, i32, i32) {
    %c0_i32 = arith.constant 0 : i32
    %c0_i32_0 = arith.constant 0 : i32
    %c0_i32_1 = arith.constant 0 : i32
    return %arg0, %c0_i32, %c0_i32_0 : i32, i32, i32
  }
  func.func @transform_1(%arg0: i32) -> (i32, i32) {
    %c0_i32 = arith.constant 0 : i32
    %c0_i32_0 = arith.constant 0 : i32
    %c0_i32_1 = arith.constant 0 : i32
    return %c0_i32, %c0_i32_0 : i32, i32
  }
  func.func @transform_2(%arg0: i32) -> (i32, i32) {
    %c0_i32 = arith.constant 0 : i32
    %c0_i32_0 = arith.constant 0 : i32
    %c0_i32_1 = arith.constant 0 : i32
    return %c0_i32, %c0_i32_0 : i32, i32
  }
  func.func @transform_3(%arg0: i32) -> (i32, i32) {
    %c0_i32 = arith.constant 0 : i32
    %c0_i32_0 = arith.constant 0 : i32
    %c0_i32_1 = arith.constant 0 : i32
    return %c0_i32, %c0_i32_0 : i32, i32
  }
  func.func @transform_4(%arg0: i32) -> (i32, i32, i32) {
    %c0_i32 = arith.constant 0 : i32
    %c0_i32_0 = arith.constant 0 : i32
    %c0_i32_1 = arith.constant 0 : i32
    %c0_i32_2 = arith.constant 0 : i32
    return %c0_i32, %c0_i32_0, %c0_i32_1 : i32, i32, i32
  }
  func.func @transform_5(%arg0: i32) -> (i32, i32) {
    %c0_i32 = arith.constant 0 : i32
    %c0_i32_0 = arith.constant 0 : i32
    %c0_i32_1 = arith.constant 0 : i32
    return %c0_i32, %c0_i32_0 : i32, i32
  }
  func.func @transform_6(%arg0: i32) -> (i32, i32, i32) {
    %c0_i32 = arith.constant 0 : i32
    %c0_i32_0 = arith.constant 0 : i32
    %c0_i32_1 = arith.constant 0 : i32
    %c0_i32_2 = arith.constant 0 : i32
    return %c0_i32, %c0_i32_0, %c0_i32_1 : i32, i32, i32
  }
  func.func @transform_7(%arg0: i32) -> (i32, i32) {
    %c0_i32 = arith.constant 0 : i32
    %c0_i32_0 = arith.constant 0 : i32
    %c0_i32_1 = arith.constant 0 : i32
    return %c0_i32, %c0_i32_0 : i32, i32
  }
  func.func @transform_8(%arg0: i32) -> (i32, i32, i32) {
    %c0_i32 = arith.constant 0 : i32
    %c0_i32_0 = arith.constant 0 : i32
    %c0_i32_1 = arith.constant 0 : i32
    return %arg0, %c0_i32, %c0_i32_0 : i32, i32, i32
  }
}

</mosaic_0001>

<llo_original>
// kernel: tpu_custom_call.1
$region0: #{tpu_custom_call.1}
  #allocation0 [shape = 'u32[]', space=smem, size = 0x4, offset = 0x4, fixed_abs, tag = 'smem constant byte address 0x4 - core index']
  #allocation1 [shape = 'u32[144,128]{1,0:T(1,128)}', space=vmem, size = 0x12000, scoped, tag = 'internal scratch']
  #allocation2 [shape = 'f32[360,64]{1,0:T(8,128)}', space=vmem, size = 0x2d000, scoped, tag = 'scratch operand']
  #allocation3 [shape = 'f32[360,64]{1,0:T(8,128)}', space=vmem, size = 0x2d000, scoped, tag = 'scratch operand']
  #allocation4 [shape = 'f32[1,1]{1,0:T(1,128)S(1)}', space=vmem, size = 0x200, scoped, tag = 'scoped memory for tpu_custom_call.1']
  %s0 = inlined_call_operand.vmem [shape: f32[2,288,9], index: 0, kind: input, shape index: {}]
  %s1 = inlined_call_operand.vmem [shape: f32[288,1], index: 1, kind: input, shape index: {}]
  %s2 = inlined_call_operand.vmem [shape: f32[9,64], index: 2, kind: input, shape index: {}]
  %s3 = inlined_call_operand.vmem [shape: f32[1,64], index: 3, kind: input, shape index: {}]
  %s4 = inlined_call_operand.vmem [shape: f32[9,64,64], index: 4, kind: input, shape index: {}]
  %s5 = inlined_call_operand.vmem [shape: f32[1,64], index: 5, kind: input, shape index: {}]
  %s6 = inlined_call_operand.vmem [shape: f32[9,1,64], index: 6, kind: input, shape index: {}]
  %s7 = inlined_call_operand.<no memory space> [shape: f32[1,1], index: 7, kind: input, shape index: {}]
  %s8 = inlined_call_operand.vmem [shape: f32[2,288,1], index: 8, kind: output, shape index: {}]
  %s9 = sld [smem:[#allocation0]]
  $region65: #{tpu_custom_call.1} parent=0
    _
  %s11 = ssub.s32 1, %s9
  %s12 = scalar_select 0, %s11, %s9
  %v13 = vstv %s7
  %14 = vst [vmem:[#allocation4] sm:$0x1] %v13
  loop: start=0, step=1, limit=4
  $region2: #{tpu_custom_call.1} parent=0 // loop_pre_header
    _
  $region3: #{tpu_custom_call.1} parent=0 // loop_header
    %s16 = sphi 0, %s20
    %p17 = scmp.ge.s32.totalorder %s16, 4
    %s26 = sphi 0, %s28
    %s29 = sphi 0, %s26
    %s30 = sphi 0, %s29
    %s46 = sphi 0, %s30
    %s50 = sphi 0, %s50
    %s52 = sphi 0, %s50
    %s53 = sphi 0, %s52
    %s67 = sphi 0, %s53
    %s71 = sphi 0, %s71
    %s73 = sphi 0, %s71
    %s74 = sphi 0, %s73
    %s88 = sphi 0, %s74
    %s92 = sphi 0, %s92
    %s94 = sphi 0, %s92
    %s95 = sphi 0, %s94
    %s109 = sphi 0, %s95
    %s113 = sphi 0, %s113
    %s115 = sphi 0, %s113
    %s116 = sphi 0, %s115
    %s130 = sphi 0, %s116
    %s134 = sphi 0, %s134
    %s136 = sphi 0, %s134
    %s137 = sphi 0, %s136
    %s151 = sphi 0, %s137
    %s155 = sphi 0, %s155
    %s157 = sphi 0, %s155
    %s158 = sphi 0, %s157
    %s172 = sphi 0, %s158
    %s176 = sphi 0, %s176
    %s178 = sphi 0, %s176
    %s179 = sphi 0, %s178
    %s193 = sphi 0, %s179
    %s199 = sphi 0, %s201
    %s202 = sphi 0, %s199
    %s203 = sphi 0, %s202
    %s219 = sphi 0, %s203
  $region4: #{tpu_custom_call.1} parent=0 // loop_header_branch
    %19 = sbr.rel (%p17) target = $region8
  $region5: #{tpu_custom_call.1} parent=0 // loop_body
    %s21 = ssub.s32 %s16, 1
    %s22 = ssub.s32 %s16, 2
    %s23 = sadd.s32 %s16, 1
    %s24 = ssub.s32 %s16, %s23
    %p25 = scmp.eq.s32.totalorder %s24, 0
    %s27 = sadd.s32 %s26, 1
    %s28 = scalar_select %p25, %s26, %s27
    %p31 = pneg %p25
    %p32 = scmp.eq.s32.totalorder %s16, 1
    %p33 = por %p31, %p32
    %p34 = scmp.ne.s32.totalorder %s26, %s29
    %p35 = scmp.eq.s32.totalorder %s16, 0
    %p36 = por %p34, %p35
    %p37 = scmp.ne.s32.totalorder %s26, %s29
    %p38 = scmp.eq.s32.totalorder %s21, 1
    %p39 = por %p37, %p38
    %p40 = scmp.ne.s32.totalorder %s29, %s30
    %p41 = scmp.eq.s32.totalorder %s21, 0
    %p42 = por %p40, %p41
    %p43 = scmp.ne.s32.totalorder %s29, %s30
    %p44 = scmp.eq.s32.totalorder %s22, 1
    %p45 = por %p43, %p44
    %p47 = scmp.ne.s32.totalorder %s30, %s46
    %p48 = scmp.eq.s32.totalorder %s22, 0
    %p49 = por %p47, %p48
    %s51 = sadd.s32 %s50, 1
    %p54 = scmp.eq.s32.totalorder %s16, 1
    %p55 = scmp.ne.s32.totalorder %s50, %s52
    %p56 = scmp.eq.s32.totalorder %s16, 0
    %p57 = por %p55, %p56
    %p58 = scmp.ne.s32.totalorder %s50, %s52
    %p59 = scmp.eq.s32.totalorder %s21, 1
    %p60 = por %p58, %p59
    %p61 = scmp.ne.s32.totalorder %s52, %s53
    %p62 = scmp.eq.s32.totalorder %s21, 0
    %p63 = por %p61, %p62
    %p64 = scmp.ne.s32.totalorder %s52, %s53
    %p65 = scmp.eq.s32.totalorder %s22, 1
    %p66 = por %p64, %p65
    %p68 = scmp.ne.s32.totalorder %s53, %s67
    %p69 = scmp.eq.s32.totalorder %s22, 0
    %p70 = por %p68, %p69
    %s72 = sadd.s32 %s71, 1
    %p75 = scmp.eq.s32.totalorder %s16, 1
    %p76 = scmp.ne.s32.totalorder %s71, %s73
    %p77 = scmp.eq.s32.totalorder %s16, 0
    %p78 = por %p76, %p77
    %p79 = scmp.ne.s32.totalorder %s71, %s73
    %p80 = scmp.eq.s32.totalorder %s21, 1
    %p81 = por %p79, %p80
    %p82 = scmp.ne.s32.totalorder %s73, %s74
    %p83 = scmp.eq.s32.totalorder %s21, 0
    %p84 = por %p82, %p83
    %p85 = scmp.ne.s32.totalorder %s73, %s74
    %p86 = scmp.eq.s32.totalorder %s22, 1
    %p87 = por %p85, %p86
    %p89 = scmp.ne.s32.totalorder %s74, %s88
    %p90 = scmp.eq.s32.totalorder %s22, 0
    %p91 = por %p89, %p90
    %s93 = sadd.s32 %s92, 1
    %p96 = scmp.eq.s32.totalorder %s16, 1
    %p97 = scmp.ne.s32.totalorder %s92, %s94
    %p98 = scmp.eq.s32.totalorder %s16, 0
    %p99 = por %p97, %p98
    %p100 = scmp.ne.s32.totalorder %s92, %s94
    %p101 = scmp.eq.s32.totalorder %s21, 1
    %p102 = por %p100, %p101
    %p103 = scmp.ne.s32.totalorder %s94, %s95
    %p104 = scmp.eq.s32.totalorder %s21, 0
    %p105 = por %p103, %p104
    %p106 = scmp.ne.s32.totalorder %s94, %s95
    %p107 = scmp.eq.s32.totalorder %s22, 1
    %p108 = por %p106, %p107
    %p110 = scmp.ne.s32.totalorder %s95, %s109
    %p111 = scmp.eq.s32.totalorder %s22, 0
    %p112 = por %p110, %p111
    %s114 = sadd.s32 %s113, 1
    %p117 = scmp.eq.s32.totalorder %s16, 1
    %p118 = scmp.ne.s32.totalorder %s113, %s115
    %p119 = scmp.eq.s32.totalorder %s16, 0
    %p120 = por %p118, %p119
    %p121 = scmp.ne.s32.totalorder %s113, %s115
    %p122 = scmp.eq.s32.totalorder %s21, 1
    %p123 = por %p121, %p122
    %p124 = scmp.ne.s32.totalorder %s115, %s116
    %p125 = scmp.eq.s32.totalorder %s21, 0
    %p126 = por %p124, %p125
    %p127 = scmp.ne.s32.totalorder %s115, %s116
    %p128 = scmp.eq.s32.totalorder %s22, 1
    %p129 = por %p127, %p128
    %p131 = scmp.ne.s32.totalorder %s116, %s130
    %p132 = scmp.eq.s32.totalorder %s22, 0
    %p133 = por %p131, %p132
    %s135 = sadd.s32 %s134, 1
    %p138 = scmp.eq.s32.totalorder %s16, 1
    %p139 = scmp.ne.s32.totalorder %s134, %s136
    %p140 = scmp.eq.s32.totalorder %s16, 0
    %p141 = por %p139, %p140
    %p142 = scmp.ne.s32.totalorder %s134, %s136
    %p143 = scmp.eq.s32.totalorder %s21, 1
    %p144 = por %p142, %p143
    %p145 = scmp.ne.s32.totalorder %s136, %s137
    %p146 = scmp.eq.s32.totalorder %s21, 0
    %p147 = por %p145, %p146
    %p148 = scmp.ne.s32.totalorder %s136, %s137
    %p149 = scmp.eq.s32.totalorder %s22, 1
    %p150 = por %p148, %p149
    %p152 = scmp.ne.s32.totalorder %s137, %s151
    %p153 = scmp.eq.s32.totalorder %s22, 0
    %p154 = por %p152, %p153
    %s156 = sadd.s32 %s155, 1
    %p159 = scmp.eq.s32.totalorder %s16, 1
    %p160 = scmp.ne.s32.totalorder %s155, %s157
    %p161 = scmp.eq.s32.totalorder %s16, 0
    %p162 = por %p160, %p161
    %p163 = scmp.ne.s32.totalorder %s155, %s157
    %p164 = scmp.eq.s32.totalorder %s21, 1
    %p165 = por %p163, %p164
    %p166 = scmp.ne.s32.totalorder %s157, %s158
    %p167 = scmp.eq.s32.totalorder %s21, 0
    %p168 = por %p166, %p167
    %p169 = scmp.ne.s32.totalorder %s157, %s158
    %p170 = scmp.eq.s32.totalorder %s22, 1
    %p171 = por %p169, %p170
    %p173 = scmp.ne.s32.totalorder %s158, %s172
    %p174 = scmp.eq.s32.totalorder %s22, 0
    %p175 = por %p173, %p174
    %s177 = sadd.s32 %s176, 1
    %p180 = scmp.eq.s32.totalorder %s16, 1
    %p181 = scmp.ne.s32.totalorder %s176, %s178
    %p182 = scmp.eq.s32.totalorder %s16, 0
    %p183 = por %p181, %p182
    %p184 = scmp.ne.s32.totalorder %s176, %s178
    %p185 = scmp.eq.s32.totalorder %s21, 1
    %p186 = por %p184, %p185
    %p187 = scmp.ne.s32.totalorder %s178, %s179
    %p188 = scmp.eq.s32.totalorder %s21, 0
    %p189 = por %p187, %p188
    %p190 = scmp.ne.s32.totalorder %s178, %s179
    %p191 = scmp.eq.s32.totalorder %s22, 1
    %p192 = por %p190, %p191
    %p194 = scmp.ne.s32.totalorder %s179, %s193
    %p195 = scmp.eq.s32.totalorder %s22, 0
    %p196 = por %p194, %p195
    %s197 = ssub.s32 %s16, %s23
    %p198 = scmp.eq.s32.totalorder %s197, 0
    %s200 = sadd.s32 %s199, 1
    %s201 = scalar_select %p198, %s199, %s200
    %p204 = pneg %p198
    %p205 = scmp.eq.s32.totalorder %s16, 1
    %p206 = por %p204, %p205
    %p207 = scmp.ne.s32.totalorder %s199, %s202
    %p208 = scmp.eq.s32.totalorder %s16, 0
    %p209 = por %p207, %p208
    %p210 = scmp.ne.s32.totalorder %s199, %s202
    %p211 = scmp.eq.s32.totalorder %s21, 1
    %p212 = por %p210, %p211
    %p213 = scmp.ne.s32.totalorder %s202, %s203
    %p214 = scmp.eq.s32.totalorder %s21, 0
    %p215 = por %p213, %p214
    %p216 = scmp.ne.s32.totalorder %s202, %s203
    %p217 = scmp.eq.s32.totalorder %s22, 1
    %p218 = por %p216, %p217
    %p220 = scmp.ne.s32.totalorder %s203, %s219
    %p221 = scmp.eq.s32.totalorder %s22, 0
    %p222 = por %p220, %p221
    %p223 = scmp.le.s32.totalorder 1, %s16
    %p224 = scmp.lt.s32.totalorder %s16, 3
    %p225 = pnand %p223, %p224
    %p226 = pneg %p225
    // Predicated region
    $region9: #{tpu_custom_call.1} parent=5 // pred_check
      _
    $region10: #{tpu_custom_call.1} parent=5 // pred_check_branch
      %228 = sbr.rel (%p225) target = $region12
    $region11: #{tpu_custom_call.1} parent=5 // pred_region
      %s229 = ssub.s32 %s16, 1
      // Predicated region
      $region13: #{tpu_custom_call.1} parent=11 // pred_check
        %p230 = pneg %p63
      $region14: #{tpu_custom_call.1} parent=11 // pred_check_branch
        %232 = sbr.rel (%p230) target = $region16
      $region15: #{tpu_custom_call.1} parent=11 // pred_region
        _
      $region16: #{tpu_custom_call.1} parent=11 // pred_fallthru
        _
      // Predicated region
      $region17: #{tpu_custom_call.1} parent=11 // pred_check
        %p233 = pneg %p84
      $region18: #{tpu_custom_call.1} parent=11 // pred_check_branch
        %235 = sbr.rel (%p233) target = $region20
      $region19: #{tpu_custom_call.1} parent=11 // pred_region
        _
      $region20: #{tpu_custom_call.1} parent=11 // pred_fallthru
        _
      // Predicated region
      $region21: #{tpu_custom_call.1} parent=11 // pred_check
        %p236 = pneg %p105
      $region22: #{tpu_custom_call.1} parent=11 // pred_check_branch
        %238 = sbr.rel (%p236) target = $region24
      $region23: #{tpu_custom_call.1} parent=11 // pred_region
        _
      $region24: #{tpu_custom_call.1} parent=11 // pred_fallthru
        _
      // Predicated region
      $region25: #{tpu_custom_call.1} parent=11 // pred_check
        %p239 = pneg %p126
      $region26: #{tpu_custom_call.1} parent=11 // pred_check_branch
        %241 = sbr.rel (%p239) target = $region28
      $region27: #{tpu_custom_call.1} parent=11 // pred_region
        _
      $region28: #{tpu_custom_call.1} parent=11 // pred_fallthru
        _
      // Predicated region
      $region29: #{tpu_custom_call.1} parent=11 // pred_check
        %p242 = pneg %p147
      $region30: #{tpu_custom_call.1} parent=11 // pred_check_branch
        %244 = sbr.rel (%p242) target = $region32
      $region31: #{tpu_custom_call.1} parent=11 // pred_region
        _
      $region32: #{tpu_custom_call.1} parent=11 // pred_fallthru
        _
      // Predicated region
      $region33: #{tpu_custom_call.1} parent=11 // pred_check
        %p245 = pneg %p168
      $region34: #{tpu_custom_call.1} parent=11 // pred_check_branch
        %247 = sbr.rel (%p245) target = $region36
      $region35: #{tpu_custom_call.1} parent=11 // pred_region
        _
      $region36: #{tpu_custom_call.1} parent=11 // pred_fallthru
        _
      // Predicated region
      $region37: #{tpu_custom_call.1} parent=11 // pred_check
        %p248 = pneg %p189
      $region38: #{tpu_custom_call.1} parent=11 // pred_check_branch
        %250 = sbr.rel (%p248) target = $region40
      $region39: #{tpu_custom_call.1} parent=11 // pred_region
        _
      $region40: #{tpu_custom_call.1} parent=11 // pred_fallthru
        _
    $region12: #{tpu_custom_call.1} parent=5 // pred_fallthru
      _
    %p251 = scmp.lt.s32.totalorder %s16, 2
    // Predicated region
    $region41: #{tpu_custom_call.1} parent=5 // pred_check
      %p252 = pneg %p251
    $region42: #{tpu_custom_call.1} parent=5 // pred_check_branch
      %254 = sbr.rel (%p252) target = $region44
    $region43: #{tpu_custom_call.1} parent=5 // pred_region
      // Predicated region
      $region45: #{tpu_custom_call.1} parent=43 // pred_check
        %p255 = pneg %p36
      $region46: #{tpu_custom_call.1} parent=43 // pred_check_branch
        %257 = sbr.rel (%p255) target = $region48
      $region47: #{tpu_custom_call.1} parent=43 // pred_region
        %p258 = scmp.lt.s32.totalorder %s16, 1
        %s259 = scalar_select %p258, %s16, 1
        %s260 = smul.addr %s259, 36
        %s261 = smul.addr %s260, 8
        %s262 = scalar_lea.vmem %s0, %s261
      $region48: #{tpu_custom_call.1} parent=43 // pred_fallthru
        _
    $region44: #{tpu_custom_call.1} parent=5 // pred_fallthru
      _
    %p263 = scmp.le.s32.totalorder 1, %s16
    %p264 = scmp.lt.s32.totalorder %s16, 3
    %p265 = pnand %p263, %p264
    %p266 = pneg %p265
    // Predicated region
    $region49: #{tpu_custom_call.1} parent=5 // pred_check
      _
    $region50: #{tpu_custom_call.1} parent=5 // pred_check_branch
      %268 = sbr.rel (%p265) target = $region52
    $region51: #{tpu_custom_call.1} parent=5 // pred_region
      %s269 = ssub.s32 %s16, 1
      %p270 = scmp.lt.s32.totalorder %s21, 1
      %s271 = scalar_select %p270, %s21, 1
      %s272 = smul.addr %s271, 36
      %s273 = smul.addr %s272, 8
      %s274 = scalar_lea.vmem %s0, %s273
      %p275 = pneg %p42
      %p276 = pneg %p39
      %p277 = pneg %p63
      %p278 = pneg %p60
      %p279 = pneg %p84
      %p280 = pneg %p81
      %p281 = pneg %p105
      %p282 = pneg %p102
      %p283 = pneg %p126
      %p284 = pneg %p123
      %p285 = pneg %p147
      %p286 = pneg %p144
      %p287 = pneg %p168
      %p288 = pneg %p165
      %p289 = pneg %p189
      %p290 = pneg %p186
      %p291 = pneg %p215
      %p292 = pneg %p212
      %p293 = scmp.lt.s32.totalorder %s21, 1
      %s294 = scalar_select %p293, %s21, 1
      %s295 = smul.addr %s294, 36
      %s296 = smul.addr %s295, 8
      %s297 = scalar_lea.vmem %s8, %s296
      %p298 = scmp.lt.s32.totalorder %s21, 1
      %s299 = scalar_select %p298, %s21, 1
      %s300 = smul.addr %s299, 36
      %s301 = smul.addr %s300, 8
      %s302 = scalar_lea.vmem %s0, %s301
      %p303 = scmp.lt.s32.totalorder %s21, 1
      %s304 = scalar_select %p303, %s21, 1
      %s305 = smul.addr %s304, 36
      %s306 = smul.addr %s305, 8
      %s307 = scalar_lea.vmem %s8, %s306
      %vm308 = vcmask 523264
      %309 = vst.msk [vmem:[#allocation2] sm:$0xff] %vm308, 0.0
      %310 = vst.msk [vmem:[#allocation2 + $0x8] sm:$0xff] %vm308, 0.0
      %311 = vst.msk [vmem:[#allocation2 + $0x10] sm:$0xff] %vm308, 0.0
      %312 = vst.msk [vmem:[#allocation2 + $0x18] sm:$0xff] %vm308, 0.0
      %vm313 = vcmask 519168
      %314 = vst.msk [vmem:[#allocation2 + $0x20] sm:$0xf] %vm313, 0.0
      %315 = vst.msk [vmem:[#allocation2 + $0x144] sm:$0xff] %vm308, 0.0
      %316 = vst.msk [vmem:[#allocation2 + $0x14c] sm:$0xff] %vm308, 0.0
      %317 = vst.msk [vmem:[#allocation2 + $0x154] sm:$0xff] %vm308, 0.0
      %318 = vst.msk [vmem:[#allocation2 + $0x15c] sm:$0xff] %vm308, 0.0
      %319 = vst.msk [vmem:[#allocation2 + $0x164] sm:$0xf] %vm313, 0.0
      %320 = vst.msk [vmem:[#allocation3] sm:$0xff] %vm308, 0.0
      %321 = vst.msk [vmem:[#allocation3 + $0x8] sm:$0xff] %vm308, 0.0
      %322 = vst.msk [vmem:[#allocation3 + $0x10] sm:$0xff] %vm308, 0.0
      %323 = vst.msk [vmem:[#allocation3 + $0x18] sm:$0xff] %vm308, 0.0
      %324 = vst.msk [vmem:[#allocation3 + $0x20] sm:$0xf] %vm313, 0.0
      %325 = vst.msk [vmem:[#allocation3 + $0x144] sm:$0xff] %vm308, 0.0
      %326 = vst.msk [vmem:[#allocation3 + $0x14c] sm:$0xff] %vm308, 0.0
      %327 = vst.msk [vmem:[#allocation3 + $0x154] sm:$0xff] %vm308, 0.0
      %328 = vst.msk [vmem:[#allocation3 + $0x15c] sm:$0xff] %vm308, 0.0
      %329 = vst.msk [vmem:[#allocation3 + $0x164] sm:$0xf] %vm313, 0.0
      %v330 = vld [vmem:[%s1] sm:$0xff]
      %v331 = vld [vmem:[%s1 + $0x8] sm:$0xff]
      %v332 = vld [vmem:[%s1 + $0x10] sm:$0xff]
      %v333 = vld [vmem:[%s1 + $0x18] sm:$0xff]
      %v334 = vld [vmem:[%s1 + $0x20] sm:$0xff]
      %v335 = vld [vmem:[%s1 + $0x28] sm:$0xff]
      %v336 = vld [vmem:[%s1 + $0x30] sm:$0xff]
      %v337 = vld [vmem:[%s1 + $0x38] sm:$0xff]
      %v338 = vld [vmem:[%s1 + $0x40] sm:$0xff]
      %v339 = vld [vmem:[%s1 + $0x48] sm:$0xff]
      %v340 = vld [vmem:[%s1 + $0x50] sm:$0xff]
      %v341 = vld [vmem:[%s1 + $0x58] sm:$0xff]
      %v342 = vld [vmem:[%s1 + $0x60] sm:$0xff]
      %v343 = vld [vmem:[%s1 + $0x68] sm:$0xff]
      %v344 = vld [vmem:[%s1 + $0x70] sm:$0xff]
      %v345 = vld [vmem:[%s1 + $0x78] sm:$0xff]
      %v346 = vld [vmem:[%s1 + $0x80] sm:$0xff]
      %v347 = vld [vmem:[%s1 + $0x88] sm:$0xff]
      %v348 = vld [vmem:[%s1 + $0x90] sm:$0xff]
      %v349 = vld [vmem:[%s1 + $0x98] sm:$0xff]
      %v350 = vld [vmem:[%s1 + $0xa0] sm:$0xff]
      %v351 = vld [vmem:[%s1 + $0xa8] sm:$0xff]
      %v352 = vld [vmem:[%s1 + $0xb0] sm:$0xff]
      %v353 = vld [vmem:[%s1 + $0xb8] sm:$0xff]
      %v354 = vld [vmem:[%s1 + $0xc0] sm:$0xff]
      %v355 = vld [vmem:[%s1 + $0xc8] sm:$0xff]
      %v356 = vld [vmem:[%s1 + $0xd0] sm:$0xff]
      %v357 = vld [vmem:[%s1 + $0xd8] sm:$0xff]
      %v358 = vld [vmem:[%s1 + $0xe0] sm:$0xff]
      %v359 = vld [vmem:[%s1 + $0xe8] sm:$0xff]
      %v360 = vld [vmem:[%s1 + $0xf0] sm:$0xff]
      %v361 = vld [vmem:[%s1 + $0xf8] sm:$0xff]
      %v362 = vld [vmem:[%s1 + $0x100] sm:$0xff]
      %v363 = vld [vmem:[%s1 + $0x108] sm:$0xff]
      %v364 = vld [vmem:[%s1 + $0x110] sm:$0xff]
      %v365 = vld [vmem:[%s1 + $0x118] sm:$0xff]
      %v366 = vld [vmem:[%s302] sm:$0xff]
      %v367 = vld [vmem:[%s302 + $0x8] sm:$0xff]
      %v368 = vld [vmem:[%s302 + $0x10] sm:$0xff]
      %v369 = vld [vmem:[%s302 + $0x18] sm:$0xff]
      %v370 = vld [vmem:[%s302 + $0x20] sm:$0xff]
      %v371 = vld [vmem:[%s302 + $0x28] sm:$0xff]
      %v372 = vld [vmem:[%s302 + $0x30] sm:$0xff]
      %v373 = vld [vmem:[%s302 + $0x38] sm:$0xff]
      %v374 = vld [vmem:[%s302 + $0x40] sm:$0xff]
      %v375 = vld [vmem:[%s302 + $0x48] sm:$0xff]
      %v376 = vld [vmem:[%s302 + $0x50] sm:$0xff]
      %v377 = vld [vmem:[%s302 + $0x58] sm:$0xff]
      %v378 = vld [vmem:[%s302 + $0x60] sm:$0xff]
      %v379 = vld [vmem:[%s302 + $0x68] sm:$0xff]
      %v380 = vld [vmem:[%s302 + $0x70] sm:$0xff]
      %v381 = vld [vmem:[%s302 + $0x78] sm:$0xff]
      %v382 = vld [vmem:[%s302 + $0x80] sm:$0xff]
      %v383 = vld [vmem:[%s302 + $0x88] sm:$0xff]
      %v384 = vld [vmem:[%s302 + $0x90] sm:$0xff]
      %v385 = vld [vmem:[%s302 + $0x98] sm:$0xff]
      %v386 = vld [vmem:[%s302 + $0xa0] sm:$0xff]
      %v387 = vld [vmem:[%s302 + $0xa8] sm:$0xff]
      %v388 = vld [vmem:[%s302 + $0xb0] sm:$0xff]
      %v389 = vld [vmem:[%s302 + $0xb8] sm:$0xff]
      %v390 = vld [vmem:[%s302 + $0xc0] sm:$0xff]
      %v391 = vld [vmem:[%s302 + $0xc8] sm:$0xff]
      %v392 = vld [vmem:[%s302 + $0xd0] sm:$0xff]
      %v393 = vld [vmem:[%s302 + $0xd8] sm:$0xff]
      %v394 = vld [vmem:[%s302 + $0xe0] sm:$0xff]
      %v395 = vld [vmem:[%s302 + $0xe8] sm:$0xff]
      %v396 = vld [vmem:[%s302 + $0xf0] sm:$0xff]
      %v397 = vld [vmem:[%s302 + $0xf8] sm:$0xff]
      %v398 = vld [vmem:[%s302 + $0x100] sm:$0xff]
      %v399 = vld [vmem:[%s302 + $0x108] sm:$0xff]
      %v400 = vld [vmem:[%s302 + $0x110] sm:$0xff]
      %v401 = vld [vmem:[%s302 + $0x118] sm:$0xff]
      %v402 = vld [vmem:[%s2] sm:$0xff]
      %v403 = vld [vmem:[%s2 + $0x8] sm:$0x1]
      %v404 = vld [vmem:[%s3] sm:$0x1]
      %v406 = vlaneseq
      %v407 = vshrl.u32 %v406, 7
      %v408 = vsub.s32 0, %v407
      %v409 = vrot.slane %v404, %v408
      %vm411 = vcmask 72704
      %v413 = vsel %vm411, %v366, 0
      %v416 = vsel %vm411, %v367, 0
      %v419 = vsel %vm411, %v368, 0
      %v422 = vsel %vm411, %v369, 0
      %v425 = vsel %vm411, %v370, 0
      %v428 = vsel %vm411, %v371, 0
      %v431 = vsel %vm411, %v372, 0
      %v434 = vsel %vm411, %v373, 0
      %v437 = vsel %vm411, %v374, 0
      %v440 = vsel %vm411, %v375, 0
      %v443 = vsel %vm411, %v376, 0
      %v446 = vsel %vm411, %v377, 0
      %v449 = vsel %vm411, %v378, 0
      %v452 = vsel %vm411, %v379, 0
      %v455 = vsel %vm411, %v380, 0
      %v458 = vsel %vm411, %v381, 0
      %v461 = vsel %vm411, %v382, 0
      %v464 = vsel %vm411, %v383, 0
      %v467 = vsel %vm411, %v384, 0
      %v470 = vsel %vm411, %v385, 0
      %v473 = vsel %vm411, %v386, 0
      %v476 = vsel %vm411, %v387, 0
      %v479 = vsel %vm411, %v388, 0
      %v482 = vsel %vm411, %v389, 0
      %v485 = vsel %vm411, %v390, 0
      %v488 = vsel %vm411, %v391, 0
      %v491 = vsel %vm411, %v392, 0
      %v494 = vsel %vm411, %v393, 0
      %v497 = vsel %vm411, %v394, 0
      %v500 = vsel %vm411, %v395, 0
      %v503 = vsel %vm411, %v396, 0
      %v506 = vsel %vm411, %v397, 0
      %v509 = vsel %vm411, %v398, 0
      %v512 = vsel %vm411, %v399, 0
      %v515 = vsel %vm411, %v400, 0
      %v518 = vsel %vm411, %v401, 0
      %vm520 = vcmask 1040384
      %v522 = vsel %vm520, %v403, 0
      %524 = vmatprep.subr.mxu0 0.0
      %525 = vmatpush1.msra.mxu0 %v402
      %526 = vmatprep.subr.mxu0 0.0
      %527 = vmatpush1.msra.mxu0 %v522
      %528 = vmatprep.subr.mxu0 0.0
      %529 = vmatpush1.msra.mxu0 0.0
      %530 = vmatprep.subr.mxu0 0.0
      %531 = vmatpush1.msra.mxu0 0.0
      %532 = vmatprep.subr.mxu0 0.0
      %533 = vmatpush1.msra.mxu0 0.0
      %534 = vmatprep.subr.mxu0 0.0
      %535 = vmatpush1.msra.mxu0 0.0
      %536 = vmatprep.subr.mxu0 0.0
      %537 = vmatpush1.msra.mxu0 0.0
      %538 = vmatprep.subr.mxu0 0.0
      %539 = vmatpush1.msra.mxu0 0.0
      %540 = vmatprep.subr.mxu0 0.0
      %541 = vmatpush1.msra.mxu0 0.0
      %542 = vmatprep.subr.mxu0 0.0
      %543 = vmatpush1.msra.mxu0 0.0
      %544 = vmatprep.subr.mxu0 0.0
      %545 = vmatpush1.msra.mxu0 0.0
      %546 = vmatprep.subr.mxu0 0.0
      %547 = vmatpush1.msra.mxu0 0.0
      %548 = vmatprep.subr.mxu0 0.0
      %549 = vmatpush1.msra.mxu0 0.0
      %550 = vmatprep.subr.mxu0 0.0
      %551 = vmatpush1.msra.mxu0 0.0
      %552 = vmatprep.subr.mxu0 0.0
      %553 = vmatpush1.msra.mxu0 0.0
      %554 = vmatprep.subr.mxu0 0.0
      %555 = vmatpush1.msra.mxu0 0.0
      %556 = vmatprep.subr.mxu0 0.0
      %557 = vmatpush1.msra.mxu0 0.0
      %558 = vmatprep.subr.mxu0 0.0
      %559 = vmatpush1.msra.mxu0 0.0
      %560 = vmatprep.subr.mxu0 0.0
      %561 = vmatpush1.msra.mxu0 0.0
      %562 = vmatprep.subr.mxu0 0.0
      %563 = vmatpush1.msra.mxu0 0.0
      %564 = vmatprep.subr.mxu0 0.0
      %565 = vmatpush1.msra.mxu0 0.0
      %566 = vmatprep.subr.mxu0 0.0
      %567 = vmatpush1.msra.mxu0 0.0
      %568 = vmatprep.subr.mxu0 0.0
      %569 = vmatpush1.msra.mxu0 0.0
      %570 = vmatprep.subr.mxu0 0.0
      %571 = vmatpush1.msra.mxu0 0.0
      %572 = vmatprep.subr.mxu0 0.0
      %573 = vmatpush1.msra.mxu0 0.0
      %574 = vmatprep.subr.mxu0 0.0
      %575 = vmatpush1.msra.mxu0 0.0
      %576 = vmatprep.subr.mxu0 0.0
      %577 = vmatpush1.msra.mxu0 0.0
      %578 = vmatprep.subr.mxu0 0.0
      %579 = vmatpush1.msra.mxu0 0.0
      %580 = vmatprep.subr.mxu0 0.0
      %581 = vmatpush1.msra.mxu0 0.0
      %582 = vmatprep.subr.mxu0 0.0
      %583 = vmatpush1.msra.mxu0 0.0
      %584 = vmatprep.subr.mxu0 0.0
      %585 = vmatpush1.msra.mxu0 0.0
      %586 = vmatprep.subr.mxu0 0.0
      %587 = vmatpush1.msra.mxu0 0.0
      %588 = vmatprep.mubr.f32.mxu0 0.0
      %589 = vmatmul.mubr.f32.gmra.mrb[0].mxu0 %v413
      %v590 = vpop.f32.mrb[0].mxu0
      %v591 = vadd.f32 %v409, %v590
      %v592 = vpop.f32.mrb[0].mxu0
      %593 = vmatprep.mubr.f32.mxu0 0.0
      %594 = vmatmul.mubr.f32.gmra.mrb[0].mxu0 %v416
      %v595 = vpop.f32.mrb[0].mxu0
      %v596 = vadd.f32 %v409, %v595
      %v597 = vpop.f32.mrb[0].mxu0
      %598 = vmatprep.mubr.f32.mxu0 0.0
      %599 = vmatmul.mubr.f32.gmra.mrb[0].mxu0 %v419
      %v600 = vpop.f32.mrb[0].mxu0
      %v601 = vadd.f32 %v409, %v600
      %v602 = vpop.f32.mrb[0].mxu0
      %603 = vmatprep.mubr.f32.mxu0 0.0
      %604 = vmatmul.mubr.f32.gmra.mrb[0].mxu0 %v422
      %v605 = vpop.f32.mrb[0].mxu0
      %v606 = vadd.f32 %v409, %v605
      %v607 = vpop.f32.mrb[0].mxu0
      %608 = vmatprep.mubr.f32.mxu0 0.0
      %609 = vmatmul.mubr.f32.gmra.mrb[0].mxu0 %v425
      %v610 = vpop.f32.mrb[0].mxu0
      %v611 = vadd.f32 %v409, %v610
      %v612 = vpop.f32.mrb[0].mxu0
      %613 = vmatprep.mubr.f32.mxu0 0.0
      %614 = vmatmul.mubr.f32.gmra.mrb[0].mxu0 %v428
      %v615 = vpop.f32.mrb[0].mxu0
      %v616 = vadd.f32 %v409, %v615
      %v617 = vpop.f32.mrb[0].mxu0
      %618 = vmatprep.mubr.f32.mxu0 0.0
      %619 = vmatmul.mubr.f32.gmra.mrb[0].mxu0 %v431
      %v620 = vpop.f32.mrb[0].mxu0
      %v621 = vadd.f32 %v409, %v620
      %v622 = vpop.f32.mrb[0].mxu0
      %623 = vmatprep.mubr.f32.mxu0 0.0
      %624 = vmatmul.mubr.f32.gmra.mrb[0].mxu0 %v434
      %v625 = vpop.f32.mrb[0].mxu0
      %v626 = vadd.f32 %v409, %v625
      %v627 = vpop.f32.mrb[0].mxu0
      %628 = vmatprep.mubr.f32.mxu0 0.0
      %629 = vmatmul.mubr.f32.gmra.mrb[0].mxu0 %v437
      %v630 = vpop.f32.mrb[0].mxu0
      %v631 = vadd.f32 %v409, %v630
      %v632 = vpop.f32.mrb[0].mxu0
      %633 = vmatprep.mubr.f32.mxu0 0.0
      %634 = vmatmul.mubr.f32.gmra.mrb[0].mxu0 %v440
      %v635 = vpop.f32.mrb[0].mxu0
      %v636 = vadd.f32 %v409, %v635
      %v637 = vpop.f32.mrb[0].mxu0
      %638 = vmatprep.mubr.f32.mxu0 0.0
      %639 = vmatmul.mubr.f32.gmra.mrb[0].mxu0 %v443
      %v640 = vpop.f32.mrb[0].mxu0
      %v641 = vadd.f32 %v409, %v640
      %v642 = vpop.f32.mrb[0].mxu0
      %643 = vmatprep.mubr.f32.mxu0 0.0
      %644 = vmatmul.mubr.f32.gmra.mrb[0].mxu0 %v446
      %v645 = vpop.f32.mrb[0].mxu0
      %v646 = vadd.f32 %v409, %v645
      %v647 = vpop.f32.mrb[0].mxu0
      %648 = vmatprep.mubr.f32.mxu0 0.0
      %649 = vmatmul.mubr.f32.gmra.mrb[0].mxu0 %v449
      %v650 = vpop.f32.mrb[0].mxu0
      %v651 = vadd.f32 %v409, %v650
      %v652 = vpop.f32.mrb[0].mxu0
      %653 = vmatprep.mubr.f32.mxu0 0.0
      %654 = vmatmul.mubr.f32.gmra.mrb[0].mxu0 %v452
      %v655 = vpop.f32.mrb[0].mxu0
      %v656 = vadd.f32 %v409, %v655
      %v657 = vpop.f32.mrb[0].mxu0
      %658 = vmatprep.mubr.f32.mxu0 0.0
      %659 = vmatmul.mubr.f32.gmra.mrb[0].mxu0 %v455
      %v660 = vpop.f32.mrb[0].mxu0
      %v661 = vadd.f32 %v409, %v660
      %v662 = vpop.f32.mrb[0].mxu0
      %663 = vmatprep.mubr.f32.mxu0 0.0
      %664 = vmatmul.mubr.f32.gmra.mrb[0].mxu0 %v458
      %v665 = vpop.f32.mrb[0].mxu0
      %v666 = vadd.f32 %v409, %v665
      %v667 = vpop.f32.mrb[0].mxu0
      %668 = vmatprep.mubr.f32.mxu0 0.0
      %669 = vmatmul.mubr.f32.gmra.mrb[0].mxu0 %v461
      %v670 = vpop.f32.mrb[0].mxu0
      %v671 = vadd.f32 %v409, %v670
      %v672 = vpop.f32.mrb[0].mxu0
      %673 = vmatprep.mubr.f32.mxu0 0.0
      %674 = vmatmul.mubr.f32.gmra.mrb[0].mxu0 %v464
      %v675 = vpop.f32.mrb[0].mxu0
      %v676 = vadd.f32 %v409, %v675
      %v677 = vpop.f32.mrb[0].mxu0
      %678 = vmatprep.mubr.f32.mxu0 0.0
      %679 = vmatmul.mubr.f32.gmra.mrb[0].mxu0 %v467
      %v680 = vpop.f32.mrb[0].mxu0
      %v681 = vadd.f32 %v409, %v680
      %v682 = vpop.f32.mrb[0].mxu0
      %683 = vmatprep.mubr.f32.mxu0 0.0
      %684 = vmatmul.mubr.f32.gmra.mrb[0].mxu0 %v470
      %v685 = vpop.f32.mrb[0].mxu0
      %v686 = vadd.f32 %v409, %v685
      %v687 = vpop.f32.mrb[0].mxu0
      %688 = vmatprep.mubr.f32.mxu0 0.0
      %689 = vmatmul.mubr.f32.gmra.mrb[0].mxu0 %v473
      %v690 = vpop.f32.mrb[0].mxu0
      %v691 = vadd.f32 %v409, %v690
      %v692 = vpop.f32.mrb[0].mxu0
      %693 = vmatprep.mubr.f32.mxu0 0.0
      %694 = vmatmul.mubr.f32.gmra.mrb[0].mxu0 %v476
      %v695 = vpop.f32.mrb[0].mxu0
      %v696 = vadd.f32 %v409, %v695
      %v697 = vpop.f32.mrb[0].mxu0
      %698 = vmatprep.mubr.f32.mxu0 0.0
      %699 = vmatmul.mubr.f32.gmra.mrb[0].mxu0 %v479
      %v700 = vpop.f32.mrb[0].mxu0
      %v701 = vadd.f32 %v409, %v700
      %v702 = vpop.f32.mrb[0].mxu0
      %703 = vmatprep.mubr.f32.mxu0 0.0
      %704 = vmatmul.mubr.f32.gmra.mrb[0].mxu0 %v482
      %v705 = vpop.f32.mrb[0].mxu0
      %v706 = vadd.f32 %v409, %v705
      %v707 = vpop.f32.mrb[0].mxu0
      %708 = vmatprep.mubr.f32.mxu0 0.0
      %709 = vmatmul.mubr.f32.gmra.mrb[0].mxu0 %v485
      %v710 = vpop.f32.mrb[0].mxu0
      %v711 = vadd.f32 %v409, %v710
      %v712 = vpop.f32.mrb[0].mxu0
      %713 = vmatprep.mubr.f32.mxu0 0.0
      %714 = vmatmul.mubr.f32.gmra.mrb[0].mxu0 %v488
      %v715 = vpop.f32.mrb[0].mxu0
      %v716 = vadd.f32 %v409, %v715
      %v717 = vpop.f32.mrb[0].mxu0
      %718 = vmatprep.mubr.f32.mxu0 0.0
      %719 = vmatmul.mubr.f32.gmra.mrb[0].mxu0 %v491
      %v720 = vpop.f32.mrb[0].mxu0
      %v721 = vadd.f32 %v409, %v720
      %v722 = vpop.f32.mrb[0].mxu0
      %723 = vmatprep.mubr.f32.mxu0 0.0
      %724 = vmatmul.mubr.f32.gmra.mrb[0].mxu0 %v494
      %v725 = vpop.f32.mrb[0].mxu0
      %v726 = vadd.f32 %v409, %v725
      %v727 = vpop.f32.mrb[0].mxu0
      %728 = vmatprep.mubr.f32.mxu0 0.0
      %729 = vmatmul.mubr.f32.gmra.mrb[0].mxu0 %v497
      %v730 = vpop.f32.mrb[0].mxu0
      %v731 = vadd.f32 %v409, %v730
      %v732 = vpop.f32.mrb[0].mxu0
      %733 = vmatprep.mubr.f32.mxu0 0.0
      %734 = vmatmul.mubr.f32.gmra.mrb[0].mxu0 %v500
      %v735 = vpop.f32.mrb[0].mxu0
      %v736 = vadd.f32 %v409, %v735
      %v737 = vpop.f32.mrb[0].mxu0
      %738 = vmatprep.mubr.f32.mxu0 0.0
      %739 = vmatmul.mubr.f32.gmra.mrb[0].mxu0 %v503
      %v740 = vpop.f32.mrb[0].mxu0
      %v741 = vadd.f32 %v409, %v740
      %v742 = vpop.f32.mrb[0].mxu0
      %743 = vmatprep.mubr.f32.mxu0 0.0
      %744 = vmatmul.mubr.f32.gmra.mrb[0].mxu0 %v506
      %v745 = vpop.f32.mrb[0].mxu0
      %v746 = vadd.f32 %v409, %v745
      %v747 = vpop.f32.mrb[0].mxu0
      %748 = vmatprep.mubr.f32.mxu0 0.0
      %749 = vmatmul.mubr.f32.gmra.mrb[0].mxu0 %v509
      %v750 = vpop.f32.mrb[0].mxu0
      %v751 = vadd.f32 %v409, %v750
      %v752 = vpop.f32.mrb[0].mxu0
      %753 = vmatprep.mubr.f32.mxu0 0.0
      %754 = vmatmul.mubr.f32.gmra.mrb[0].mxu0 %v512
      %v755 = vpop.f32.mrb[0].mxu0
      %v756 = vadd.f32 %v409, %v755
      %v757 = vpop.f32.mrb[0].mxu0
      %758 = vmatprep.mubr.f32.mxu0 0.0
      %759 = vmatmul.mubr.f32.gmra.mrb[0].mxu0 %v515
      %v760 = vpop.f32.mrb[0].mxu0
      %v761 = vadd.f32 %v409, %v760
      %v762 = vpop.f32.mrb[0].mxu0
      %763 = vmatprep.mubr.f32.mxu0 0.0
      %764 = vmatmul.mubr.f32.gmra.mrb[0].mxu0 %v518
      %v765 = vpop.f32.mrb[0].mxu0
      %v766 = vadd.f32 %v409, %v765
      %v767 = vpop.f32.mrb[0].mxu0
      %768 = vdwg.mxu0
      %v769 = vmax.f32 %v591, 0.0
      %v770 = vmax.f32 %v596, 0.0
      %v771 = vmax.f32 %v601, 0.0
      %v772 = vmax.f32 %v606, 0.0
      %v773 = vmax.f32 %v611, 0.0
      %v774 = vmax.f32 %v616, 0.0
      %v775 = vmax.f32 %v621, 0.0
      %v776 = vmax.f32 %v626, 0.0
      %v777 = vmax.f32 %v631, 0.0
      %v778 = vmax.f32 %v636, 0.0
      %v779 = vmax.f32 %v641, 0.0
      %v780 = vmax.f32 %v646, 0.0
      %v781 = vmax.f32 %v651, 0.0
      %v782 = vmax.f32 %v656, 0.0
      %v783 = vmax.f32 %v661, 0.0
      %v784 = vmax.f32 %v666, 0.0
      %v785 = vmax.f32 %v671, 0.0
      %v786 = vmax.f32 %v676, 0.0
      %v787 = vmax.f32 %v681, 0.0
      %v788 = vmax.f32 %v686, 0.0
      %v789 = vmax.f32 %v691, 0.0
      %v790 = vmax.f32 %v696, 0.0
      %v791 = vmax.f32 %v701, 0.0
      %v792 = vmax.f32 %v706, 0.0
      %v793 = vmax.f32 %v711, 0.0
      %v794 = vmax.f32 %v716, 0.0
      %v795 = vmax.f32 %v721, 0.0
      %v796 = vmax.f32 %v726, 0.0
      %v797 = vmax.f32 %v731, 0.0
      %v798 = vmax.f32 %v736, 0.0
      %v799 = vmax.f32 %v741, 0.0
      %v800 = vmax.f32 %v746, 0.0
      %v801 = vmax.f32 %v751, 0.0
      %v802 = vmax.f32 %v756, 0.0
      %v803 = vmax.f32 %v761, 0.0
      %v804 = vmax.f32 %v766, 0.0
      %806 = vset.pattern.permute.xlu0 0
      %807 = vperm.xlu0 %806, %v330
      %v808 = vpop.permute.xlu0 %807
      %811 = vset.pattern.permute.xlu0 0
      %812 = vperm.xlu0 %811, %v331
      %v813 = vpop.permute.xlu0 %812
      %816 = vset.pattern.permute.xlu0 0
      %817 = vperm.xlu0 %816, %v332
      %v818 = vpop.permute.xlu0 %817
      %821 = vset.pattern.permute.xlu0 0
      %822 = vperm.xlu0 %821, %v333
      %v823 = vpop.permute.xlu0 %822
      %826 = vset.pattern.permute.xlu0 0
      %827 = vperm.xlu0 %826, %v334
      %v828 = vpop.permute.xlu0 %827
      %831 = vset.pattern.permute.xlu0 0
      %832 = vperm.xlu0 %831, %v335
      %v833 = vpop.permute.xlu0 %832
      %836 = vset.pattern.permute.xlu0 0
      %837 = vperm.xlu0 %836, %v336
      %v838 = vpop.permute.xlu0 %837
      %841 = vset.pattern.permute.xlu0 0
      %842 = vperm.xlu0 %841, %v337
      %v843 = vpop.permute.xlu0 %842
      %846 = vset.pattern.permute.xlu0 0
      %847 = vperm.xlu0 %846, %v338
      %v848 = vpop.permute.xlu0 %847
      %851 = vset.pattern.permute.xlu0 0
      %852 = vperm.xlu0 %851, %v339
      %v853 = vpop.permute.xlu0 %852
      %856 = vset.pattern.permute.xlu0 0
      %857 = vperm.xlu0 %856, %v340
      %v858 = vpop.permute.xlu0 %857
      %861 = vset.pattern.permute.xlu0 0
      %862 = vperm.xlu0 %861, %v341
      %v863 = vpop.permute.xlu0 %862
      %866 = vset.pattern.permute.xlu0 0
      %867 = vperm.xlu0 %866, %v342
      %v868 = vpop.permute.xlu0 %867
      %871 = vset.pattern.permute.xlu0 0
      %872 = vperm.xlu0 %871, %v343
      %v873 = vpop.permute.xlu0 %872
      %876 = vset.pattern.permute.xlu0 0
      %877 = vperm.xlu0 %876, %v344
      %v878 = vpop.permute.xlu0 %877
      %881 = vset.pattern.permute.xlu0 0
      %882 = vperm.xlu0 %881, %v345
      %v883 = vpop.permute.xlu0 %882
      %886 = vset.pattern.permute.xlu0 0
      %887 = vperm.xlu0 %886, %v346
      %v888 = vpop.permute.xlu0 %887
      %891 = vset.pattern.permute.xlu0 0
      %892 = vperm.xlu0 %891, %v347
      %v893 = vpop.permute.xlu0 %892
      %896 = vset.pattern.permute.xlu0 0
      %897 = vperm.xlu0 %896, %v348
      %v898 = vpop.permute.xlu0 %897
      %901 = vset.pattern.permute.xlu0 0
      %902 = vperm.xlu0 %901, %v349
      %v903 = vpop.permute.xlu0 %902
      %906 = vset.pattern.permute.xlu0 0
      %907 = vperm.xlu0 %906, %v350
      %v908 = vpop.permute.xlu0 %907
      %911 = vset.pattern.permute.xlu0 0
      %912 = vperm.xlu0 %911, %v351
      %v913 = vpop.permute.xlu0 %912
      %916 = vset.pattern.permute.xlu0 0
      %917 = vperm.xlu0 %916, %v352
      %v918 = vpop.permute.xlu0 %917
      %921 = vset.pattern.permute.xlu0 0
      %922 = vperm.xlu0 %921, %v353
      %v923 = vpop.permute.xlu0 %922
      %926 = vset.pattern.permute.xlu0 0
      %927 = vperm.xlu0 %926, %v354
      %v928 = vpop.permute.xlu0 %927
      %931 = vset.pattern.permute.xlu0 0
      %932 = vperm.xlu0 %931, %v355
      %v933 = vpop.permute.xlu0 %932
      %936 = vset.pattern.permute.xlu0 0
      %937 = vperm.xlu0 %936, %v356
      %v938 = vpop.permute.xlu0 %937
      %941 = vset.pattern.permute.xlu0 0
      %942 = vperm.xlu0 %941, %v357
      %v943 = vpop.permute.xlu0 %942
      %946 = vset.pattern.permute.xlu0 0
      %947 = vperm.xlu0 %946, %v358
      %v948 = vpop.permute.xlu0 %947
      %951 = vset.pattern.permute.xlu0 0
      %952 = vperm.xlu0 %951, %v359
      %v953 = vpop.permute.xlu0 %952
      %956 = vset.pattern.permute.xlu0 0
      %957 = vperm.xlu0 %956, %v360
      %v958 = vpop.permute.xlu0 %957
      %961 = vset.pattern.permute.xlu0 0
      %962 = vperm.xlu0 %961, %v361
      %v963 = vpop.permute.xlu0 %962
      %966 = vset.pattern.permute.xlu0 0
      %967 = vperm.xlu0 %966, %v362
      %v968 = vpop.permute.xlu0 %967
      %971 = vset.pattern.permute.xlu0 0
      %972 = vperm.xlu0 %971, %v363
      %v973 = vpop.permute.xlu0 %972
      %976 = vset.pattern.permute.xlu0 0
      %977 = vperm.xlu0 %976, %v364
      %v978 = vpop.permute.xlu0 %977
      %981 = vset.pattern.permute.xlu0 0
      %982 = vperm.xlu0 %981, %v365
      %v983 = vpop.permute.xlu0 %982
      %v985 = vmul.f32 %v769, %v808
      %v986 = vmul.f32 %v770, %v813
      %v987 = vmul.f32 %v771, %v818
      %v988 = vmul.f32 %v772, %v823
      %v989 = vmul.f32 %v773, %v828
      %v990 = vmul.f32 %v774, %v833
      %v991 = vmul.f32 %v775, %v838
      %v992 = vmul.f32 %v776, %v843
      %v993 = vmul.f32 %v777, %v848
      %v994 = vmul.f32 %v778, %v853
      %v995 = vmul.f32 %v779, %v858
      %v996 = vmul.f32 %v780, %v863
      %v997 = vmul.f32 %v781, %v868
      %v998 = vmul.f32 %v782, %v873
      %v999 = vmul.f32 %v783, %v878
      %v1000 = vmul.f32 %v784, %v883
      %v1001 = vmul.f32 %v785, %v888
      %v1002 = vmul.f32 %v786, %v893
      %v1003 = vmul.f32 %v787, %v898
      %v1004 = vmul.f32 %v788, %v903
      %v1005 = vmul.f32 %v789, %v908
      %v1006 = vmul.f32 %v790, %v913
      %v1007 = vmul.f32 %v791, %v918
      %v1008 = vmul.f32 %v792, %v923
      %v1009 = vmul.f32 %v793, %v928
      %v1010 = vmul.f32 %v794, %v933
      %v1011 = vmul.f32 %v795, %v938
      %v1012 = vmul.f32 %v796, %v943
      %v1013 = vmul.f32 %v797, %v948
      %v1014 = vmul.f32 %v798, %v953
      %v1015 = vmul.f32 %v799, %v958
      %v1016 = vmul.f32 %v800, %v963
      %v1017 = vmul.f32 %v801, %v968
      %v1018 = vmul.f32 %v802, %v973
      %v1019 = vmul.f32 %v803, %v978
      %v1020 = vmul.f32 %v804, %v983
      %1021 = vst.msk [vmem:[#allocation2 + $0x24] sm:$0xff] %vm308, %v985
      %1022 = vst.msk [vmem:[#allocation2 + $0x2c] sm:$0xff] %vm308, %v986
      %1023 = vst.msk [vmem:[#allocation2 + $0x34] sm:$0xff] %vm308, %v987
      %1024 = vst.msk [vmem:[#allocation2 + $0x3c] sm:$0xff] %vm308, %v988
      %1025 = vst.msk [vmem:[#allocation2 + $0x44] sm:$0xff] %vm308, %v989
      %1026 = vst.msk [vmem:[#allocation2 + $0x4c] sm:$0xff] %vm308, %v990
      %1027 = vst.msk [vmem:[#allocation2 + $0x54] sm:$0xff] %vm308, %v991
      %1028 = vst.msk [vmem:[#allocation2 + $0x5c] sm:$0xff] %vm308, %v992
      %1029 = vst.msk [vmem:[#allocation2 + $0x64] sm:$0xff] %vm308, %v993
      %1030 = vst.msk [vmem:[#allocation2 + $0x6c] sm:$0xff] %vm308, %v994
      %1031 = vst.msk [vmem:[#allocation2 + $0x74] sm:$0xff] %vm308, %v995
      %1032 = vst.msk [vmem:[#allocation2 + $0x7c] sm:$0xff] %vm308, %v996
      %1033 = vst.msk [vmem:[#allocation2 + $0x84] sm:$0xff] %vm308, %v997
      %1034 = vst.msk [vmem:[#allocation2 + $0x8c] sm:$0xff] %vm308, %v998
      %1035 = vst.msk [vmem:[#allocation2 + $0x94] sm:$0xff] %vm308, %v999
      %1036 = vst.msk [vmem:[#allocation2 + $0x9c] sm:$0xff] %vm308, %v1000
      %1037 = vst.msk [vmem:[#allocation2 + $0xa4] sm:$0xff] %vm308, %v1001
      %1038 = vst.msk [vmem:[#allocation2 + $0xac] sm:$0xff] %vm308, %v1002
      %1039 = vst.msk [vmem:[#allocation2 + $0xb4] sm:$0xff] %vm308, %v1003
      %1040 = vst.msk [vmem:[#allocation2 + $0xbc] sm:$0xff] %vm308, %v1004
      %1041 = vst.msk [vmem:[#allocation2 + $0xc4] sm:$0xff] %vm308, %v1005
      %1042 = vst.msk [vmem:[#allocation2 + $0xcc] sm:$0xff] %vm308, %v1006
      %1043 = vst.msk [vmem:[#allocation2 + $0xd4] sm:$0xff] %vm308, %v1007
      %1044 = vst.msk [vmem:[#allocation2 + $0xdc] sm:$0xff] %vm308, %v1008
      %1045 = vst.msk [vmem:[#allocation2 + $0xe4] sm:$0xff] %vm308, %v1009
      %1046 = vst.msk [vmem:[#allocation2 + $0xec] sm:$0xff] %vm308, %v1010
      %1047 = vst.msk [vmem:[#allocation2 + $0xf4] sm:$0xff] %vm308, %v1011
      %1048 = vst.msk [vmem:[#allocation2 + $0xfc] sm:$0xff] %vm308, %v1012
      %1049 = vst.msk [vmem:[#allocation2 + $0x104] sm:$0xff] %vm308, %v1013
      %1050 = vst.msk [vmem:[#allocation2 + $0x10c] sm:$0xff] %vm308, %v1014
      %1051 = vst.msk [vmem:[#allocation2 + $0x114] sm:$0xff] %vm308, %v1015
      %1052 = vst.msk [vmem:[#allocation2 + $0x11c] sm:$0xff] %vm308, %v1016
      %1053 = vst.msk [vmem:[#allocation2 + $0x124] sm:$0xff] %vm308, %v1017
      %1054 = vst.msk [vmem:[#allocation2 + $0x12c] sm:$0xff] %vm308, %v1018
      %1055 = vst.msk [vmem:[#allocation2 + $0x134] sm:$0xff] %vm308, %v1019
      %1056 = vst.msk [vmem:[#allocation2 + $0x13c] sm:$0xff] %vm308, %v1020
      %v1057 = vld [vmem:[#allocation2 + $0x11] sm:$0xff]
      %v1058 = vld [vmem:[#allocation2 + $0x19] sm:$0xff]
      %v1059 = vld [vmem:[#allocation2 + $0x21] sm:$0xff]
      %v1060 = vld [vmem:[#allocation2 + $0x29] sm:$0xff]
      %v1061 = vld [vmem:[#allocation2 + $0x31] sm:$0xff]
      %v1062 = vld [vmem:[#allocation2 + $0x39] sm:$0xff]
      %v1063 = vld [vmem:[#allocation2 + $0x41] sm:$0xff]
      %v1064 = vld [vmem:[#allocation2 + $0x49] sm:$0xff]
      %v1065 = vld [vmem:[#allocation2 + $0x51] sm:$0xff]
      %v1066 = vld [vmem:[#allocation2 + $0x59] sm:$0xff]
      %v1067 = vld [vmem:[#allocation2 + $0x61] sm:$0xff]
      %v1068 = vld [vmem:[#allocation2 + $0x69] sm:$0xff]
      %v1069 = vld [vmem:[#allocation2 + $0x71] sm:$0xff]
      %v1070 = vld [vmem:[#allocation2 + $0x79] sm:$0xff]
      %v1071 = vld [vmem:[#allocation2 + $0x81] sm:$0xff]
      %v1072 = vld [vmem:[#allocation2 + $0x89] sm:$0xff]
      %v1073 = vld [vmem:[#allocation2 + $0x91] sm:$0xff]
      %v1074 = vld [vmem:[#allocation2 + $0x99] sm:$0xff]
      %v1075 = vld [vmem:[#allocation2 + $0xa1] sm:$0xff]
      %v1076 = vld [vmem:[#allocation2 + $0xa9] sm:$0xff]
      %v1077 = vld [vmem:[#allocation2 + $0xb1] sm:$0xff]
      %v1078 = vld [vmem:[#allocation2 + $0xb9] sm:$0xff]
      %v1079 = vld [vmem:[#allocation2 + $0xc1] sm:$0xff]
      %v1080 = vld [vmem:[#allocation2 + $0xc9] sm:$0xff]
      %v1081 = vld [vmem:[#allocation2 + $0xd1] sm:$0xff]
      %v1082 = vld [vmem:[#allocation2 + $0xd9] sm:$0xff]
      %v1083 = vld [vmem:[#allocation2 + $0xe1] sm:$0xff]
      %v1084 = vld [vmem:[#allocation2 + $0xe9] sm:$0xff]
      %v1085 = vld [vmem:[#allocation2 + $0xf1] sm:$0xff]
      %v1086 = vld [vmem:[#allocation2 + $0xf9] sm:$0xff]
      %v1087 = vld [vmem:[#allocation2 + $0x101] sm:$0xff]
      %v1088 = vld [vmem:[#allocation2 + $0x109] sm:$0xff]
      %v1089 = vld [vmem:[#allocation2 + $0x111] sm:$0xff]
      %v1090 = vld [vmem:[#allocation2 + $0x119] sm:$0xff]
      %v1091 = vld [vmem:[#allocation2 + $0x121] sm:$0xff]
      %v1092 = vld [vmem:[#allocation2 + $0x129] sm:$0xff]
      %v1093 = vld [vmem:[%s4] sm:$0xff]
      %v1094 = vld [vmem:[%s4 + $0x8] sm:$0xff]
      %v1095 = vld [vmem:[%s4 + $0x10] sm:$0xff]
      %v1096 = vld [vmem:[%s4 + $0x18] sm:$0xff]
      %v1097 = vld [vmem:[%s4 + $0x20] sm:$0xff]
      %v1098 = vld [vmem:[%s4 + $0x28] sm:$0xff]
      %v1099 = vld [vmem:[%s4 + $0x30] sm:$0xff]
      %v1100 = vld [vmem:[%s4 + $0x38] sm:$0xff]
      %v1101 = vld [vmem:[#allocation2 + $0x12] sm:$0xff]
      %v1102 = vld [vmem:[#allocation2 + $0x1a] sm:$0xff]
      %v1103 = vld [vmem:[#allocation2 + $0x22] sm:$0xff]
      %v1104 = vld [vmem:[#allocation2 + $0x2a] sm:$0xff]
      %v1105 = vld [vmem:[#allocation2 + $0x32] sm:$0xff]
      %v1106 = vld [vmem:[#allocation2 + $0x3a] sm:$0xff]
      %v1107 = vld [vmem:[#allocation2 + $0x42] sm:$0xff]
      %v1108 = vld [vmem:[#allocation2 + $0x4a] sm:$0xff]
      %v1109 = vld [vmem:[#allocation2 + $0x52] sm:$0xff]
      %v1110 = vld [vmem:[#allocation2 + $0x5a] sm:$0xff]
      %v1111 = vld [vmem:[#allocation2 + $0x62] sm:$0xff]
      %v1112 = vld [vmem:[#allocation2 + $0x6a] sm:$0xff]
      %v1113 = vld [vmem:[#allocation2 + $0x72] sm:$0xff]
      %v1114 = vld [vmem:[#allocation2 + $0x7a] sm:$0xff]
      %v1115 = vld [vmem:[#allocation2 + $0x82] sm:$0xff]
      %v1116 = vld [vmem:[#allocation2 + $0x8a] sm:$0xff]
      %v1117 = vld [vmem:[#allocation2 + $0x92] sm:$0xff]
      %v1118 = vld [vmem:[#allocation2 + $0x9a] sm:$0xff]
      %v1119 = vld [vmem:[#allocation2 + $0xa2] sm:$0xff]
      %v1120 = vld [vmem:[#allocation2 + $0xaa] sm:$0xff]
      %v1121 = vld [vmem:[#allocation2 + $0xb2] sm:$0xff]
      %v1122 = vld [vmem:[#allocation2 + $0xba] sm:$0xff]
      %v1123 = vld [vmem:[#allocation2 + $0xc2] sm:$0xff]
      %v1124 = vld [vmem:[#allocation2 + $0xca] sm:$0xff]
      %v1125 = vld [vmem:[#allocation2 + $0xd2] sm:$0xff]
      %v1126 = vld [vmem:[#allocation2 + $0xda] sm:$0xff]
      %v1127 = vld [vmem:[#allocation2 + $0xe2] sm:$0xff]
      %v1128 = vld [vmem:[#allocation2 + $0xea] sm:$0xff]
      %v1129 = vld [vmem:[#allocation2 + $0xf2] sm:$0xff]
      %v1130 = vld [vmem:[#allocation2 + $0xfa] sm:$0xff]
      %v1131 = vld [vmem:[#allocation2 + $0x102] sm:$0xff]
      %v1132 = vld [vmem:[#allocation2 + $0x10a] sm:$0xff]
      %v1133 = vld [vmem:[#allocation2 + $0x112] sm:$0xff]
      %v1134 = vld [vmem:[#allocation2 + $0x11a] sm:$0xff]
      %v1135 = vld [vmem:[#allocation2 + $0x122] sm:$0xff]
      %v1136 = vld [vmem:[#allocation2 + $0x12a] sm:$0xff]
      %s1137 = scalar_lea.vmem %s4, 64
      %v1138 = vld [vmem:[%s1137] sm:$0xff]
      %v1139 = vld [vmem:[%s1137 + $0x8] sm:$0xff]
      %v1140 = vld [vmem:[%s1137 + $0x10] sm:$0xff]
      %v1141 = vld [vmem:[%s1137 + $0x18] sm:$0xff]
      %v1142 = vld [vmem:[%s1137 + $0x20] sm:$0xff]
      %v1143 = vld [vmem:[%s1137 + $0x28] sm:$0xff]
      %v1144 = vld [vmem:[%s1137 + $0x30] sm:$0xff]
      %v1145 = vld [vmem:[%s1137 + $0x38] sm:$0xff]
      %v1147 = vsel %vm308, %v1101, 0
      %v1150 = vsel %vm308, %v1102, 0
      %v1153 = vsel %vm308, %v1103, 0
      %v1156 = vsel %vm308, %v1104, 0
      %v1159 = vsel %vm308, %v1105, 0
      %v1162 = vsel %vm308, %v1106, 0
      %v1165 = vsel %vm308, %v1107, 0
      %v1168 = vsel %vm308, %v1108, 0
      %v1171 = vsel %vm308, %v1109, 0
      %v1174 = vsel %vm308, %v1110, 0
      %v1177 = vsel %vm308, %v1111, 0
      %v1180 = vsel %vm308, %v1112, 0
      %v1183 = vsel %vm308, %v1113, 0
      %v1186 = vsel %vm308, %v1114, 0
      %v1189 = vsel %vm308, %v1115, 0
      %v1192 = vsel %vm308, %v1116, 0
      %v1195 = vsel %vm308, %v1117, 0
      %v1198 = vsel %vm308, %v1118, 0
      %v1201 = vsel %vm308, %v1119, 0
      %v1204 = vsel %vm308, %v1120, 0
      %v1207 = vsel %vm308, %v1121, 0
      %v1210 = vsel %vm308, %v1122, 0
      %v1213 = vsel %vm308, %v1123, 0
      %v1216 = vsel %vm308, %v1124, 0
      %v1219 = vsel %vm308, %v1125, 0
      %v1222 = vsel %vm308, %v1126, 0
      %v1225 = vsel %vm308, %v1127, 0
      %v1228 = vsel %vm308, %v1128, 0
      %v1231 = vsel %vm308, %v1129, 0
      %v1234 = vsel %vm308, %v1130, 0
      %v1237 = vsel %vm308, %v1131, 0
      %v1240 = vsel %vm308, %v1132, 0
      %v1243 = vsel %vm308, %v1133, 0
      %v1246 = vsel %vm308, %v1134, 0
      %v1249 = vsel %vm308, %v1135, 0
      %v1252 = vsel %vm308, %v1136, 0
      %1254 = vmatprep.subr.mxu0 0.0
      %1255 = vmatpush1.msra.mxu0 %v1138
      %1256 = vmatprep.subr.mxu0 0.0
      %1257 = vmatpush1.msra.mxu0 %v1139
      %1258 = vmatprep.subr.mxu0 0.0
      %1259 = vmatpush1.msra.mxu0 %v1140
      %1260 = vmatprep.subr.mxu0 0.0
      %1261 = vmatpush1.msra.mxu0 %v1141
      %1262 = vmatprep.subr.mxu0 0.0
      %1263 = vmatpush1.msra.mxu0 %v1142
      %1264 = vmatprep.subr.mxu0 0.0
      %1265 = vmatpush1.msra.mxu0 %v1143
      %1266 = vmatprep.subr.mxu0 0.0
      %1267 = vmatpush1.msra.mxu0 %v1144
      %1268 = vmatprep.subr.mxu0 0.0
      %1269 = vmatpush1.msra.mxu0 %v1145
      %1270 = vmatprep.subr.mxu0 0.0
      %1271 = vmatpush1.msra.mxu0 0.0
      %1272 = vmatprep.subr.mxu0 0.0
      %1273 = vmatpush1.msra.mxu0 0.0
      %1274 = vmatprep.subr.mxu0 0.0
      %1275 = vmatpush1.msra.mxu0 0.0
      %1276 = vmatprep.subr.mxu0 0.0
      %1277 = vmatpush1.msra.mxu0 0.0
      %1278 = vmatprep.subr.mxu0 0.0
      %1279 = vmatpush1.msra.mxu0 0.0
      %1280 = vmatprep.subr.mxu0 0.0
      %1281 = vmatpush1.msra.mxu0 0.0
      %1282 = vmatprep.subr.mxu0 0.0
      %1283 = vmatpush1.msra.mxu0 0.0
      %1284 = vmatprep.subr.mxu0 0.0
      %1285 = vmatpush1.msra.mxu0 0.0
      %1286 = vmatprep.subr.mxu0 0.0
      %1287 = vmatpush1.msra.mxu0 0.0
      %1288 = vmatprep.subr.mxu0 0.0
      %1289 = vmatpush1.msra.mxu0 0.0
      %1290 = vmatprep.subr.mxu0 0.0
      %1291 = vmatpush1.msra.mxu0 0.0
      %1292 = vmatprep.subr.mxu0 0.0
      %1293 = vmatpush1.msra.mxu0 0.0
      %1294 = vmatprep.subr.mxu0 0.0
      %1295 = vmatpush1.msra.mxu0 0.0
      %1296 = vmatprep.subr.mxu0 0.0
      %1297 = vmatpush1.msra.mxu0 0.0
      %1298 = vmatprep.subr.mxu0 0.0
      %1299 = vmatpush1.msra.mxu0 0.0
      %1300 = vmatprep.subr.mxu0 0.0
      %1301 = vmatpush1.msra.mxu0 0.0
      %1302 = vmatprep.subr.mxu0 0.0
      %1303 = vmatpush1.msra.mxu0 0.0
      %1304 = vmatprep.subr.mxu0 0.0
      %1305 = vmatpush1.msra.mxu0 0.0
      %1306 = vmatprep.subr.mxu0 0.0
      %1307 = vmatpush1.msra.mxu0 0.0
      %1308 = vmatprep.subr.mxu0 0.0
      %1309 = vmatpush1.msra.mxu0 0.0
      %1310 = vmatprep.subr.mxu0 0.0
      %1311 = vmatpush1.msra.mxu0 0.0
      %1312 = vmatprep.subr.mxu0 0.0
      %1313 = vmatpush1.msra.mxu0 0.0
      %1314 = vmatprep.subr.mxu0 0.0
      %1315 = vmatpush1.msra.mxu0 0.0
      %1316 = vmatprep.subr.mxu0 0.0
      %1317 = vmatpush1.msra.mxu0 0.0
      %1318 = vmatprep.mubr.f32.mxu0 0.0
      %1319 = vmatmul.mubr.f32.gmra.mrb[0].mxu0 %v1147
      %v1320 = vpop.f32.mrb[0].mxu0
      %v1321 = vadd.f32 0.0, %v1320
      %v1322 = vpop.f32.mrb[0].mxu0
      %1323 = vmatprep.mubr.f32.mxu0 0.0
      %1324 = vmatmul.mubr.f32.gmra.mrb[0].mxu0 %v1150
      %v1325 = vpop.f32.mrb[0].mxu0
      %v1326 = vadd.f32 0.0, %v1325
      %v1327 = vpop.f32.mrb[0].mxu0
      %1328 = vmatprep.mubr.f32.mxu0 0.0
      %1329 = vmatmul.mubr.f32.gmra.mrb[0].mxu0 %v1153
      %v1330 = vpop.f32.mrb[0].mxu0
      %v1331 = vadd.f32 0.0, %v1330
      %v1332 = vpop.f32.mrb[0].mxu0
      %1333 = vmatprep.mubr.f32.mxu0 0.0
      %1334 = vmatmul.mubr.f32.gmra.mrb[0].mxu0 %v1156
      %v1335 = vpop.f32.mrb[0].mxu0
      %v1336 = vadd.f32 0.0, %v1335
      %v1337 = vpop.f32.mrb[0].mxu0
      %1338 = vmatprep.mubr.f32.mxu0 0.0
      %1339 = vmatmul.mubr.f32.gmra.mrb[0].mxu0 %v1159
      %v1340 = vpop.f32.mrb[0].mxu0
      %v1341 = vadd.f32 0.0, %v1340
      %v1342 = vpop.f32.mrb[0].mxu0
      %1343 = vmatprep.mubr.f32.mxu0 0.0
      %1344 = vmatmul.mubr.f32.gmra.mrb[0].mxu0 %v1162
      %v1345 = vpop.f32.mrb[0].mxu0
      %v1346 = vadd.f32 0.0, %v1345
      %v1347 = vpop.f32.mrb[0].mxu0
      %1348 = vmatprep.mubr.f32.mxu0 0.0
      %1349 = vmatmul.mubr.f32.gmra.mrb[0].mxu0 %v1165
      %v1350 = vpop.f32.mrb[0].mxu0
      %v1351 = vadd.f32 0.0, %v1350
      %v1352 = vpop.f32.mrb[0].mxu0
      %1353 = vmatprep.mubr.f32.mxu0 0.0
      %1354 = vmatmul.mubr.f32.gmra.mrb[0].mxu0 %v1168
      %v1355 = vpop.f32.mrb[0].mxu0
      %v1356 = vadd.f32 0.0, %v1355
      %v1357 = vpop.f32.mrb[0].mxu0
      %1358 = vmatprep.mubr.f32.mxu0 0.0
      %1359 = vmatmul.mubr.f32.gmra.mrb[0].mxu0 %v1171
      %v1360 = vpop.f32.mrb[0].mxu0
      %v1361 = vadd.f32 0.0, %v1360
      %v1362 = vpop.f32.mrb[0].mxu0
      %1363 = vmatprep.mubr.f32.mxu0 0.0
      %1364 = vmatmul.mubr.f32.gmra.mrb[0].mxu0 %v1174
      %v1365 = vpop.f32.mrb[0].mxu0
      %v1366 = vadd.f32 0.0, %v1365
      %v1367 = vpop.f32.mrb[0].mxu0
      %1368 = vmatprep.mubr.f32.mxu0 0.0
      %1369 = vmatmul.mubr.f32.gmra.mrb[0].mxu0 %v1177
      %v1370 = vpop.f32.mrb[0].mxu0
      %v1371 = vadd.f32 0.0, %v1370
      %v1372 = vpop.f32.mrb[0].mxu0
      %1373 = vmatprep.mubr.f32.mxu0 0.0
      %1374 = vmatmul.mubr.f32.gmra.mrb[0].mxu0 %v1180
      %v1375 = vpop.f32.mrb[0].mxu0
      %v1376 = vadd.f32 0.0, %v1375
      %v1377 = vpop.f32.mrb[0].mxu0
      %1378 = vmatprep.mubr.f32.mxu0 0.0
      %1379 = vmatmul.mubr.f32.gmra.mrb[0].mxu0 %v1183
      %v1380 = vpop.f32.mrb[0].mxu0
      %v1381 = vadd.f32 0.0, %v1380
      %v1382 = vpop.f32.mrb[0].mxu0
      %1383 = vmatprep.mubr.f32.mxu0 0.0
      %1384 = vmatmul.mubr.f32.gmra.mrb[0].mxu0 %v1186
      %v1385 = vpop.f32.mrb[0].mxu0
      %v1386 = vadd.f32 0.0, %v1385
      %v1387 = vpop.f32.mrb[0].mxu0
      %1388 = vmatprep.mubr.f32.mxu0 0.0
      %1389 = vmatmul.mubr.f32.gmra.mrb[0].mxu0 %v1189
      %v1390 = vpop.f32.mrb[0].mxu0
      %v1391 = vadd.f32 0.0, %v1390
      %v1392 = vpop.f32.mrb[0].mxu0
      %1393 = vmatprep.mubr.f32.mxu0 0.0
      %1394 = vmatmul.mubr.f32.gmra.mrb[0].mxu0 %v1192
      %v1395 = vpop.f32.mrb[0].mxu0
      %v1396 = vadd.f32 0.0, %v1395
      %v1397 = vpop.f32.mrb[0].mxu0
      %1398 = vmatprep.mubr.f32.mxu0 0.0
      %1399 = vmatmul.mubr.f32.gmra.mrb[0].mxu0 %v1195
      %v1400 = vpop.f32.mrb[0].mxu0
      %v1401 = vadd.f32 0.0, %v1400
      %v1402 = vpop.f32.mrb[0].mxu0
      %1403 = vmatprep.mubr.f32.mxu0 0.0
      %1404 = vmatmul.mubr.f32.gmra.mrb[0].mxu0 %v1198
      %v1405 = vpop.f32.mrb[0].mxu0
      %v1406 = vadd.f32 0.0, %v1405
      %v1407 = vpop.f32.mrb[0].mxu0
      %1408 = vmatprep.mubr.f32.mxu0 0.0
      %1409 = vmatmul.mubr.f32.gmra.mrb[0].mxu0 %v1201
      %v1410 = vpop.f32.mrb[0].mxu0
      %v1411 = vadd.f32 0.0, %v1410
      %v1412 = vpop.f32.mrb[0].mxu0
      %1413 = vmatprep.mubr.f32.mxu0 0.0
      %1414 = vmatmul.mubr.f32.gmra.mrb[0].mxu0 %v1204
      %v1415 = vpop.f32.mrb[0].mxu0
      %v1416 = vadd.f32 0.0, %v1415
      %v1417 = vpop.f32.mrb[0].mxu0
      %1418 = vmatprep.mubr.f32.mxu0 0.0
      %1419 = vmatmul.mubr.f32.gmra.mrb[0].mxu0 %v1207
      %v1420 = vpop.f32.mrb[0].mxu0
      %v1421 = vadd.f32 0.0, %v1420
      %v1422 = vpop.f32.mrb[0].mxu0
      %1423 = vmatprep.mubr.f32.mxu0 0.0
      %1424 = vmatmul.mubr.f32.gmra.mrb[0].mxu0 %v1210
      %v1425 = vpop.f32.mrb[0].mxu0
      %v1426 = vadd.f32 0.0, %v1425
      %v1427 = vpop.f32.mrb[0].mxu0
      %1428 = vmatprep.mubr.f32.mxu0 0.0
      %1429 = vmatmul.mubr.f32.gmra.mrb[0].mxu0 %v1213
      %v1430 = vpop.f32.mrb[0].mxu0
      %v1431 = vadd.f32 0.0, %v1430
      %v1432 = vpop.f32.mrb[0].mxu0
      %1433 = vmatprep.mubr.f32.mxu0 0.0
      %1434 = vmatmul.mubr.f32.gmra.mrb[0].mxu0 %v1216
      %v1435 = vpop.f32.mrb[0].mxu0
      %v1436 = vadd.f32 0.0, %v1435
      %v1437 = vpop.f32.mrb[0].mxu0
      %1438 = vmatprep.mubr.f32.mxu0 0.0
      %1439 = vmatmul.mubr.f32.gmra.mrb[0].mxu0 %v1219
      %v1440 = vpop.f32.mrb[0].mxu0
      %v1441 = vadd.f32 0.0, %v1440
      %v1442 = vpop.f32.mrb[0].mxu0
      %1443 = vmatprep.mubr.f32.mxu0 0.0
      %1444 = vmatmul.mubr.f32.gmra.mrb[0].mxu0 %v1222
      %v1445 = vpop.f32.mrb[0].mxu0
      %v1446 = vadd.f32 0.0, %v1445
      %v1447 = vpop.f32.mrb[0].mxu0
      %1448 = vmatprep.mubr.f32.mxu0 0.0
      %1449 = vmatmul.mubr.f32.gmra.mrb[0].mxu0 %v1225
      %v1450 = vpop.f32.mrb[0].mxu0
      %v1451 = vadd.f32 0.0, %v1450
      %v1452 = vpop.f32.mrb[0].mxu0
      %1453 = vmatprep.mubr.f32.mxu0 0.0
      %1454 = vmatmul.mubr.f32.gmra.mrb[0].mxu0 %v1228
      %v1455 = vpop.f32.mrb[0].mxu0
      %v1456 = vadd.f32 0.0, %v1455
      %v1457 = vpop.f32.mrb[0].mxu0
      %1458 = vmatprep.mubr.f32.mxu0 0.0
      %1459 = vmatmul.mubr.f32.gmra.mrb[0].mxu0 %v1231
      %v1460 = vpop.f32.mrb[0].mxu0
      %v1461 = vadd.f32 0.0, %v1460
      %v1462 = vpop.f32.mrb[0].mxu0
      %1463 = vmatprep.mubr.f32.mxu0 0.0
      %1464 = vmatmul.mubr.f32.gmra.mrb[0].mxu0 %v1234
      %v1465 = vpop.f32.mrb[0].mxu0
      %v1466 = vadd.f32 0.0, %v1465
      %v1467 = vpop.f32.mrb[0].mxu0
      %1468 = vmatprep.mubr.f32.mxu0 0.0
      %1469 = vmatmul.mubr.f32.gmra.mrb[0].mxu0 %v1237
      %v1470 = vpop.f32.mrb[0].mxu0
      %v1471 = vadd.f32 0.0, %v1470
      %v1472 = vpop.f32.mrb[0].mxu0
      %1473 = vmatprep.mubr.f32.mxu0 0.0
      %1474 = vmatmul.mubr.f32.gmra.mrb[0].mxu0 %v1240
      %v1475 = vpop.f32.mrb[0].mxu0
      %v1476 = vadd.f32 0.0, %v1475
      %v1477 = vpop.f32.mrb[0].mxu0
      %1478 = vmatprep.mubr.f32.mxu0 0.0
      %1479 = vmatmul.mubr.f32.gmra.mrb[0].mxu0 %v1243
      %v1480 = vpop.f32.mrb[0].mxu0
      %v1481 = vadd.f32 0.0, %v1480
      %v1482 = vpop.f32.mrb[0].mxu0
      %1483 = vmatprep.mubr.f32.mxu0 0.0
      %1484 = vmatmul.mubr.f32.gmra.mrb[0].mxu0 %v1246
      %v1485 = vpop.f32.mrb[0].mxu0
      %v1486 = vadd.f32 0.0, %v1485
      %v1487 = vpop.f32.mrb[0].mxu0
      %1488 = vmatprep.mubr.f32.mxu0 0.0
      %1489 = vmatmul.mubr.f32.gmra.mrb[0].mxu0 %v1249
      %v1490 = vpop.f32.mrb[0].mxu0
      %v1491 = vadd.f32 0.0, %v1490
      %v1492 = vpop.f32.mrb[0].mxu0
      %1493 = vmatprep.mubr.f32.mxu0 0.0
      %1494 = vmatmul.mubr.f32.gmra.mrb[0].mxu0 %v1252
      %v1495 = vpop.f32.mrb[0].mxu0
      %v1496 = vadd.f32 0.0, %v1495
      %v1497 = vpop.f32.mrb[0].mxu0
      %1498 = vdwg.mxu0
      %v1500 = vsel %vm308, %v1057, 0
      %v1503 = vsel %vm308, %v1058, 0
      %v1506 = vsel %vm308, %v1059, 0
      %v1509 = vsel %vm308, %v1060, 0
      %v1512 = vsel %vm308, %v1061, 0
      %v1515 = vsel %vm308, %v1062, 0
      %v1518 = vsel %vm308, %v1063, 0
      %v1521 = vsel %vm308, %v1064, 0
      %v1524 = vsel %vm308, %v1065, 0
      %v1527 = vsel %vm308, %v1066, 0
      %v1530 = vsel %vm308, %v1067, 0
      %v1533 = vsel %vm308, %v1068, 0
      %v1536 = vsel %vm308, %v1069, 0
      %v1539 = vsel %vm308, %v1070, 0
      %v1542 = vsel %vm308, %v1071, 0
      %v1545 = vsel %vm308, %v1072, 0
      %v1548 = vsel %vm308, %v1073, 0
      %v1551 = vsel %vm308, %v1074, 0
      %v1554 = vsel %vm308, %v1075, 0
      %v1557 = vsel %vm308, %v1076, 0
      %v1560 = vsel %vm308, %v1077, 0
      %v1563 = vsel %vm308, %v1078, 0
      %v1566 = vsel %vm308, %v1079, 0
      %v1569 = vsel %vm308, %v1080, 0
      %v1572 = vsel %vm308, %v1081, 0
      %v1575 = vsel %vm308, %v1082, 0
      %v1578 = vsel %vm308, %v1083, 0
      %v1581 = vsel %vm308, %v1084, 0
      %v1584 = vsel %vm308, %v1085, 0
      %v1587 = vsel %vm308, %v1086, 0
      %v1590 = vsel %vm308, %v1087, 0
      %v1593 = vsel %vm308, %v1088, 0
      %v1596 = vsel %vm308, %v1089, 0
      %v1599 = vsel %vm308, %v1090, 0
      %v1602 = vsel %vm308, %v1091, 0
      %v1605 = vsel %vm308, %v1092, 0
      %1607 = vmatprep.subr.mxu0 0.0
      %1608 = vmatpush1.msra.mxu0 %v1093
      %1609 = vmatprep.subr.mxu0 0.0
      %1610 = vmatpush1.msra.mxu0 %v1094
      %1611 = vmatprep.subr.mxu0 0.0
      %1612 = vmatpush1.msra.mxu0 %v1095
      %1613 = vmatprep.subr.mxu0 0.0
      %1614 = vmatpush1.msra.mxu0 %v1096
      %1615 = vmatprep.subr.mxu0 0.0
      %1616 = vmatpush1.msra.mxu0 %v1097
      %1617 = vmatprep.subr.mxu0 0.0
      %1618 = vmatpush1.msra.mxu0 %v1098
      %1619 = vmatprep.subr.mxu0 0.0
      %1620 = vmatpush1.msra.mxu0 %v1099
      %1621 = vmatprep.subr.mxu0 0.0
      %1622 = vmatpush1.msra.mxu0 %v1100
      %1623 = vmatprep.subr.mxu0 0.0
      %1624 = vmatpush1.msra.mxu0 0.0
      %1625 = vmatprep.subr.mxu0 0.0
      %1626 = vmatpush1.msra.mxu0 0.0
      %1627 = vmatprep.subr.mxu0 0.0
      %1628 = vmatpush1.msra.mxu0 0.0
      %1629 = vmatprep.subr.mxu0 0.0
      %1630 = vmatpush1.msra.mxu0 0.0
      %1631 = vmatprep.subr.mxu0 0.0
      %1632 = vmatpush1.msra.mxu0 0.0
      %1633 = vmatprep.subr.mxu0 0.0
      %1634 = vmatpush1.msra.mxu0 0.0
      %1635 = vmatprep.subr.mxu0 0.0
      %1636 = vmatpush1.msra.mxu0 0.0
      %1637 = vmatprep.subr.mxu0 0.0
      %1638 = vmatpush1.msra.mxu0 0.0
      %1639 = vmatprep.subr.mxu0 0.0
      %1640 = vmatpush1.msra.mxu0 0.0
      %1641 = vmatprep.subr.mxu0 0.0
      %1642 = vmatpush1.msra.mxu0 0.0
      %1643 = vmatprep.subr.mxu0 0.0
      %1644 = vmatpush1.msra.mxu0 0.0
      %1645 = vmatprep.subr.mxu0 0.0
      %1646 = vmatpush1.msra.mxu0 0.0
      %1647 = vmatprep.subr.mxu0 0.0
      %1648 = vmatpush1.msra.mxu0 0.0
      %1649 = vmatprep.subr.mxu0 0.0
      %1650 = vmatpush1.msra.mxu0 0.0
      %1651 = vmatprep.subr.mxu0 0.0
      %1652 = vmatpush1.msra.mxu0 0.0
      %1653 = vmatprep.subr.mxu0 0.0
      %1654 = vmatpush1.msra.mxu0 0.0
      %1655 = vmatprep.subr.mxu0 0.0
      %1656 = vmatpush1.msra.mxu0 0.0
      %1657 = vmatprep.subr.mxu0 0.0
      %1658 = vmatpush1.msra.mxu0 0.0
      %1659 = vmatprep.subr.mxu0 0.0
      %1660 = vmatpush1.msra.mxu0 0.0
      %1661 = vmatprep.subr.mxu0 0.0
      %1662 = vmatpush1.msra.mxu0 0.0
      %1663 = vmatprep.subr.mxu0 0.0
      %1664 = vmatpush1.msra.mxu0 0.0
      %1665 = vmatprep.subr.mxu0 0.0
      %1666 = vmatpush1.msra.mxu0 0.0
      %1667 = vmatprep.subr.mxu0 0.0
      %1668 = vmatpush1.msra.mxu0 0.0
      %1669 = vmatprep.subr.mxu0 0.0
      %1670 = vmatpush1.msra.mxu0 0.0
      %1671 = vmatprep.mubr.f32.mxu0 0.0
      %1672 = vmatmul.mubr.f32.gmra.mrb[0].mxu0 %v1500
      %v1673 = vpop.f32.mrb[0].mxu0
      %v1674 = vadd.f32 %v1321, %v1673
      %v1675 = vpop.f32.mrb[0].mxu0
      %1676 = vmatprep.mubr.f32.mxu0 0.0
      %1677 = vmatmul.mubr.f32.gmra.mrb[0].mxu0 %v1503
      %v1678 = vpop.f32.mrb[0].mxu0
      %v1679 = vadd.f32 %v1326, %v1678
      %v1680 = vpop.f32.mrb[0].mxu0
      %1681 = vmatprep.mubr.f32.mxu0 0.0
      %1682 = vmatmul.mubr.f32.gmra.mrb[0].mxu0 %v1506
      %v1683 = vpop.f32.mrb[0].mxu0
      %v1684 = vadd.f32 %v1331, %v1683
      %v1685 = vpop.f32.mrb[0].mxu0
      %1686 = vmatprep.mubr.f32.mxu0 0.0
      %1687 = vmatmul.mubr.f32.gmra.mrb[0].mxu0 %v1509
      %v1688 = vpop.f32.mrb[0].mxu0
      %v1689 = vadd.f32 %v1336, %v1688
      %v1690 = vpop.f32.mrb[0].mxu0
      %1691 = vmatprep.mubr.f32.mxu0 0.0
      %1692 = vmatmul.mubr.f32.gmra.mrb[0].mxu0 %v1512
      %v1693 = vpop.f32.mrb[0].mxu0
      %v1694 = vadd.f32 %v1341, %v1693
      %v1695 = vpop.f32.mrb[0].mxu0
      %1696 = vmatprep.mubr.f32.mxu0 0.0
      %1697 = vmatmul.mubr.f32.gmra.mrb[0].mxu0 %v1515
      %v1698 = vpop.f32.mrb[0].mxu0
      %v1699 = vadd.f32 %v1346, %v1698
      %v1700 = vpop.f32.mrb[0].mxu0
      %1701 = vmatprep.mubr.f32.mxu0 0.0
      %1702 = vmatmul.mubr.f32.gmra.mrb[0].mxu0 %v1518
      %v1703 = vpop.f32.mrb[0].mxu0
      %v1704 = vadd.f32 %v1351, %v1703
      %v1705 = vpop.f32.mrb[0].mxu0
      %1706 = vmatprep.mubr.f32.mxu0 0.0
      %1707 = vmatmul.mubr.f32.gmra.mrb[0].mxu0 %v1521
      %v1708 = vpop.f32.mrb[0].mxu0
      %v1709 = vadd.f32 %v1356, %v1708
      %v1710 = vpop.f32.mrb[0].mxu0
      %1711 = vmatprep.mubr.f32.mxu0 0.0
      %1712 = vmatmul.mubr.f32.gmra.mrb[0].mxu0 %v1524
      %v1713 = vpop.f32.mrb[0].mxu0
      %v1714 = vadd.f32 %v1361, %v1713
      %v1715 = vpop.f32.mrb[0].mxu0
      %1716 = vmatprep.mubr.f32.mxu0 0.0
      %1717 = vmatmul.mubr.f32.gmra.mrb[0].mxu0 %v1527
      %v1718 = vpop.f32.mrb[0].mxu0
      %v1719 = vadd.f32 %v1366, %v1718
      %v1720 = vpop.f32.mrb[0].mxu0
      %1721 = vmatprep.mubr.f32.mxu0 0.0
      %1722 = vmatmul.mubr.f32.gmra.mrb[0].mxu0 %v1530
      %v1723 = vpop.f32.mrb[0].mxu0
      %v1724 = vadd.f32 %v1371, %v1723
      %v1725 = vpop.f32.mrb[0].mxu0
      %1726 = vmatprep.mubr.f32.mxu0 0.0
      %1727 = vmatmul.mubr.f32.gmra.mrb[0].mxu0 %v1533
      %v1728 = vpop.f32.mrb[0].mxu0
      %v1729 = vadd.f32 %v1376, %v1728
      %v1730 = vpop.f32.mrb[0].mxu0
      %1731 = vmatprep.mubr.f32.mxu0 0.0
      %1732 = vmatmul.mubr.f32.gmra.mrb[0].mxu0 %v1536
      %v1733 = vpop.f32.mrb[0].mxu0
      %v1734 = vadd.f32 %v1381, %v1733
      %v1735 = vpop.f32.mrb[0].mxu0
      %1736 = vmatprep.mubr.f32.mxu0 0.0
      %1737 = vmatmul.mubr.f32.gmra.mrb[0].mxu0 %v1539
      %v1738 = vpop.f32.mrb[0].mxu0
      %v1739 = vadd.f32 %v1386, %v1738
      %v1740 = vpop.f32.mrb[0].mxu0
      %1741 = vmatprep.mubr.f32.mxu0 0.0
      %1742 = vmatmul.mubr.f32.gmra.mrb[0].mxu0 %v1542
      %v1743 = vpop.f32.mrb[0].mxu0
      %v1744 = vadd.f32 %v1391, %v1743
      %v1745 = vpop.f32.mrb[0].mxu0
      %1746 = vmatprep.mubr.f32.mxu0 0.0
      %1747 = vmatmul.mubr.f32.gmra.mrb[0].mxu0 %v1545
      %v1748 = vpop.f32.mrb[0].mxu0
      %v1749 = vadd.f32 %v1396, %v1748
      %v1750 = vpop.f32.mrb[0].mxu0
      %1751 = vmatprep.mubr.f32.mxu0 0.0
      %1752 = vmatmul.mubr.f32.gmra.mrb[0].mxu0 %v1548
      %v1753 = vpop.f32.mrb[0].mxu0
      %v1754 = vadd.f32 %v1401, %v1753
      %v1755 = vpop.f32.mrb[0].mxu0
      %1756 = vmatprep.mubr.f32.mxu0 0.0
      %1757 = vmatmul.mubr.f32.gmra.mrb[0].mxu0 %v1551
      %v1758 = vpop.f32.mrb[0].mxu0
      %v1759 = vadd.f32 %v1406, %v1758
      %v1760 = vpop.f32.mrb[0].mxu0
      %1761 = vmatprep.mubr.f32.mxu0 0.0
      %1762 = vmatmul.mubr.f32.gmra.mrb[0].mxu0 %v1554
      %v1763 = vpop.f32.mrb[0].mxu0
      %v1764 = vadd.f32 %v1411, %v1763
      %v1765 = vpop.f32.mrb[0].mxu0
      %1766 = vmatprep.mubr.f32.mxu0 0.0
      %1767 = vmatmul.mubr.f32.gmra.mrb[0].mxu0 %v1557
      %v1768 = vpop.f32.mrb[0].mxu0
      %v1769 = vadd.f32 %v1416, %v1768
      %v1770 = vpop.f32.mrb[0].mxu0
      %1771 = vmatprep.mubr.f32.mxu0 0.0
      %1772 = vmatmul.mubr.f32.gmra.mrb[0].mxu0 %v1560
      %v1773 = vpop.f32.mrb[0].mxu0
      %v1774 = vadd.f32 %v1421, %v1773
      %v1775 = vpop.f32.mrb[0].mxu0
      %1776 = vmatprep.mubr.f32.mxu0 0.0
      %1777 = vmatmul.mubr.f32.gmra.mrb[0].mxu0 %v1563
      %v1778 = vpop.f32.mrb[0].mxu0
      %v1779 = vadd.f32 %v1426, %v1778
      %v1780 = vpop.f32.mrb[0].mxu0
      %1781 = vmatprep.mubr.f32.mxu0 0.0
      %1782 = vmatmul.mubr.f32.gmra.mrb[0].mxu0 %v1566
      %v1783 = vpop.f32.mrb[0].mxu0
      %v1784 = vadd.f32 %v1431, %v1783
      %v1785 = vpop.f32.mrb[0].mxu0
      %1786 = vmatprep.mubr.f32.mxu0 0.0
      %1787 = vmatmul.mubr.f32.gmra.mrb[0].mxu0 %v1569
      %v1788 = vpop.f32.mrb[0].mxu0
      %v1789 = vadd.f32 %v1436, %v1788
      %v1790 = vpop.f32.mrb[0].mxu0
      %1791 = vmatprep.mubr.f32.mxu0 0.0
      %1792 = vmatmul.mubr.f32.gmra.mrb[0].mxu0 %v1572
      %v1793 = vpop.f32.mrb[0].mxu0
      %v1794 = vadd.f32 %v1441, %v1793
      %v1795 = vpop.f32.mrb[0].mxu0
      %1796 = vmatprep.mubr.f32.mxu0 0.0
      %1797 = vmatmul.mubr.f32.gmra.mrb[0].mxu0 %v1575
      %v1798 = vpop.f32.mrb[0].mxu0
      %v1799 = vadd.f32 %v1446, %v1798
      %v1800 = vpop.f32.mrb[0].mxu0
      %1801 = vmatprep.mubr.f32.mxu0 0.0
      %1802 = vmatmul.mubr.f32.gmra.mrb[0].mxu0 %v1578
      %v1803 = vpop.f32.mrb[0].mxu0
      %v1804 = vadd.f32 %v1451, %v1803
      %v1805 = vpop.f32.mrb[0].mxu0
      %1806 = vmatprep.mubr.f32.mxu0 0.0
      %1807 = vmatmul.mubr.f32.gmra.mrb[0].mxu0 %v1581
      %v1808 = vpop.f32.mrb[0].mxu0
      %v1809 = vadd.f32 %v1456, %v1808
      %v1810 = vpop.f32.mrb[0].mxu0
      %1811 = vmatprep.mubr.f32.mxu0 0.0
      %1812 = vmatmul.mubr.f32.gmra.mrb[0].mxu0 %v1584
      %v1813 = vpop.f32.mrb[0].mxu0
      %v1814 = vadd.f32 %v1461, %v1813
      %v1815 = vpop.f32.mrb[0].mxu0
      %1816 = vmatprep.mubr.f32.mxu0 0.0
      %1817 = vmatmul.mubr.f32.gmra.mrb[0].mxu0 %v1587
      %v1818 = vpop.f32.mrb[0].mxu0
      %v1819 = vadd.f32 %v1466, %v1818
      %v1820 = vpop.f32.mrb[0].mxu0
      %1821 = vmatprep.mubr.f32.mxu0 0.0
      %1822 = vmatmul.mubr.f32.gmra.mrb[0].mxu0 %v1590
      %v1823 = vpop.f32.mrb[0].mxu0
      %v1824 = vadd.f32 %v1471, %v1823
      %v1825 = vpop.f32.mrb[0].mxu0
      %1826 = vmatprep.mubr.f32.mxu0 0.0
      %1827 = vmatmul.mubr.f32.gmra.mrb[0].mxu0 %v1593
      %v1828 = vpop.f32.mrb[0].mxu0
      %v1829 = vadd.f32 %v1476, %v1828
      %v1830 = vpop.f32.mrb[0].mxu0
      %1831 = vmatprep.mubr.f32.mxu0 0.0
      %1832 = vmatmul.mubr.f32.gmra.mrb[0].mxu0 %v1596
      %v1833 = vpop.f32.mrb[0].mxu0
      %v1834 = vadd.f32 %v1481, %v1833
      %v1835 = vpop.f32.mrb[0].mxu0
      %1836 = vmatprep.mubr.f32.mxu0 0.0
      %1837 = vmatmul.mubr.f32.gmra.mrb[0].mxu0 %v1599
      %v1838 = vpop.f32.mrb[0].mxu0
      %v1839 = vadd.f32 %v1486, %v1838
      %v1840 = vpop.f32.mrb[0].mxu0
      %1841 = vmatprep.mubr.f32.mxu0 0.0
      %1842 = vmatmul.mubr.f32.gmra.mrb[0].mxu0 %v1602
      %v1843 = vpop.f32.mrb[0].mxu0
      %v1844 = vadd.f32 %v1491, %v1843
      %v1845 = vpop.f32.mrb[0].mxu0
      %1846 = vmatprep.mubr.f32.mxu0 0.0
      %1847 = vmatmul.mubr.f32.gmra.mrb[0].mxu0 %v1605
      %v1848 = vpop.f32.mrb[0].mxu0
      %v1849 = vadd.f32 %v1496, %v1848
      %v1850 = vpop.f32.mrb[0].mxu0
      %1851 = vdwg.mxu0
      %v1852 = vld [vmem:[#allocation2 + $0x13] sm:$0xff]
      %v1853 = vld [vmem:[#allocation2 + $0x1b] sm:$0xff]
      %v1854 = vld [vmem:[#allocation2 + $0x23] sm:$0xff]
      %v1855 = vld [vmem:[#allocation2 + $0x2b] sm:$0xff]
      %v1856 = vld [vmem:[#allocation2 + $0x33] sm:$0xff]
      %v1857 = vld [vmem:[#allocation2 + $0x3b] sm:$0xff]
      %v1858 = vld [vmem:[#allocation2 + $0x43] sm:$0xff]
      %v1859 = vld [vmem:[#allocation2 + $0x4b] sm:$0xff]
      %v1860 = vld [vmem:[#allocation2 + $0x53] sm:$0xff]
      %v1861 = vld [vmem:[#allocation2 + $0x5b] sm:$0xff]
      %v1862 = vld [vmem:[#allocation2 + $0x63] sm:$0xff]
      %v1863 = vld [vmem:[#allocation2 + $0x6b] sm:$0xff]
      %v1864 = vld [vmem:[#allocation2 + $0x73] sm:$0xff]
      %v1865 = vld [vmem:[#allocation2 + $0x7b] sm:$0xff]
      %v1866 = vld [vmem:[#allocation2 + $0x83] sm:$0xff]
      %v1867 = vld [vmem:[#allocation2 + $0x8b] sm:$0xff]
      %v1868 = vld [vmem:[#allocation2 + $0x93] sm:$0xff]
      %v1869 = vld [vmem:[#allocation2 + $0x9b] sm:$0xff]
      %v1870 = vld [vmem:[#allocation2 + $0xa3] sm:$0xff]
      %v1871 = vld [vmem:[#allocation2 + $0xab] sm:$0xff]
      %v1872 = vld [vmem:[#allocation2 + $0xb3] sm:$0xff]
      %v1873 = vld [vmem:[#allocation2 + $0xbb] sm:$0xff]
      %v1874 = vld [vmem:[#allocation2 + $0xc3] sm:$0xff]
      %v1875 = vld [vmem:[#allocation2 + $0xcb] sm:$0xff]
      %v1876 = vld [vmem:[#allocation2 + $0xd3] sm:$0xff]
      %v1877 = vld [vmem:[#allocation2 + $0xdb] sm:$0xff]
      %v1878 = vld [vmem:[#allocation2 + $0xe3] sm:$0xff]
      %v1879 = vld [vmem:[#allocation2 + $0xeb] sm:$0xff]
      %v1880 = vld [vmem:[#allocation2 + $0xf3] sm:$0xff]
      %v1881 = vld [vmem:[#allocation2 + $0xfb] sm:$0xff]
      %v1882 = vld [vmem:[#allocation2 + $0x103] sm:$0xff]
      %v1883 = vld [vmem:[#allocation2 + $0x10b] sm:$0xff]
      %v1884 = vld [vmem:[#allocation2 + $0x113] sm:$0xff]
      %v1885 = vld [vmem:[#allocation2 + $0x11b] sm:$0xff]
      %v1886 = vld [vmem:[#allocation2 + $0x123] sm:$0xff]
      %v1887 = vld [vmem:[#allocation2 + $0x12b] sm:$0xff]
      %s1888 = scalar_lea.vmem %s4, 128
      %v1889 = vld [vmem:[%s1888] sm:$0xff]
      %v1890 = vld [vmem:[%s1888 + $0x8] sm:$0xff]
      %v1891 = vld [vmem:[%s1888 + $0x10] sm:$0xff]
      %v1892 = vld [vmem:[%s1888 + $0x18] sm:$0xff]
      %v1893 = vld [vmem:[%s1888 + $0x20] sm:$0xff]
      %v1894 = vld [vmem:[%s1888 + $0x28] sm:$0xff]
      %v1895 = vld [vmem:[%s1888 + $0x30] sm:$0xff]
      %v1896 = vld [vmem:[%s1888 + $0x38] sm:$0xff]
      %v1898 = vsel %vm308, %v1852, 0
      %v1901 = vsel %vm308, %v1853, 0
      %v1904 = vsel %vm308, %v1854, 0
      %v1907 = vsel %vm308, %v1855, 0
      %v1910 = vsel %vm308, %v1856, 0
      %v1913 = vsel %vm308, %v1857, 0
      %v1916 = vsel %vm308, %v1858, 0
      %v1919 = vsel %vm308, %v1859, 0
      %v1922 = vsel %vm308, %v1860, 0
      %v1925 = vsel %vm308, %v1861, 0
      %v1928 = vsel %vm308, %v1862, 0
      %v1931 = vsel %vm308, %v1863, 0
      %v1934 = vsel %vm308, %v1864, 0
      %v1937 = vsel %vm308, %v1865, 0
      %v1940 = vsel %vm308, %v1866, 0
      %v1943 = vsel %vm308, %v1867, 0
      %v1946 = vsel %vm308, %v1868, 0
      %v1949 = vsel %vm308, %v1869, 0
      %v1952 = vsel %vm308, %v1870, 0
      %v1955 = vsel %vm308, %v1871, 0
      %v1958 = vsel %vm308, %v1872, 0
      %v1961 = vsel %vm308, %v1873, 0
      %v1964 = vsel %vm308, %v1874, 0
      %v1967 = vsel %vm308, %v1875, 0
      %v1970 = vsel %vm308, %v1876, 0
      %v1973 = vsel %vm308, %v1877, 0
      %v1976 = vsel %vm308, %v1878, 0
      %v1979 = vsel %vm308, %v1879, 0
      %v1982 = vsel %vm308, %v1880, 0
      %v1985 = vsel %vm308, %v1881, 0
      %v1988 = vsel %vm308, %v1882, 0
      %v1991 = vsel %vm308, %v1883, 0
      %v1994 = vsel %vm308, %v1884, 0
      %v1997 = vsel %vm308, %v1885, 0
      %v2000 = vsel %vm308, %v1886, 0
      %v2003 = vsel %vm308, %v1887, 0
      %2005 = vmatprep.subr.mxu0 0.0
      %2006 = vmatpush1.msra.mxu0 %v1889
      %2007 = vmatprep.subr.mxu0 0.0
      %2008 = vmatpush1.msra.mxu0 %v1890
      %2009 = vmatprep.subr.mxu0 0.0
      %2010 = vmatpush1.msra.mxu0 %v1891
      %2011 = vmatprep.subr.mxu0 0.0
      %2012 = vmatpush1.msra.mxu0 %v1892
      %2013 = vmatprep.subr.mxu0 0.0
      %2014 = vmatpush1.msra.mxu0 %v1893
      %2015 = vmatprep.subr.mxu0 0.0
      %2016 = vmatpush1.msra.mxu0 %v1894
      %2017 = vmatprep.subr.mxu0 0.0
      %2018 = vmatpush1.msra.mxu0 %v1895
      %2019 = vmatprep.subr.mxu0 0.0
      %2020 = vmatpush1.msra.mxu0 %v1896
      %2021 = vmatprep.subr.mxu0 0.0
      %2022 = vmatpush1.msra.mxu0 0.0
      %2023 = vmatprep.subr.mxu0 0.0
      %2024 = vmatpush1.msra.mxu0 0.0
      %2025 = vmatprep.subr.mxu0 0.0
      %2026 = vmatpush1.msra.mxu0 0.0
      %2027 = vmatprep.subr.mxu0 0.0
      %2028 = vmatpush1.msra.mxu0 0.0
      %2029 = vmatprep.subr.mxu0 0.0
      %2030 = vmatpush1.msra.mxu0 0.0
      %2031 = vmatprep.subr.mxu0 0.0
      %2032 = vmatpush1.msra.mxu0 0.0
      %2033 = vmatprep.subr.mxu0 0.0
      %2034 = vmatpush1.msra.mxu0 0.0
      %2035 = vmatprep.subr.mxu0 0.0
      %2036 = vmatpush1.msra.mxu0 0.0
      %2037 = vmatprep.subr.mxu0 0.0
      %2038 = vmatpush1.msra.mxu0 0.0
      %2039 = vmatprep.subr.mxu0 0.0
      %2040 = vmatpush1.msra.mxu0 0.0
      %2041 = vmatprep.subr.mxu0 0.0
      %2042 = vmatpush1.msra.mxu0 0.0
      %2043 = vmatprep.subr.mxu0 0.0
      %2044 = vmatpush1.msra.mxu0 0.0
      %2045 = vmatprep.subr.mxu0 0.0
      %2046 = vmatpush1.msra.mxu0 0.0
      %2047 = vmatprep.subr.mxu0 0.0
      %2048 = vmatpush1.msra.mxu0 0.0
      %2049 = vmatprep.subr.mxu0 0.0
      %2050 = vmatpush1.msra.mxu0 0.0
      %2051 = vmatprep.subr.mxu0 0.0
      %2052 = vmatpush1.msra.mxu0 0.0
      %2053 = vmatprep.subr.mxu0 0.0
      %2054 = vmatpush1.msra.mxu0 0.0
      %2055 = vmatprep.subr.mxu0 0.0
      %2056 = vmatpush1.msra.mxu0 0.0
      %2057 = vmatprep.subr.mxu0 0.0
      %2058 = vmatpush1.msra.mxu0 0.0
      %2059 = vmatprep.subr.mxu0 0.0
      %2060 = vmatpush1.msra.mxu0 0.0
      %2061 = vmatprep.subr.mxu0 0.0
      %2062 = vmatpush1.msra.mxu0 0.0
      %2063 = vmatprep.subr.mxu0 0.0
      %2064 = vmatpush1.msra.mxu0 0.0
      %2065 = vmatprep.subr.mxu0 0.0
      %2066 = vmatpush1.msra.mxu0 0.0
      %2067 = vmatprep.subr.mxu0 0.0
      %2068 = vmatpush1.msra.mxu0 0.0
      %2069 = vmatprep.mubr.f32.mxu0 0.0
      %2070 = vmatmul.mubr.f32.gmra.mrb[0].mxu0 %v1898
      %v2071 = vpop.f32.mrb[0].mxu0
      %v2072 = vadd.f32 0.0, %v2071
      %v2073 = vpop.f32.mrb[0].mxu0
      %2074 = vmatprep.mubr.f32.mxu0 0.0
      %2075 = vmatmul.mubr.f32.gmra.mrb[0].mxu0 %v1901
      %v2076 = vpop.f32.mrb[0].mxu0
      %v2077 = vadd.f32 0.0, %v2076
      %v2078 = vpop.f32.mrb[0].mxu0
      %2079 = vmatprep.mubr.f32.mxu0 0.0
      %2080 = vmatmul.mubr.f32.gmra.mrb[0].mxu0 %v1904
      %v2081 = vpop.f32.mrb[0].mxu0
      %v2082 = vadd.f32 0.0, %v2081
      %v2083 = vpop.f32.mrb[0].mxu0
      %2084 = vmatprep.mubr.f32.mxu0 0.0
      %2085 = vmatmul.mubr.f32.gmra.mrb[0].mxu0 %v1907
      %v2086 = vpop.f32.mrb[0].mxu0
      %v2087 = vadd.f32 0.0, %v2086
      %v2088 = vpop.f32.mrb[0].mxu0
      %2089 = vmatprep.mubr.f32.mxu0 0.0
      %2090 = vmatmul.mubr.f32.gmra.mrb[0].mxu0 %v1910
      %v2091 = vpop.f32.mrb[0].mxu0
      %v2092 = vadd.f32 0.0, %v2091
      %v2093 = vpop.f32.mrb[0].mxu0
      %2094 = vmatprep.mubr.f32.mxu0 0.0
      %2095 = vmatmul.mubr.f32.gmra.mrb[0].mxu0 %v1913
      %v2096 = vpop.f32.mrb[0].mxu0
      %v2097 = vadd.f32 0.0, %v2096
      %v2098 = vpop.f32.mrb[0].mxu0
      %2099 = vmatprep.mubr.f32.mxu0 0.0
      %2100 = vmatmul.mubr.f32.gmra.mrb[0].mxu0 %v1916
      %v2101 = vpop.f32.mrb[0].mxu0
      %v2102 = vadd.f32 0.0, %v2101
      %v2103 = vpop.f32.mrb[0].mxu0
      %2104 = vmatprep.mubr.f32.mxu0 0.0
      %2105 = vmatmul.mubr.f32.gmra.mrb[0].mxu0 %v1919
      %v2106 = vpop.f32.mrb[0].mxu0
      %v2107 = vadd.f32 0.0, %v2106
      %v2108 = vpop.f32.mrb[0].mxu0
      %2109 = vmatprep.mubr.f32.mxu0 0.0
      %2110 = vmatmul.mubr.f32.gmra.mrb[0].mxu0 %v1922
      %v2111 = vpop.f32.mrb[0].mxu0
      %v2112 = vadd.f32 0.0, %v2111
      %v2113 = vpop.f32.mrb[0].mxu0
      %2114 = vmatprep.mubr.f32.mxu0 0.0
      %2115 = vmatmul.mubr.f32.gmra.mrb[0].mxu0 %v1925
      %v2116 = vpop.f32.mrb[0].mxu0
      %v2117 = vadd.f32 0.0, %v2116
      %v2118 = vpop.f32.mrb[0].mxu0
      %2119 = vmatprep.mubr.f32.mxu0 0.0
      %2120 = vmatmul.mubr.f32.gmra.mrb[0].mxu0 %v1928
      %v2121 = vpop.f32.mrb[0].mxu0
      %v2122 = vadd.f32 0.0, %v2121
      %v2123 = vpop.f32.mrb[0].mxu0
      %2124 = vmatprep.mubr.f32.mxu0 0.0
      %2125 = vmatmul.mubr.f32.gmra.mrb[0].mxu0 %v1931
      %v2126 = vpop.f32.mrb[0].mxu0
      %v2127 = vadd.f32 0.0, %v2126
      %v2128 = vpop.f32.mrb[0].mxu0
      %2129 = vmatprep.mubr.f32.mxu0 0.0
      %2130 = vmatmul.mubr.f32.gmra.mrb[0].mxu0 %v1934
      %v2131 = vpop.f32.mrb[0].mxu0
      %v2132 = vadd.f32 0.0, %v2131
      %v2133 = vpop.f32.mrb[0].mxu0
      %2134 = vmatprep.mubr.f32.mxu0 0.0
      %2135 = vmatmul.mubr.f32.gmra.mrb[0].mxu0 %v1937
      %v2136 = vpop.f32.mrb[0].mxu0
      %v2137 = vadd.f32 0.0, %v2136
      %v2138 = vpop.f32.mrb[0].mxu0
      %2139 = vmatprep.mubr.f32.mxu0 0.0
      %2140 = vmatmul.mubr.f32.gmra.mrb[0].mxu0 %v1940
      %v2141 = vpop.f32.mrb[0].mxu0
      %v2142 = vadd.f32 0.0, %v2141
      %v2143 = vpop.f32.mrb[0].mxu0
      %2144 = vmatprep.mubr.f32.mxu0 0.0
      %2145 = vmatmul.mubr.f32.gmra.mrb[0].mxu0 %v1943
      %v2146 = vpop.f32.mrb[0].mxu0
      %v2147 = vadd.f32 0.0, %v2146
      %v2148 = vpop.f32.mrb[0].mxu0
      %2149 = vmatprep.mubr.f32.mxu0 0.0
      %2150 = vmatmul.mubr.f32.gmra.mrb[0].mxu0 %v1946
      %v2151 = vpop.f32.mrb[0].mxu0
      %v2152 = vadd.f32 0.0, %v2151
      %v2153 = vpop.f32.mrb[0].mxu0
      %2154 = vmatprep.mubr.f32.mxu0 0.0
      %2155 = vmatmul.mubr.f32.gmra.mrb[0].mxu0 %v1949
      %v2156 = vpop.f32.mrb[0].mxu0
      %v2157 = vadd.f32 0.0, %v2156
      %v2158 = vpop.f32.mrb[0].mxu0
      %2159 = vmatprep.mubr.f32.mxu0 0.0
      %2160 = vmatmul.mubr.f32.gmra.mrb[0].mxu0 %v1952
      %v2161 = vpop.f32.mrb[0].mxu0
      %v2162 = vadd.f32 0.0, %v2161
      %v2163 = vpop.f32.mrb[0].mxu0
      %2164 = vmatprep.mubr.f32.mxu0 0.0
      %2165 = vmatmul.mubr.f32.gmra.mrb[0].mxu0 %v1955
      %v2166 = vpop.f32.mrb[0].mxu0
      %v2167 = vadd.f32 0.0, %v2166
      %v2168 = vpop.f32.mrb[0].mxu0
      %2169 = vmatprep.mubr.f32.mxu0 0.0
      %2170 = vmatmul.mubr.f32.gmra.mrb[0].mxu0 %v1958
      %v2171 = vpop.f32.mrb[0].mxu0
      %v2172 = vadd.f32 0.0, %v2171
      %v2173 = vpop.f32.mrb[0].mxu0
      %2174 = vmatprep.mubr.f32.mxu0 0.0
      %2175 = vmatmul.mubr.f32.gmra.mrb[0].mxu0 %v1961
      %v2176 = vpop.f32.mrb[0].mxu0
      %v2177 = vadd.f32 0.0, %v2176
      %v2178 = vpop.f32.mrb[0].mxu0
      %2179 = vmatprep.mubr.f32.mxu0 0.0
      %2180 = vmatmul.mubr.f32.gmra.mrb[0].mxu0 %v1964
      %v2181 = vpop.f32.mrb[0].mxu0
      %v2182 = vadd.f32 0.0, %v2181
      %v2183 = vpop.f32.mrb[0].mxu0
      %2184 = vmatprep.mubr.f32.mxu0 0.0
      %2185 = vmatmul.mubr.f32.gmra.mrb[0].mxu0 %v1967
      %v2186 = vpop.f32.mrb[0].mxu0
      %v2187 = vadd.f32 0.0, %v2186
      %v2188 = vpop.f32.mrb[0].mxu0
      %2189 = vmatprep.mubr.f32.mxu0 0.0
      %2190 = vmatmul.mubr.f32.gmra.mrb[0].mxu0 %v1970
      %v2191 = vpop.f32.mrb[0].mxu0
      %v2192 = vadd.f32 0.0, %v2191
      %v2193 = vpop.f32.mrb[0].mxu0
      %2194 = vmatprep.mubr.f32.mxu0 0.0
      %2195 = vmatmul.mubr.f32.gmra.mrb[0].mxu0 %v1973
      %v2196 = vpop.f32.mrb[0].mxu0
      %v2197 = vadd.f32 0.0, %v2196
      %v2198 = vpop.f32.mrb[0].mxu0
      %2199 = vmatprep.mubr.f32.mxu0 0.0
      %2200 = vmatmul.mubr.f32.gmra.mrb[0].mxu0 %v1976
      %v2201 = vpop.f32.mrb[0].mxu0
      %v2202 = vadd.f32 0.0, %v2201
      %v2203 = vpop.f32.mrb[0].mxu0
      %2204 = vmatprep.mubr.f32.mxu0 0.0
      %2205 = vmatmul.mubr.f32.gmra.mrb[0].mxu0 %v1979
      %v2206 = vpop.f32.mrb[0].mxu0
      %v2207 = vadd.f32 0.0, %v2206
      %v2208 = vpop.f32.mrb[0].mxu0
      %2209 = vmatprep.mubr.f32.mxu0 0.0
      %2210 = vmatmul.mubr.f32.gmra.mrb[0].mxu0 %v1982
      %v2211 = vpop.f32.mrb[0].mxu0
      %v2212 = vadd.f32 0.0, %v2211
      %v2213 = vpop.f32.mrb[0].mxu0
      %2214 = vmatprep.mubr.f32.mxu0 0.0
      %2215 = vmatmul.mubr.f32.gmra.mrb[0].mxu0 %v1985
      %v2216 = vpop.f32.mrb[0].mxu0
      %v2217 = vadd.f32 0.0, %v2216
      %v2218 = vpop.f32.mrb[0].mxu0
      %2219 = vmatprep.mubr.f32.mxu0 0.0
      %2220 = vmatmul.mubr.f32.gmra.mrb[0].mxu0 %v1988
      %v2221 = vpop.f32.mrb[0].mxu0
      %v2222 = vadd.f32 0.0, %v2221
      %v2223 = vpop.f32.mrb[0].mxu0
      %2224 = vmatprep.mubr.f32.mxu0 0.0
      %2225 = vmatmul.mubr.f32.gmra.mrb[0].mxu0 %v1991
      %v2226 = vpop.f32.mrb[0].mxu0
      %v2227 = vadd.f32 0.0, %v2226
      %v2228 = vpop.f32.mrb[0].mxu0
      %2229 = vmatprep.mubr.f32.mxu0 0.0
      %2230 = vmatmul.mubr.f32.gmra.mrb[0].mxu0 %v1994
      %v2231 = vpop.f32.mrb[0].mxu0
      %v2232 = vadd.f32 0.0, %v2231
      %v2233 = vpop.f32.mrb[0].mxu0
      %2234 = vmatprep.mubr.f32.mxu0 0.0
      %2235 = vmatmul.mubr.f32.gmra.mrb[0].mxu0 %v1997
      %v2236 = vpop.f32.mrb[0].mxu0
      %v2237 = vadd.f32 0.0, %v2236
      %v2238 = vpop.f32.mrb[0].mxu0
      %2239 = vmatprep.mubr.f32.mxu0 0.0
      %2240 = vmatmul.mubr.f32.gmra.mrb[0].mxu0 %v2000
      %v2241 = vpop.f32.mrb[0].mxu0
      %v2242 = vadd.f32 0.0, %v2241
      %v2243 = vpop.f32.mrb[0].mxu0
      %2244 = vmatprep.mubr.f32.mxu0 0.0
      %2245 = vmatmul.mubr.f32.gmra.mrb[0].mxu0 %v2003
      %v2246 = vpop.f32.mrb[0].mxu0
      %v2247 = vadd.f32 0.0, %v2246
      %v2248 = vpop.f32.mrb[0].mxu0
      %2249 = vdwg.mxu0
      %v2250 = vadd.f32 %v1674, %v2072
      %v2251 = vadd.f32 %v1679, %v2077
      %v2252 = vadd.f32 %v1684, %v2082
      %v2253 = vadd.f32 %v1689, %v2087
      %v2254 = vadd.f32 %v1694, %v2092
      %v2255 = vadd.f32 %v1699, %v2097
      %v2256 = vadd.f32 %v1704, %v2102
      %v2257 = vadd.f32 %v1709, %v2107
      %v2258 = vadd.f32 %v1714, %v2112
      %v2259 = vadd.f32 %v1719, %v2117
      %v2260 = vadd.f32 %v1724, %v2122
      %v2261 = vadd.f32 %v1729, %v2127
      %v2262 = vadd.f32 %v1734, %v2132
      %v2263 = vadd.f32 %v1739, %v2137
      %v2264 = vadd.f32 %v1744, %v2142
      %v2265 = vadd.f32 %v1749, %v2147
      %v2266 = vadd.f32 %v1754, %v2152
      %v2267 = vadd.f32 %v1759, %v2157
      %v2268 = vadd.f32 %v1764, %v2162
      %v2269 = vadd.f32 %v1769, %v2167
      %v2270 = vadd.f32 %v1774, %v2172
      %v2271 = vadd.f32 %v1779, %v2177
      %v2272 = vadd.f32 %v1784, %v2182
      %v2273 = vadd.f32 %v1789, %v2187
      %v2274 = vadd.f32 %v1794, %v2192
      %v2275 = vadd.f32 %v1799, %v2197
      %v2276 = vadd.f32 %v1804, %v2202
      %v2277 = vadd.f32 %v1809, %v2207
      %v2278 = vadd.f32 %v1814, %v2212
      %v2279 = vadd.f32 %v1819, %v2217
      %v2280 = vadd.f32 %v1824, %v2222
      %v2281 = vadd.f32 %v1829, %v2227
      %v2282 = vadd.f32 %v1834, %v2232
      %v2283 = vadd.f32 %v1839, %v2237
      %v2284 = vadd.f32 %v1844, %v2242
      %v2285 = vadd.f32 %v1849, %v2247
      %v2286 = vld [vmem:[#allocation2 + $0x23] sm:$0xff]
      %v2287 = vld [vmem:[#allocation2 + $0x2b] sm:$0xff]
      %v2288 = vld [vmem:[#allocation2 + $0x33] sm:$0xff]
      %v2289 = vld [vmem:[#allocation2 + $0x3b] sm:$0xff]
      %v2290 = vld [vmem:[#allocation2 + $0x43] sm:$0xff]
      %v2291 = vld [vmem:[#allocation2 + $0x4b] sm:$0xff]
      %v2292 = vld [vmem:[#allocation2 + $0x53] sm:$0xff]
      %v2293 = vld [vmem:[#allocation2 + $0x5b] sm:$0xff]
      %v2294 = vld [vmem:[#allocation2 + $0x63] sm:$0xff]
      %v2295 = vld [vmem:[#allocation2 + $0x6b] sm:$0xff]
      %v2296 = vld [vmem:[#allocation2 + $0x73] sm:$0xff]
      %v2297 = vld [vmem:[#allocation2 + $0x7b] sm:$0xff]
      %v2298 = vld [vmem:[#allocation2 + $0x83] sm:$0xff]
      %v2299 = vld [vmem:[#allocation2 + $0x8b] sm:$0xff]
      %v2300 = vld [vmem:[#allocation2 + $0x93] sm:$0xff]
      %v2301 = vld [vmem:[#allocation2 + $0x9b] sm:$0xff]
      %v2302 = vld [vmem:[#allocation2 + $0xa3] sm:$0xff]
      %v2303 = vld [vmem:[#allocation2 + $0xab] sm:$0xff]
      %v2304 = vld [vmem:[#allocation2 + $0xb3] sm:$0xff]
      %v2305 = vld [vmem:[#allocation2 + $0xbb] sm:$0xff]
      %v2306 = vld [vmem:[#allocation2 + $0xc3] sm:$0xff]
      %v2307 = vld [vmem:[#allocation2 + $0xcb] sm:$0xff]
      %v2308 = vld [vmem:[#allocation2 + $0xd3] sm:$0xff]
      %v2309 = vld [vmem:[#allocation2 + $0xdb] sm:$0xff]
      %v2310 = vld [vmem:[#allocation2 + $0xe3] sm:$0xff]
      %v2311 = vld [vmem:[#allocation2 + $0xeb] sm:$0xff]
      %v2312 = vld [vmem:[#allocation2 + $0xf3] sm:$0xff]
      %v2313 = vld [vmem:[#allocation2 + $0xfb] sm:$0xff]
      %v2314 = vld [vmem:[#allocation2 + $0x103] sm:$0xff]
      %v2315 = vld [vmem:[#allocation2 + $0x10b] sm:$0xff]
      %v2316 = vld [vmem:[#allocation2 + $0x113] sm:$0xff]
      %v2317 = vld [vmem:[#allocation2 + $0x11b] sm:$0xff]
      %v2318 = vld [vmem:[#allocation2 + $0x123] sm:$0xff]
      %v2319 = vld [vmem:[#allocation2 + $0x12b] sm:$0xff]
      %v2320 = vld [vmem:[#allocation2 + $0x133] sm:$0xff]
      %v2321 = vld [vmem:[#allocation2 + $0x13b] sm:$0xff]
      %s2322 = scalar_lea.vmem %s4, 192
      %v2323 = vld [vmem:[%s2322] sm:$0xff]
      %v2324 = vld [vmem:[%s2322 + $0x8] sm:$0xff]
      %v2325 = vld [vmem:[%s2322 + $0x10] sm:$0xff]
      %v2326 = vld [vmem:[%s2322 + $0x18] sm:$0xff]
      %v2327 = vld [vmem:[%s2322 + $0x20] sm:$0xff]
      %v2328 = vld [vmem:[%s2322 + $0x28] sm:$0xff]
      %v2329 = vld [vmem:[%s2322 + $0x30] sm:$0xff]
      %v2330 = vld [vmem:[%s2322 + $0x38] sm:$0xff]
      %v2332 = vsel %vm308, %v2286, 0
      %v2335 = vsel %vm308, %v2287, 0
      %v2338 = vsel %vm308, %v2288, 0
      %v2341 = vsel %vm308, %v2289, 0
      %v2344 = vsel %vm308, %v2290, 0
      %v2347 = vsel %vm308, %v2291, 0
      %v2350 = vsel %vm308, %v2292, 0
      %v2353 = vsel %vm308, %v2293, 0
      %v2356 = vsel %vm308, %v2294, 0
      %v2359 = vsel %vm308, %v2295, 0
      %v2362 = vsel %vm308, %v2296, 0
      %v2365 = vsel %vm308, %v2297, 0
      %v2368 = vsel %vm308, %v2298, 0
      %v2371 = vsel %vm308, %v2299, 0
      %v2374 = vsel %vm308, %v2300, 0
      %v2377 = vsel %vm308, %v2301, 0
      %v2380 = vsel %vm308, %v2302, 0
      %v2383 = vsel %vm308, %v2303, 0
      %v2386 = vsel %vm308, %v2304, 0
      %v2389 = vsel %vm308, %v2305, 0
      %v2392 = vsel %vm308, %v2306, 0
      %v2395 = vsel %vm308, %v2307, 0
      %v2398 = vsel %vm308, %v2308, 0
      %v2401 = vsel %vm308, %v2309, 0
      %v2404 = vsel %vm308, %v2310, 0
      %v2407 = vsel %vm308, %v2311, 0
      %v2410 = vsel %vm308, %v2312, 0
      %v2413 = vsel %vm308, %v2313, 0
      %v2416 = vsel %vm308, %v2314, 0
      %v2419 = vsel %vm308, %v2315, 0
      %v2422 = vsel %vm308, %v2316, 0
      %v2425 = vsel %vm308, %v2317, 0
      %v2428 = vsel %vm308, %v2318, 0
      %v2431 = vsel %vm308, %v2319, 0
      %v2434 = vsel %vm308, %v2320, 0
      %v2437 = vsel %vm308, %v2321, 0
      %2439 = vmatprep.subr.mxu0 0.0
      %2440 = vmatpush1.msra.mxu0 %v2323
      %2441 = vmatprep.subr.mxu0 0.0
      %2442 = vmatpush1.msra.mxu0 %v2324
      %2443 = vmatprep.subr.mxu0 0.0
      %2444 = vmatpush1.msra.mxu0 %v2325
      %2445 = vmatprep.subr.mxu0 0.0
      %2446 = vmatpush1.msra.mxu0 %v2326
      %2447 = vmatprep.subr.mxu0 0.0
      %2448 = vmatpush1.msra.mxu0 %v2327
      %2449 = vmatprep.subr.mxu0 0.0
      %2450 = vmatpush1.msra.mxu0 %v2328
      %2451 = vmatprep.subr.mxu0 0.0
      %2452 = vmatpush1.msra.mxu0 %v2329
      %2453 = vmatprep.subr.mxu0 0.0
      %2454 = vmatpush1.msra.mxu0 %v2330
      %2455 = vmatprep.subr.mxu0 0.0
      %2456 = vmatpush1.msra.mxu0 0.0
      %2457 = vmatprep.subr.mxu0 0.0
      %2458 = vmatpush1.msra.mxu0 0.0
      %2459 = vmatprep.subr.mxu0 0.0
      %2460 = vmatpush1.msra.mxu0 0.0
      %2461 = vmatprep.subr.mxu0 0.0
      %2462 = vmatpush1.msra.mxu0 0.0
      %2463 = vmatprep.subr.mxu0 0.0
      %2464 = vmatpush1.msra.mxu0 0.0
      %2465 = vmatprep.subr.mxu0 0.0
      %2466 = vmatpush1.msra.mxu0 0.0
      %2467 = vmatprep.subr.mxu0 0.0
      %2468 = vmatpush1.msra.mxu0 0.0
      %2469 = vmatprep.subr.mxu0 0.0
      %2470 = vmatpush1.msra.mxu0 0.0
      %2471 = vmatprep.subr.mxu0 0.0
      %2472 = vmatpush1.msra.mxu0 0.0
      %2473 = vmatprep.subr.mxu0 0.0
      %2474 = vmatpush1.msra.mxu0 0.0
      %2475 = vmatprep.subr.mxu0 0.0
      %2476 = vmatpush1.msra.mxu0 0.0
      %2477 = vmatprep.subr.mxu0 0.0
      %2478 = vmatpush1.msra.mxu0 0.0
      %2479 = vmatprep.subr.mxu0 0.0
      %2480 = vmatpush1.msra.mxu0 0.0
      %2481 = vmatprep.subr.mxu0 0.0
      %2482 = vmatpush1.msra.mxu0 0.0
      %2483 = vmatprep.subr.mxu0 0.0
      %2484 = vmatpush1.msra.mxu0 0.0
      %2485 = vmatprep.subr.mxu0 0.0
      %2486 = vmatpush1.msra.mxu0 0.0
      %2487 = vmatprep.subr.mxu0 0.0
      %2488 = vmatpush1.msra.mxu0 0.0
      %2489 = vmatprep.subr.mxu0 0.0
      %2490 = vmatpush1.msra.mxu0 0.0
      %2491 = vmatprep.subr.mxu0 0.0
      %2492 = vmatpush1.msra.mxu0 0.0
      %2493 = vmatprep.subr.mxu0 0.0
      %2494 = vmatpush1.msra.mxu0 0.0
      %2495 = vmatprep.subr.mxu0 0.0
      %2496 = vmatpush1.msra.mxu0 0.0
      %2497 = vmatprep.subr.mxu0 0.0
      %2498 = vmatpush1.msra.mxu0 0.0
      %2499 = vmatprep.subr.mxu0 0.0
      %2500 = vmatpush1.msra.mxu0 0.0
      %2501 = vmatprep.subr.mxu0 0.0
      %2502 = vmatpush1.msra.mxu0 0.0
      %2503 = vmatprep.mubr.f32.mxu0 0.0
      %2504 = vmatmul.mubr.f32.gmra.mrb[0].mxu0 %v2332
      %v2505 = vpop.f32.mrb[0].mxu0
      %v2506 = vadd.f32 0.0, %v2505
      %v2507 = vpop.f32.mrb[0].mxu0
      %2508 = vmatprep.mubr.f32.mxu0 0.0
      %2509 = vmatmul.mubr.f32.gmra.mrb[0].mxu0 %v2335
      %v2510 = vpop.f32.mrb[0].mxu0
      %v2511 = vadd.f32 0.0, %v2510
      %v2512 = vpop.f32.mrb[0].mxu0
      %2513 = vmatprep.mubr.f32.mxu0 0.0
      %2514 = vmatmul.mubr.f32.gmra.mrb[0].mxu0 %v2338
      %v2515 = vpop.f32.mrb[0].mxu0
      %v2516 = vadd.f32 0.0, %v2515
      %v2517 = vpop.f32.mrb[0].mxu0
      %2518 = vmatprep.mubr.f32.mxu0 0.0
      %2519 = vmatmul.mubr.f32.gmra.mrb[0].mxu0 %v2341
      %v2520 = vpop.f32.mrb[0].mxu0
      %v2521 = vadd.f32 0.0, %v2520
      %v2522 = vpop.f32.mrb[0].mxu0
      %2523 = vmatprep.mubr.f32.mxu0 0.0
      %2524 = vmatmul.mubr.f32.gmra.mrb[0].mxu0 %v2344
      %v2525 = vpop.f32.mrb[0].mxu0
      %v2526 = vadd.f32 0.0, %v2525
      %v2527 = vpop.f32.mrb[0].mxu0
      %2528 = vmatprep.mubr.f32.mxu0 0.0
      %2529 = vmatmul.mubr.f32.gmra.mrb[0].mxu0 %v2347
      %v2530 = vpop.f32.mrb[0].mxu0
      %v2531 = vadd.f32 0.0, %v2530
      %v2532 = vpop.f32.mrb[0].mxu0
      %2533 = vmatprep.mubr.f32.mxu0 0.0
      %2534 = vmatmul.mubr.f32.gmra.mrb[0].mxu0 %v2350
      %v2535 = vpop.f32.mrb[0].mxu0
      %v2536 = vadd.f32 0.0, %v2535
      %v2537 = vpop.f32.mrb[0].mxu0
      %2538 = vmatprep.mubr.f32.mxu0 0.0
      %2539 = vmatmul.mubr.f32.gmra.mrb[0].mxu0 %v2353
      %v2540 = vpop.f32.mrb[0].mxu0
      %v2541 = vadd.f32 0.0, %v2540
      %v2542 = vpop.f32.mrb[0].mxu0
      %2543 = vmatprep.mubr.f32.mxu0 0.0
      %2544 = vmatmul.mubr.f32.gmra.mrb[0].mxu0 %v2356
      %v2545 = vpop.f32.mrb[0].mxu0
      %v2546 = vadd.f32 0.0, %v2545
      %v2547 = vpop.f32.mrb[0].mxu0
      %2548 = vmatprep.mubr.f32.mxu0 0.0
      %2549 = vmatmul.mubr.f32.gmra.mrb[0].mxu0 %v2359
      %v2550 = vpop.f32.mrb[0].mxu0
      %v2551 = vadd.f32 0.0, %v2550
      %v2552 = vpop.f32.mrb[0].mxu0
      %2553 = vmatprep.mubr.f32.mxu0 0.0
      %2554 = vmatmul.mubr.f32.gmra.mrb[0].mxu0 %v2362
      %v2555 = vpop.f32.mrb[0].mxu0
      %v2556 = vadd.f32 0.0, %v2555
      %v2557 = vpop.f32.mrb[0].mxu0
      %2558 = vmatprep.mubr.f32.mxu0 0.0
      %2559 = vmatmul.mubr.f32.gmra.mrb[0].mxu0 %v2365
      %v2560 = vpop.f32.mrb[0].mxu0
      %v2561 = vadd.f32 0.0, %v2560
      %v2562 = vpop.f32.mrb[0].mxu0
      %2563 = vmatprep.mubr.f32.mxu0 0.0
      %2564 = vmatmul.mubr.f32.gmra.mrb[0].mxu0 %v2368
      %v2565 = vpop.f32.mrb[0].mxu0
      %v2566 = vadd.f32 0.0, %v2565
      %v2567 = vpop.f32.mrb[0].mxu0
      %2568 = vmatprep.mubr.f32.mxu0 0.0
      %2569 = vmatmul.mubr.f32.gmra.mrb[0].mxu0 %v2371
      %v2570 = vpop.f32.mrb[0].mxu0
      %v2571 = vadd.f32 0.0, %v2570
      %v2572 = vpop.f32.mrb[0].mxu0
      %2573 = vmatprep.mubr.f32.mxu0 0.0
      %2574 = vmatmul.mubr.f32.gmra.mrb[0].mxu0 %v2374
      %v2575 = vpop.f32.mrb[0].mxu0
      %v2576 = vadd.f32 0.0, %v2575
      %v2577 = vpop.f32.mrb[0].mxu0
      %2578 = vmatprep.mubr.f32.mxu0 0.0
      %2579 = vmatmul.mubr.f32.gmra.mrb[0].mxu0 %v2377
      %v2580 = vpop.f32.mrb[0].mxu0
      %v2581 = vadd.f32 0.0, %v2580
      %v2582 = vpop.f32.mrb[0].mxu0
      %2583 = vmatprep.mubr.f32.mxu0 0.0
      %2584 = vmatmul.mubr.f32.gmra.mrb[0].mxu0 %v2380
      %v2585 = vpop.f32.mrb[0].mxu0
      %v2586 = vadd.f32 0.0, %v2585
      %v2587 = vpop.f32.mrb[0].mxu0
      %2588 = vmatprep.mubr.f32.mxu0 0.0
      %2589 = vmatmul.mubr.f32.gmra.mrb[0].mxu0 %v2383
      %v2590 = vpop.f32.mrb[0].mxu0
      %v2591 = vadd.f32 0.0, %v2590
      %v2592 = vpop.f32.mrb[0].mxu0
      %2593 = vmatprep.mubr.f32.mxu0 0.0
      %2594 = vmatmul.mubr.f32.gmra.mrb[0].mxu0 %v2386
      %v2595 = vpop.f32.mrb[0].mxu0
      %v2596 = vadd.f32 0.0, %v2595
      %v2597 = vpop.f32.mrb[0].mxu0
      %2598 = vmatprep.mubr.f32.mxu0 0.0
      %2599 = vmatmul.mubr.f32.gmra.mrb[0].mxu0 %v2389
      %v2600 = vpop.f32.mrb[0].mxu0
      %v2601 = vadd.f32 0.0, %v2600
      %v2602 = vpop.f32.mrb[0].mxu0
      %2603 = vmatprep.mubr.f32.mxu0 0.0
      %2604 = vmatmul.mubr.f32.gmra.mrb[0].mxu0 %v2392
      %v2605 = vpop.f32.mrb[0].mxu0
      %v2606 = vadd.f32 0.0, %v2605
      %v2607 = vpop.f32.mrb[0].mxu0
      %2608 = vmatprep.mubr.f32.mxu0 0.0
      %2609 = vmatmul.mubr.f32.gmra.mrb[0].mxu0 %v2395
      %v2610 = vpop.f32.mrb[0].mxu0
      %v2611 = vadd.f32 0.0, %v2610
      %v2612 = vpop.f32.mrb[0].mxu0
      %2613 = vmatprep.mubr.f32.mxu0 0.0
      %2614 = vmatmul.mubr.f32.gmra.mrb[0].mxu0 %v2398
      %v2615 = vpop.f32.mrb[0].mxu0
      %v2616 = vadd.f32 0.0, %v2615
      %v2617 = vpop.f32.mrb[0].mxu0
      %2618 = vmatprep.mubr.f32.mxu0 0.0
      %2619 = vmatmul.mubr.f32.gmra.mrb[0].mxu0 %v2401
      %v2620 = vpop.f32.mrb[0].mxu0
      %v2621 = vadd.f32 0.0, %v2620
      %v2622 = vpop.f32.mrb[0].mxu0
      %2623 = vmatprep.mubr.f32.mxu0 0.0
      %2624 = vmatmul.mubr.f32.gmra.mrb[0].mxu0 %v2404
      %v2625 = vpop.f32.mrb[0].mxu0
      %v2626 = vadd.f32 0.0, %v2625
      %v2627 = vpop.f32.mrb[0].mxu0
      %2628 = vmatprep.mubr.f32.mxu0 0.0
      %2629 = vmatmul.mubr.f32.gmra.mrb[0].mxu0 %v2407
      %v2630 = vpop.f32.mrb[0].mxu0
      %v2631 = vadd.f32 0.0, %v2630
      %v2632 = vpop.f32.mrb[0].mxu0
      %2633 = vmatprep.mubr.f32.mxu0 0.0
      %2634 = vmatmul.mubr.f32.gmra.mrb[0].mxu0 %v2410
      %v2635 = vpop.f32.mrb[0].mxu0
      %v2636 = vadd.f32 0.0, %v2635
      %v2637 = vpop.f32.mrb[0].mxu0
      %2638 = vmatprep.mubr.f32.mxu0 0.0
      %2639 = vmatmul.mubr.f32.gmra.mrb[0].mxu0 %v2413
      %v2640 = vpop.f32.mrb[0].mxu0
      %v2641 = vadd.f32 0.0, %v2640
      %v2642 = vpop.f32.mrb[0].mxu0
      %2643 = vmatprep.mubr.f32.mxu0 0.0
      %2644 = vmatmul.mubr.f32.gmra.mrb[0].mxu0 %v2416
      %v2645 = vpop.f32.mrb[0].mxu0
      %v2646 = vadd.f32 0.0, %v2645
      %v2647 = vpop.f32.mrb[0].mxu0
      %2648 = vmatprep.mubr.f32.mxu0 0.0
      %2649 = vmatmul.mubr.f32.gmra.mrb[0].mxu0 %v2419
      %v2650 = vpop.f32.mrb[0].mxu0
      %v2651 = vadd.f32 0.0, %v2650
      %v2652 = vpop.f32.mrb[0].mxu0
      %2653 = vmatprep.mubr.f32.mxu0 0.0
      %2654 = vmatmul.mubr.f32.gmra.mrb[0].mxu0 %v2422
      %v2655 = vpop.f32.mrb[0].mxu0
      %v2656 = vadd.f32 0.0, %v2655
      %v2657 = vpop.f32.mrb[0].mxu0
      %2658 = vmatprep.mubr.f32.mxu0 0.0
      %2659 = vmatmul.mubr.f32.gmra.mrb[0].mxu0 %v2425
      %v2660 = vpop.f32.mrb[0].mxu0
      %v2661 = vadd.f32 0.0, %v2660
      %v2662 = vpop.f32.mrb[0].mxu0
      %2663 = vmatprep.mubr.f32.mxu0 0.0
      %2664 = vmatmul.mubr.f32.gmra.mrb[0].mxu0 %v2428
      %v2665 = vpop.f32.mrb[0].mxu0
      %v2666 = vadd.f32 0.0, %v2665
      %v2667 = vpop.f32.mrb[0].mxu0
      %2668 = vmatprep.mubr.f32.mxu0 0.0
      %2669 = vmatmul.mubr.f32.gmra.mrb[0].mxu0 %v2431
      %v2670 = vpop.f32.mrb[0].mxu0
      %v2671 = vadd.f32 0.0, %v2670
      %v2672 = vpop.f32.mrb[0].mxu0
      %2673 = vmatprep.mubr.f32.mxu0 0.0
      %2674 = vmatmul.mubr.f32.gmra.mrb[0].mxu0 %v2434
      %v2675 = vpop.f32.mrb[0].mxu0
      %v2676 = vadd.f32 0.0, %v2675
      %v2677 = vpop.f32.mrb[0].mxu0
      %2678 = vmatprep.mubr.f32.mxu0 0.0
      %2679 = vmatmul.mubr.f32.gmra.mrb[0].mxu0 %v2437
      %v2680 = vpop.f32.mrb[0].mxu0
      %v2681 = vadd.f32 0.0, %v2680
      %v2682 = vpop.f32.mrb[0].mxu0
      %2683 = vdwg.mxu0
      %v2684 = vadd.f32 %v2250, %v2506
      %v2685 = vadd.f32 %v2251, %v2511
      %v2686 = vadd.f32 %v2252, %v2516
      %v2687 = vadd.f32 %v2253, %v2521
      %v2688 = vadd.f32 %v2254, %v2526
      %v2689 = vadd.f32 %v2255, %v2531
      %v2690 = vadd.f32 %v2256, %v2536
      %v2691 = vadd.f32 %v2257, %v2541
      %v2692 = vadd.f32 %v2258, %v2546
      %v2693 = vadd.f32 %v2259, %v2551
      %v2694 = vadd.f32 %v2260, %v2556
      %v2695 = vadd.f32 %v2261, %v2561
      %v2696 = vadd.f32 %v2262, %v2566
      %v2697 = vadd.f32 %v2263, %v2571
      %v2698 = vadd.f32 %v2264, %v2576
      %v2699 = vadd.f32 %v2265, %v2581
      %v2700 = vadd.f32 %v2266, %v2586
      %v2701 = vadd.f32 %v2267, %v2591
      %v2702 = vadd.f32 %v2268, %v2596
      %v2703 = vadd.f32 %v2269, %v2601
      %v2704 = vadd.f32 %v2270, %v2606
      %v2705 = vadd.f32 %v2271, %v2611
      %v2706 = vadd.f32 %v2272, %v2616
      %v2707 = vadd.f32 %v2273, %v2621
      %v2708 = vadd.f32 %v2274, %v2626
      %v2709 = vadd.f32 %v2275, %v2631
      %v2710 = vadd.f32 %v2276, %v2636
      %v2711 = vadd.f32 %v2277, %v2641
      %v2712 = vadd.f32 %v2278, %v2646
      %v2713 = vadd.f32 %v2279, %v2651
      %v2714 = vadd.f32 %v2280, %v2656
      %v2715 = vadd.f32 %v2281, %v2661
      %v2716 = vadd.f32 %v2282, %v2666
      %v2717 = vadd.f32 %v2283, %v2671
      %v2718 = vadd.f32 %v2284, %v2676
      %v2719 = vadd.f32 %v2285, %v2681
      %v2720 = vld [vmem:[#allocation2 + $0x24] sm:$0xff]
      %v2721 = vld [vmem:[#allocation2 + $0x2c] sm:$0xff]
      %v2722 = vld [vmem:[#allocation2 + $0x34] sm:$0xff]
      %v2723 = vld [vmem:[#allocation2 + $0x3c] sm:$0xff]
      %v2724 = vld [vmem:[#allocation2 + $0x44] sm:$0xff]
      %v2725 = vld [vmem:[#allocation2 + $0x4c] sm:$0xff]
      %v2726 = vld [vmem:[#allocation2 + $0x54] sm:$0xff]
      %v2727 = vld [vmem:[#allocation2 + $0x5c] sm:$0xff]
      %v2728 = vld [vmem:[#allocation2 + $0x64] sm:$0xff]
      %v2729 = vld [vmem:[#allocation2 + $0x6c] sm:$0xff]
      %v2730 = vld [vmem:[#allocation2 + $0x74] sm:$0xff]
      %v2731 = vld [vmem:[#allocation2 + $0x7c] sm:$0xff]
      %v2732 = vld [vmem:[#allocation2 + $0x84] sm:$0xff]
      %v2733 = vld [vmem:[#allocation2 + $0x8c] sm:$0xff]
      %v2734 = vld [vmem:[#allocation2 + $0x94] sm:$0xff]
      %v2735 = vld [vmem:[#allocation2 + $0x9c] sm:$0xff]
      %v2736 = vld [vmem:[#allocation2 + $0xa4] sm:$0xff]
      %v2737 = vld [vmem:[#allocation2 + $0xac] sm:$0xff]
      %v2738 = vld [vmem:[#allocation2 + $0xb4] sm:$0xff]
      %v2739 = vld [vmem:[#allocation2 + $0xbc] sm:$0xff]
      %v2740 = vld [vmem:[#allocation2 + $0xc4] sm:$0xff]
      %v2741 = vld [vmem:[#allocation2 + $0xcc] sm:$0xff]
      %v2742 = vld [vmem:[#allocation2 + $0xd4] sm:$0xff]
      %v2743 = vld [vmem:[#allocation2 + $0xdc] sm:$0xff]
      %v2744 = vld [vmem:[#allocation2 + $0xe4] sm:$0xff]
      %v2745 = vld [vmem:[#allocation2 + $0xec] sm:$0xff]
      %v2746 = vld [vmem:[#allocation2 + $0xf4] sm:$0xff]
      %v2747 = vld [vmem:[#allocation2 + $0xfc] sm:$0xff]
      %v2748 = vld [vmem:[#allocation2 + $0x104] sm:$0xff]
      %v2749 = vld [vmem:[#allocation2 + $0x10c] sm:$0xff]
      %v2750 = vld [vmem:[#allocation2 + $0x114] sm:$0xff]
      %v2751 = vld [vmem:[#allocation2 + $0x11c] sm:$0xff]
      %v2752 = vld [vmem:[#allocation2 + $0x124] sm:$0xff]
      %v2753 = vld [vmem:[#allocation2 + $0x12c] sm:$0xff]
      %v2754 = vld [vmem:[#allocation2 + $0x134] sm:$0xff]
      %v2755 = vld [vmem:[#allocation2 + $0x13c] sm:$0xff]
      %s2756 = scalar_lea.vmem %s4, 256
      %v2757 = vld [vmem:[%s2756] sm:$0xff]
      %v2758 = vld [vmem:[%s2756 + $0x8] sm:$0xff]
      %v2759 = vld [vmem:[%s2756 + $0x10] sm:$0xff]
      %v2760 = vld [vmem:[%s2756 + $0x18] sm:$0xff]
      %v2761 = vld [vmem:[%s2756 + $0x20] sm:$0xff]
      %v2762 = vld [vmem:[%s2756 + $0x28] sm:$0xff]
      %v2763 = vld [vmem:[%s2756 + $0x30] sm:$0xff]
      %v2764 = vld [vmem:[%s2756 + $0x38] sm:$0xff]
      %v2766 = vsel %vm308, %v2720, 0
      %v2769 = vsel %vm308, %v2721, 0
      %v2772 = vsel %vm308, %v2722, 0
      %v2775 = vsel %vm308, %v2723, 0
      %v2778 = vsel %vm308, %v2724, 0
      %v2781 = vsel %vm308, %v2725, 0
      %v2784 = vsel %vm308, %v2726, 0
      %v2787 = vsel %vm308, %v2727, 0
      %v2790 = vsel %vm308, %v2728, 0
      %v2793 = vsel %vm308, %v2729, 0
      %v2796 = vsel %vm308, %v2730, 0
      %v2799 = vsel %vm308, %v2731, 0
      %v2802 = vsel %vm308, %v2732, 0
      %v2805 = vsel %vm308, %v2733, 0
      %v2808 = vsel %vm308, %v2734, 0
      %v2811 = vsel %vm308, %v2735, 0
      %v2814 = vsel %vm308, %v2736, 0
      %v2817 = vsel %vm308, %v2737, 0
      %v2820 = vsel %vm308, %v2738, 0
      %v2823 = vsel %vm308, %v2739, 0
      %v2826 = vsel %vm308, %v2740, 0
      %v2829 = vsel %vm308, %v2741, 0
      %v2832 = vsel %vm308, %v2742, 0
      %v2835 = vsel %vm308, %v2743, 0
      %v2838 = vsel %vm308, %v2744, 0
      %v2841 = vsel %vm308, %v2745, 0
      %v2844 = vsel %vm308, %v2746, 0
      %v2847 = vsel %vm308, %v2747, 0
      %v2850 = vsel %vm308, %v2748, 0
      %v2853 = vsel %vm308, %v2749, 0
      %v2856 = vsel %vm308, %v2750, 0
      %v2859 = vsel %vm308, %v2751, 0
      %v2862 = vsel %vm308, %v2752, 0
      %v2865 = vsel %vm308, %v2753, 0
      %v2868 = vsel %vm308, %v2754, 0
      %v2871 = vsel %vm308, %v2755, 0
      %2873 = vmatprep.subr.mxu0 0.0
      %2874 = vmatpush1.msra.mxu0 %v2757
      %2875 = vmatprep.subr.mxu0 0.0
      %2876 = vmatpush1.msra.mxu0 %v2758
      %2877 = vmatprep.subr.mxu0 0.0
      %2878 = vmatpush1.msra.mxu0 %v2759
      %2879 = vmatprep.subr.mxu0 0.0
      %2880 = vmatpush1.msra.mxu0 %v2760
      %2881 = vmatprep.subr.mxu0 0.0
      %2882 = vmatpush1.msra.mxu0 %v2761
      %2883 = vmatprep.subr.mxu0 0.0
      %2884 = vmatpush1.msra.mxu0 %v2762
      %2885 = vmatprep.subr.mxu0 0.0
      %2886 = vmatpush1.msra.mxu0 %v2763
      %2887 = vmatprep.subr.mxu0 0.0
      %2888 = vmatpush1.msra.mxu0 %v2764
      %2889 = vmatprep.subr.mxu0 0.0
      %2890 = vmatpush1.msra.mxu0 0.0
      %2891 = vmatprep.subr.mxu0 0.0
      %2892 = vmatpush1.msra.mxu0 0.0
      %2893 = vmatprep.subr.mxu0 0.0
      %2894 = vmatpush1.msra.mxu0 0.0
      %2895 = vmatprep.subr.mxu0 0.0
      %2896 = vmatpush1.msra.mxu0 0.0
      %2897 = vmatprep.subr.mxu0 0.0
      %2898 = vmatpush1.msra.mxu0 0.0
      %2899 = vmatprep.subr.mxu0 0.0
      %2900 = vmatpush1.msra.mxu0 0.0
      %2901 = vmatprep.subr.mxu0 0.0
      %2902 = vmatpush1.msra.mxu0 0.0
      %2903 = vmatprep.subr.mxu0 0.0
      %2904 = vmatpush1.msra.mxu0 0.0
      %2905 = vmatprep.subr.mxu0 0.0
      %2906 = vmatpush1.msra.mxu0 0.0
      %2907 = vmatprep.subr.mxu0 0.0
      %2908 = vmatpush1.msra.mxu0 0.0
      %2909 = vmatprep.subr.mxu0 0.0
      %2910 = vmatpush1.msra.mxu0 0.0
      %2911 = vmatprep.subr.mxu0 0.0
      %2912 = vmatpush1.msra.mxu0 0.0
      %2913 = vmatprep.subr.mxu0 0.0
      %2914 = vmatpush1.msra.mxu0 0.0
      %2915 = vmatprep.subr.mxu0 0.0
      %2916 = vmatpush1.msra.mxu0 0.0
      %2917 = vmatprep.subr.mxu0 0.0
      %2918 = vmatpush1.msra.mxu0 0.0
      %2919 = vmatprep.subr.mxu0 0.0
      %2920 = vmatpush1.msra.mxu0 0.0
      %2921 = vmatprep.subr.mxu0 0.0
      %2922 = vmatpush1.msra.mxu0 0.0
      %2923 = vmatprep.subr.mxu0 0.0
      %2924 = vmatpush1.msra.mxu0 0.0
      %2925 = vmatprep.subr.mxu0 0.0
      %2926 = vmatpush1.msra.mxu0 0.0
      %2927 = vmatprep.subr.mxu0 0.0
      %2928 = vmatpush1.msra.mxu0 0.0
      %2929 = vmatprep.subr.mxu0 0.0
      %2930 = vmatpush1.msra.mxu0 0.0
      %2931 = vmatprep.subr.mxu0 0.0
      %2932 = vmatpush1.msra.mxu0 0.0
      %2933 = vmatprep.subr.mxu0 0.0
      %2934 = vmatpush1.msra.mxu0 0.0
      %2935 = vmatprep.subr.mxu0 0.0
      %2936 = vmatpush1.msra.mxu0 0.0
      %2937 = vmatprep.mubr.f32.mxu0 0.0
      %2938 = vmatmul.mubr.f32.gmra.mrb[0].mxu0 %v2766
      %v2939 = vpop.f32.mrb[0].mxu0
      %v2940 = vadd.f32 0.0, %v2939
      %v2941 = vpop.f32.mrb[0].mxu0
      %2942 = vmatprep.mubr.f32.mxu0 0.0
      %2943 = vmatmul.mubr.f32.gmra.mrb[0].mxu0 %v2769
      %v2944 = vpop.f32.mrb[0].mxu0
      %v2945 = vadd.f32 0.0, %v2944
      %v2946 = vpop.f32.mrb[0].mxu0
      %2947 = vmatprep.mubr.f32.mxu0 0.0
      %2948 = vmatmul.mubr.f32.gmra.mrb[0].mxu0 %v2772
      %v2949 = vpop.f32.mrb[0].mxu0
      %v2950 = vadd.f32 0.0, %v2949
      %v2951 = vpop.f32.mrb[0].mxu0
      %2952 = vmatprep.mubr.f32.mxu0 0.0
      %2953 = vmatmul.mubr.f32.gmra.mrb[0].mxu0 %v2775
      %v2954 = vpop.f32.mrb[0].mxu0
      %v2955 = vadd.f32 0.0, %v2954
      %v2956 = vpop.f32.mrb[0].mxu0
      %2957 = vmatprep.mubr.f32.mxu0 0.0
      %2958 = vmatmul.mubr.f32.gmra.mrb[0].mxu0 %v2778
      %v2959 = vpop.f32.mrb[0].mxu0
      %v2960 = vadd.f32 0.0, %v2959
      %v2961 = vpop.f32.mrb[0].mxu0
      %2962 = vmatprep.mubr.f32.mxu0 0.0
      %2963 = vmatmul.mubr.f32.gmra.mrb[0].mxu0 %v2781
      %v2964 = vpop.f32.mrb[0].mxu0
      %v2965 = vadd.f32 0.0, %v2964
      %v2966 = vpop.f32.mrb[0].mxu0
      %2967 = vmatprep.mubr.f32.mxu0 0.0
      %2968 = vmatmul.mubr.f32.gmra.mrb[0].mxu0 %v2784
      %v2969 = vpop.f32.mrb[0].mxu0
      %v2970 = vadd.f32 0.0, %v2969
      %v2971 = vpop.f32.mrb[0].mxu0
      %2972 = vmatprep.mubr.f32.mxu0 0.0
      %2973 = vmatmul.mubr.f32.gmra.mrb[0].mxu0 %v2787
      %v2974 = vpop.f32.mrb[0].mxu0
      %v2975 = vadd.f32 0.0, %v2974
      %v2976 = vpop.f32.mrb[0].mxu0
      %2977 = vmatprep.mubr.f32.mxu0 0.0
      %2978 = vmatmul.mubr.f32.gmra.mrb[0].mxu0 %v2790
      %v2979 = vpop.f32.mrb[0].mxu0
      %v2980 = vadd.f32 0.0, %v2979
      %v2981 = vpop.f32.mrb[0].mxu0
      %2982 = vmatprep.mubr.f32.mxu0 0.0
      %2983 = vmatmul.mubr.f32.gmra.mrb[0].mxu0 %v2793
      %v2984 = vpop.f32.mrb[0].mxu0
      %v2985 = vadd.f32 0.0, %v2984
      %v2986 = vpop.f32.mrb[0].mxu0
      %2987 = vmatprep.mubr.f32.mxu0 0.0
      %2988 = vmatmul.mubr.f32.gmra.mrb[0].mxu0 %v2796
      %v2989 = vpop.f32.mrb[0].mxu0
      %v2990 = vadd.f32 0.0, %v2989
      %v2991 = vpop.f32.mrb[0].mxu0
      %2992 = vmatprep.mubr.f32.mxu0 0.0
      %2993 = vmatmul.mubr.f32.gmra.mrb[0].mxu0 %v2799
      %v2994 = vpop.f32.mrb[0].mxu0
      %v2995 = vadd.f32 0.0, %v2994
      %v2996 = vpop.f32.mrb[0].mxu0
      %2997 = vmatprep.mubr.f32.mxu0 0.0
      %2998 = vmatmul.mubr.f32.gmra.mrb[0].mxu0 %v2802
      %v2999 = vpop.f32.mrb[0].mxu0
      %v3000 = vadd.f32 0.0, %v2999
      %v3001 = vpop.f32.mrb[0].mxu0
      %3002 = vmatprep.mubr.f32.mxu0 0.0
      %3003 = vmatmul.mubr.f32.gmra.mrb[0].mxu0 %v2805
      %v3004 = vpop.f32.mrb[0].mxu0
      %v3005 = vadd.f32 0.0, %v3004
      %v3006 = vpop.f32.mrb[0].mxu0
      %3007 = vmatprep.mubr.f32.mxu0 0.0
      %3008 = vmatmul.mubr.f32.gmra.mrb[0].mxu0 %v2808
      %v3009 = vpop.f32.mrb[0].mxu0
      %v3010 = vadd.f32 0.0, %v3009
      %v3011 = vpop.f32.mrb[0].mxu0
      %3012 = vmatprep.mubr.f32.mxu0 0.0
      %3013 = vmatmul.mubr.f32.gmra.mrb[0].mxu0 %v2811
      %v3014 = vpop.f32.mrb[0].mxu0
      %v3015 = vadd.f32 0.0, %v3014
      %v3016 = vpop.f32.mrb[0].mxu0
      %3017 = vmatprep.mubr.f32.mxu0 0.0
      %3018 = vmatmul.mubr.f32.gmra.mrb[0].mxu0 %v2814
      %v3019 = vpop.f32.mrb[0].mxu0
      %v3020 = vadd.f32 0.0, %v3019
      %v3021 = vpop.f32.mrb[0].mxu0
      %3022 = vmatprep.mubr.f32.mxu0 0.0
      %3023 = vmatmul.mubr.f32.gmra.mrb[0].mxu0 %v2817
      %v3024 = vpop.f32.mrb[0].mxu0
      %v3025 = vadd.f32 0.0, %v3024
      %v3026 = vpop.f32.mrb[0].mxu0
      %3027 = vmatprep.mubr.f32.mxu0 0.0
      %3028 = vmatmul.mubr.f32.gmra.mrb[0].mxu0 %v2820
      %v3029 = vpop.f32.mrb[0].mxu0
      %v3030 = vadd.f32 0.0, %v3029
      %v3031 = vpop.f32.mrb[0].mxu0
      %3032 = vmatprep.mubr.f32.mxu0 0.0
      %3033 = vmatmul.mubr.f32.gmra.mrb[0].mxu0 %v2823
      %v3034 = vpop.f32.mrb[0].mxu0
      %v3035 = vadd.f32 0.0, %v3034
      %v3036 = vpop.f32.mrb[0].mxu0
      %3037 = vmatprep.mubr.f32.mxu0 0.0
      %3038 = vmatmul.mubr.f32.gmra.mrb[0].mxu0 %v2826
      %v3039 = vpop.f32.mrb[0].mxu0
      %v3040 = vadd.f32 0.0, %v3039
      %v3041 = vpop.f32.mrb[0].mxu0
      %3042 = vmatprep.mubr.f32.mxu0 0.0
      %3043 = vmatmul.mubr.f32.gmra.mrb[0].mxu0 %v2829
      %v3044 = vpop.f32.mrb[0].mxu0
      %v3045 = vadd.f32 0.0, %v3044
      %v3046 = vpop.f32.mrb[0].mxu0
      %3047 = vmatprep.mubr.f32.mxu0 0.0
      %3048 = vmatmul.mubr.f32.gmra.mrb[0].mxu0 %v2832
      %v3049 = vpop.f32.mrb[0].mxu0
      %v3050 = vadd.f32 0.0, %v3049
      %v3051 = vpop.f32.mrb[0].mxu0
      %3052 = vmatprep.mubr.f32.mxu0 0.0
      %3053 = vmatmul.mubr.f32.gmra.mrb[0].mxu0 %v2835
      %v3054 = vpop.f32.mrb[0].mxu0
      %v3055 = vadd.f32 0.0, %v3054
      %v3056 = vpop.f32.mrb[0].mxu0
      %3057 = vmatprep.mubr.f32.mxu0 0.0
      %3058 = vmatmul.mubr.f32.gmra.mrb[0].mxu0 %v2838
      %v3059 = vpop.f32.mrb[0].mxu0
      %v3060 = vadd.f32 0.0, %v3059
      %v3061 = vpop.f32.mrb[0].mxu0
      %3062 = vmatprep.mubr.f32.mxu0 0.0
      %3063 = vmatmul.mubr.f32.gmra.mrb[0].mxu0 %v2841
      %v3064 = vpop.f32.mrb[0].mxu0
      %v3065 = vadd.f32 0.0, %v3064
      %v3066 = vpop.f32.mrb[0].mxu0
      %3067 = vmatprep.mubr.f32.mxu0 0.0
      %3068 = vmatmul.mubr.f32.gmra.mrb[0].mxu0 %v2844
      %v3069 = vpop.f32.mrb[0].mxu0
      %v3070 = vadd.f32 0.0, %v3069
      %v3071 = vpop.f32.mrb[0].mxu0
      %3072 = vmatprep.mubr.f32.mxu0 0.0
      %3073 = vmatmul.mubr.f32.gmra.mrb[0].mxu0 %v2847
      %v3074 = vpop.f32.mrb[0].mxu0
      %v3075 = vadd.f32 0.0, %v3074
      %v3076 = vpop.f32.mrb[0].mxu0
      %3077 = vmatprep.mubr.f32.mxu0 0.0
      %3078 = vmatmul.mubr.f32.gmra.mrb[0].mxu0 %v2850
      %v3079 = vpop.f32.mrb[0].mxu0
      %v3080 = vadd.f32 0.0, %v3079
      %v3081 = vpop.f32.mrb[0].mxu0
      %3082 = vmatprep.mubr.f32.mxu0 0.0
      %3083 = vmatmul.mubr.f32.gmra.mrb[0].mxu0 %v2853
      %v3084 = vpop.f32.mrb[0].mxu0
      %v3085 = vadd.f32 0.0, %v3084
      %v3086 = vpop.f32.mrb[0].mxu0
      %3087 = vmatprep.mubr.f32.mxu0 0.0
      %3088 = vmatmul.mubr.f32.gmra.mrb[0].mxu0 %v2856
      %v3089 = vpop.f32.mrb[0].mxu0
      %v3090 = vadd.f32 0.0, %v3089
      %v3091 = vpop.f32.mrb[0].mxu0
      %3092 = vmatprep.mubr.f32.mxu0 0.0
      %3093 = vmatmul.mubr.f32.gmra.mrb[0].mxu0 %v2859
      %v3094 = vpop.f32.mrb[0].mxu0
      %v3095 = vadd.f32 0.0, %v3094
      %v3096 = vpop.f32.mrb[0].mxu0
      %3097 = vmatprep.mubr.f32.mxu0 0.0
      %3098 = vmatmul.mubr.f32.gmra.mrb[0].mxu0 %v2862
      %v3099 = vpop.f32.mrb[0].mxu0
      %v3100 = vadd.f32 0.0, %v3099
      %v3101 = vpop.f32.mrb[0].mxu0
      %3102 = vmatprep.mubr.f32.mxu0 0.0
      %3103 = vmatmul.mubr.f32.gmra.mrb[0].mxu0 %v2865
      %v3104 = vpop.f32.mrb[0].mxu0
      %v3105 = vadd.f32 0.0, %v3104
      %v3106 = vpop.f32.mrb[0].mxu0
      %3107 = vmatprep.mubr.f32.mxu0 0.0
      %3108 = vmatmul.mubr.f32.gmra.mrb[0].mxu0 %v2868
      %v3109 = vpop.f32.mrb[0].mxu0
      %v3110 = vadd.f32 0.0, %v3109
      %v3111 = vpop.f32.mrb[0].mxu0
      %3112 = vmatprep.mubr.f32.mxu0 0.0
      %3113 = vmatmul.mubr.f32.gmra.mrb[0].mxu0 %v2871
      %v3114 = vpop.f32.mrb[0].mxu0
      %v3115 = vadd.f32 0.0, %v3114
      %v3116 = vpop.f32.mrb[0].mxu0
      %3117 = vdwg.mxu0
      %v3118 = vadd.f32 %v2684, %v2940
      %v3119 = vadd.f32 %v2685, %v2945
      %v3120 = vadd.f32 %v2686, %v2950
      %v3121 = vadd.f32 %v2687, %v2955
      %v3122 = vadd.f32 %v2688, %v2960
      %v3123 = vadd.f32 %v2689, %v2965
      %v3124 = vadd.f32 %v2690, %v2970
      %v3125 = vadd.f32 %v2691, %v2975
      %v3126 = vadd.f32 %v2692, %v2980
      %v3127 = vadd.f32 %v2693, %v2985
      %v3128 = vadd.f32 %v2694, %v2990
      %v3129 = vadd.f32 %v2695, %v2995
      %v3130 = vadd.f32 %v2696, %v3000
      %v3131 = vadd.f32 %v2697, %v3005
      %v3132 = vadd.f32 %v2698, %v3010
      %v3133 = vadd.f32 %v2699, %v3015
      %v3134 = vadd.f32 %v2700, %v3020
      %v3135 = vadd.f32 %v2701, %v3025
      %v3136 = vadd.f32 %v2702, %v3030
      %v3137 = vadd.f32 %v2703, %v3035
      %v3138 = vadd.f32 %v2704, %v3040
      %v3139 = vadd.f32 %v2705, %v3045
      %v3140 = vadd.f32 %v2706, %v3050
      %v3141 = vadd.f32 %v2707, %v3055
      %v3142 = vadd.f32 %v2708, %v3060
      %v3143 = vadd.f32 %v2709, %v3065
      %v3144 = vadd.f32 %v2710, %v3070
      %v3145 = vadd.f32 %v2711, %v3075
      %v3146 = vadd.f32 %v2712, %v3080
      %v3147 = vadd.f32 %v2713, %v3085
      %v3148 = vadd.f32 %v2714, %v3090
      %v3149 = vadd.f32 %v2715, %v3095
      %v3150 = vadd.f32 %v2716, %v3100
      %v3151 = vadd.f32 %v2717, %v3105
      %v3152 = vadd.f32 %v2718, %v3110
      %v3153 = vadd.f32 %v2719, %v3115
      %v3154 = vld [vmem:[#allocation2 + $0x25] sm:$0xff]
      %v3155 = vld [vmem:[#allocation2 + $0x2d] sm:$0xff]
      %v3156 = vld [vmem:[#allocation2 + $0x35] sm:$0xff]
      %v3157 = vld [vmem:[#allocation2 + $0x3d] sm:$0xff]
      %v3158 = vld [vmem:[#allocation2 + $0x45] sm:$0xff]
      %v3159 = vld [vmem:[#allocation2 + $0x4d] sm:$0xff]
      %v3160 = vld [vmem:[#allocation2 + $0x55] sm:$0xff]
      %v3161 = vld [vmem:[#allocation2 + $0x5d] sm:$0xff]
      %v3162 = vld [vmem:[#allocation2 + $0x65] sm:$0xff]
      %v3163 = vld [vmem:[#allocation2 + $0x6d] sm:$0xff]
      %v3164 = vld [vmem:[#allocation2 + $0x75] sm:$0xff]
      %v3165 = vld [vmem:[#allocation2 + $0x7d] sm:$0xff]
      %v3166 = vld [vmem:[#allocation2 + $0x85] sm:$0xff]
      %v3167 = vld [vmem:[#allocation2 + $0x8d] sm:$0xff]
      %v3168 = vld [vmem:[#allocation2 + $0x95] sm:$0xff]
      %v3169 = vld [vmem:[#allocation2 + $0x9d] sm:$0xff]
      %v3170 = vld [vmem:[#allocation2 + $0xa5] sm:$0xff]
      %v3171 = vld [vmem:[#allocation2 + $0xad] sm:$0xff]
      %v3172 = vld [vmem:[#allocation2 + $0xb5] sm:$0xff]
      %v3173 = vld [vmem:[#allocation2 + $0xbd] sm:$0xff]
      %v3174 = vld [vmem:[#allocation2 + $0xc5] sm:$0xff]
      %v3175 = vld [vmem:[#allocation2 + $0xcd] sm:$0xff]
      %v3176 = vld [vmem:[#allocation2 + $0xd5] sm:$0xff]
      %v3177 = vld [vmem:[#allocation2 + $0xdd] sm:$0xff]
      %v3178 = vld [vmem:[#allocation2 + $0xe5] sm:$0xff]
      %v3179 = vld [vmem:[#allocation2 + $0xed] sm:$0xff]
      %v3180 = vld [vmem:[#allocation2 + $0xf5] sm:$0xff]
      %v3181 = vld [vmem:[#allocation2 + $0xfd] sm:$0xff]
      %v3182 = vld [vmem:[#allocation2 + $0x105] sm:$0xff]
      %v3183 = vld [vmem:[#allocation2 + $0x10d] sm:$0xff]
      %v3184 = vld [vmem:[#allocation2 + $0x115] sm:$0xff]
      %v3185 = vld [vmem:[#allocation2 + $0x11d] sm:$0xff]
      %v3186 = vld [vmem:[#allocation2 + $0x125] sm:$0xff]
      %v3187 = vld [vmem:[#allocation2 + $0x12d] sm:$0xff]
      %v3188 = vld [vmem:[#allocation2 + $0x135] sm:$0xff]
      %v3189 = vld [vmem:[#allocation2 + $0x13d] sm:$0xff]
      %s3190 = scalar_lea.vmem %s4, 320
      %v3191 = vld [vmem:[%s3190] sm:$0xff]
      %v3192 = vld [vmem:[%s3190 + $0x8] sm:$0xff]
      %v3193 = vld [vmem:[%s3190 + $0x10] sm:$0xff]
      %v3194 = vld [vmem:[%s3190 + $0x18] sm:$0xff]
      %v3195 = vld [vmem:[%s3190 + $0x20] sm:$0xff]
      %v3196 = vld [vmem:[%s3190 + $0x28] sm:$0xff]
      %v3197 = vld [vmem:[%s3190 + $0x30] sm:$0xff]
      %v3198 = vld [vmem:[%s3190 + $0x38] sm:$0xff]
      %v3200 = vsel %vm308, %v3154, 0
      %v3203 = vsel %vm308, %v3155, 0
      %v3206 = vsel %vm308, %v3156, 0
      %v3209 = vsel %vm308, %v3157, 0
      %v3212 = vsel %vm308, %v3158, 0
      %v3215 = vsel %vm308, %v3159, 0
      %v3218 = vsel %vm308, %v3160, 0
      %v3221 = vsel %vm308, %v3161, 0
      %v3224 = vsel %vm308, %v3162, 0
      %v3227 = vsel %vm308, %v3163, 0
      %v3230 = vsel %vm308, %v3164, 0
      %v3233 = vsel %vm308, %v3165, 0
      %v3236 = vsel %vm308, %v3166, 0
      %v3239 = vsel %vm308, %v3167, 0
      %v3242 = vsel %vm308, %v3168, 0
      %v3245 = vsel %vm308, %v3169, 0
      %v3248 = vsel %vm308, %v3170, 0
      %v3251 = vsel %vm308, %v3171, 0
      %v3254 = vsel %vm308, %v3172, 0
      %v3257 = vsel %vm308, %v3173, 0
      %v3260 = vsel %vm308, %v3174, 0
      %v3263 = vsel %vm308, %v3175, 0
      %v3266 = vsel %vm308, %v3176, 0
      %v3269 = vsel %vm308, %v3177, 0
      %v3272 = vsel %vm308, %v3178, 0
      %v3275 = vsel %vm308, %v3179, 0
      %v3278 = vsel %vm308, %v3180, 0
      %v3281 = vsel %vm308, %v3181, 0
      %v3284 = vsel %vm308, %v3182, 0
      %v3287 = vsel %vm308, %v3183, 0
      %v3290 = vsel %vm308, %v3184, 0
      %v3293 = vsel %vm308, %v3185, 0
      %v3296 = vsel %vm308, %v3186, 0
      %v3299 = vsel %vm308, %v3187, 0
      %v3302 = vsel %vm308, %v3188, 0
      %v3305 = vsel %vm308, %v3189, 0
      %3307 = vmatprep.subr.mxu0 0.0
      %3308 = vmatpush1.msra.mxu0 %v3191
      %3309 = vmatprep.subr.mxu0 0.0
      %3310 = vmatpush1.msra.mxu0 %v3192
      %3311 = vmatprep.subr.mxu0 0.0
      %3312 = vmatpush1.msra.mxu0 %v3193
      %3313 = vmatprep.subr.mxu0 0.0
      %3314 = vmatpush1.msra.mxu0 %v3194
      %3315 = vmatprep.subr.mxu0 0.0
      %3316 = vmatpush1.msra.mxu0 %v3195
      %3317 = vmatprep.subr.mxu0 0.0
      %3318 = vmatpush1.msra.mxu0 %v3196
      %3319 = vmatprep.subr.mxu0 0.0
      %3320 = vmatpush1.msra.mxu0 %v3197
      %3321 = vmatprep.subr.mxu0 0.0
      %3322 = vmatpush1.msra.mxu0 %v3198
      %3323 = vmatprep.subr.mxu0 0.0
      %3324 = vmatpush1.msra.mxu0 0.0
      %3325 = vmatprep.subr.mxu0 0.0
      %3326 = vmatpush1.msra.mxu0 0.0
      %3327 = vmatprep.subr.mxu0 0.0
      %3328 = vmatpush1.msra.mxu0 0.0
      %3329 = vmatprep.subr.mxu0 0.0
      %3330 = vmatpush1.msra.mxu0 0.0
      %3331 = vmatprep.subr.mxu0 0.0
      %3332 = vmatpush1.msra.mxu0 0.0
      %3333 = vmatprep.subr.mxu0 0.0
      %3334 = vmatpush1.msra.mxu0 0.0
      %3335 = vmatprep.subr.mxu0 0.0
      %3336 = vmatpush1.msra.mxu0 0.0
      %3337 = vmatprep.subr.mxu0 0.0
      %3338 = vmatpush1.msra.mxu0 0.0
      %3339 = vmatprep.subr.mxu0 0.0
      %3340 = vmatpush1.msra.mxu0 0.0
      %3341 = vmatprep.subr.mxu0 0.0
      %3342 = vmatpush1.msra.mxu0 0.0
      %3343 = vmatprep.subr.mxu0 0.0
      %3344 = vmatpush1.msra.mxu0 0.0
      %3345 = vmatprep.subr.mxu0 0.0
      %3346 = vmatpush1.msra.mxu0 0.0
      %3347 = vmatprep.subr.mxu0 0.0
      %3348 = vmatpush1.msra.mxu0 0.0
      %3349 = vmatprep.subr.mxu0 0.0
      %3350 = vmatpush1.msra.mxu0 0.0
      %3351 = vmatprep.subr.mxu0 0.0
      %3352 = vmatpush1.msra.mxu0 0.0
      %3353 = vmatprep.subr.mxu0 0.0
      %3354 = vmatpush1.msra.mxu0 0.0
      %3355 = vmatprep.subr.mxu0 0.0
      %3356 = vmatpush1.msra.mxu0 0.0
      %3357 = vmatprep.subr.mxu0 0.0
      %3358 = vmatpush1.msra.mxu0 0.0
      %3359 = vmatprep.subr.mxu0 0.0
      %3360 = vmatpush1.msra.mxu0 0.0
      %3361 = vmatprep.subr.mxu0 0.0
      %3362 = vmatpush1.msra.mxu0 0.0
      %3363 = vmatprep.subr.mxu0 0.0
      %3364 = vmatpush1.msra.mxu0 0.0
      %3365 = vmatprep.subr.mxu0 0.0
      %3366 = vmatpush1.msra.mxu0 0.0
      %3367 = vmatprep.subr.mxu0 0.0
      %3368 = vmatpush1.msra.mxu0 0.0
      %3369 = vmatprep.subr.mxu0 0.0
      %3370 = vmatpush1.msra.mxu0 0.0
      %3371 = vmatprep.mubr.f32.mxu0 0.0
      %3372 = vmatmul.mubr.f32.gmra.mrb[0].mxu0 %v3200
      %v3373 = vpop.f32.mrb[0].mxu0
      %v3374 = vadd.f32 0.0, %v3373
      %v3375 = vpop.f32.mrb[0].mxu0
      %3376 = vmatprep.mubr.f32.mxu0 0.0
      %3377 = vmatmul.mubr.f32.gmra.mrb[0].mxu0 %v3203
      %v3378 = vpop.f32.mrb[0].mxu0
      %v3379 = vadd.f32 0.0, %v3378
      %v3380 = vpop.f32.mrb[0].mxu0
      %3381 = vmatprep.mubr.f32.mxu0 0.0
      %3382 = vmatmul.mubr.f32.gmra.mrb[0].mxu0 %v3206
      %v3383 = vpop.f32.mrb[0].mxu0
      %v3384 = vadd.f32 0.0, %v3383
      %v3385 = vpop.f32.mrb[0].mxu0
      %3386 = vmatprep.mubr.f32.mxu0 0.0
      %3387 = vmatmul.mubr.f32.gmra.mrb[0].mxu0 %v3209
      %v3388 = vpop.f32.mrb[0].mxu0
      %v3389 = vadd.f32 0.0, %v3388
      %v3390 = vpop.f32.mrb[0].mxu0
      %3391 = vmatprep.mubr.f32.mxu0 0.0
      %3392 = vmatmul.mubr.f32.gmra.mrb[0].mxu0 %v3212
      %v3393 = vpop.f32.mrb[0].mxu0
      %v3394 = vadd.f32 0.0, %v3393
      %v3395 = vpop.f32.mrb[0].mxu0
      %3396 = vmatprep.mubr.f32.mxu0 0.0
      %3397 = vmatmul.mubr.f32.gmra.mrb[0].mxu0 %v3215
      %v3398 = vpop.f32.mrb[0].mxu0
      %v3399 = vadd.f32 0.0, %v3398
      %v3400 = vpop.f32.mrb[0].mxu0
      %3401 = vmatprep.mubr.f32.mxu0 0.0
      %3402 = vmatmul.mubr.f32.gmra.mrb[0].mxu0 %v3218
      %v3403 = vpop.f32.mrb[0].mxu0
      %v3404 = vadd.f32 0.0, %v3403
      %v3405 = vpop.f32.mrb[0].mxu0
      %3406 = vmatprep.mubr.f32.mxu0 0.0
      %3407 = vmatmul.mubr.f32.gmra.mrb[0].mxu0 %v3221
      %v3408 = vpop.f32.mrb[0].mxu0
      %v3409 = vadd.f32 0.0, %v3408
      %v3410 = vpop.f32.mrb[0].mxu0
      %3411 = vmatprep.mubr.f32.mxu0 0.0
      %3412 = vmatmul.mubr.f32.gmra.mrb[0].mxu0 %v3224
      %v3413 = vpop.f32.mrb[0].mxu0
      %v3414 = vadd.f32 0.0, %v3413
      %v3415 = vpop.f32.mrb[0].mxu0
      %3416 = vmatprep.mubr.f32.mxu0 0.0
      %3417 = vmatmul.mubr.f32.gmra.mrb[0].mxu0 %v3227
      %v3418 = vpop.f32.mrb[0].mxu0
      %v3419 = vadd.f32 0.0, %v3418
      %v3420 = vpop.f32.mrb[0].mxu0
      %3421 = vmatprep.mubr.f32.mxu0 0.0
      %3422 = vmatmul.mubr.f32.gmra.mrb[0].mxu0 %v3230
      %v3423 = vpop.f32.mrb[0].mxu0
      %v3424 = vadd.f32 0.0, %v3423
      %v3425 = vpop.f32.mrb[0].mxu0
      %3426 = vmatprep.mubr.f32.mxu0 0.0
      %3427 = vmatmul.mubr.f32.gmra.mrb[0].mxu0 %v3233
      %v3428 = vpop.f32.mrb[0].mxu0
      %v3429 = vadd.f32 0.0, %v3428
      %v3430 = vpop.f32.mrb[0].mxu0
      %3431 = vmatprep.mubr.f32.mxu0 0.0
      %3432 = vmatmul.mubr.f32.gmra.mrb[0].mxu0 %v3236
      %v3433 = vpop.f32.mrb[0].mxu0
      %v3434 = vadd.f32 0.0, %v3433
      %v3435 = vpop.f32.mrb[0].mxu0
      %3436 = vmatprep.mubr.f32.mxu0 0.0
      %3437 = vmatmul.mubr.f32.gmra.mrb[0].mxu0 %v3239
      %v3438 = vpop.f32.mrb[0].mxu0
      %v3439 = vadd.f32 0.0, %v3438
      %v3440 = vpop.f32.mrb[0].mxu0
      %3441 = vmatprep.mubr.f32.mxu0 0.0
      %3442 = vmatmul.mubr.f32.gmra.mrb[0].mxu0 %v3242
      %v3443 = vpop.f32.mrb[0].mxu0
      %v3444 = vadd.f32 0.0, %v3443
      %v3445 = vpop.f32.mrb[0].mxu0
      %3446 = vmatprep.mubr.f32.mxu0 0.0
      %3447 = vmatmul.mubr.f32.gmra.mrb[0].mxu0 %v3245
      %v3448 = vpop.f32.mrb[0].mxu0
      %v3449 = vadd.f32 0.0, %v3448
      %v3450 = vpop.f32.mrb[0].mxu0
      %3451 = vmatprep.mubr.f32.mxu0 0.0
      %3452 = vmatmul.mubr.f32.gmra.mrb[0].mxu0 %v3248
      %v3453 = vpop.f32.mrb[0].mxu0
      %v3454 = vadd.f32 0.0, %v3453
      %v3455 = vpop.f32.mrb[0].mxu0
      %3456 = vmatprep.mubr.f32.mxu0 0.0
      %3457 = vmatmul.mubr.f32.gmra.mrb[0].mxu0 %v3251
      %v3458 = vpop.f32.mrb[0].mxu0
      %v3459 = vadd.f32 0.0, %v3458
      %v3460 = vpop.f32.mrb[0].mxu0
      %3461 = vmatprep.mubr.f32.mxu0 0.0
      %3462 = vmatmul.mubr.f32.gmra.mrb[0].mxu0 %v3254
      %v3463 = vpop.f32.mrb[0].mxu0
      %v3464 = vadd.f32 0.0, %v3463
      %v3465 = vpop.f32.mrb[0].mxu0
      %3466 = vmatprep.mubr.f32.mxu0 0.0
      %3467 = vmatmul.mubr.f32.gmra.mrb[0].mxu0 %v3257
      %v3468 = vpop.f32.mrb[0].mxu0
      %v3469 = vadd.f32 0.0, %v3468
      %v3470 = vpop.f32.mrb[0].mxu0
      %3471 = vmatprep.mubr.f32.mxu0 0.0
      %3472 = vmatmul.mubr.f32.gmra.mrb[0].mxu0 %v3260
      %v3473 = vpop.f32.mrb[0].mxu0
      %v3474 = vadd.f32 0.0, %v3473
      %v3475 = vpop.f32.mrb[0].mxu0
      %3476 = vmatprep.mubr.f32.mxu0 0.0
      %3477 = vmatmul.mubr.f32.gmra.mrb[0].mxu0 %v3263
      %v3478 = vpop.f32.mrb[0].mxu0
      %v3479 = vadd.f32 0.0, %v3478
      %v3480 = vpop.f32.mrb[0].mxu0
      %3481 = vmatprep.mubr.f32.mxu0 0.0
      %3482 = vmatmul.mubr.f32.gmra.mrb[0].mxu0 %v3266
      %v3483 = vpop.f32.mrb[0].mxu0
      %v3484 = vadd.f32 0.0, %v3483
      %v3485 = vpop.f32.mrb[0].mxu0
      %3486 = vmatprep.mubr.f32.mxu0 0.0
      %3487 = vmatmul.mubr.f32.gmra.mrb[0].mxu0 %v3269
      %v3488 = vpop.f32.mrb[0].mxu0
      %v3489 = vadd.f32 0.0, %v3488
      %v3490 = vpop.f32.mrb[0].mxu0
      %3491 = vmatprep.mubr.f32.mxu0 0.0
      %3492 = vmatmul.mubr.f32.gmra.mrb[0].mxu0 %v3272
      %v3493 = vpop.f32.mrb[0].mxu0
      %v3494 = vadd.f32 0.0, %v3493
      %v3495 = vpop.f32.mrb[0].mxu0
      %3496 = vmatprep.mubr.f32.mxu0 0.0
      %3497 = vmatmul.mubr.f32.gmra.mrb[0].mxu0 %v3275
      %v3498 = vpop.f32.mrb[0].mxu0
      %v3499 = vadd.f32 0.0, %v3498
      %v3500 = vpop.f32.mrb[0].mxu0
      %3501 = vmatprep.mubr.f32.mxu0 0.0
      %3502 = vmatmul.mubr.f32.gmra.mrb[0].mxu0 %v3278
      %v3503 = vpop.f32.mrb[0].mxu0
      %v3504 = vadd.f32 0.0, %v3503
      %v3505 = vpop.f32.mrb[0].mxu0
      %3506 = vmatprep.mubr.f32.mxu0 0.0
      %3507 = vmatmul.mubr.f32.gmra.mrb[0].mxu0 %v3281
      %v3508 = vpop.f32.mrb[0].mxu0
      %v3509 = vadd.f32 0.0, %v3508
      %v3510 = vpop.f32.mrb[0].mxu0
      %3511 = vmatprep.mubr.f32.mxu0 0.0
      %3512 = vmatmul.mubr.f32.gmra.mrb[0].mxu0 %v3284
      %v3513 = vpop.f32.mrb[0].mxu0
      %v3514 = vadd.f32 0.0, %v3513
      %v3515 = vpop.f32.mrb[0].mxu0
      %3516 = vmatprep.mubr.f32.mxu0 0.0
      %3517 = vmatmul.mubr.f32.gmra.mrb[0].mxu0 %v3287
      %v3518 = vpop.f32.mrb[0].mxu0
      %v3519 = vadd.f32 0.0, %v3518
      %v3520 = vpop.f32.mrb[0].mxu0
      %3521 = vmatprep.mubr.f32.mxu0 0.0
      %3522 = vmatmul.mubr.f32.gmra.mrb[0].mxu0 %v3290
      %v3523 = vpop.f32.mrb[0].mxu0
      %v3524 = vadd.f32 0.0, %v3523
      %v3525 = vpop.f32.mrb[0].mxu0
      %3526 = vmatprep.mubr.f32.mxu0 0.0
      %3527 = vmatmul.mubr.f32.gmra.mrb[0].mxu0 %v3293
      %v3528 = vpop.f32.mrb[0].mxu0
      %v3529 = vadd.f32 0.0, %v3528
      %v3530 = vpop.f32.mrb[0].mxu0
      %3531 = vmatprep.mubr.f32.mxu0 0.0
      %3532 = vmatmul.mubr.f32.gmra.mrb[0].mxu0 %v3296
      %v3533 = vpop.f32.mrb[0].mxu0
      %v3534 = vadd.f32 0.0, %v3533
      %v3535 = vpop.f32.mrb[0].mxu0
      %3536 = vmatprep.mubr.f32.mxu0 0.0
      %3537 = vmatmul.mubr.f32.gmra.mrb[0].mxu0 %v3299
      %v3538 = vpop.f32.mrb[0].mxu0
      %v3539 = vadd.f32 0.0, %v3538
      %v3540 = vpop.f32.mrb[0].mxu0
      %3541 = vmatprep.mubr.f32.mxu0 0.0
      %3542 = vmatmul.mubr.f32.gmra.mrb[0].mxu0 %v3302
      %v3543 = vpop.f32.mrb[0].mxu0
      %v3544 = vadd.f32 0.0, %v3543
      %v3545 = vpop.f32.mrb[0].mxu0
      %3546 = vmatprep.mubr.f32.mxu0 0.0
      %3547 = vmatmul.mubr.f32.gmra.mrb[0].mxu0 %v3305
      %v3548 = vpop.f32.mrb[0].mxu0
      %v3549 = vadd.f32 0.0, %v3548
      %v3550 = vpop.f32.mrb[0].mxu0
      %3551 = vdwg.mxu0
      %v3552 = vadd.f32 %v3118, %v3374
      %v3553 = vadd.f32 %v3119, %v3379
      %v3554 = vadd.f32 %v3120, %v3384
      %v3555 = vadd.f32 %v3121, %v3389
      %v3556 = vadd.f32 %v3122, %v3394
      %v3557 = vadd.f32 %v3123, %v3399
      %v3558 = vadd.f32 %v3124, %v3404
      %v3559 = vadd.f32 %v3125, %v3409
      %v3560 = vadd.f32 %v3126, %v3414
      %v3561 = vadd.f32 %v3127, %v3419
      %v3562 = vadd.f32 %v3128, %v3424
      %v3563 = vadd.f32 %v3129, %v3429
      %v3564 = vadd.f32 %v3130, %v3434
      %v3565 = vadd.f32 %v3131, %v3439
      %v3566 = vadd.f32 %v3132, %v3444
      %v3567 = vadd.f32 %v3133, %v3449
      %v3568 = vadd.f32 %v3134, %v3454
      %v3569 = vadd.f32 %v3135, %v3459
      %v3570 = vadd.f32 %v3136, %v3464
      %v3571 = vadd.f32 %v3137, %v3469
      %v3572 = vadd.f32 %v3138, %v3474
      %v3573 = vadd.f32 %v3139, %v3479
      %v3574 = vadd.f32 %v3140, %v3484
      %v3575 = vadd.f32 %v3141, %v3489
      %v3576 = vadd.f32 %v3142, %v3494
      %v3577 = vadd.f32 %v3143, %v3499
      %v3578 = vadd.f32 %v3144, %v3504
      %v3579 = vadd.f32 %v3145, %v3509
      %v3580 = vadd.f32 %v3146, %v3514
      %v3581 = vadd.f32 %v3147, %v3519
      %v3582 = vadd.f32 %v3148, %v3524
      %v3583 = vadd.f32 %v3149, %v3529
      %v3584 = vadd.f32 %v3150, %v3534
      %v3585 = vadd.f32 %v3151, %v3539
      %v3586 = vadd.f32 %v3152, %v3544
      %v3587 = vadd.f32 %v3153, %v3549
      %v3588 = vld [vmem:[#allocation2 + $0x35] sm:$0xff]
      %v3589 = vld [vmem:[#allocation2 + $0x3d] sm:$0xff]
      %v3590 = vld [vmem:[#allocation2 + $0x45] sm:$0xff]
      %v3591 = vld [vmem:[#allocation2 + $0x4d] sm:$0xff]
      %v3592 = vld [vmem:[#allocation2 + $0x55] sm:$0xff]
      %v3593 = vld [vmem:[#allocation2 + $0x5d] sm:$0xff]
      %v3594 = vld [vmem:[#allocation2 + $0x65] sm:$0xff]
      %v3595 = vld [vmem:[#allocation2 + $0x6d] sm:$0xff]
      %v3596 = vld [vmem:[#allocation2 + $0x75] sm:$0xff]
      %v3597 = vld [vmem:[#allocation2 + $0x7d] sm:$0xff]
      %v3598 = vld [vmem:[#allocation2 + $0x85] sm:$0xff]
      %v3599 = vld [vmem:[#allocation2 + $0x8d] sm:$0xff]
      %v3600 = vld [vmem:[#allocation2 + $0x95] sm:$0xff]
      %v3601 = vld [vmem:[#allocation2 + $0x9d] sm:$0xff]
      %v3602 = vld [vmem:[#allocation2 + $0xa5] sm:$0xff]
      %v3603 = vld [vmem:[#allocation2 + $0xad] sm:$0xff]
      %v3604 = vld [vmem:[#allocation2 + $0xb5] sm:$0xff]
      %v3605 = vld [vmem:[#allocation2 + $0xbd] sm:$0xff]
      %v3606 = vld [vmem:[#allocation2 + $0xc5] sm:$0xff]
      %v3607 = vld [vmem:[#allocation2 + $0xcd] sm:$0xff]
      %v3608 = vld [vmem:[#allocation2 + $0xd5] sm:$0xff]
      %v3609 = vld [vmem:[#allocation2 + $0xdd] sm:$0xff]
      %v3610 = vld [vmem:[#allocation2 + $0xe5] sm:$0xff]
      %v3611 = vld [vmem:[#allocation2 + $0xed] sm:$0xff]
      %v3612 = vld [vmem:[#allocation2 + $0xf5] sm:$0xff]
      %v3613 = vld [vmem:[#allocation2 + $0xfd] sm:$0xff]
      %v3614 = vld [vmem:[#allocation2 + $0x105] sm:$0xff]
      %v3615 = vld [vmem:[#allocation2 + $0x10d] sm:$0xff]
      %v3616 = vld [vmem:[#allocation2 + $0x115] sm:$0xff]
      %v3617 = vld [vmem:[#allocation2 + $0x11d] sm:$0xff]
      %v3618 = vld [vmem:[#allocation2 + $0x125] sm:$0xff]
      %v3619 = vld [vmem:[#allocation2 + $0x12d] sm:$0xff]
      %v3620 = vld [vmem:[#allocation2 + $0x135] sm:$0xff]
      %v3621 = vld [vmem:[#allocation2 + $0x13d] sm:$0xff]
      %v3622 = vld [vmem:[#allocation2 + $0x145] sm:$0xff]
      %v3623 = vld [vmem:[#allocation2 + $0x14d] sm:$0xff]
      %s3624 = scalar_lea.vmem %s4, 384
      %v3625 = vld [vmem:[%s3624] sm:$0xff]
      %v3626 = vld [vmem:[%s3624 + $0x8] sm:$0xff]
      %v3627 = vld [vmem:[%s3624 + $0x10] sm:$0xff]
      %v3628 = vld [vmem:[%s3624 + $0x18] sm:$0xff]
      %v3629 = vld [vmem:[%s3624 + $0x20] sm:$0xff]
      %v3630 = vld [vmem:[%s3624 + $0x28] sm:$0xff]
      %v3631 = vld [vmem:[%s3624 + $0x30] sm:$0xff]
      %v3632 = vld [vmem:[%s3624 + $0x38] sm:$0xff]
      %v3634 = vsel %vm308, %v3588, 0
      %v3637 = vsel %vm308, %v3589, 0
      %v3640 = vsel %vm308, %v3590, 0
      %v3643 = vsel %vm308, %v3591, 0
      %v3646 = vsel %vm308, %v3592, 0
      %v3649 = vsel %vm308, %v3593, 0
      %v3652 = vsel %vm308, %v3594, 0
      %v3655 = vsel %vm308, %v3595, 0
      %v3658 = vsel %vm308, %v3596, 0
      %v3661 = vsel %vm308, %v3597, 0
      %v3664 = vsel %vm308, %v3598, 0
      %v3667 = vsel %vm308, %v3599, 0
      %v3670 = vsel %vm308, %v3600, 0
      %v3673 = vsel %vm308, %v3601, 0
      %v3676 = vsel %vm308, %v3602, 0
      %v3679 = vsel %vm308, %v3603, 0
      %v3682 = vsel %vm308, %v3604, 0
      %v3685 = vsel %vm308, %v3605, 0
      %v3688 = vsel %vm308, %v3606, 0
      %v3691 = vsel %vm308, %v3607, 0
      %v3694 = vsel %vm308, %v3608, 0
      %v3697 = vsel %vm308, %v3609, 0
      %v3700 = vsel %vm308, %v3610, 0
      %v3703 = vsel %vm308, %v3611, 0
      %v3706 = vsel %vm308, %v3612, 0
      %v3709 = vsel %vm308, %v3613, 0
      %v3712 = vsel %vm308, %v3614, 0
      %v3715 = vsel %vm308, %v3615, 0
      %v3718 = vsel %vm308, %v3616, 0
      %v3721 = vsel %vm308, %v3617, 0
      %v3724 = vsel %vm308, %v3618, 0
      %v3727 = vsel %vm308, %v3619, 0
      %v3730 = vsel %vm308, %v3620, 0
      %v3733 = vsel %vm308, %v3621, 0
      %v3736 = vsel %vm308, %v3622, 0
      %v3739 = vsel %vm308, %v3623, 0
      %3741 = vmatprep.subr.mxu0 0.0
      %3742 = vmatpush1.msra.mxu0 %v3625
      %3743 = vmatprep.subr.mxu0 0.0
      %3744 = vmatpush1.msra.mxu0 %v3626
      %3745 = vmatprep.subr.mxu0 0.0
      %3746 = vmatpush1.msra.mxu0 %v3627
      %3747 = vmatprep.subr.mxu0 0.0
      %3748 = vmatpush1.msra.mxu0 %v3628
      %3749 = vmatprep.subr.mxu0 0.0
      %3750 = vmatpush1.msra.mxu0 %v3629
      %3751 = vmatprep.subr.mxu0 0.0
      %3752 = vmatpush1.msra.mxu0 %v3630
      %3753 = vmatprep.subr.mxu0 0.0
      %3754 = vmatpush1.msra.mxu0 %v3631
      %3755 = vmatprep.subr.mxu0 0.0
      %3756 = vmatpush1.msra.mxu0 %v3632
      %3757 = vmatprep.subr.mxu0 0.0
      %3758 = vmatpush1.msra.mxu0 0.0
      %3759 = vmatprep.subr.mxu0 0.0
      %3760 = vmatpush1.msra.mxu0 0.0
      %3761 = vmatprep.subr.mxu0 0.0
      %3762 = vmatpush1.msra.mxu0 0.0
      %3763 = vmatprep.subr.mxu0 0.0
      %3764 = vmatpush1.msra.mxu0 0.0
      %3765 = vmatprep.subr.mxu0 0.0
      %3766 = vmatpush1.msra.mxu0 0.0
      %3767 = vmatprep.subr.mxu0 0.0
      %3768 = vmatpush1.msra.mxu0 0.0
      %3769 = vmatprep.subr.mxu0 0.0
      %3770 = vmatpush1.msra.mxu0 0.0
      %3771 = vmatprep.subr.mxu0 0.0
      %3772 = vmatpush1.msra.mxu0 0.0
      %3773 = vmatprep.subr.mxu0 0.0
      %3774 = vmatpush1.msra.mxu0 0.0
      %3775 = vmatprep.subr.mxu0 0.0
      %3776 = vmatpush1.msra.mxu0 0.0
      %3777 = vmatprep.subr.mxu0 0.0
      %3778 = vmatpush1.msra.mxu0 0.0
      %3779 = vmatprep.subr.mxu0 0.0
      %3780 = vmatpush1.msra.mxu0 0.0
      %3781 = vmatprep.subr.mxu0 0.0
      %3782 = vmatpush1.msra.mxu0 0.0
      %3783 = vmatprep.subr.mxu0 0.0
      %3784 = vmatpush1.msra.mxu0 0.0
      %3785 = vmatprep.subr.mxu0 0.0
      %3786 = vmatpush1.msra.mxu0 0.0
      %3787 = vmatprep.subr.mxu0 0.0
      %3788 = vmatpush1.msra.mxu0 0.0
      %3789 = vmatprep.subr.mxu0 0.0
      %3790 = vmatpush1.msra.mxu0 0.0
      %3791 = vmatprep.subr.mxu0 0.0
      %3792 = vmatpush1.msra.mxu0 0.0
      %3793 = vmatprep.subr.mxu0 0.0
      %3794 = vmatpush1.msra.mxu0 0.0
      %3795 = vmatprep.subr.mxu0 0.0
      %3796 = vmatpush1.msra.mxu0 0.0
      %3797 = vmatprep.subr.mxu0 0.0
      %3798 = vmatpush1.msra.mxu0 0.0
      %3799 = vmatprep.subr.mxu0 0.0
      %3800 = vmatpush1.msra.mxu0 0.0
      %3801 = vmatprep.subr.mxu0 0.0
      %3802 = vmatpush1.msra.mxu0 0.0
      %3803 = vmatprep.subr.mxu0 0.0
      %3804 = vmatpush1.msra.mxu0 0.0
      %3805 = vmatprep.mubr.f32.mxu0 0.0
      %3806 = vmatmul.mubr.f32.gmra.mrb[0].mxu0 %v3634
      %v3807 = vpop.f32.mrb[0].mxu0
      %v3808 = vadd.f32 0.0, %v3807
      %v3809 = vpop.f32.mrb[0].mxu0
      %3810 = vmatprep.mubr.f32.mxu0 0.0
      %3811 = vmatmul.mubr.f32.gmra.mrb[0].mxu0 %v3637
      %v3812 = vpop.f32.mrb[0].mxu0
      %v3813 = vadd.f32 0.0, %v3812
      %v3814 = vpop.f32.mrb[0].mxu0
      %3815 = vmatprep.mubr.f32.mxu0 0.0
      %3816 = vmatmul.mubr.f32.gmra.mrb[0].mxu0 %v3640
      %v3817 = vpop.f32.mrb[0].mxu0
      %v3818 = vadd.f32 0.0, %v3817
      %v3819 = vpop.f32.mrb[0].mxu0
      %3820 = vmatprep.mubr.f32.mxu0 0.0
      %3821 = vmatmul.mubr.f32.gmra.mrb[0].mxu0 %v3643
      %v3822 = vpop.f32.mrb[0].mxu0
      %v3823 = vadd.f32 0.0, %v3822
      %v3824 = vpop.f32.mrb[0].mxu0
      %3825 = vmatprep.mubr.f32.mxu0 0.0
      %3826 = vmatmul.mubr.f32.gmra.mrb[0].mxu0 %v3646
      %v3827 = vpop.f32.mrb[0].mxu0
      %v3828 = vadd.f32 0.0, %v3827
      %v3829 = vpop.f32.mrb[0].mxu0
      %3830 = vmatprep.mubr.f32.mxu0 0.0
      %3831 = vmatmul.mubr.f32.gmra.mrb[0].mxu0 %v3649
      %v3832 = vpop.f32.mrb[0].mxu0
      %v3833 = vadd.f32 0.0, %v3832
      %v3834 = vpop.f32.mrb[0].mxu0
      %3835 = vmatprep.mubr.f32.mxu0 0.0
      %3836 = vmatmul.mubr.f32.gmra.mrb[0].mxu0 %v3652
      %v3837 = vpop.f32.mrb[0].mxu0
      %v3838 = vadd.f32 0.0, %v3837
      %v3839 = vpop.f32.mrb[0].mxu0
      %3840 = vmatprep.mubr.f32.mxu0 0.0
      %3841 = vmatmul.mubr.f32.gmra.mrb[0].mxu0 %v3655
      %v3842 = vpop.f32.mrb[0].mxu0
      %v3843 = vadd.f32 0.0, %v3842
      %v3844 = vpop.f32.mrb[0].mxu0
      %3845 = vmatprep.mubr.f32.mxu0 0.0
      %3846 = vmatmul.mubr.f32.gmra.mrb[0].mxu0 %v3658
      %v3847 = vpop.f32.mrb[0].mxu0
      %v3848 = vadd.f32 0.0, %v3847
      %v3849 = vpop.f32.mrb[0].mxu0
      %3850 = vmatprep.mubr.f32.mxu0 0.0
      %3851 = vmatmul.mubr.f32.gmra.mrb[0].mxu0 %v3661
      %v3852 = vpop.f32.mrb[0].mxu0
      %v3853 = vadd.f32 0.0, %v3852
      %v3854 = vpop.f32.mrb[0].mxu0
      %3855 = vmatprep.mubr.f32.mxu0 0.0
      %3856 = vmatmul.mubr.f32.gmra.mrb[0].mxu0 %v3664
      %v3857 = vpop.f32.mrb[0].mxu0
      %v3858 = vadd.f32 0.0, %v3857
      %v3859 = vpop.f32.mrb[0].mxu0
      %3860 = vmatprep.mubr.f32.mxu0 0.0
      %3861 = vmatmul.mubr.f32.gmra.mrb[0].mxu0 %v3667
      %v3862 = vpop.f32.mrb[0].mxu0
      %v3863 = vadd.f32 0.0, %v3862
      %v3864 = vpop.f32.mrb[0].mxu0
      %3865 = vmatprep.mubr.f32.mxu0 0.0
      %3866 = vmatmul.mubr.f32.gmra.mrb[0].mxu0 %v3670
      %v3867 = vpop.f32.mrb[0].mxu0
      %v3868 = vadd.f32 0.0, %v3867
      %v3869 = vpop.f32.mrb[0].mxu0
      %3870 = vmatprep.mubr.f32.mxu0 0.0
      %3871 = vmatmul.mubr.f32.gmra.mrb[0].mxu0 %v3673
      %v3872 = vpop.f32.mrb[0].mxu0
      %v3873 = vadd.f32 0.0, %v3872
      %v3874 = vpop.f32.mrb[0].mxu0
      %3875 = vmatprep.mubr.f32.mxu0 0.0
      %3876 = vmatmul.mubr.f32.gmra.mrb[0].mxu0 %v3676
      %v3877 = vpop.f32.mrb[0].mxu0
      %v3878 = vadd.f32 0.0, %v3877
      %v3879 = vpop.f32.mrb[0].mxu0
      %3880 = vmatprep.mubr.f32.mxu0 0.0
      %3881 = vmatmul.mubr.f32.gmra.mrb[0].mxu0 %v3679
      %v3882 = vpop.f32.mrb[0].mxu0
      %v3883 = vadd.f32 0.0, %v3882
      %v3884 = vpop.f32.mrb[0].mxu0
      %3885 = vmatprep.mubr.f32.mxu0 0.0
      %3886 = vmatmul.mubr.f32.gmra.mrb[0].mxu0 %v3682
      %v3887 = vpop.f32.mrb[0].mxu0
      %v3888 = vadd.f32 0.0, %v3887
      %v3889 = vpop.f32.mrb[0].mxu0
      %3890 = vmatprep.mubr.f32.mxu0 0.0
      %3891 = vmatmul.mubr.f32.gmra.mrb[0].mxu0 %v3685
      %v3892 = vpop.f32.mrb[0].mxu0
      %v3893 = vadd.f32 0.0, %v3892
      %v3894 = vpop.f32.mrb[0].mxu0
      %3895 = vmatprep.mubr.f32.mxu0 0.0
      %3896 = vmatmul.mubr.f32.gmra.mrb[0].mxu0 %v3688
      %v3897 = vpop.f32.mrb[0].mxu0
      %v3898 = vadd.f32 0.0, %v3897
      %v3899 = vpop.f32.mrb[0].mxu0
      %3900 = vmatprep.mubr.f32.mxu0 0.0
      %3901 = vmatmul.mubr.f32.gmra.mrb[0].mxu0 %v3691
      %v3902 = vpop.f32.mrb[0].mxu0
      %v3903 = vadd.f32 0.0, %v3902
      %v3904 = vpop.f32.mrb[0].mxu0
      %3905 = vmatprep.mubr.f32.mxu0 0.0
      %3906 = vmatmul.mubr.f32.gmra.mrb[0].mxu0 %v3694
      %v3907 = vpop.f32.mrb[0].mxu0
      %v3908 = vadd.f32 0.0, %v3907
      %v3909 = vpop.f32.mrb[0].mxu0
      %3910 = vmatprep.mubr.f32.mxu0 0.0
      %3911 = vmatmul.mubr.f32.gmra.mrb[0].mxu0 %v3697
      %v3912 = vpop.f32.mrb[0].mxu0
      %v3913 = vadd.f32 0.0, %v3912
      %v3914 = vpop.f32.mrb[0].mxu0
      %3915 = vmatprep.mubr.f32.mxu0 0.0
      %3916 = vmatmul.mubr.f32.gmra.mrb[0].mxu0 %v3700
      %v3917 = vpop.f32.mrb[0].mxu0
      %v3918 = vadd.f32 0.0, %v3917
      %v3919 = vpop.f32.mrb[0].mxu0
      %3920 = vmatprep.mubr.f32.mxu0 0.0
      %3921 = vmatmul.mubr.f32.gmra.mrb[0].mxu0 %v3703
      %v3922 = vpop.f32.mrb[0].mxu0
      %v3923 = vadd.f32 0.0, %v3922
      %v3924 = vpop.f32.mrb[0].mxu0
      %3925 = vmatprep.mubr.f32.mxu0 0.0
      %3926 = vmatmul.mubr.f32.gmra.mrb[0].mxu0 %v3706
      %v3927 = vpop.f32.mrb[0].mxu0
      %v3928 = vadd.f32 0.0, %v3927
      %v3929 = vpop.f32.mrb[0].mxu0
      %3930 = vmatprep.mubr.f32.mxu0 0.0
      %3931 = vmatmul.mubr.f32.gmra.mrb[0].mxu0 %v3709
      %v3932 = vpop.f32.mrb[0].mxu0
      %v3933 = vadd.f32 0.0, %v3932
      %v3934 = vpop.f32.mrb[0].mxu0
      %3935 = vmatprep.mubr.f32.mxu0 0.0
      %3936 = vmatmul.mubr.f32.gmra.mrb[0].mxu0 %v3712
      %v3937 = vpop.f32.mrb[0].mxu0
      %v3938 = vadd.f32 0.0, %v3937
      %v3939 = vpop.f32.mrb[0].mxu0
      %3940 = vmatprep.mubr.f32.mxu0 0.0
      %3941 = vmatmul.mubr.f32.gmra.mrb[0].mxu0 %v3715
      %v3942 = vpop.f32.mrb[0].mxu0
      %v3943 = vadd.f32 0.0, %v3942
      %v3944 = vpop.f32.mrb[0].mxu0
      %3945 = vmatprep.mubr.f32.mxu0 0.0
      %3946 = vmatmul.mubr.f32.gmra.mrb[0].mxu0 %v3718
      %v3947 = vpop.f32.mrb[0].mxu0
      %v3948 = vadd.f32 0.0, %v3947
      %v3949 = vpop.f32.mrb[0].mxu0
      %3950 = vmatprep.mubr.f32.mxu0 0.0
      %3951 = vmatmul.mubr.f32.gmra.mrb[0].mxu0 %v3721
      %v3952 = vpop.f32.mrb[0].mxu0
      %v3953 = vadd.f32 0.0, %v3952
      %v3954 = vpop.f32.mrb[0].mxu0
      %3955 = vmatprep.mubr.f32.mxu0 0.0
      %3956 = vmatmul.mubr.f32.gmra.mrb[0].mxu0 %v3724
      %v3957 = vpop.f32.mrb[0].mxu0
      %v3958 = vadd.f32 0.0, %v3957
      %v3959 = vpop.f32.mrb[0].mxu0
      %3960 = vmatprep.mubr.f32.mxu0 0.0
      %3961 = vmatmul.mubr.f32.gmra.mrb[0].mxu0 %v3727
      %v3962 = vpop.f32.mrb[0].mxu0
      %v3963 = vadd.f32 0.0, %v3962
      %v3964 = vpop.f32.mrb[0].mxu0
      %3965 = vmatprep.mubr.f32.mxu0 0.0
      %3966 = vmatmul.mubr.f32.gmra.mrb[0].mxu0 %v3730
      %v3967 = vpop.f32.mrb[0].mxu0
      %v3968 = vadd.f32 0.0, %v3967
      %v3969 = vpop.f32.mrb[0].mxu0
      %3970 = vmatprep.mubr.f32.mxu0 0.0
      %3971 = vmatmul.mubr.f32.gmra.mrb[0].mxu0 %v3733
      %v3972 = vpop.f32.mrb[0].mxu0
      %v3973 = vadd.f32 0.0, %v3972
      %v3974 = vpop.f32.mrb[0].mxu0
      %3975 = vmatprep.mubr.f32.mxu0 0.0
      %3976 = vmatmul.mubr.f32.gmra.mrb[0].mxu0 %v3736
      %v3977 = vpop.f32.mrb[0].mxu0
      %v3978 = vadd.f32 0.0, %v3977
      %v3979 = vpop.f32.mrb[0].mxu0
      %3980 = vmatprep.mubr.f32.mxu0 0.0
      %3981 = vmatmul.mubr.f32.gmra.mrb[0].mxu0 %v3739
      %v3982 = vpop.f32.mrb[0].mxu0
      %v3983 = vadd.f32 0.0, %v3982
      %v3984 = vpop.f32.mrb[0].mxu0
      %3985 = vdwg.mxu0
      %v3986 = vadd.f32 %v3552, %v3808
      %v3987 = vadd.f32 %v3553, %v3813
      %v3988 = vadd.f32 %v3554, %v3818
      %v3989 = vadd.f32 %v3555, %v3823
      %v3990 = vadd.f32 %v3556, %v3828
      %v3991 = vadd.f32 %v3557, %v3833
      %v3992 = vadd.f32 %v3558, %v3838
      %v3993 = vadd.f32 %v3559, %v3843
      %v3994 = vadd.f32 %v3560, %v3848
      %v3995 = vadd.f32 %v3561, %v3853
      %v3996 = vadd.f32 %v3562, %v3858
      %v3997 = vadd.f32 %v3563, %v3863
      %v3998 = vadd.f32 %v3564, %v3868
      %v3999 = vadd.f32 %v3565, %v3873
      %v4000 = vadd.f32 %v3566, %v3878
      %v4001 = vadd.f32 %v3567, %v3883
      %v4002 = vadd.f32 %v3568, %v3888
      %v4003 = vadd.f32 %v3569, %v3893
      %v4004 = vadd.f32 %v3570, %v3898
      %v4005 = vadd.f32 %v3571, %v3903
      %v4006 = vadd.f32 %v3572, %v3908
      %v4007 = vadd.f32 %v3573, %v3913
      %v4008 = vadd.f32 %v3574, %v3918
      %v4009 = vadd.f32 %v3575, %v3923
      %v4010 = vadd.f32 %v3576, %v3928
      %v4011 = vadd.f32 %v3577, %v3933
      %v4012 = vadd.f32 %v3578, %v3938
      %v4013 = vadd.f32 %v3579, %v3943
      %v4014 = vadd.f32 %v3580, %v3948
      %v4015 = vadd.f32 %v3581, %v3953
      %v4016 = vadd.f32 %v3582, %v3958
      %v4017 = vadd.f32 %v3583, %v3963
      %v4018 = vadd.f32 %v3584, %v3968
      %v4019 = vadd.f32 %v3585, %v3973
      %v4020 = vadd.f32 %v3586, %v3978
      %v4021 = vadd.f32 %v3587, %v3983
      %v4022 = vld [vmem:[#allocation2 + $0x36] sm:$0xff]
      %v4023 = vld [vmem:[#allocation2 + $0x3e] sm:$0xff]
      %v4024 = vld [vmem:[#allocation2 + $0x46] sm:$0xff]
      %v4025 = vld [vmem:[#allocation2 + $0x4e] sm:$0xff]
      %v4026 = vld [vmem:[#allocation2 + $0x56] sm:$0xff]
      %v4027 = vld [vmem:[#allocation2 + $0x5e] sm:$0xff]
      %v4028 = vld [vmem:[#allocation2 + $0x66] sm:$0xff]
      %v4029 = vld [vmem:[#allocation2 + $0x6e] sm:$0xff]
      %v4030 = vld [vmem:[#allocation2 + $0x76] sm:$0xff]
      %v4031 = vld [vmem:[#allocation2 + $0x7e] sm:$0xff]
      %v4032 = vld [vmem:[#allocation2 + $0x86] sm:$0xff]
      %v4033 = vld [vmem:[#allocation2 + $0x8e] sm:$0xff]
      %v4034 = vld [vmem:[#allocation2 + $0x96] sm:$0xff]
      %v4035 = vld [vmem:[#allocation2 + $0x9e] sm:$0xff]
      %v4036 = vld [vmem:[#allocation2 + $0xa6] sm:$0xff]
      %v4037 = vld [vmem:[#allocation2 + $0xae] sm:$0xff]
      %v4038 = vld [vmem:[#allocation2 + $0xb6] sm:$0xff]
      %v4039 = vld [vmem:[#allocation2 + $0xbe] sm:$0xff]
      %v4040 = vld [vmem:[#allocation2 + $0xc6] sm:$0xff]
      %v4041 = vld [vmem:[#allocation2 + $0xce] sm:$0xff]
      %v4042 = vld [vmem:[#allocation2 + $0xd6] sm:$0xff]
      %v4043 = vld [vmem:[#allocation2 + $0xde] sm:$0xff]
      %v4044 = vld [vmem:[#allocation2 + $0xe6] sm:$0xff]
      %v4045 = vld [vmem:[#allocation2 + $0xee] sm:$0xff]
      %v4046 = vld [vmem:[#allocation2 + $0xf6] sm:$0xff]
      %v4047 = vld [vmem:[#allocation2 + $0xfe] sm:$0xff]
      %v4048 = vld [vmem:[#allocation2 + $0x106] sm:$0xff]
      %v4049 = vld [vmem:[#allocation2 + $0x10e] sm:$0xff]
      %v4050 = vld [vmem:[#allocation2 + $0x116] sm:$0xff]
      %v4051 = vld [vmem:[#allocation2 + $0x11e] sm:$0xff]
      %v4052 = vld [vmem:[#allocation2 + $0x126] sm:$0xff]
      %v4053 = vld [vmem:[#allocation2 + $0x12e] sm:$0xff]
      %v4054 = vld [vmem:[#allocation2 + $0x136] sm:$0xff]
      %v4055 = vld [vmem:[#allocation2 + $0x13e] sm:$0xff]
      %v4056 = vld [vmem:[#allocation2 + $0x146] sm:$0xff]
      %v4057 = vld [vmem:[#allocation2 + $0x14e] sm:$0xff]
      %s4058 = scalar_lea.vmem %s4, 448
      %v4059 = vld [vmem:[%s4058] sm:$0xff]
      %v4060 = vld [vmem:[%s4058 + $0x8] sm:$0xff]
      %v4061 = vld [vmem:[%s4058 + $0x10] sm:$0xff]
      %v4062 = vld [vmem:[%s4058 + $0x18] sm:$0xff]
      %v4063 = vld [vmem:[%s4058 + $0x20] sm:$0xff]
      %v4064 = vld [vmem:[%s4058 + $0x28] sm:$0xff]
      %v4065 = vld [vmem:[%s4058 + $0x30] sm:$0xff]
      %v4066 = vld [vmem:[%s4058 + $0x38] sm:$0xff]
      %v4068 = vsel %vm308, %v4022, 0
      %v4071 = vsel %vm308, %v4023, 0
      %v4074 = vsel %vm308, %v4024, 0
      %v4077 = vsel %vm308, %v4025, 0
      %v4080 = vsel %vm308, %v4026, 0
      %v4083 = vsel %vm308, %v4027, 0
      %v4086 = vsel %vm308, %v4028, 0
      %v4089 = vsel %vm308, %v4029, 0
      %v4092 = vsel %vm308, %v4030, 0
      %v4095 = vsel %vm308, %v4031, 0
      %v4098 = vsel %vm308, %v4032, 0
      %v4101 = vsel %vm308, %v4033, 0
      %v4104 = vsel %vm308, %v4034, 0
      %v4107 = vsel %vm308, %v4035, 0
      %v4110 = vsel %vm308, %v4036, 0
      %v4113 = vsel %vm308, %v4037, 0
      %v4116 = vsel %vm308, %v4038, 0
      %v4119 = vsel %vm308, %v4039, 0
      %v4122 = vsel %vm308, %v4040, 0
      %v4125 = vsel %vm308, %v4041, 0
      %v4128 = vsel %vm308, %v4042, 0
      %v4131 = vsel %vm308, %v4043, 0
      %v4134 = vsel %vm308, %v4044, 0
      %v4137 = vsel %vm308, %v4045, 0
      %v4140 = vsel %vm308, %v4046, 0
      %v4143 = vsel %vm308, %v4047, 0
      %v4146 = vsel %vm308, %v4048, 0
      %v4149 = vsel %vm308, %v4049, 0
      %v4152 = vsel %vm308, %v4050, 0
      %v4155 = vsel %vm308, %v4051, 0
      %v4158 = vsel %vm308, %v4052, 0
      %v4161 = vsel %vm308, %v4053, 0
      %v4164 = vsel %vm308, %v4054, 0
      %v4167 = vsel %vm308, %v4055, 0
      %v4170 = vsel %vm308, %v4056, 0
      %v4173 = vsel %vm308, %v4057, 0
      %4175 = vmatprep.subr.mxu0 0.0
      %4176 = vmatpush1.msra.mxu0 %v4059
      %4177 = vmatprep.subr.mxu0 0.0
      %4178 = vmatpush1.msra.mxu0 %v4060
      %4179 = vmatprep.subr.mxu0 0.0
      %4180 = vmatpush1.msra.mxu0 %v4061
      %4181 = vmatprep.subr.mxu0 0.0
      %4182 = vmatpush1.msra.mxu0 %v4062
      %4183 = vmatprep.subr.mxu0 0.0
      %4184 = vmatpush1.msra.mxu0 %v4063
      %4185 = vmatprep.subr.mxu0 0.0
      %4186 = vmatpush1.msra.mxu0 %v4064
      %4187 = vmatprep.subr.mxu0 0.0
      %4188 = vmatpush1.msra.mxu0 %v4065
      %4189 = vmatprep.subr.mxu0 0.0
      %4190 = vmatpush1.msra.mxu0 %v4066
      %4191 = vmatprep.subr.mxu0 0.0
      %4192 = vmatpush1.msra.mxu0 0.0
      %4193 = vmatprep.subr.mxu0 0.0
      %4194 = vmatpush1.msra.mxu0 0.0
      %4195 = vmatprep.subr.mxu0 0.0
      %4196 = vmatpush1.msra.mxu0 0.0
      %4197 = vmatprep.subr.mxu0 0.0
      %4198 = vmatpush1.msra.mxu0 0.0
      %4199 = vmatprep.subr.mxu0 0.0
      %4200 = vmatpush1.msra.mxu0 0.0
      %4201 = vmatprep.subr.mxu0 0.0
      %4202 = vmatpush1.msra.mxu0 0.0
      %4203 = vmatprep.subr.mxu0 0.0
      %4204 = vmatpush1.msra.mxu0 0.0
      %4205 = vmatprep.subr.mxu0 0.0
      %4206 = vmatpush1.msra.mxu0 0.0
      %4207 = vmatprep.subr.mxu0 0.0
      %4208 = vmatpush1.msra.mxu0 0.0
      %4209 = vmatprep.subr.mxu0 0.0
      %4210 = vmatpush1.msra.mxu0 0.0
      %4211 = vmatprep.subr.mxu0 0.0
      %4212 = vmatpush1.msra.mxu0 0.0
      %4213 = vmatprep.subr.mxu0 0.0
      %4214 = vmatpush1.msra.mxu0 0.0
      %4215 = vmatprep.subr.mxu0 0.0
      %4216 = vmatpush1.msra.mxu0 0.0
      %4217 = vmatprep.subr.mxu0 0.0
      %4218 = vmatpush1.msra.mxu0 0.0
      %4219 = vmatprep.subr.mxu0 0.0
      %4220 = vmatpush1.msra.mxu0 0.0
      %4221 = vmatprep.subr.mxu0 0.0
      %4222 = vmatpush1.msra.mxu0 0.0
      %4223 = vmatprep.subr.mxu0 0.0
      %4224 = vmatpush1.msra.mxu0 0.0
      %4225 = vmatprep.subr.mxu0 0.0
      %4226 = vmatpush1.msra.mxu0 0.0
      %4227 = vmatprep.subr.mxu0 0.0
      %4228 = vmatpush1.msra.mxu0 0.0
      %4229 = vmatprep.subr.mxu0 0.0
      %4230 = vmatpush1.msra.mxu0 0.0
      %4231 = vmatprep.subr.mxu0 0.0
      %4232 = vmatpush1.msra.mxu0 0.0
      %4233 = vmatprep.subr.mxu0 0.0
      %4234 = vmatpush1.msra.mxu0 0.0
      %4235 = vmatprep.subr.mxu0 0.0
      %4236 = vmatpush1.msra.mxu0 0.0
      %4237 = vmatprep.subr.mxu0 0.0
      %4238 = vmatpush1.msra.mxu0 0.0
      %4239 = vmatprep.mubr.f32.mxu0 0.0
      %4240 = vmatmul.mubr.f32.gmra.mrb[0].mxu0 %v4068
      %v4241 = vpop.f32.mrb[0].mxu0
      %v4242 = vadd.f32 0.0, %v4241
      %v4243 = vpop.f32.mrb[0].mxu0
      %4244 = vmatprep.mubr.f32.mxu0 0.0
      %4245 = vmatmul.mubr.f32.gmra.mrb[0].mxu0 %v4071
      %v4246 = vpop.f32.mrb[0].mxu0
      %v4247 = vadd.f32 0.0, %v4246
      %v4248 = vpop.f32.mrb[0].mxu0
      %4249 = vmatprep.mubr.f32.mxu0 0.0
      %4250 = vmatmul.mubr.f32.gmra.mrb[0].mxu0 %v4074
      %v4251 = vpop.f32.mrb[0].mxu0
      %v4252 = vadd.f32 0.0, %v4251
      %v4253 = vpop.f32.mrb[0].mxu0
      %4254 = vmatprep.mubr.f32.mxu0 0.0
      %4255 = vmatmul.mubr.f32.gmra.mrb[0].mxu0 %v4077
      %v4256 = vpop.f32.mrb[0].mxu0
      %v4257 = vadd.f32 0.0, %v4256
      %v4258 = vpop.f32.mrb[0].mxu0
      %4259 = vmatprep.mubr.f32.mxu0 0.0
      %4260 = vmatmul.mubr.f32.gmra.mrb[0].mxu0 %v4080
      %v4261 = vpop.f32.mrb[0].mxu0
      %v4262 = vadd.f32 0.0, %v4261
      %v4263 = vpop.f32.mrb[0].mxu0
      %4264 = vmatprep.mubr.f32.mxu0 0.0
      %4265 = vmatmul.mubr.f32.gmra.mrb[0].mxu0 %v4083
      %v4266 = vpop.f32.mrb[0].mxu0
      %v4267 = vadd.f32 0.0, %v4266
      %v4268 = vpop.f32.mrb[0].mxu0
      %4269 = vmatprep.mubr.f32.mxu0 0.0
      %4270 = vmatmul.mubr.f32.gmra.mrb[0].mxu0 %v4086
      %v4271 = vpop.f32.mrb[0].mxu0
      %v4272 = vadd.f32 0.0, %v4271
      %v4273 = vpop.f32.mrb[0].mxu0
      %4274 = vmatprep.mubr.f32.mxu0 0.0
      %4275 = vmatmul.mubr.f32.gmra.mrb[0].mxu0 %v4089
      %v4276 = vpop.f32.mrb[0].mxu0
      %v4277 = vadd.f32 0.0, %v4276
      %v4278 = vpop.f32.mrb[0].mxu0
      %4279 = vmatprep.mubr.f32.mxu0 0.0
      %4280 = vmatmul.mubr.f32.gmra.mrb[0].mxu0 %v4092
      %v4281 = vpop.f32.mrb[0].mxu0
      %v4282 = vadd.f32 0.0, %v4281
      %v4283 = vpop.f32.mrb[0].mxu0
      %4284 = vmatprep.mubr.f32.mxu0 0.0
      %4285 = vmatmul.mubr.f32.gmra.mrb[0].mxu0 %v4095
      %v4286 = vpop.f32.mrb[0].mxu0
      %v4287 = vadd.f32 0.0, %v4286
      %v4288 = vpop.f32.mrb[0].mxu0
      %4289 = vmatprep.mubr.f32.mxu0 0.0
      %4290 = vmatmul.mubr.f32.gmra.mrb[0].mxu0 %v4098
      %v4291 = vpop.f32.mrb[0].mxu0
      %v4292 = vadd.f32 0.0, %v4291
      %v4293 = vpop.f32.mrb[0].mxu0
      %4294 = vmatprep.mubr.f32.mxu0 0.0
      %4295 = vmatmul.mubr.f32.gmra.mrb[0].mxu0 %v4101
      %v4296 = vpop.f32.mrb[0].mxu0
      %v4297 = vadd.f32 0.0, %v4296
      %v4298 = vpop.f32.mrb[0].mxu0
      %4299 = vmatprep.mubr.f32.mxu0 0.0
      %4300 = vmatmul.mubr.f32.gmra.mrb[0].mxu0 %v4104
      %v4301 = vpop.f32.mrb[0].mxu0
      %v4302 = vadd.f32 0.0, %v4301
      %v4303 = vpop.f32.mrb[0].mxu0
      %4304 = vmatprep.mubr.f32.mxu0 0.0
      %4305 = vmatmul.mubr.f32.gmra.mrb[0].mxu0 %v4107
      %v4306 = vpop.f32.mrb[0].mxu0
      %v4307 = vadd.f32 0.0, %v4306
      %v4308 = vpop.f32.mrb[0].mxu0
      %4309 = vmatprep.mubr.f32.mxu0 0.0
      %4310 = vmatmul.mubr.f32.gmra.mrb[0].mxu0 %v4110
      %v4311 = vpop.f32.mrb[0].mxu0
      %v4312 = vadd.f32 0.0, %v4311
      %v4313 = vpop.f32.mrb[0].mxu0
      %4314 = vmatprep.mubr.f32.mxu0 0.0
      %4315 = vmatmul.mubr.f32.gmra.mrb[0].mxu0 %v4113
      %v4316 = vpop.f32.mrb[0].mxu0
      %v4317 = vadd.f32 0.0, %v4316
      %v4318 = vpop.f32.mrb[0].mxu0
      %4319 = vmatprep.mubr.f32.mxu0 0.0
      %4320 = vmatmul.mubr.f32.gmra.mrb[0].mxu0 %v4116
      %v4321 = vpop.f32.mrb[0].mxu0
      %v4322 = vadd.f32 0.0, %v4321
      %v4323 = vpop.f32.mrb[0].mxu0
      %4324 = vmatprep.mubr.f32.mxu0 0.0
      %4325 = vmatmul.mubr.f32.gmra.mrb[0].mxu0 %v4119
      %v4326 = vpop.f32.mrb[0].mxu0
      %v4327 = vadd.f32 0.0, %v4326
      %v4328 = vpop.f32.mrb[0].mxu0
      %4329 = vmatprep.mubr.f32.mxu0 0.0
      %4330 = vmatmul.mubr.f32.gmra.mrb[0].mxu0 %v4122
      %v4331 = vpop.f32.mrb[0].mxu0
      %v4332 = vadd.f32 0.0, %v4331
      %v4333 = vpop.f32.mrb[0].mxu0
      %4334 = vmatprep.mubr.f32.mxu0 0.0
      %4335 = vmatmul.mubr.f32.gmra.mrb[0].mxu0 %v4125
      %v4336 = vpop.f32.mrb[0].mxu0
      %v4337 = vadd.f32 0.0, %v4336
      %v4338 = vpop.f32.mrb[0].mxu0
      %4339 = vmatprep.mubr.f32.mxu0 0.0
      %4340 = vmatmul.mubr.f32.gmra.mrb[0].mxu0 %v4128
      %v4341 = vpop.f32.mrb[0].mxu0
      %v4342 = vadd.f32 0.0, %v4341
      %v4343 = vpop.f32.mrb[0].mxu0
      %4344 = vmatprep.mubr.f32.mxu0 0.0
      %4345 = vmatmul.mubr.f32.gmra.mrb[0].mxu0 %v4131
      %v4346 = vpop.f32.mrb[0].mxu0
      %v4347 = vadd.f32 0.0, %v4346
      %v4348 = vpop.f32.mrb[0].mxu0
      %4349 = vmatprep.mubr.f32.mxu0 0.0
      %4350 = vmatmul.mubr.f32.gmra.mrb[0].mxu0 %v4134
      %v4351 = vpop.f32.mrb[0].mxu0
      %v4352 = vadd.f32 0.0, %v4351
      %v4353 = vpop.f32.mrb[0].mxu0
      %4354 = vmatprep.mubr.f32.mxu0 0.0
      %4355 = vmatmul.mubr.f32.gmra.mrb[0].mxu0 %v4137
      %v4356 = vpop.f32.mrb[0].mxu0
      %v4357 = vadd.f32 0.0, %v4356
      %v4358 = vpop.f32.mrb[0].mxu0
      %4359 = vmatprep.mubr.f32.mxu0 0.0
      %4360 = vmatmul.mubr.f32.gmra.mrb[0].mxu0 %v4140
      %v4361 = vpop.f32.mrb[0].mxu0
      %v4362 = vadd.f32 0.0, %v4361
      %v4363 = vpop.f32.mrb[0].mxu0
      %4364 = vmatprep.mubr.f32.mxu0 0.0
      %4365 = vmatmul.mubr.f32.gmra.mrb[0].mxu0 %v4143
      %v4366 = vpop.f32.mrb[0].mxu0
      %v4367 = vadd.f32 0.0, %v4366
      %v4368 = vpop.f32.mrb[0].mxu0
      %4369 = vmatprep.mubr.f32.mxu0 0.0
      %4370 = vmatmul.mubr.f32.gmra.mrb[0].mxu0 %v4146
      %v4371 = vpop.f32.mrb[0].mxu0
      %v4372 = vadd.f32 0.0, %v4371
      %v4373 = vpop.f32.mrb[0].mxu0
      %4374 = vmatprep.mubr.f32.mxu0 0.0
      %4375 = vmatmul.mubr.f32.gmra.mrb[0].mxu0 %v4149
      %v4376 = vpop.f32.mrb[0].mxu0
      %v4377 = vadd.f32 0.0, %v4376
      %v4378 = vpop.f32.mrb[0].mxu0
      %4379 = vmatprep.mubr.f32.mxu0 0.0
      %4380 = vmatmul.mubr.f32.gmra.mrb[0].mxu0 %v4152
      %v4381 = vpop.f32.mrb[0].mxu0
      %v4382 = vadd.f32 0.0, %v4381
      %v4383 = vpop.f32.mrb[0].mxu0
      %4384 = vmatprep.mubr.f32.mxu0 0.0
      %4385 = vmatmul.mubr.f32.gmra.mrb[0].mxu0 %v4155
      %v4386 = vpop.f32.mrb[0].mxu0
      %v4387 = vadd.f32 0.0, %v4386
      %v4388 = vpop.f32.mrb[0].mxu0
      %4389 = vmatprep.mubr.f32.mxu0 0.0
      %4390 = vmatmul.mubr.f32.gmra.mrb[0].mxu0 %v4158
      %v4391 = vpop.f32.mrb[0].mxu0
      %v4392 = vadd.f32 0.0, %v4391
      %v4393 = vpop.f32.mrb[0].mxu0
      %4394 = vmatprep.mubr.f32.mxu0 0.0
      %4395 = vmatmul.mubr.f32.gmra.mrb[0].mxu0 %v4161
      %v4396 = vpop.f32.mrb[0].mxu0
      %v4397 = vadd.f32 0.0, %v4396
      %v4398 = vpop.f32.mrb[0].mxu0
      %4399 = vmatprep.mubr.f32.mxu0 0.0
      %4400 = vmatmul.mubr.f32.gmra.mrb[0].mxu0 %v4164
      %v4401 = vpop.f32.mrb[0].mxu0
      %v4402 = vadd.f32 0.0, %v4401
      %v4403 = vpop.f32.mrb[0].mxu0
      %4404 = vmatprep.mubr.f32.mxu0 0.0
      %4405 = vmatmul.mubr.f32.gmra.mrb[0].mxu0 %v4167
      %v4406 = vpop.f32.mrb[0].mxu0
      %v4407 = vadd.f32 0.0, %v4406
      %v4408 = vpop.f32.mrb[0].mxu0
      %4409 = vmatprep.mubr.f32.mxu0 0.0
      %4410 = vmatmul.mubr.f32.gmra.mrb[0].mxu0 %v4170
      %v4411 = vpop.f32.mrb[0].mxu0
      %v4412 = vadd.f32 0.0, %v4411
      %v4413 = vpop.f32.mrb[0].mxu0
      %4414 = vmatprep.mubr.f32.mxu0 0.0
      %4415 = vmatmul.mubr.f32.gmra.mrb[0].mxu0 %v4173
      %v4416 = vpop.f32.mrb[0].mxu0
      %v4417 = vadd.f32 0.0, %v4416
      %v4418 = vpop.f32.mrb[0].mxu0
      %4419 = vdwg.mxu0
      %v4420 = vadd.f32 %v3986, %v4242
      %v4421 = vadd.f32 %v3987, %v4247
      %v4422 = vadd.f32 %v3988, %v4252
      %v4423 = vadd.f32 %v3989, %v4257
      %v4424 = vadd.f32 %v3990, %v4262
      %v4425 = vadd.f32 %v3991, %v4267
      %v4426 = vadd.f32 %v3992, %v4272
      %v4427 = vadd.f32 %v3993, %v4277
      %v4428 = vadd.f32 %v3994, %v4282
      %v4429 = vadd.f32 %v3995, %v4287
      %v4430 = vadd.f32 %v3996, %v4292
      %v4431 = vadd.f32 %v3997, %v4297
      %v4432 = vadd.f32 %v3998, %v4302
      %v4433 = vadd.f32 %v3999, %v4307
      %v4434 = vadd.f32 %v4000, %v4312
      %v4435 = vadd.f32 %v4001, %v4317
      %v4436 = vadd.f32 %v4002, %v4322
      %v4437 = vadd.f32 %v4003, %v4327
      %v4438 = vadd.f32 %v4004, %v4332
      %v4439 = vadd.f32 %v4005, %v4337
      %v4440 = vadd.f32 %v4006, %v4342
      %v4441 = vadd.f32 %v4007, %v4347
      %v4442 = vadd.f32 %v4008, %v4352
      %v4443 = vadd.f32 %v4009, %v4357
      %v4444 = vadd.f32 %v4010, %v4362
      %v4445 = vadd.f32 %v4011, %v4367
      %v4446 = vadd.f32 %v4012, %v4372
      %v4447 = vadd.f32 %v4013, %v4377
      %v4448 = vadd.f32 %v4014, %v4382
      %v4449 = vadd.f32 %v4015, %v4387
      %v4450 = vadd.f32 %v4016, %v4392
      %v4451 = vadd.f32 %v4017, %v4397
      %v4452 = vadd.f32 %v4018, %v4402
      %v4453 = vadd.f32 %v4019, %v4407
      %v4454 = vadd.f32 %v4020, %v4412
      %v4455 = vadd.f32 %v4021, %v4417
      %v4456 = vld [vmem:[#allocation2 + $0x37] sm:$0xff]
      %v4457 = vld [vmem:[#allocation2 + $0x3f] sm:$0xff]
      %v4458 = vld [vmem:[#allocation2 + $0x47] sm:$0xff]
      %v4459 = vld [vmem:[#allocation2 + $0x4f] sm:$0xff]
      %v4460 = vld [vmem:[#allocation2 + $0x57] sm:$0xff]
      %v4461 = vld [vmem:[#allocation2 + $0x5f] sm:$0xff]
      %v4462 = vld [vmem:[#allocation2 + $0x67] sm:$0xff]
      %v4463 = vld [vmem:[#allocation2 + $0x6f] sm:$0xff]
      %v4464 = vld [vmem:[#allocation2 + $0x77] sm:$0xff]
      %v4465 = vld [vmem:[#allocation2 + $0x7f] sm:$0xff]
      %v4466 = vld [vmem:[#allocation2 + $0x87] sm:$0xff]
      %v4467 = vld [vmem:[#allocation2 + $0x8f] sm:$0xff]
      %v4468 = vld [vmem:[#allocation2 + $0x97] sm:$0xff]
      %v4469 = vld [vmem:[#allocation2 + $0x9f] sm:$0xff]
      %v4470 = vld [vmem:[#allocation2 + $0xa7] sm:$0xff]
      %v4471 = vld [vmem:[#allocation2 + $0xaf] sm:$0xff]
      %v4472 = vld [vmem:[#allocation2 + $0xb7] sm:$0xff]
      %v4473 = vld [vmem:[#allocation2 + $0xbf] sm:$0xff]
      %v4474 = vld [vmem:[#allocation2 + $0xc7] sm:$0xff]
      %v4475 = vld [vmem:[#allocation2 + $0xcf] sm:$0xff]
      %v4476 = vld [vmem:[#allocation2 + $0xd7] sm:$0xff]
      %v4477 = vld [vmem:[#allocation2 + $0xdf] sm:$0xff]
      %v4478 = vld [vmem:[#allocation2 + $0xe7] sm:$0xff]
      %v4479 = vld [vmem:[#allocation2 + $0xef] sm:$0xff]
      %v4480 = vld [vmem:[#allocation2 + $0xf7] sm:$0xff]
      %v4481 = vld [vmem:[#allocation2 + $0xff] sm:$0xff]
      %v4482 = vld [vmem:[#allocation2 + $0x107] sm:$0xff]
      %v4483 = vld [vmem:[#allocation2 + $0x10f] sm:$0xff]
      %v4484 = vld [vmem:[#allocation2 + $0x117] sm:$0xff]
      %v4485 = vld [vmem:[#allocation2 + $0x11f] sm:$0xff]
      %v4486 = vld [vmem:[#allocation2 + $0x127] sm:$0xff]
      %v4487 = vld [vmem:[#allocation2 + $0x12f] sm:$0xff]
      %v4488 = vld [vmem:[#allocation2 + $0x137] sm:$0xff]
      %v4489 = vld [vmem:[#allocation2 + $0x13f] sm:$0xff]
      %v4490 = vld [vmem:[#allocation2 + $0x147] sm:$0xff]
      %v4491 = vld [vmem:[#allocation2 + $0x14f] sm:$0xff]
      %s4492 = scalar_lea.vmem %s4, 512
      %v4493 = vld [vmem:[%s4492] sm:$0xff]
      %v4494 = vld [vmem:[%s4492 + $0x8] sm:$0xff]
      %v4495 = vld [vmem:[%s4492 + $0x10] sm:$0xff]
      %v4496 = vld [vmem:[%s4492 + $0x18] sm:$0xff]
      %v4497 = vld [vmem:[%s4492 + $0x20] sm:$0xff]
      %v4498 = vld [vmem:[%s4492 + $0x28] sm:$0xff]
      %v4499 = vld [vmem:[%s4492 + $0x30] sm:$0xff]
      %v4500 = vld [vmem:[%s4492 + $0x38] sm:$0xff]
      %v4502 = vsel %vm308, %v4456, 0
      %v4505 = vsel %vm308, %v4457, 0
      %v4508 = vsel %vm308, %v4458, 0
      %v4511 = vsel %vm308, %v4459, 0
      %v4514 = vsel %vm308, %v4460, 0
      %v4517 = vsel %vm308, %v4461, 0
      %v4520 = vsel %vm308, %v4462, 0
      %v4523 = vsel %vm308, %v4463, 0
      %v4526 = vsel %vm308, %v4464, 0
      %v4529 = vsel %vm308, %v4465, 0
      %v4532 = vsel %vm308, %v4466, 0
      %v4535 = vsel %vm308, %v4467, 0
      %v4538 = vsel %vm308, %v4468, 0
      %v4541 = vsel %vm308, %v4469, 0
      %v4544 = vsel %vm308, %v4470, 0
      %v4547 = vsel %vm308, %v4471, 0
      %v4550 = vsel %vm308, %v4472, 0
      %v4553 = vsel %vm308, %v4473, 0
      %v4556 = vsel %vm308, %v4474, 0
      %v4559 = vsel %vm308, %v4475, 0
      %v4562 = vsel %vm308, %v4476, 0
      %v4565 = vsel %vm308, %v4477, 0
      %v4568 = vsel %vm308, %v4478, 0
      %v4571 = vsel %vm308, %v4479, 0
      %v4574 = vsel %vm308, %v4480, 0
      %v4577 = vsel %vm308, %v4481, 0
      %v4580 = vsel %vm308, %v4482, 0
      %v4583 = vsel %vm308, %v4483, 0
      %v4586 = vsel %vm308, %v4484, 0
      %v4589 = vsel %vm308, %v4485, 0
      %v4592 = vsel %vm308, %v4486, 0
      %v4595 = vsel %vm308, %v4487, 0
      %v4598 = vsel %vm308, %v4488, 0
      %v4601 = vsel %vm308, %v4489, 0
      %v4604 = vsel %vm308, %v4490, 0
      %v4607 = vsel %vm308, %v4491, 0
      %4609 = vmatprep.subr.mxu0 0.0
      %4610 = vmatpush1.msra.mxu0 %v4493
      %4611 = vmatprep.subr.mxu0 0.0
      %4612 = vmatpush1.msra.mxu0 %v4494
      %4613 = vmatprep.subr.mxu0 0.0
      %4614 = vmatpush1.msra.mxu0 %v4495
      %4615 = vmatprep.subr.mxu0 0.0
      %4616 = vmatpush1.msra.mxu0 %v4496
      %4617 = vmatprep.subr.mxu0 0.0
      %4618 = vmatpush1.msra.mxu0 %v4497
      %4619 = vmatprep.subr.mxu0 0.0
      %4620 = vmatpush1.msra.mxu0 %v4498
      %4621 = vmatprep.subr.mxu0 0.0
      %4622 = vmatpush1.msra.mxu0 %v4499
      %4623 = vmatprep.subr.mxu0 0.0
      %4624 = vmatpush1.msra.mxu0 %v4500
      %4625 = vmatprep.subr.mxu0 0.0
      %4626 = vmatpush1.msra.mxu0 0.0
      %4627 = vmatprep.subr.mxu0 0.0
      %4628 = vmatpush1.msra.mxu0 0.0
      %4629 = vmatprep.subr.mxu0 0.0
      %4630 = vmatpush1.msra.mxu0 0.0
      %4631 = vmatprep.subr.mxu0 0.0
      %4632 = vmatpush1.msra.mxu0 0.0
      %4633 = vmatprep.subr.mxu0 0.0
      %4634 = vmatpush1.msra.mxu0 0.0
      %4635 = vmatprep.subr.mxu0 0.0
      %4636 = vmatpush1.msra.mxu0 0.0
      %4637 = vmatprep.subr.mxu0 0.0
      %4638 = vmatpush1.msra.mxu0 0.0
      %4639 = vmatprep.subr.mxu0 0.0
      %4640 = vmatpush1.msra.mxu0 0.0
      %4641 = vmatprep.subr.mxu0 0.0
      %4642 = vmatpush1.msra.mxu0 0.0
      %4643 = vmatprep.subr.mxu0 0.0
      %4644 = vmatpush1.msra.mxu0 0.0
      %4645 = vmatprep.subr.mxu0 0.0
      %4646 = vmatpush1.msra.mxu0 0.0
      %4647 = vmatprep.subr.mxu0 0.0
      %4648 = vmatpush1.msra.mxu0 0.0
      %4649 = vmatprep.subr.mxu0 0.0
      %4650 = vmatpush1.msra.mxu0 0.0
      %4651 = vmatprep.subr.mxu0 0.0
      %4652 = vmatpush1.msra.mxu0 0.0
      %4653 = vmatprep.subr.mxu0 0.0
      %4654 = vmatpush1.msra.mxu0 0.0
      %4655 = vmatprep.subr.mxu0 0.0
      %4656 = vmatpush1.msra.mxu0 0.0
      %4657 = vmatprep.subr.mxu0 0.0
      %4658 = vmatpush1.msra.mxu0 0.0
      %4659 = vmatprep.subr.mxu0 0.0
      %4660 = vmatpush1.msra.mxu0 0.0
      %4661 = vmatprep.subr.mxu0 0.0
      %4662 = vmatpush1.msra.mxu0 0.0
      %4663 = vmatprep.subr.mxu0 0.0
      %4664 = vmatpush1.msra.mxu0 0.0
      %4665 = vmatprep.subr.mxu0 0.0
      %4666 = vmatpush1.msra.mxu0 0.0
      %4667 = vmatprep.subr.mxu0 0.0
      %4668 = vmatpush1.msra.mxu0 0.0
      %4669 = vmatprep.subr.mxu0 0.0
      %4670 = vmatpush1.msra.mxu0 0.0
      %4671 = vmatprep.subr.mxu0 0.0
      %4672 = vmatpush1.msra.mxu0 0.0
      %4673 = vmatprep.mubr.f32.mxu0 0.0
      %4674 = vmatmul.mubr.f32.gmra.mrb[0].mxu0 %v4502
      %v4675 = vpop.f32.mrb[0].mxu0
      %v4676 = vadd.f32 0.0, %v4675
      %v4677 = vpop.f32.mrb[0].mxu0
      %4678 = vmatprep.mubr.f32.mxu0 0.0
      %4679 = vmatmul.mubr.f32.gmra.mrb[0].mxu0 %v4505
      %v4680 = vpop.f32.mrb[0].mxu0
      %v4681 = vadd.f32 0.0, %v4680
      %v4682 = vpop.f32.mrb[0].mxu0
      %4683 = vmatprep.mubr.f32.mxu0 0.0
      %4684 = vmatmul.mubr.f32.gmra.mrb[0].mxu0 %v4508
      %v4685 = vpop.f32.mrb[0].mxu0
      %v4686 = vadd.f32 0.0, %v4685
      %v4687 = vpop.f32.mrb[0].mxu0
      %4688 = vmatprep.mubr.f32.mxu0 0.0
      %4689 = vmatmul.mubr.f32.gmra.mrb[0].mxu0 %v4511
      %v4690 = vpop.f32.mrb[0].mxu0
      %v4691 = vadd.f32 0.0, %v4690
      %v4692 = vpop.f32.mrb[0].mxu0
      %4693 = vmatprep.mubr.f32.mxu0 0.0
      %4694 = vmatmul.mubr.f32.gmra.mrb[0].mxu0 %v4514
      %v4695 = vpop.f32.mrb[0].mxu0
      %v4696 = vadd.f32 0.0, %v4695
      %v4697 = vpop.f32.mrb[0].mxu0
      %4698 = vmatprep.mubr.f32.mxu0 0.0
      %4699 = vmatmul.mubr.f32.gmra.mrb[0].mxu0 %v4517
      %v4700 = vpop.f32.mrb[0].mxu0
      %v4701 = vadd.f32 0.0, %v4700
      %v4702 = vpop.f32.mrb[0].mxu0
      %4703 = vmatprep.mubr.f32.mxu0 0.0
      %4704 = vmatmul.mubr.f32.gmra.mrb[0].mxu0 %v4520
      %v4705 = vpop.f32.mrb[0].mxu0
      %v4706 = vadd.f32 0.0, %v4705
      %v4707 = vpop.f32.mrb[0].mxu0
      %4708 = vmatprep.mubr.f32.mxu0 0.0
      %4709 = vmatmul.mubr.f32.gmra.mrb[0].mxu0 %v4523
      %v4710 = vpop.f32.mrb[0].mxu0
      %v4711 = vadd.f32 0.0, %v4710
      %v4712 = vpop.f32.mrb[0].mxu0
      %4713 = vmatprep.mubr.f32.mxu0 0.0
      %4714 = vmatmul.mubr.f32.gmra.mrb[0].mxu0 %v4526
      %v4715 = vpop.f32.mrb[0].mxu0
      %v4716 = vadd.f32 0.0, %v4715
      %v4717 = vpop.f32.mrb[0].mxu0
      %4718 = vmatprep.mubr.f32.mxu0 0.0
      %4719 = vmatmul.mubr.f32.gmra.mrb[0].mxu0 %v4529
      %v4720 = vpop.f32.mrb[0].mxu0
      %v4721 = vadd.f32 0.0, %v4720
      %v4722 = vpop.f32.mrb[0].mxu0
      %4723 = vmatprep.mubr.f32.mxu0 0.0
      %4724 = vmatmul.mubr.f32.gmra.mrb[0].mxu0 %v4532
      %v4725 = vpop.f32.mrb[0].mxu0
      %v4726 = vadd.f32 0.0, %v4725
      %v4727 = vpop.f32.mrb[0].mxu0
      %4728 = vmatprep.mubr.f32.mxu0 0.0
      %4729 = vmatmul.mubr.f32.gmra.mrb[0].mxu0 %v4535
      %v4730 = vpop.f32.mrb[0].mxu0
      %v4731 = vadd.f32 0.0, %v4730
      %v4732 = vpop.f32.mrb[0].mxu0
      %4733 = vmatprep.mubr.f32.mxu0 0.0
      %4734 = vmatmul.mubr.f32.gmra.mrb[0].mxu0 %v4538
      %v4735 = vpop.f32.mrb[0].mxu0
      %v4736 = vadd.f32 0.0, %v4735
      %v4737 = vpop.f32.mrb[0].mxu0
      %4738 = vmatprep.mubr.f32.mxu0 0.0
      %4739 = vmatmul.mubr.f32.gmra.mrb[0].mxu0 %v4541
      %v4740 = vpop.f32.mrb[0].mxu0
      %v4741 = vadd.f32 0.0, %v4740
      %v4742 = vpop.f32.mrb[0].mxu0
      %4743 = vmatprep.mubr.f32.mxu0 0.0
      %4744 = vmatmul.mubr.f32.gmra.mrb[0].mxu0 %v4544
      %v4745 = vpop.f32.mrb[0].mxu0
      %v4746 = vadd.f32 0.0, %v4745
      %v4747 = vpop.f32.mrb[0].mxu0
      %4748 = vmatprep.mubr.f32.mxu0 0.0
      %4749 = vmatmul.mubr.f32.gmra.mrb[0].mxu0 %v4547
      %v4750 = vpop.f32.mrb[0].mxu0
      %v4751 = vadd.f32 0.0, %v4750
      %v4752 = vpop.f32.mrb[0].mxu0
      %4753 = vmatprep.mubr.f32.mxu0 0.0
      %4754 = vmatmul.mubr.f32.gmra.mrb[0].mxu0 %v4550
      %v4755 = vpop.f32.mrb[0].mxu0
      %v4756 = vadd.f32 0.0, %v4755
      %v4757 = vpop.f32.mrb[0].mxu0
      %4758 = vmatprep.mubr.f32.mxu0 0.0
      %4759 = vmatmul.mubr.f32.gmra.mrb[0].mxu0 %v4553
      %v4760 = vpop.f32.mrb[0].mxu0
      %v4761 = vadd.f32 0.0, %v4760
      %v4762 = vpop.f32.mrb[0].mxu0
      %4763 = vmatprep.mubr.f32.mxu0 0.0
      %4764 = vmatmul.mubr.f32.gmra.mrb[0].mxu0 %v4556
      %v4765 = vpop.f32.mrb[0].mxu0
      %v4766 = vadd.f32 0.0, %v4765
      %v4767 = vpop.f32.mrb[0].mxu0
      %4768 = vmatprep.mubr.f32.mxu0 0.0
      %4769 = vmatmul.mubr.f32.gmra.mrb[0].mxu0 %v4559
      %v4770 = vpop.f32.mrb[0].mxu0
      %v4771 = vadd.f32 0.0, %v4770
      %v4772 = vpop.f32.mrb[0].mxu0
      %4773 = vmatprep.mubr.f32.mxu0 0.0
      %4774 = vmatmul.mubr.f32.gmra.mrb[0].mxu0 %v4562
      %v4775 = vpop.f32.mrb[0].mxu0
      %v4776 = vadd.f32 0.0, %v4775
      %v4777 = vpop.f32.mrb[0].mxu0
      %4778 = vmatprep.mubr.f32.mxu0 0.0
      %4779 = vmatmul.mubr.f32.gmra.mrb[0].mxu0 %v4565
      %v4780 = vpop.f32.mrb[0].mxu0
      %v4781 = vadd.f32 0.0, %v4780
      %v4782 = vpop.f32.mrb[0].mxu0
      %4783 = vmatprep.mubr.f32.mxu0 0.0
      %4784 = vmatmul.mubr.f32.gmra.mrb[0].mxu0 %v4568
      %v4785 = vpop.f32.mrb[0].mxu0
      %v4786 = vadd.f32 0.0, %v4785
      %v4787 = vpop.f32.mrb[0].mxu0
      %4788 = vmatprep.mubr.f32.mxu0 0.0
      %4789 = vmatmul.mubr.f32.gmra.mrb[0].mxu0 %v4571
      %v4790 = vpop.f32.mrb[0].mxu0
      %v4791 = vadd.f32 0.0, %v4790
      %v4792 = vpop.f32.mrb[0].mxu0
      %4793 = vmatprep.mubr.f32.mxu0 0.0
      %4794 = vmatmul.mubr.f32.gmra.mrb[0].mxu0 %v4574
      %v4795 = vpop.f32.mrb[0].mxu0
      %v4796 = vadd.f32 0.0, %v4795
      %v4797 = vpop.f32.mrb[0].mxu0
      %4798 = vmatprep.mubr.f32.mxu0 0.0
      %4799 = vmatmul.mubr.f32.gmra.mrb[0].mxu0 %v4577
      %v4800 = vpop.f32.mrb[0].mxu0
      %v4801 = vadd.f32 0.0, %v4800
      %v4802 = vpop.f32.mrb[0].mxu0
      %4803 = vmatprep.mubr.f32.mxu0 0.0
      %4804 = vmatmul.mubr.f32.gmra.mrb[0].mxu0 %v4580
      %v4805 = vpop.f32.mrb[0].mxu0
      %v4806 = vadd.f32 0.0, %v4805
      %v4807 = vpop.f32.mrb[0].mxu0
      %4808 = vmatprep.mubr.f32.mxu0 0.0
      %4809 = vmatmul.mubr.f32.gmra.mrb[0].mxu0 %v4583
      %v4810 = vpop.f32.mrb[0].mxu0
      %v4811 = vadd.f32 0.0, %v4810
      %v4812 = vpop.f32.mrb[0].mxu0
      %4813 = vmatprep.mubr.f32.mxu0 0.0
      %4814 = vmatmul.mubr.f32.gmra.mrb[0].mxu0 %v4586
      %v4815 = vpop.f32.mrb[0].mxu0
      %v4816 = vadd.f32 0.0, %v4815
      %v4817 = vpop.f32.mrb[0].mxu0
      %4818 = vmatprep.mubr.f32.mxu0 0.0
      %4819 = vmatmul.mubr.f32.gmra.mrb[0].mxu0 %v4589
      %v4820 = vpop.f32.mrb[0].mxu0
      %v4821 = vadd.f32 0.0, %v4820
      %v4822 = vpop.f32.mrb[0].mxu0
      %4823 = vmatprep.mubr.f32.mxu0 0.0
      %4824 = vmatmul.mubr.f32.gmra.mrb[0].mxu0 %v4592
      %v4825 = vpop.f32.mrb[0].mxu0
      %v4826 = vadd.f32 0.0, %v4825
      %v4827 = vpop.f32.mrb[0].mxu0
      %4828 = vmatprep.mubr.f32.mxu0 0.0
      %4829 = vmatmul.mubr.f32.gmra.mrb[0].mxu0 %v4595
      %v4830 = vpop.f32.mrb[0].mxu0
      %v4831 = vadd.f32 0.0, %v4830
      %v4832 = vpop.f32.mrb[0].mxu0
      %4833 = vmatprep.mubr.f32.mxu0 0.0
      %4834 = vmatmul.mubr.f32.gmra.mrb[0].mxu0 %v4598
      %v4835 = vpop.f32.mrb[0].mxu0
      %v4836 = vadd.f32 0.0, %v4835
      %v4837 = vpop.f32.mrb[0].mxu0
      %4838 = vmatprep.mubr.f32.mxu0 0.0
      %4839 = vmatmul.mubr.f32.gmra.mrb[0].mxu0 %v4601
      %v4840 = vpop.f32.mrb[0].mxu0
      %v4841 = vadd.f32 0.0, %v4840
      %v4842 = vpop.f32.mrb[0].mxu0
      %4843 = vmatprep.mubr.f32.mxu0 0.0
      %4844 = vmatmul.mubr.f32.gmra.mrb[0].mxu0 %v4604
      %v4845 = vpop.f32.mrb[0].mxu0
      %v4846 = vadd.f32 0.0, %v4845
      %v4847 = vpop.f32.mrb[0].mxu0
      %4848 = vmatprep.mubr.f32.mxu0 0.0
      %4849 = vmatmul.mubr.f32.gmra.mrb[0].mxu0 %v4607
      %v4850 = vpop.f32.mrb[0].mxu0
      %v4851 = vadd.f32 0.0, %v4850
      %v4852 = vpop.f32.mrb[0].mxu0
      %4853 = vdwg.mxu0
      %v4854 = vadd.f32 %v4420, %v4676
      %v4855 = vadd.f32 %v4421, %v4681
      %v4856 = vadd.f32 %v4422, %v4686
      %v4857 = vadd.f32 %v4423, %v4691
      %v4858 = vadd.f32 %v4424, %v4696
      %v4859 = vadd.f32 %v4425, %v4701
      %v4860 = vadd.f32 %v4426, %v4706
      %v4861 = vadd.f32 %v4427, %v4711
      %v4862 = vadd.f32 %v4428, %v4716
      %v4863 = vadd.f32 %v4429, %v4721
      %v4864 = vadd.f32 %v4430, %v4726
      %v4865 = vadd.f32 %v4431, %v4731
      %v4866 = vadd.f32 %v4432, %v4736
      %v4867 = vadd.f32 %v4433, %v4741
      %v4868 = vadd.f32 %v4434, %v4746
      %v4869 = vadd.f32 %v4435, %v4751
      %v4870 = vadd.f32 %v4436, %v4756
      %v4871 = vadd.f32 %v4437, %v4761
      %v4872 = vadd.f32 %v4438, %v4766
      %v4873 = vadd.f32 %v4439, %v4771
      %v4874 = vadd.f32 %v4440, %v4776
      %v4875 = vadd.f32 %v4441, %v4781
      %v4876 = vadd.f32 %v4442, %v4786
      %v4877 = vadd.f32 %v4443, %v4791
      %v4878 = vadd.f32 %v4444, %v4796
      %v4879 = vadd.f32 %v4445, %v4801
      %v4880 = vadd.f32 %v4446, %v4806
      %v4881 = vadd.f32 %v4447, %v4811
      %v4882 = vadd.f32 %v4448, %v4816
      %v4883 = vadd.f32 %v4449, %v4821
      %v4884 = vadd.f32 %v4450, %v4826
      %v4885 = vadd.f32 %v4451, %v4831
      %v4886 = vadd.f32 %v4452, %v4836
      %v4887 = vadd.f32 %v4453, %v4841
      %v4888 = vadd.f32 %v4454, %v4846
      %v4889 = vadd.f32 %v4455, %v4851
      %v4890 = vld [vmem:[%s5] sm:$0x1]
      %v4892 = vlaneseq
      %v4893 = vshrl.u32 %v4892, 7
      %v4894 = vsub.s32 0, %v4893
      %v4895 = vrot.slane %v4890, %v4894
      %v4897 = vadd.f32 %v4854, %v4895
      %v4898 = vadd.f32 %v4855, %v4895
      %v4899 = vadd.f32 %v4856, %v4895
      %v4900 = vadd.f32 %v4857, %v4895
      %v4901 = vadd.f32 %v4858, %v4895
      %v4902 = vadd.f32 %v4859, %v4895
      %v4903 = vadd.f32 %v4860, %v4895
      %v4904 = vadd.f32 %v4861, %v4895
      %v4905 = vadd.f32 %v4862, %v4895
      %v4906 = vadd.f32 %v4863, %v4895
      %v4907 = vadd.f32 %v4864, %v4895
      %v4908 = vadd.f32 %v4865, %v4895
      %v4909 = vadd.f32 %v4866, %v4895
      %v4910 = vadd.f32 %v4867, %v4895
      %v4911 = vadd.f32 %v4868, %v4895
      %v4912 = vadd.f32 %v4869, %v4895
      %v4913 = vadd.f32 %v4870, %v4895
      %v4914 = vadd.f32 %v4871, %v4895
      %v4915 = vadd.f32 %v4872, %v4895
      %v4916 = vadd.f32 %v4873, %v4895
      %v4917 = vadd.f32 %v4874, %v4895
      %v4918 = vadd.f32 %v4875, %v4895
      %v4919 = vadd.f32 %v4876, %v4895
      %v4920 = vadd.f32 %v4877, %v4895
      %v4921 = vadd.f32 %v4878, %v4895
      %v4922 = vadd.f32 %v4879, %v4895
      %v4923 = vadd.f32 %v4880, %v4895
      %v4924 = vadd.f32 %v4881, %v4895
      %v4925 = vadd.f32 %v4882, %v4895
      %v4926 = vadd.f32 %v4883, %v4895
      %v4927 = vadd.f32 %v4884, %v4895
      %v4928 = vadd.f32 %v4885, %v4895
      %v4929 = vadd.f32 %v4886, %v4895
      %v4930 = vadd.f32 %v4887, %v4895
      %v4931 = vadd.f32 %v4888, %v4895
      %v4932 = vadd.f32 %v4889, %v4895
      %v4933 = vmax.f32 %v4897, 0.0
      %v4934 = vmax.f32 %v4898, 0.0
      %v4935 = vmax.f32 %v4899, 0.0
      %v4936 = vmax.f32 %v4900, 0.0
      %v4937 = vmax.f32 %v4901, 0.0
      %v4938 = vmax.f32 %v4902, 0.0
      %v4939 = vmax.f32 %v4903, 0.0
      %v4940 = vmax.f32 %v4904, 0.0
      %v4941 = vmax.f32 %v4905, 0.0
      %v4942 = vmax.f32 %v4906, 0.0
      %v4943 = vmax.f32 %v4907, 0.0
      %v4944 = vmax.f32 %v4908, 0.0
      %v4945 = vmax.f32 %v4909, 0.0
      %v4946 = vmax.f32 %v4910, 0.0
      %v4947 = vmax.f32 %v4911, 0.0
      %v4948 = vmax.f32 %v4912, 0.0
      %v4949 = vmax.f32 %v4913, 0.0
      %v4950 = vmax.f32 %v4914, 0.0
      %v4951 = vmax.f32 %v4915, 0.0
      %v4952 = vmax.f32 %v4916, 0.0
      %v4953 = vmax.f32 %v4917, 0.0
      %v4954 = vmax.f32 %v4918, 0.0
      %v4955 = vmax.f32 %v4919, 0.0
      %v4956 = vmax.f32 %v4920, 0.0
      %v4957 = vmax.f32 %v4921, 0.0
      %v4958 = vmax.f32 %v4922, 0.0
      %v4959 = vmax.f32 %v4923, 0.0
      %v4960 = vmax.f32 %v4924, 0.0
      %v4961 = vmax.f32 %v4925, 0.0
      %v4962 = vmax.f32 %v4926, 0.0
      %v4963 = vmax.f32 %v4927, 0.0
      %v4964 = vmax.f32 %v4928, 0.0
      %v4965 = vmax.f32 %v4929, 0.0
      %v4966 = vmax.f32 %v4930, 0.0
      %v4967 = vmax.f32 %v4931, 0.0
      %v4968 = vmax.f32 %v4932, 0.0
      %v4969 = vmul.f32 %v4933, %v808
      %v4970 = vmul.f32 %v4934, %v813
      %v4971 = vmul.f32 %v4935, %v818
      %v4972 = vmul.f32 %v4936, %v823
      %v4973 = vmul.f32 %v4937, %v828
      %v4974 = vmul.f32 %v4938, %v833
      %v4975 = vmul.f32 %v4939, %v838
      %v4976 = vmul.f32 %v4940, %v843
      %v4977 = vmul.f32 %v4941, %v848
      %v4978 = vmul.f32 %v4942, %v853
      %v4979 = vmul.f32 %v4943, %v858
      %v4980 = vmul.f32 %v4944, %v863
      %v4981 = vmul.f32 %v4945, %v868
      %v4982 = vmul.f32 %v4946, %v873
      %v4983 = vmul.f32 %v4947, %v878
      %v4984 = vmul.f32 %v4948, %v883
      %v4985 = vmul.f32 %v4949, %v888
      %v4986 = vmul.f32 %v4950, %v893
      %v4987 = vmul.f32 %v4951, %v898
      %v4988 = vmul.f32 %v4952, %v903
      %v4989 = vmul.f32 %v4953, %v908
      %v4990 = vmul.f32 %v4954, %v913
      %v4991 = vmul.f32 %v4955, %v918
      %v4992 = vmul.f32 %v4956, %v923
      %v4993 = vmul.f32 %v4957, %v928
      %v4994 = vmul.f32 %v4958, %v933
      %v4995 = vmul.f32 %v4959, %v938
      %v4996 = vmul.f32 %v4960, %v943
      %v4997 = vmul.f32 %v4961, %v948
      %v4998 = vmul.f32 %v4962, %v953
      %v4999 = vmul.f32 %v4963, %v958
      %v5000 = vmul.f32 %v4964, %v963
      %v5001 = vmul.f32 %v4965, %v968
      %v5002 = vmul.f32 %v4966, %v973
      %v5003 = vmul.f32 %v4967, %v978
      %v5004 = vmul.f32 %v4968, %v983
      %5005 = vst.msk [vmem:[#allocation3 + $0x24] sm:$0xff] %vm308, %v4969
      %5006 = vst.msk [vmem:[#allocation3 + $0x2c] sm:$0xff] %vm308, %v4970
      %5007 = vst.msk [vmem:[#allocation3 + $0x34] sm:$0xff] %vm308, %v4971
      %5008 = vst.msk [vmem:[#allocation3 + $0x3c] sm:$0xff] %vm308, %v4972
      %5009 = vst.msk [vmem:[#allocation3 + $0x44] sm:$0xff] %vm308, %v4973
      %5010 = vst.msk [vmem:[#allocation3 + $0x4c] sm:$0xff] %vm308, %v4974
      %5011 = vst.msk [vmem:[#allocation3 + $0x54] sm:$0xff] %vm308, %v4975
      %5012 = vst.msk [vmem:[#allocation3 + $0x5c] sm:$0xff] %vm308, %v4976
      %5013 = vst.msk [vmem:[#allocation3 + $0x64] sm:$0xff] %vm308, %v4977
      %5014 = vst.msk [vmem:[#allocation3 + $0x6c] sm:$0xff] %vm308, %v4978
      %5015 = vst.msk [vmem:[#allocation3 + $0x74] sm:$0xff] %vm308, %v4979
      %5016 = vst.msk [vmem:[#allocation3 + $0x7c] sm:$0xff] %vm308, %v4980
      %5017 = vst.msk [vmem:[#allocation3 + $0x84] sm:$0xff] %vm308, %v4981
      %5018 = vst.msk [vmem:[#allocation3 + $0x8c] sm:$0xff] %vm308, %v4982
      %5019 = vst.msk [vmem:[#allocation3 + $0x94] sm:$0xff] %vm308, %v4983
      %5020 = vst.msk [vmem:[#allocation3 + $0x9c] sm:$0xff] %vm308, %v4984
      %5021 = vst.msk [vmem:[#allocation3 + $0xa4] sm:$0xff] %vm308, %v4985
      %5022 = vst.msk [vmem:[#allocation3 + $0xac] sm:$0xff] %vm308, %v4986
      %5023 = vst.msk [vmem:[#allocation3 + $0xb4] sm:$0xff] %vm308, %v4987
      %5024 = vst.msk [vmem:[#allocation3 + $0xbc] sm:$0xff] %vm308, %v4988
      %5025 = vst.msk [vmem:[#allocation3 + $0xc4] sm:$0xff] %vm308, %v4989
      %5026 = vst.msk [vmem:[#allocation3 + $0xcc] sm:$0xff] %vm308, %v4990
      %5027 = vst.msk [vmem:[#allocation3 + $0xd4] sm:$0xff] %vm308, %v4991
      %5028 = vst.msk [vmem:[#allocation3 + $0xdc] sm:$0xff] %vm308, %v4992
      %5029 = vst.msk [vmem:[#allocation3 + $0xe4] sm:$0xff] %vm308, %v4993
      %5030 = vst.msk [vmem:[#allocation3 + $0xec] sm:$0xff] %vm308, %v4994
      %5031 = vst.msk [vmem:[#allocation3 + $0xf4] sm:$0xff] %vm308, %v4995
      %5032 = vst.msk [vmem:[#allocation3 + $0xfc] sm:$0xff] %vm308, %v4996
      %5033 = vst.msk [vmem:[#allocation3 + $0x104] sm:$0xff] %vm308, %v4997
      %5034 = vst.msk [vmem:[#allocation3 + $0x10c] sm:$0xff] %vm308, %v4998
      %5035 = vst.msk [vmem:[#allocation3 + $0x114] sm:$0xff] %vm308, %v4999
      %5036 = vst.msk [vmem:[#allocation3 + $0x11c] sm:$0xff] %vm308, %v5000
      %5037 = vst.msk [vmem:[#allocation3 + $0x124] sm:$0xff] %vm308, %v5001
      %5038 = vst.msk [vmem:[#allocation3 + $0x12c] sm:$0xff] %vm308, %v5002
      %5039 = vst.msk [vmem:[#allocation3 + $0x134] sm:$0xff] %vm308, %v5003
      %5040 = vst.msk [vmem:[#allocation3 + $0x13c] sm:$0xff] %vm308, %v5004
      %v5041 = vld [vmem:[#allocation3 + $0x11] sm:$0xff]
      %v5042 = vld [vmem:[#allocation3 + $0x19] sm:$0xff]
      %v5043 = vld [vmem:[#allocation3 + $0x21] sm:$0xff]
      %v5044 = vld [vmem:[#allocation3 + $0x29] sm:$0xff]
      %v5045 = vld [vmem:[#allocation3 + $0x31] sm:$0xff]
      %v5046 = vld [vmem:[#allocation3 + $0x39] sm:$0xff]
      %v5047 = vld [vmem:[#allocation3 + $0x41] sm:$0xff]
      %v5048 = vld [vmem:[#allocation3 + $0x49] sm:$0xff]
      %v5049 = vld [vmem:[#allocation3 + $0x51] sm:$0xff]
      %v5050 = vld [vmem:[#allocation3 + $0x59] sm:$0xff]
      %v5051 = vld [vmem:[#allocation3 + $0x61] sm:$0xff]
      %v5052 = vld [vmem:[#allocation3 + $0x69] sm:$0xff]
      %v5053 = vld [vmem:[#allocation3 + $0x71] sm:$0xff]
      %v5054 = vld [vmem:[#allocation3 + $0x79] sm:$0xff]
      %v5055 = vld [vmem:[#allocation3 + $0x81] sm:$0xff]
      %v5056 = vld [vmem:[#allocation3 + $0x89] sm:$0xff]
      %v5057 = vld [vmem:[#allocation3 + $0x91] sm:$0xff]
      %v5058 = vld [vmem:[#allocation3 + $0x99] sm:$0xff]
      %v5059 = vld [vmem:[#allocation3 + $0xa1] sm:$0xff]
      %v5060 = vld [vmem:[#allocation3 + $0xa9] sm:$0xff]
      %v5061 = vld [vmem:[#allocation3 + $0xb1] sm:$0xff]
      %v5062 = vld [vmem:[#allocation3 + $0xb9] sm:$0xff]
      %v5063 = vld [vmem:[#allocation3 + $0xc1] sm:$0xff]
      %v5064 = vld [vmem:[#allocation3 + $0xc9] sm:$0xff]
      %v5065 = vld [vmem:[#allocation3 + $0xd1] sm:$0xff]
      %v5066 = vld [vmem:[#allocation3 + $0xd9] sm:$0xff]
      %v5067 = vld [vmem:[#allocation3 + $0xe1] sm:$0xff]
      %v5068 = vld [vmem:[#allocation3 + $0xe9] sm:$0xff]
      %v5069 = vld [vmem:[#allocation3 + $0xf1] sm:$0xff]
      %v5070 = vld [vmem:[#allocation3 + $0xf9] sm:$0xff]
      %v5071 = vld [vmem:[#allocation3 + $0x101] sm:$0xff]
      %v5072 = vld [vmem:[#allocation3 + $0x109] sm:$0xff]
      %v5073 = vld [vmem:[#allocation3 + $0x111] sm:$0xff]
      %v5074 = vld [vmem:[#allocation3 + $0x119] sm:$0xff]
      %v5075 = vld [vmem:[#allocation3 + $0x121] sm:$0xff]
      %v5076 = vld [vmem:[#allocation3 + $0x129] sm:$0xff]
      %v5077 = vld [vmem:[%s6] sm:$0x1]
      %v5079 = vlaneseq
      %v5080 = vshrl.u32 %v5079, 7
      %v5081 = vsub.s32 0, %v5080
      %v5082 = vrot.slane %v5077, %v5081
      %v5084 = vmul.f32 %v5041, %v5082
      %v5085 = vmul.f32 %v5042, %v5082
      %v5086 = vmul.f32 %v5043, %v5082
      %v5087 = vmul.f32 %v5044, %v5082
      %v5088 = vmul.f32 %v5045, %v5082
      %v5089 = vmul.f32 %v5046, %v5082
      %v5090 = vmul.f32 %v5047, %v5082
      %v5091 = vmul.f32 %v5048, %v5082
      %v5092 = vmul.f32 %v5049, %v5082
      %v5093 = vmul.f32 %v5050, %v5082
      %v5094 = vmul.f32 %v5051, %v5082
      %v5095 = vmul.f32 %v5052, %v5082
      %v5096 = vmul.f32 %v5053, %v5082
      %v5097 = vmul.f32 %v5054, %v5082
      %v5098 = vmul.f32 %v5055, %v5082
      %v5099 = vmul.f32 %v5056, %v5082
      %v5100 = vmul.f32 %v5057, %v5082
      %v5101 = vmul.f32 %v5058, %v5082
      %v5102 = vmul.f32 %v5059, %v5082
      %v5103 = vmul.f32 %v5060, %v5082
      %v5104 = vmul.f32 %v5061, %v5082
      %v5105 = vmul.f32 %v5062, %v5082
      %v5106 = vmul.f32 %v5063, %v5082
      %v5107 = vmul.f32 %v5064, %v5082
      %v5108 = vmul.f32 %v5065, %v5082
      %v5109 = vmul.f32 %v5066, %v5082
      %v5110 = vmul.f32 %v5067, %v5082
      %v5111 = vmul.f32 %v5068, %v5082
      %v5112 = vmul.f32 %v5069, %v5082
      %v5113 = vmul.f32 %v5070, %v5082
      %v5114 = vmul.f32 %v5071, %v5082
      %v5115 = vmul.f32 %v5072, %v5082
      %v5116 = vmul.f32 %v5073, %v5082
      %v5117 = vmul.f32 %v5074, %v5082
      %v5118 = vmul.f32 %v5075, %v5082
      %v5119 = vmul.f32 %v5076, %v5082
      %v5120 = vadd.f32 %v5084, 0.0
      %v5121 = vadd.f32 %v5085, 0.0
      %v5122 = vadd.f32 %v5086, 0.0
      %v5123 = vadd.f32 %v5087, 0.0
      %v5124 = vadd.f32 %v5088, 0.0
      %v5125 = vadd.f32 %v5089, 0.0
      %v5126 = vadd.f32 %v5090, 0.0
      %v5127 = vadd.f32 %v5091, 0.0
      %v5128 = vadd.f32 %v5092, 0.0
      %v5129 = vadd.f32 %v5093, 0.0
      %v5130 = vadd.f32 %v5094, 0.0
      %v5131 = vadd.f32 %v5095, 0.0
      %v5132 = vadd.f32 %v5096, 0.0
      %v5133 = vadd.f32 %v5097, 0.0
      %v5134 = vadd.f32 %v5098, 0.0
      %v5135 = vadd.f32 %v5099, 0.0
      %v5136 = vadd.f32 %v5100, 0.0
      %v5137 = vadd.f32 %v5101, 0.0
      %v5138 = vadd.f32 %v5102, 0.0
      %v5139 = vadd.f32 %v5103, 0.0
      %v5140 = vadd.f32 %v5104, 0.0
      %v5141 = vadd.f32 %v5105, 0.0
      %v5142 = vadd.f32 %v5106, 0.0
      %v5143 = vadd.f32 %v5107, 0.0
      %v5144 = vadd.f32 %v5108, 0.0
      %v5145 = vadd.f32 %v5109, 0.0
      %v5146 = vadd.f32 %v5110, 0.0
      %v5147 = vadd.f32 %v5111, 0.0
      %v5148 = vadd.f32 %v5112, 0.0
      %v5149 = vadd.f32 %v5113, 0.0
      %v5150 = vadd.f32 %v5114, 0.0
      %v5151 = vadd.f32 %v5115, 0.0
      %v5152 = vadd.f32 %v5116, 0.0
      %v5153 = vadd.f32 %v5117, 0.0
      %v5154 = vadd.f32 %v5118, 0.0
      %v5155 = vadd.f32 %v5119, 0.0
      %v5156 = vld [vmem:[#allocation3 + $0x12] sm:$0xff]
      %v5157 = vld [vmem:[#allocation3 + $0x1a] sm:$0xff]
      %v5158 = vld [vmem:[#allocation3 + $0x22] sm:$0xff]
      %v5159 = vld [vmem:[#allocation3 + $0x2a] sm:$0xff]
      %v5160 = vld [vmem:[#allocation3 + $0x32] sm:$0xff]
      %v5161 = vld [vmem:[#allocation3 + $0x3a] sm:$0xff]
      %v5162 = vld [vmem:[#allocation3 + $0x42] sm:$0xff]
      %v5163 = vld [vmem:[#allocation3 + $0x4a] sm:$0xff]
      %v5164 = vld [vmem:[#allocation3 + $0x52] sm:$0xff]
      %v5165 = vld [vmem:[#allocation3 + $0x5a] sm:$0xff]
      %v5166 = vld [vmem:[#allocation3 + $0x62] sm:$0xff]
      %v5167 = vld [vmem:[#allocation3 + $0x6a] sm:$0xff]
      %v5168 = vld [vmem:[#allocation3 + $0x72] sm:$0xff]
      %v5169 = vld [vmem:[#allocation3 + $0x7a] sm:$0xff]
      %v5170 = vld [vmem:[#allocation3 + $0x82] sm:$0xff]
      %v5171 = vld [vmem:[#allocation3 + $0x8a] sm:$0xff]
      %v5172 = vld [vmem:[#allocation3 + $0x92] sm:$0xff]
      %v5173 = vld [vmem:[#allocation3 + $0x9a] sm:$0xff]
      %v5174 = vld [vmem:[#allocation3 + $0xa2] sm:$0xff]
      %v5175 = vld [vmem:[#allocation3 + $0xaa] sm:$0xff]
      %v5176 = vld [vmem:[#allocation3 + $0xb2] sm:$0xff]
      %v5177 = vld [vmem:[#allocation3 + $0xba] sm:$0xff]
      %v5178 = vld [vmem:[#allocation3 + $0xc2] sm:$0xff]
      %v5179 = vld [vmem:[#allocation3 + $0xca] sm:$0xff]
      %v5180 = vld [vmem:[#allocation3 + $0xd2] sm:$0xff]
      %v5181 = vld [vmem:[#allocation3 + $0xda] sm:$0xff]
      %v5182 = vld [vmem:[#allocation3 + $0xe2] sm:$0xff]
      %v5183 = vld [vmem:[#allocation3 + $0xea] sm:$0xff]
      %v5184 = vld [vmem:[#allocation3 + $0xf2] sm:$0xff]
      %v5185 = vld [vmem:[#allocation3 + $0xfa] sm:$0xff]
      %v5186 = vld [vmem:[#allocation3 + $0x102] sm:$0xff]
      %v5187 = vld [vmem:[#allocation3 + $0x10a] sm:$0xff]
      %v5188 = vld [vmem:[#allocation3 + $0x112] sm:$0xff]
      %v5189 = vld [vmem:[#allocation3 + $0x11a] sm:$0xff]
      %v5190 = vld [vmem:[#allocation3 + $0x122] sm:$0xff]
      %v5191 = vld [vmem:[#allocation3 + $0x12a] sm:$0xff]
      %s5192 = scalar_lea.vmem %s6, 1
      %v5193 = vld [vmem:[%s5192] sm:$0x1]
      %v5195 = vlaneseq
      %v5196 = vshrl.u32 %v5195, 7
      %v5197 = vsub.s32 0, %v5196
      %v5198 = vrot.slane %v5193, %v5197
      %v5200 = vmul.f32 %v5156, %v5198
      %v5201 = vmul.f32 %v5157, %v5198
      %v5202 = vmul.f32 %v5158, %v5198
      %v5203 = vmul.f32 %v5159, %v5198
      %v5204 = vmul.f32 %v5160, %v5198
      %v5205 = vmul.f32 %v5161, %v5198
      %v5206 = vmul.f32 %v5162, %v5198
      %v5207 = vmul.f32 %v5163, %v5198
      %v5208 = vmul.f32 %v5164, %v5198
      %v5209 = vmul.f32 %v5165, %v5198
      %v5210 = vmul.f32 %v5166, %v5198
      %v5211 = vmul.f32 %v5167, %v5198
      %v5212 = vmul.f32 %v5168, %v5198
      %v5213 = vmul.f32 %v5169, %v5198
      %v5214 = vmul.f32 %v5170, %v5198
      %v5215 = vmul.f32 %v5171, %v5198
      %v5216 = vmul.f32 %v5172, %v5198
      %v5217 = vmul.f32 %v5173, %v5198
      %v5218 = vmul.f32 %v5174, %v5198
      %v5219 = vmul.f32 %v5175, %v5198
      %v5220 = vmul.f32 %v5176, %v5198
      %v5221 = vmul.f32 %v5177, %v5198
      %v5222 = vmul.f32 %v5178, %v5198
      %v5223 = vmul.f32 %v5179, %v5198
      %v5224 = vmul.f32 %v5180, %v5198
      %v5225 = vmul.f32 %v5181, %v5198
      %v5226 = vmul.f32 %v5182, %v5198
      %v5227 = vmul.f32 %v5183, %v5198
      %v5228 = vmul.f32 %v5184, %v5198
      %v5229 = vmul.f32 %v5185, %v5198
      %v5230 = vmul.f32 %v5186, %v5198
      %v5231 = vmul.f32 %v5187, %v5198
      %v5232 = vmul.f32 %v5188, %v5198
      %v5233 = vmul.f32 %v5189, %v5198
      %v5234 = vmul.f32 %v5190, %v5198
      %v5235 = vmul.f32 %v5191, %v5198
      %v5236 = vadd.f32 %v5120, %v5200
      %v5237 = vadd.f32 %v5121, %v5201
      %v5238 = vadd.f32 %v5122, %v5202
      %v5239 = vadd.f32 %v5123, %v5203
      %v5240 = vadd.f32 %v5124, %v5204
      %v5241 = vadd.f32 %v5125, %v5205
      %v5242 = vadd.f32 %v5126, %v5206
      %v5243 = vadd.f32 %v5127, %v5207
      %v5244 = vadd.f32 %v5128, %v5208
      %v5245 = vadd.f32 %v5129, %v5209
      %v5246 = vadd.f32 %v5130, %v5210
      %v5247 = vadd.f32 %v5131, %v5211
      %v5248 = vadd.f32 %v5132, %v5212
      %v5249 = vadd.f32 %v5133, %v5213
      %v5250 = vadd.f32 %v5134, %v5214
      %v5251 = vadd.f32 %v5135, %v5215
      %v5252 = vadd.f32 %v5136, %v5216
      %v5253 = vadd.f32 %v5137, %v5217
      %v5254 = vadd.f32 %v5138, %v5218
      %v5255 = vadd.f32 %v5139, %v5219
      %v5256 = vadd.f32 %v5140, %v5220
      %v5257 = vadd.f32 %v5141, %v5221
      %v5258 = vadd.f32 %v5142, %v5222
      %v5259 = vadd.f32 %v5143, %v5223
      %v5260 = vadd.f32 %v5144, %v5224
      %v5261 = vadd.f32 %v5145, %v5225
      %v5262 = vadd.f32 %v5146, %v5226
      %v5263 = vadd.f32 %v5147, %v5227
      %v5264 = vadd.f32 %v5148, %v5228
      %v5265 = vadd.f32 %v5149, %v5229
      %v5266 = vadd.f32 %v5150, %v5230
      %v5267 = vadd.f32 %v5151, %v5231
      %v5268 = vadd.f32 %v5152, %v5232
      %v5269 = vadd.f32 %v5153, %v5233
      %v5270 = vadd.f32 %v5154, %v5234
      %v5271 = vadd.f32 %v5155, %v5235
      %v5272 = vld [vmem:[#allocation3 + $0x13] sm:$0xff]
      %v5273 = vld [vmem:[#allocation3 + $0x1b] sm:$0xff]
      %v5274 = vld [vmem:[#allocation3 + $0x23] sm:$0xff]
      %v5275 = vld [vmem:[#allocation3 + $0x2b] sm:$0xff]
      %v5276 = vld [vmem:[#allocation3 + $0x33] sm:$0xff]
      %v5277 = vld [vmem:[#allocation3 + $0x3b] sm:$0xff]
      %v5278 = vld [vmem:[#allocation3 + $0x43] sm:$0xff]
      %v5279 = vld [vmem:[#allocation3 + $0x4b] sm:$0xff]
      %v5280 = vld [vmem:[#allocation3 + $0x53] sm:$0xff]
      %v5281 = vld [vmem:[#allocation3 + $0x5b] sm:$0xff]
      %v5282 = vld [vmem:[#allocation3 + $0x63] sm:$0xff]
      %v5283 = vld [vmem:[#allocation3 + $0x6b] sm:$0xff]
      %v5284 = vld [vmem:[#allocation3 + $0x73] sm:$0xff]
      %v5285 = vld [vmem:[#allocation3 + $0x7b] sm:$0xff]
      %v5286 = vld [vmem:[#allocation3 + $0x83] sm:$0xff]
      %v5287 = vld [vmem:[#allocation3 + $0x8b] sm:$0xff]
      %v5288 = vld [vmem:[#allocation3 + $0x93] sm:$0xff]
      %v5289 = vld [vmem:[#allocation3 + $0x9b] sm:$0xff]
      %v5290 = vld [vmem:[#allocation3 + $0xa3] sm:$0xff]
      %v5291 = vld [vmem:[#allocation3 + $0xab] sm:$0xff]
      %v5292 = vld [vmem:[#allocation3 + $0xb3] sm:$0xff]
      %v5293 = vld [vmem:[#allocation3 + $0xbb] sm:$0xff]
      %v5294 = vld [vmem:[#allocation3 + $0xc3] sm:$0xff]
      %v5295 = vld [vmem:[#allocation3 + $0xcb] sm:$0xff]
      %v5296 = vld [vmem:[#allocation3 + $0xd3] sm:$0xff]
      %v5297 = vld [vmem:[#allocation3 + $0xdb] sm:$0xff]
      %v5298 = vld [vmem:[#allocation3 + $0xe3] sm:$0xff]
      %v5299 = vld [vmem:[#allocation3 + $0xeb] sm:$0xff]
      %v5300 = vld [vmem:[#allocation3 + $0xf3] sm:$0xff]
      %v5301 = vld [vmem:[#allocation3 + $0xfb] sm:$0xff]
      %v5302 = vld [vmem:[#allocation3 + $0x103] sm:$0xff]
      %v5303 = vld [vmem:[#allocation3 + $0x10b] sm:$0xff]
      %v5304 = vld [vmem:[#allocation3 + $0x113] sm:$0xff]
      %v5305 = vld [vmem:[#allocation3 + $0x11b] sm:$0xff]
      %v5306 = vld [vmem:[#allocation3 + $0x123] sm:$0xff]
      %v5307 = vld [vmem:[#allocation3 + $0x12b] sm:$0xff]
      %s5308 = scalar_lea.vmem %s6, 2
      %v5309 = vld [vmem:[%s5308] sm:$0x1]
      %v5311 = vlaneseq
      %v5312 = vshrl.u32 %v5311, 7
      %v5313 = vsub.s32 0, %v5312
      %v5314 = vrot.slane %v5309, %v5313
      %v5316 = vmul.f32 %v5272, %v5314
      %v5317 = vmul.f32 %v5273, %v5314
      %v5318 = vmul.f32 %v5274, %v5314
      %v5319 = vmul.f32 %v5275, %v5314
      %v5320 = vmul.f32 %v5276, %v5314
      %v5321 = vmul.f32 %v5277, %v5314
      %v5322 = vmul.f32 %v5278, %v5314
      %v5323 = vmul.f32 %v5279, %v5314
      %v5324 = vmul.f32 %v5280, %v5314
      %v5325 = vmul.f32 %v5281, %v5314
      %v5326 = vmul.f32 %v5282, %v5314
      %v5327 = vmul.f32 %v5283, %v5314
      %v5328 = vmul.f32 %v5284, %v5314
      %v5329 = vmul.f32 %v5285, %v5314
      %v5330 = vmul.f32 %v5286, %v5314
      %v5331 = vmul.f32 %v5287, %v5314
      %v5332 = vmul.f32 %v5288, %v5314
      %v5333 = vmul.f32 %v5289, %v5314
      %v5334 = vmul.f32 %v5290, %v5314
      %v5335 = vmul.f32 %v5291, %v5314
      %v5336 = vmul.f32 %v5292, %v5314
      %v5337 = vmul.f32 %v5293, %v5314
      %v5338 = vmul.f32 %v5294, %v5314
      %v5339 = vmul.f32 %v5295, %v5314
      %v5340 = vmul.f32 %v5296, %v5314
      %v5341 = vmul.f32 %v5297, %v5314
      %v5342 = vmul.f32 %v5298, %v5314
      %v5343 = vmul.f32 %v5299, %v5314
      %v5344 = vmul.f32 %v5300, %v5314
      %v5345 = vmul.f32 %v5301, %v5314
      %v5346 = vmul.f32 %v5302, %v5314
      %v5347 = vmul.f32 %v5303, %v5314
      %v5348 = vmul.f32 %v5304, %v5314
      %v5349 = vmul.f32 %v5305, %v5314
      %v5350 = vmul.f32 %v5306, %v5314
      %v5351 = vmul.f32 %v5307, %v5314
      %v5352 = vadd.f32 %v5236, %v5316
      %v5353 = vadd.f32 %v5237, %v5317
      %v5354 = vadd.f32 %v5238, %v5318
      %v5355 = vadd.f32 %v5239, %v5319
      %v5356 = vadd.f32 %v5240, %v5320
      %v5357 = vadd.f32 %v5241, %v5321
      %v5358 = vadd.f32 %v5242, %v5322
      %v5359 = vadd.f32 %v5243, %v5323
      %v5360 = vadd.f32 %v5244, %v5324
      %v5361 = vadd.f32 %v5245, %v5325
      %v5362 = vadd.f32 %v5246, %v5326
      %v5363 = vadd.f32 %v5247, %v5327
      %v5364 = vadd.f32 %v5248, %v5328
      %v5365 = vadd.f32 %v5249, %v5329
      %v5366 = vadd.f32 %v5250, %v5330
      %v5367 = vadd.f32 %v5251, %v5331
      %v5368 = vadd.f32 %v5252, %v5332
      %v5369 = vadd.f32 %v5253, %v5333
      %v5370 = vadd.f32 %v5254, %v5334
      %v5371 = vadd.f32 %v5255, %v5335
      %v5372 = vadd.f32 %v5256, %v5336
      %v5373 = vadd.f32 %v5257, %v5337
      %v5374 = vadd.f32 %v5258, %v5338
      %v5375 = vadd.f32 %v5259, %v5339
      %v5376 = vadd.f32 %v5260, %v5340
      %v5377 = vadd.f32 %v5261, %v5341
      %v5378 = vadd.f32 %v5262, %v5342
      %v5379 = vadd.f32 %v5263, %v5343
      %v5380 = vadd.f32 %v5264, %v5344
      %v5381 = vadd.f32 %v5265, %v5345
      %v5382 = vadd.f32 %v5266, %v5346
      %v5383 = vadd.f32 %v5267, %v5347
      %v5384 = vadd.f32 %v5268, %v5348
      %v5385 = vadd.f32 %v5269, %v5349
      %v5386 = vadd.f32 %v5270, %v5350
      %v5387 = vadd.f32 %v5271, %v5351
      %v5388 = vld [vmem:[#allocation3 + $0x133] sm:$0xff]
      %v5389 = vld [vmem:[#allocation3 + $0x13b] sm:$0xff]
      %s5390 = scalar_lea.vmem %s6, 3
      %v5391 = vld [vmem:[%s5390] sm:$0x1]
      %v5393 = vlaneseq
      %v5394 = vshrl.u32 %v5393, 7
      %v5395 = vsub.s32 0, %v5394
      %v5396 = vrot.slane %v5391, %v5395
      %v5398 = vmul.f32 %v5274, %v5396
      %v5399 = vmul.f32 %v5275, %v5396
      %v5400 = vmul.f32 %v5276, %v5396
      %v5401 = vmul.f32 %v5277, %v5396
      %v5402 = vmul.f32 %v5278, %v5396
      %v5403 = vmul.f32 %v5279, %v5396
      %v5404 = vmul.f32 %v5280, %v5396
      %v5405 = vmul.f32 %v5281, %v5396
      %v5406 = vmul.f32 %v5282, %v5396
      %v5407 = vmul.f32 %v5283, %v5396
      %v5408 = vmul.f32 %v5284, %v5396
      %v5409 = vmul.f32 %v5285, %v5396
      %v5410 = vmul.f32 %v5286, %v5396
      %v5411 = vmul.f32 %v5287, %v5396
      %v5412 = vmul.f32 %v5288, %v5396
      %v5413 = vmul.f32 %v5289, %v5396
      %v5414 = vmul.f32 %v5290, %v5396
      %v5415 = vmul.f32 %v5291, %v5396
      %v5416 = vmul.f32 %v5292, %v5396
      %v5417 = vmul.f32 %v5293, %v5396
      %v5418 = vmul.f32 %v5294, %v5396
      %v5419 = vmul.f32 %v5295, %v5396
      %v5420 = vmul.f32 %v5296, %v5396
      %v5421 = vmul.f32 %v5297, %v5396
      %v5422 = vmul.f32 %v5298, %v5396
      %v5423 = vmul.f32 %v5299, %v5396
      %v5424 = vmul.f32 %v5300, %v5396
      %v5425 = vmul.f32 %v5301, %v5396
      %v5426 = vmul.f32 %v5302, %v5396
      %v5427 = vmul.f32 %v5303, %v5396
      %v5428 = vmul.f32 %v5304, %v5396
      %v5429 = vmul.f32 %v5305, %v5396
      %v5430 = vmul.f32 %v5306, %v5396
      %v5431 = vmul.f32 %v5307, %v5396
      %v5432 = vmul.f32 %v5388, %v5396
      %v5433 = vmul.f32 %v5389, %v5396
      %v5434 = vadd.f32 %v5352, %v5398
      %v5435 = vadd.f32 %v5353, %v5399
      %v5436 = vadd.f32 %v5354, %v5400
      %v5437 = vadd.f32 %v5355, %v5401
      %v5438 = vadd.f32 %v5356, %v5402
      %v5439 = vadd.f32 %v5357, %v5403
      %v5440 = vadd.f32 %v5358, %v5404
      %v5441 = vadd.f32 %v5359, %v5405
      %v5442 = vadd.f32 %v5360, %v5406
      %v5443 = vadd.f32 %v5361, %v5407
      %v5444 = vadd.f32 %v5362, %v5408
      %v5445 = vadd.f32 %v5363, %v5409
      %v5446 = vadd.f32 %v5364, %v5410
      %v5447 = vadd.f32 %v5365, %v5411
      %v5448 = vadd.f32 %v5366, %v5412
      %v5449 = vadd.f32 %v5367, %v5413
      %v5450 = vadd.f32 %v5368, %v5414
      %v5451 = vadd.f32 %v5369, %v5415
      %v5452 = vadd.f32 %v5370, %v5416
      %v5453 = vadd.f32 %v5371, %v5417
      %v5454 = vadd.f32 %v5372, %v5418
      %v5455 = vadd.f32 %v5373, %v5419
      %v5456 = vadd.f32 %v5374, %v5420
      %v5457 = vadd.f32 %v5375, %v5421
      %v5458 = vadd.f32 %v5376, %v5422
      %v5459 = vadd.f32 %v5377, %v5423
      %v5460 = vadd.f32 %v5378, %v5424
      %v5461 = vadd.f32 %v5379, %v5425
      %v5462 = vadd.f32 %v5380, %v5426
      %v5463 = vadd.f32 %v5381, %v5427
      %v5464 = vadd.f32 %v5382, %v5428
      %v5465 = vadd.f32 %v5383, %v5429
      %v5466 = vadd.f32 %v5384, %v5430
      %v5467 = vadd.f32 %v5385, %v5431
      %v5468 = vadd.f32 %v5386, %v5432
      %v5469 = vadd.f32 %v5387, %v5433
      %v5470 = vld [vmem:[#allocation3 + $0x24] sm:$0xff]
      %v5471 = vld [vmem:[#allocation3 + $0x2c] sm:$0xff]
      %v5472 = vld [vmem:[#allocation3 + $0x34] sm:$0xff]
      %v5473 = vld [vmem:[#allocation3 + $0x3c] sm:$0xff]
      %v5474 = vld [vmem:[#allocation3 + $0x44] sm:$0xff]
      %v5475 = vld [vmem:[#allocation3 + $0x4c] sm:$0xff]
      %v5476 = vld [vmem:[#allocation3 + $0x54] sm:$0xff]
      %v5477 = vld [vmem:[#allocation3 + $0x5c] sm:$0xff]
      %v5478 = vld [vmem:[#allocation3 + $0x64] sm:$0xff]
      %v5479 = vld [vmem:[#allocation3 + $0x6c] sm:$0xff]
      %v5480 = vld [vmem:[#allocation3 + $0x74] sm:$0xff]
      %v5481 = vld [vmem:[#allocation3 + $0x7c] sm:$0xff]
      %v5482 = vld [vmem:[#allocation3 + $0x84] sm:$0xff]
      %v5483 = vld [vmem:[#allocation3 + $0x8c] sm:$0xff]
      %v5484 = vld [vmem:[#allocation3 + $0x94] sm:$0xff]
      %v5485 = vld [vmem:[#allocation3 + $0x9c] sm:$0xff]
      %v5486 = vld [vmem:[#allocation3 + $0xa4] sm:$0xff]
      %v5487 = vld [vmem:[#allocation3 + $0xac] sm:$0xff]
      %v5488 = vld [vmem:[#allocation3 + $0xb4] sm:$0xff]
      %v5489 = vld [vmem:[#allocation3 + $0xbc] sm:$0xff]
      %v5490 = vld [vmem:[#allocation3 + $0xc4] sm:$0xff]
      %v5491 = vld [vmem:[#allocation3 + $0xcc] sm:$0xff]
      %v5492 = vld [vmem:[#allocation3 + $0xd4] sm:$0xff]
      %v5493 = vld [vmem:[#allocation3 + $0xdc] sm:$0xff]
      %v5494 = vld [vmem:[#allocation3 + $0xe4] sm:$0xff]
      %v5495 = vld [vmem:[#allocation3 + $0xec] sm:$0xff]
      %v5496 = vld [vmem:[#allocation3 + $0xf4] sm:$0xff]
      %v5497 = vld [vmem:[#allocation3 + $0xfc] sm:$0xff]
      %v5498 = vld [vmem:[#allocation3 + $0x104] sm:$0xff]
      %v5499 = vld [vmem:[#allocation3 + $0x10c] sm:$0xff]
      %v5500 = vld [vmem:[#allocation3 + $0x114] sm:$0xff]
      %v5501 = vld [vmem:[#allocation3 + $0x11c] sm:$0xff]
      %v5502 = vld [vmem:[#allocation3 + $0x124] sm:$0xff]
      %v5503 = vld [vmem:[#allocation3 + $0x12c] sm:$0xff]
      %v5504 = vld [vmem:[#allocation3 + $0x134] sm:$0xff]
      %v5505 = vld [vmem:[#allocation3 + $0x13c] sm:$0xff]
      %s5506 = scalar_lea.vmem %s6, 4
      %v5507 = vld [vmem:[%s5506] sm:$0x1]
      %v5509 = vlaneseq
      %v5510 = vshrl.u32 %v5509, 7
      %v5511 = vsub.s32 0, %v5510
      %v5512 = vrot.slane %v5507, %v5511
      %v5514 = vmul.f32 %v5470, %v5512
      %v5515 = vmul.f32 %v5471, %v5512
      %v5516 = vmul.f32 %v5472, %v5512
      %v5517 = vmul.f32 %v5473, %v5512
      %v5518 = vmul.f32 %v5474, %v5512
      %v5519 = vmul.f32 %v5475, %v5512
      %v5520 = vmul.f32 %v5476, %v5512
      %v5521 = vmul.f32 %v5477, %v5512
      %v5522 = vmul.f32 %v5478, %v5512
      %v5523 = vmul.f32 %v5479, %v5512
      %v5524 = vmul.f32 %v5480, %v5512
      %v5525 = vmul.f32 %v5481, %v5512
      %v5526 = vmul.f32 %v5482, %v5512
      %v5527 = vmul.f32 %v5483, %v5512
      %v5528 = vmul.f32 %v5484, %v5512
      %v5529 = vmul.f32 %v5485, %v5512
      %v5530 = vmul.f32 %v5486, %v5512
      %v5531 = vmul.f32 %v5487, %v5512
      %v5532 = vmul.f32 %v5488, %v5512
      %v5533 = vmul.f32 %v5489, %v5512
      %v5534 = vmul.f32 %v5490, %v5512
      %v5535 = vmul.f32 %v5491, %v5512
      %v5536 = vmul.f32 %v5492, %v5512
      %v5537 = vmul.f32 %v5493, %v5512
      %v5538 = vmul.f32 %v5494, %v5512
      %v5539 = vmul.f32 %v5495, %v5512
      %v5540 = vmul.f32 %v5496, %v5512
      %v5541 = vmul.f32 %v5497, %v5512
      %v5542 = vmul.f32 %v5498, %v5512
      %v5543 = vmul.f32 %v5499, %v5512
      %v5544 = vmul.f32 %v5500, %v5512
      %v5545 = vmul.f32 %v5501, %v5512
      %v5546 = vmul.f32 %v5502, %v5512
      %v5547 = vmul.f32 %v5503, %v5512
      %v5548 = vmul.f32 %v5504, %v5512
      %v5549 = vmul.f32 %v5505, %v5512
      %v5550 = vadd.f32 %v5434, %v5514
      %v5551 = vadd.f32 %v5435, %v5515
      %v5552 = vadd.f32 %v5436, %v5516
      %v5553 = vadd.f32 %v5437, %v5517
      %v5554 = vadd.f32 %v5438, %v5518
      %v5555 = vadd.f32 %v5439, %v5519
      %v5556 = vadd.f32 %v5440, %v5520
      %v5557 = vadd.f32 %v5441, %v5521
      %v5558 = vadd.f32 %v5442, %v5522
      %v5559 = vadd.f32 %v5443, %v5523
      %v5560 = vadd.f32 %v5444, %v5524
      %v5561 = vadd.f32 %v5445, %v5525
      %v5562 = vadd.f32 %v5446, %v5526
      %v5563 = vadd.f32 %v5447, %v5527
      %v5564 = vadd.f32 %v5448, %v5528
      %v5565 = vadd.f32 %v5449, %v5529
      %v5566 = vadd.f32 %v5450, %v5530
      %v5567 = vadd.f32 %v5451, %v5531
      %v5568 = vadd.f32 %v5452, %v5532
      %v5569 = vadd.f32 %v5453, %v5533
      %v5570 = vadd.f32 %v5454, %v5534
      %v5571 = vadd.f32 %v5455, %v5535
      %v5572 = vadd.f32 %v5456, %v5536
      %v5573 = vadd.f32 %v5457, %v5537
      %v5574 = vadd.f32 %v5458, %v5538
      %v5575 = vadd.f32 %v5459, %v5539
      %v5576 = vadd.f32 %v5460, %v5540
      %v5577 = vadd.f32 %v5461, %v5541
      %v5578 = vadd.f32 %v5462, %v5542
      %v5579 = vadd.f32 %v5463, %v5543
      %v5580 = vadd.f32 %v5464, %v5544
      %v5581 = vadd.f32 %v5465, %v5545
      %v5582 = vadd.f32 %v5466, %v5546
      %v5583 = vadd.f32 %v5467, %v5547
      %v5584 = vadd.f32 %v5468, %v5548
      %v5585 = vadd.f32 %v5469, %v5549
      %v5586 = vld [vmem:[#allocation3 + $0x25] sm:$0xff]
      %v5587 = vld [vmem:[#allocation3 + $0x2d] sm:$0xff]
      %v5588 = vld [vmem:[#allocation3 + $0x35] sm:$0xff]
      %v5589 = vld [vmem:[#allocation3 + $0x3d] sm:$0xff]
      %v5590 = vld [vmem:[#allocation3 + $0x45] sm:$0xff]
      %v5591 = vld [vmem:[#allocation3 + $0x4d] sm:$0xff]
      %v5592 = vld [vmem:[#allocation3 + $0x55] sm:$0xff]
      %v5593 = vld [vmem:[#allocation3 + $0x5d] sm:$0xff]
      %v5594 = vld [vmem:[#allocation3 + $0x65] sm:$0xff]
      %v5595 = vld [vmem:[#allocation3 + $0x6d] sm:$0xff]
      %v5596 = vld [vmem:[#allocation3 + $0x75] sm:$0xff]
      %v5597 = vld [vmem:[#allocation3 + $0x7d] sm:$0xff]
      %v5598 = vld [vmem:[#allocation3 + $0x85] sm:$0xff]
      %v5599 = vld [vmem:[#allocation3 + $0x8d] sm:$0xff]
      %v5600 = vld [vmem:[#allocation3 + $0x95] sm:$0xff]
      %v5601 = vld [vmem:[#allocation3 + $0x9d] sm:$0xff]
      %v5602 = vld [vmem:[#allocation3 + $0xa5] sm:$0xff]
      %v5603 = vld [vmem:[#allocation3 + $0xad] sm:$0xff]
      %v5604 = vld [vmem:[#allocation3 + $0xb5] sm:$0xff]
      %v5605 = vld [vmem:[#allocation3 + $0xbd] sm:$0xff]
      %v5606 = vld [vmem:[#allocation3 + $0xc5] sm:$0xff]
      %v5607 = vld [vmem:[#allocation3 + $0xcd] sm:$0xff]
      %v5608 = vld [vmem:[#allocation3 + $0xd5] sm:$0xff]
      %v5609 = vld [vmem:[#allocation3 + $0xdd] sm:$0xff]
      %v5610 = vld [vmem:[#allocation3 + $0xe5] sm:$0xff]
      %v5611 = vld [vmem:[#allocation3 + $0xed] sm:$0xff]
      %v5612 = vld [vmem:[#allocation3 + $0xf5] sm:$0xff]
      %v5613 = vld [vmem:[#allocation3 + $0xfd] sm:$0xff]
      %v5614 = vld [vmem:[#allocation3 + $0x105] sm:$0xff]
      %v5615 = vld [vmem:[#allocation3 + $0x10d] sm:$0xff]
      %v5616 = vld [vmem:[#allocation3 + $0x115] sm:$0xff]
      %v5617 = vld [vmem:[#allocation3 + $0x11d] sm:$0xff]
      %v5618 = vld [vmem:[#allocation3 + $0x125] sm:$0xff]
      %v5619 = vld [vmem:[#allocation3 + $0x12d] sm:$0xff]
      %v5620 = vld [vmem:[#allocation3 + $0x135] sm:$0xff]
      %v5621 = vld [vmem:[#allocation3 + $0x13d] sm:$0xff]
      %s5622 = scalar_lea.vmem %s6, 5
      %v5623 = vld [vmem:[%s5622] sm:$0x1]
      %v5625 = vlaneseq
      %v5626 = vshrl.u32 %v5625, 7
      %v5627 = vsub.s32 0, %v5626
      %v5628 = vrot.slane %v5623, %v5627
      %v5630 = vmul.f32 %v5586, %v5628
      %v5631 = vmul.f32 %v5587, %v5628
      %v5632 = vmul.f32 %v5588, %v5628
      %v5633 = vmul.f32 %v5589, %v5628
      %v5634 = vmul.f32 %v5590, %v5628
      %v5635 = vmul.f32 %v5591, %v5628
      %v5636 = vmul.f32 %v5592, %v5628
      %v5637 = vmul.f32 %v5593, %v5628
      %v5638 = vmul.f32 %v5594, %v5628
      %v5639 = vmul.f32 %v5595, %v5628
      %v5640 = vmul.f32 %v5596, %v5628
      %v5641 = vmul.f32 %v5597, %v5628
      %v5642 = vmul.f32 %v5598, %v5628
      %v5643 = vmul.f32 %v5599, %v5628
      %v5644 = vmul.f32 %v5600, %v5628
      %v5645 = vmul.f32 %v5601, %v5628
      %v5646 = vmul.f32 %v5602, %v5628
      %v5647 = vmul.f32 %v5603, %v5628
      %v5648 = vmul.f32 %v5604, %v5628
      %v5649 = vmul.f32 %v5605, %v5628
      %v5650 = vmul.f32 %v5606, %v5628
      %v5651 = vmul.f32 %v5607, %v5628
      %v5652 = vmul.f32 %v5608, %v5628
      %v5653 = vmul.f32 %v5609, %v5628
      %v5654 = vmul.f32 %v5610, %v5628
      %v5655 = vmul.f32 %v5611, %v5628
      %v5656 = vmul.f32 %v5612, %v5628
      %v5657 = vmul.f32 %v5613, %v5628
      %v5658 = vmul.f32 %v5614, %v5628
      %v5659 = vmul.f32 %v5615, %v5628
      %v5660 = vmul.f32 %v5616, %v5628
      %v5661 = vmul.f32 %v5617, %v5628
      %v5662 = vmul.f32 %v5618, %v5628
      %v5663 = vmul.f32 %v5619, %v5628
      %v5664 = vmul.f32 %v5620, %v5628
      %v5665 = vmul.f32 %v5621, %v5628
      %v5666 = vadd.f32 %v5550, %v5630
      %v5667 = vadd.f32 %v5551, %v5631
      %v5668 = vadd.f32 %v5552, %v5632
      %v5669 = vadd.f32 %v5553, %v5633
      %v5670 = vadd.f32 %v5554, %v5634
      %v5671 = vadd.f32 %v5555, %v5635
      %v5672 = vadd.f32 %v5556, %v5636
      %v5673 = vadd.f32 %v5557, %v5637
      %v5674 = vadd.f32 %v5558, %v5638
      %v5675 = vadd.f32 %v5559, %v5639
      %v5676 = vadd.f32 %v5560, %v5640
      %v5677 = vadd.f32 %v5561, %v5641
      %v5678 = vadd.f32 %v5562, %v5642
      %v5679 = vadd.f32 %v5563, %v5643
      %v5680 = vadd.f32 %v5564, %v5644
      %v5681 = vadd.f32 %v5565, %v5645
      %v5682 = vadd.f32 %v5566, %v5646
      %v5683 = vadd.f32 %v5567, %v5647
      %v5684 = vadd.f32 %v5568, %v5648
      %v5685 = vadd.f32 %v5569, %v5649
      %v5686 = vadd.f32 %v5570, %v5650
      %v5687 = vadd.f32 %v5571, %v5651
      %v5688 = vadd.f32 %v5572, %v5652
      %v5689 = vadd.f32 %v5573, %v5653
      %v5690 = vadd.f32 %v5574, %v5654
      %v5691 = vadd.f32 %v5575, %v5655
      %v5692 = vadd.f32 %v5576, %v5656
      %v5693 = vadd.f32 %v5577, %v5657
      %v5694 = vadd.f32 %v5578, %v5658
      %v5695 = vadd.f32 %v5579, %v5659
      %v5696 = vadd.f32 %v5580, %v5660
      %v5697 = vadd.f32 %v5581, %v5661
      %v5698 = vadd.f32 %v5582, %v5662
      %v5699 = vadd.f32 %v5583, %v5663
      %v5700 = vadd.f32 %v5584, %v5664
      %v5701 = vadd.f32 %v5585, %v5665
      %v5702 = vld [vmem:[#allocation3 + $0x145] sm:$0xff]
      %v5703 = vld [vmem:[#allocation3 + $0x14d] sm:$0xff]
      %s5704 = scalar_lea.vmem %s6, 6
      %v5705 = vld [vmem:[%s5704] sm:$0x1]
      %v5707 = vlaneseq
      %v5708 = vshrl.u32 %v5707, 7
      %v5709 = vsub.s32 0, %v5708
      %v5710 = vrot.slane %v5705, %v5709
      %v5712 = vmul.f32 %v5588, %v5710
      %v5713 = vmul.f32 %v5589, %v5710
      %v5714 = vmul.f32 %v5590, %v5710
      %v5715 = vmul.f32 %v5591, %v5710
      %v5716 = vmul.f32 %v5592, %v5710
      %v5717 = vmul.f32 %v5593, %v5710
      %v5718 = vmul.f32 %v5594, %v5710
      %v5719 = vmul.f32 %v5595, %v5710
      %v5720 = vmul.f32 %v5596, %v5710
      %v5721 = vmul.f32 %v5597, %v5710
      %v5722 = vmul.f32 %v5598, %v5710
      %v5723 = vmul.f32 %v5599, %v5710
      %v5724 = vmul.f32 %v5600, %v5710
      %v5725 = vmul.f32 %v5601, %v5710
      %v5726 = vmul.f32 %v5602, %v5710
      %v5727 = vmul.f32 %v5603, %v5710
      %v5728 = vmul.f32 %v5604, %v5710
      %v5729 = vmul.f32 %v5605, %v5710
      %v5730 = vmul.f32 %v5606, %v5710
      %v5731 = vmul.f32 %v5607, %v5710
      %v5732 = vmul.f32 %v5608, %v5710
      %v5733 = vmul.f32 %v5609, %v5710
      %v5734 = vmul.f32 %v5610, %v5710
      %v5735 = vmul.f32 %v5611, %v5710
      %v5736 = vmul.f32 %v5612, %v5710
      %v5737 = vmul.f32 %v5613, %v5710
      %v5738 = vmul.f32 %v5614, %v5710
      %v5739 = vmul.f32 %v5615, %v5710
      %v5740 = vmul.f32 %v5616, %v5710
      %v5741 = vmul.f32 %v5617, %v5710
      %v5742 = vmul.f32 %v5618, %v5710
      %v5743 = vmul.f32 %v5619, %v5710
      %v5744 = vmul.f32 %v5620, %v5710
      %v5745 = vmul.f32 %v5621, %v5710
      %v5746 = vmul.f32 %v5702, %v5710
      %v5747 = vmul.f32 %v5703, %v5710
      %v5748 = vadd.f32 %v5666, %v5712
      %v5749 = vadd.f32 %v5667, %v5713
      %v5750 = vadd.f32 %v5668, %v5714
      %v5751 = vadd.f32 %v5669, %v5715
      %v5752 = vadd.f32 %v5670, %v5716
      %v5753 = vadd.f32 %v5671, %v5717
      %v5754 = vadd.f32 %v5672, %v5718
      %v5755 = vadd.f32 %v5673, %v5719
      %v5756 = vadd.f32 %v5674, %v5720
      %v5757 = vadd.f32 %v5675, %v5721
      %v5758 = vadd.f32 %v5676, %v5722
      %v5759 = vadd.f32 %v5677, %v5723
      %v5760 = vadd.f32 %v5678, %v5724
      %v5761 = vadd.f32 %v5679, %v5725
      %v5762 = vadd.f32 %v5680, %v5726
      %v5763 = vadd.f32 %v5681, %v5727
      %v5764 = vadd.f32 %v5682, %v5728
      %v5765 = vadd.f32 %v5683, %v5729
      %v5766 = vadd.f32 %v5684, %v5730
      %v5767 = vadd.f32 %v5685, %v5731
      %v5768 = vadd.f32 %v5686, %v5732
      %v5769 = vadd.f32 %v5687, %v5733
      %v5770 = vadd.f32 %v5688, %v5734
      %v5771 = vadd.f32 %v5689, %v5735
      %v5772 = vadd.f32 %v5690, %v5736
      %v5773 = vadd.f32 %v5691, %v5737
      %v5774 = vadd.f32 %v5692, %v5738
      %v5775 = vadd.f32 %v5693, %v5739
      %v5776 = vadd.f32 %v5694, %v5740
      %v5777 = vadd.f32 %v5695, %v5741
      %v5778 = vadd.f32 %v5696, %v5742
      %v5779 = vadd.f32 %v5697, %v5743
      %v5780 = vadd.f32 %v5698, %v5744
      %v5781 = vadd.f32 %v5699, %v5745
      %v5782 = vadd.f32 %v5700, %v5746
      %v5783 = vadd.f32 %v5701, %v5747
      %v5784 = vld [vmem:[#allocation3 + $0x36] sm:$0xff]
      %v5785 = vld [vmem:[#allocation3 + $0x3e] sm:$0xff]
      %v5786 = vld [vmem:[#allocation3 + $0x46] sm:$0xff]
      %v5787 = vld [vmem:[#allocation3 + $0x4e] sm:$0xff]
      %v5788 = vld [vmem:[#allocation3 + $0x56] sm:$0xff]
      %v5789 = vld [vmem:[#allocation3 + $0x5e] sm:$0xff]
      %v5790 = vld [vmem:[#allocation3 + $0x66] sm:$0xff]
      %v5791 = vld [vmem:[#allocation3 + $0x6e] sm:$0xff]
      %v5792 = vld [vmem:[#allocation3 + $0x76] sm:$0xff]
      %v5793 = vld [vmem:[#allocation3 + $0x7e] sm:$0xff]
      %v5794 = vld [vmem:[#allocation3 + $0x86] sm:$0xff]
      %v5795 = vld [vmem:[#allocation3 + $0x8e] sm:$0xff]
      %v5796 = vld [vmem:[#allocation3 + $0x96] sm:$0xff]
      %v5797 = vld [vmem:[#allocation3 + $0x9e] sm:$0xff]
      %v5798 = vld [vmem:[#allocation3 + $0xa6] sm:$0xff]
      %v5799 = vld [vmem:[#allocation3 + $0xae] sm:$0xff]
      %v5800 = vld [vmem:[#allocation3 + $0xb6] sm:$0xff]
      %v5801 = vld [vmem:[#allocation3 + $0xbe] sm:$0xff]
      %v5802 = vld [vmem:[#allocation3 + $0xc6] sm:$0xff]
      %v5803 = vld [vmem:[#allocation3 + $0xce] sm:$0xff]
      %v5804 = vld [vmem:[#allocation3 + $0xd6] sm:$0xff]
      %v5805 = vld [vmem:[#allocation3 + $0xde] sm:$0xff]
      %v5806 = vld [vmem:[#allocation3 + $0xe6] sm:$0xff]
      %v5807 = vld [vmem:[#allocation3 + $0xee] sm:$0xff]
      %v5808 = vld [vmem:[#allocation3 + $0xf6] sm:$0xff]
      %v5809 = vld [vmem:[#allocation3 + $0xfe] sm:$0xff]
      %v5810 = vld [vmem:[#allocation3 + $0x106] sm:$0xff]
      %v5811 = vld [vmem:[#allocation3 + $0x10e] sm:$0xff]
      %v5812 = vld [vmem:[#allocation3 + $0x116] sm:$0xff]
      %v5813 = vld [vmem:[#allocation3 + $0x11e] sm:$0xff]
      %v5814 = vld [vmem:[#allocation3 + $0x126] sm:$0xff]
      %v5815 = vld [vmem:[#allocation3 + $0x12e] sm:$0xff]
      %v5816 = vld [vmem:[#allocation3 + $0x136] sm:$0xff]
      %v5817 = vld [vmem:[#allocation3 + $0x13e] sm:$0xff]
      %v5818 = vld [vmem:[#allocation3 + $0x146] sm:$0xff]
      %v5819 = vld [vmem:[#allocation3 + $0x14e] sm:$0xff]
      %s5820 = scalar_lea.vmem %s6, 7
      %v5821 = vld [vmem:[%s5820] sm:$0x1]
      %v5823 = vlaneseq
      %v5824 = vshrl.u32 %v5823, 7
      %v5825 = vsub.s32 0, %v5824
      %v5826 = vrot.slane %v5821, %v5825
      %v5828 = vmul.f32 %v5784, %v5826
      %v5829 = vmul.f32 %v5785, %v5826
      %v5830 = vmul.f32 %v5786, %v5826
      %v5831 = vmul.f32 %v5787, %v5826
      %v5832 = vmul.f32 %v5788, %v5826
      %v5833 = vmul.f32 %v5789, %v5826
      %v5834 = vmul.f32 %v5790, %v5826
      %v5835 = vmul.f32 %v5791, %v5826
      %v5836 = vmul.f32 %v5792, %v5826
      %v5837 = vmul.f32 %v5793, %v5826
      %v5838 = vmul.f32 %v5794, %v5826
      %v5839 = vmul.f32 %v5795, %v5826
      %v5840 = vmul.f32 %v5796, %v5826
      %v5841 = vmul.f32 %v5797, %v5826
      %v5842 = vmul.f32 %v5798, %v5826
      %v5843 = vmul.f32 %v5799, %v5826
      %v5844 = vmul.f32 %v5800, %v5826
      %v5845 = vmul.f32 %v5801, %v5826
      %v5846 = vmul.f32 %v5802, %v5826
      %v5847 = vmul.f32 %v5803, %v5826
      %v5848 = vmul.f32 %v5804, %v5826
      %v5849 = vmul.f32 %v5805, %v5826
      %v5850 = vmul.f32 %v5806, %v5826
      %v5851 = vmul.f32 %v5807, %v5826
      %v5852 = vmul.f32 %v5808, %v5826
      %v5853 = vmul.f32 %v5809, %v5826
      %v5854 = vmul.f32 %v5810, %v5826
      %v5855 = vmul.f32 %v5811, %v5826
      %v5856 = vmul.f32 %v5812, %v5826
      %v5857 = vmul.f32 %v5813, %v5826
      %v5858 = vmul.f32 %v5814, %v5826
      %v5859 = vmul.f32 %v5815, %v5826
      %v5860 = vmul.f32 %v5816, %v5826
      %v5861 = vmul.f32 %v5817, %v5826
      %v5862 = vmul.f32 %v5818, %v5826
      %v5863 = vmul.f32 %v5819, %v5826
      %v5864 = vadd.f32 %v5748, %v5828
      %v5865 = vadd.f32 %v5749, %v5829
      %v5866 = vadd.f32 %v5750, %v5830
      %v5867 = vadd.f32 %v5751, %v5831
      %v5868 = vadd.f32 %v5752, %v5832
      %v5869 = vadd.f32 %v5753, %v5833
      %v5870 = vadd.f32 %v5754, %v5834
      %v5871 = vadd.f32 %v5755, %v5835
      %v5872 = vadd.f32 %v5756, %v5836
      %v5873 = vadd.f32 %v5757, %v5837
      %v5874 = vadd.f32 %v5758, %v5838
      %v5875 = vadd.f32 %v5759, %v5839
      %v5876 = vadd.f32 %v5760, %v5840
      %v5877 = vadd.f32 %v5761, %v5841
      %v5878 = vadd.f32 %v5762, %v5842
      %v5879 = vadd.f32 %v5763, %v5843
      %v5880 = vadd.f32 %v5764, %v5844
      %v5881 = vadd.f32 %v5765, %v5845
      %v5882 = vadd.f32 %v5766, %v5846
      %v5883 = vadd.f32 %v5767, %v5847
      %v5884 = vadd.f32 %v5768, %v5848
      %v5885 = vadd.f32 %v5769, %v5849
      %v5886 = vadd.f32 %v5770, %v5850
      %v5887 = vadd.f32 %v5771, %v5851
      %v5888 = vadd.f32 %v5772, %v5852
      %v5889 = vadd.f32 %v5773, %v5853
      %v5890 = vadd.f32 %v5774, %v5854
      %v5891 = vadd.f32 %v5775, %v5855
      %v5892 = vadd.f32 %v5776, %v5856
      %v5893 = vadd.f32 %v5777, %v5857
      %v5894 = vadd.f32 %v5778, %v5858
      %v5895 = vadd.f32 %v5779, %v5859
      %v5896 = vadd.f32 %v5780, %v5860
      %v5897 = vadd.f32 %v5781, %v5861
      %v5898 = vadd.f32 %v5782, %v5862
      %v5899 = vadd.f32 %v5783, %v5863
      %v5900 = vld [vmem:[#allocation3 + $0x37] sm:$0xff]
      %v5901 = vld [vmem:[#allocation3 + $0x3f] sm:$0xff]
      %v5902 = vld [vmem:[#allocation3 + $0x47] sm:$0xff]
      %v5903 = vld [vmem:[#allocation3 + $0x4f] sm:$0xff]
      %v5904 = vld [vmem:[#allocation3 + $0x57] sm:$0xff]
      %v5905 = vld [vmem:[#allocation3 + $0x5f] sm:$0xff]
      %v5906 = vld [vmem:[#allocation3 + $0x67] sm:$0xff]
      %v5907 = vld [vmem:[#allocation3 + $0x6f] sm:$0xff]
      %v5908 = vld [vmem:[#allocation3 + $0x77] sm:$0xff]
      %v5909 = vld [vmem:[#allocation3 + $0x7f] sm:$0xff]
      %v5910 = vld [vmem:[#allocation3 + $0x87] sm:$0xff]
      %v5911 = vld [vmem:[#allocation3 + $0x8f] sm:$0xff]
      %v5912 = vld [vmem:[#allocation3 + $0x97] sm:$0xff]
      %v5913 = vld [vmem:[#allocation3 + $0x9f] sm:$0xff]
      %v5914 = vld [vmem:[#allocation3 + $0xa7] sm:$0xff]
      %v5915 = vld [vmem:[#allocation3 + $0xaf] sm:$0xff]
      %v5916 = vld [vmem:[#allocation3 + $0xb7] sm:$0xff]
      %v5917 = vld [vmem:[#allocation3 + $0xbf] sm:$0xff]
      %v5918 = vld [vmem:[#allocation3 + $0xc7] sm:$0xff]
      %v5919 = vld [vmem:[#allocation3 + $0xcf] sm:$0xff]
      %v5920 = vld [vmem:[#allocation3 + $0xd7] sm:$0xff]
      %v5921 = vld [vmem:[#allocation3 + $0xdf] sm:$0xff]
      %v5922 = vld [vmem:[#allocation3 + $0xe7] sm:$0xff]
      %v5923 = vld [vmem:[#allocation3 + $0xef] sm:$0xff]
      %v5924 = vld [vmem:[#allocation3 + $0xf7] sm:$0xff]
      %v5925 = vld [vmem:[#allocation3 + $0xff] sm:$0xff]
      %v5926 = vld [vmem:[#allocation3 + $0x107] sm:$0xff]
      %v5927 = vld [vmem:[#allocation3 + $0x10f] sm:$0xff]
      %v5928 = vld [vmem:[#allocation3 + $0x117] sm:$0xff]
      %v5929 = vld [vmem:[#allocation3 + $0x11f] sm:$0xff]
      %v5930 = vld [vmem:[#allocation3 + $0x127] sm:$0xff]
      %v5931 = vld [vmem:[#allocation3 + $0x12f] sm:$0xff]
      %v5932 = vld [vmem:[#allocation3 + $0x137] sm:$0xff]
      %v5933 = vld [vmem:[#allocation3 + $0x13f] sm:$0xff]
      %v5934 = vld [vmem:[#allocation3 + $0x147] sm:$0xff]
      %v5935 = vld [vmem:[#allocation3 + $0x14f] sm:$0xff]
      %s5936 = scalar_lea.vmem %s6, 8
      %v5937 = vld [vmem:[%s5936] sm:$0x1]
      %v5939 = vlaneseq
      %v5940 = vshrl.u32 %v5939, 7
      %v5941 = vsub.s32 0, %v5940
      %v5942 = vrot.slane %v5937, %v5941
      %v5944 = vmul.f32 %v5900, %v5942
      %v5945 = vmul.f32 %v5901, %v5942
      %v5946 = vmul.f32 %v5902, %v5942
      %v5947 = vmul.f32 %v5903, %v5942
      %v5948 = vmul.f32 %v5904, %v5942
      %v5949 = vmul.f32 %v5905, %v5942
      %v5950 = vmul.f32 %v5906, %v5942
      %v5951 = vmul.f32 %v5907, %v5942
      %v5952 = vmul.f32 %v5908, %v5942
      %v5953 = vmul.f32 %v5909, %v5942
      %v5954 = vmul.f32 %v5910, %v5942
      %v5955 = vmul.f32 %v5911, %v5942
      %v5956 = vmul.f32 %v5912, %v5942
      %v5957 = vmul.f32 %v5913, %v5942
      %v5958 = vmul.f32 %v5914, %v5942
      %v5959 = vmul.f32 %v5915, %v5942
      %v5960 = vmul.f32 %v5916, %v5942
      %v5961 = vmul.f32 %v5917, %v5942
      %v5962 = vmul.f32 %v5918, %v5942
      %v5963 = vmul.f32 %v5919, %v5942
      %v5964 = vmul.f32 %v5920, %v5942
      %v5965 = vmul.f32 %v5921, %v5942
      %v5966 = vmul.f32 %v5922, %v5942
      %v5967 = vmul.f32 %v5923, %v5942
      %v5968 = vmul.f32 %v5924, %v5942
      %v5969 = vmul.f32 %v5925, %v5942
      %v5970 = vmul.f32 %v5926, %v5942
      %v5971 = vmul.f32 %v5927, %v5942
      %v5972 = vmul.f32 %v5928, %v5942
      %v5973 = vmul.f32 %v5929, %v5942
      %v5974 = vmul.f32 %v5930, %v5942
      %v5975 = vmul.f32 %v5931, %v5942
      %v5976 = vmul.f32 %v5932, %v5942
      %v5977 = vmul.f32 %v5933, %v5942
      %v5978 = vmul.f32 %v5934, %v5942
      %v5979 = vmul.f32 %v5935, %v5942
      %v5980 = vadd.f32 %v5864, %v5944
      %v5981 = vadd.f32 %v5865, %v5945
      %v5982 = vadd.f32 %v5866, %v5946
      %v5983 = vadd.f32 %v5867, %v5947
      %v5984 = vadd.f32 %v5868, %v5948
      %v5985 = vadd.f32 %v5869, %v5949
      %v5986 = vadd.f32 %v5870, %v5950
      %v5987 = vadd.f32 %v5871, %v5951
      %v5988 = vadd.f32 %v5872, %v5952
      %v5989 = vadd.f32 %v5873, %v5953
      %v5990 = vadd.f32 %v5874, %v5954
      %v5991 = vadd.f32 %v5875, %v5955
      %v5992 = vadd.f32 %v5876, %v5956
      %v5993 = vadd.f32 %v5877, %v5957
      %v5994 = vadd.f32 %v5878, %v5958
      %v5995 = vadd.f32 %v5879, %v5959
      %v5996 = vadd.f32 %v5880, %v5960
      %v5997 = vadd.f32 %v5881, %v5961
      %v5998 = vadd.f32 %v5882, %v5962
      %v5999 = vadd.f32 %v5883, %v5963
      %v6000 = vadd.f32 %v5884, %v5964
      %v6001 = vadd.f32 %v5885, %v5965
      %v6002 = vadd.f32 %v5886, %v5966
      %v6003 = vadd.f32 %v5887, %v5967
      %v6004 = vadd.f32 %v5888, %v5968
      %v6005 = vadd.f32 %v5889, %v5969
      %v6006 = vadd.f32 %v5890, %v5970
      %v6007 = vadd.f32 %v5891, %v5971
      %v6008 = vadd.f32 %v5892, %v5972
      %v6009 = vadd.f32 %v5893, %v5973
      %v6010 = vadd.f32 %v5894, %v5974
      %v6011 = vadd.f32 %v5895, %v5975
      %v6012 = vadd.f32 %v5896, %v5976
      %v6013 = vadd.f32 %v5897, %v5977
      %v6014 = vadd.f32 %v5898, %v5978
      %v6015 = vadd.f32 %v5899, %v5979
      %v6016 = vsel %vm308, %v5980, 0.0
      %6017 = vadd.xlane.f32.xlu0 %v6016
      %v6018 = vpop.xlane.xlu0 %6017
      %v6019 = vsel %vm308, %v5981, 0.0
      %6020 = vadd.xlane.f32.xlu0 %v6019
      %v6021 = vpop.xlane.xlu0 %6020
      %v6022 = vsel %vm308, %v5982, 0.0
      %6023 = vadd.xlane.f32.xlu0 %v6022
      %v6024 = vpop.xlane.xlu0 %6023
      %v6025 = vsel %vm308, %v5983, 0.0
      %6026 = vadd.xlane.f32.xlu0 %v6025
      %v6027 = vpop.xlane.xlu0 %6026
      %v6028 = vsel %vm308, %v5984, 0.0
      %6029 = vadd.xlane.f32.xlu0 %v6028
      %v6030 = vpop.xlane.xlu0 %6029
      %v6031 = vsel %vm308, %v5985, 0.0
      %6032 = vadd.xlane.f32.xlu0 %v6031
      %v6033 = vpop.xlane.xlu0 %6032
      %v6034 = vsel %vm308, %v5986, 0.0
      %6035 = vadd.xlane.f32.xlu0 %v6034
      %v6036 = vpop.xlane.xlu0 %6035
      %v6037 = vsel %vm308, %v5987, 0.0
      %6038 = vadd.xlane.f32.xlu0 %v6037
      %v6039 = vpop.xlane.xlu0 %6038
      %v6040 = vsel %vm308, %v5988, 0.0
      %6041 = vadd.xlane.f32.xlu0 %v6040
      %v6042 = vpop.xlane.xlu0 %6041
      %v6043 = vsel %vm308, %v5989, 0.0
      %6044 = vadd.xlane.f32.xlu0 %v6043
      %v6045 = vpop.xlane.xlu0 %6044
      %v6046 = vsel %vm308, %v5990, 0.0
      %6047 = vadd.xlane.f32.xlu0 %v6046
      %v6048 = vpop.xlane.xlu0 %6047
      %v6049 = vsel %vm308, %v5991, 0.0
      %6050 = vadd.xlane.f32.xlu0 %v6049
      %v6051 = vpop.xlane.xlu0 %6050
      %v6052 = vsel %vm308, %v5992, 0.0
      %6053 = vadd.xlane.f32.xlu0 %v6052
      %v6054 = vpop.xlane.xlu0 %6053
      %v6055 = vsel %vm308, %v5993, 0.0
      %6056 = vadd.xlane.f32.xlu0 %v6055
      %v6057 = vpop.xlane.xlu0 %6056
      %v6058 = vsel %vm308, %v5994, 0.0
      %6059 = vadd.xlane.f32.xlu0 %v6058
      %v6060 = vpop.xlane.xlu0 %6059
      %v6061 = vsel %vm308, %v5995, 0.0
      %6062 = vadd.xlane.f32.xlu0 %v6061
      %v6063 = vpop.xlane.xlu0 %6062
      %v6064 = vsel %vm308, %v5996, 0.0
      %6065 = vadd.xlane.f32.xlu0 %v6064
      %v6066 = vpop.xlane.xlu0 %6065
      %v6067 = vsel %vm308, %v5997, 0.0
      %6068 = vadd.xlane.f32.xlu0 %v6067
      %v6069 = vpop.xlane.xlu0 %6068
      %v6070 = vsel %vm308, %v5998, 0.0
      %6071 = vadd.xlane.f32.xlu0 %v6070
      %v6072 = vpop.xlane.xlu0 %6071
      %v6073 = vsel %vm308, %v5999, 0.0
      %6074 = vadd.xlane.f32.xlu0 %v6073
      %v6075 = vpop.xlane.xlu0 %6074
      %v6076 = vsel %vm308, %v6000, 0.0
      %6077 = vadd.xlane.f32.xlu0 %v6076
      %v6078 = vpop.xlane.xlu0 %6077
      %v6079 = vsel %vm308, %v6001, 0.0
      %6080 = vadd.xlane.f32.xlu0 %v6079
      %v6081 = vpop.xlane.xlu0 %6080
      %v6082 = vsel %vm308, %v6002, 0.0
      %6083 = vadd.xlane.f32.xlu0 %v6082
      %v6084 = vpop.xlane.xlu0 %6083
      %v6085 = vsel %vm308, %v6003, 0.0
      %6086 = vadd.xlane.f32.xlu0 %v6085
      %v6087 = vpop.xlane.xlu0 %6086
      %v6088 = vsel %vm308, %v6004, 0.0
      %6089 = vadd.xlane.f32.xlu0 %v6088
      %v6090 = vpop.xlane.xlu0 %6089
      %v6091 = vsel %vm308, %v6005, 0.0
      %6092 = vadd.xlane.f32.xlu0 %v6091
      %v6093 = vpop.xlane.xlu0 %6092
      %v6094 = vsel %vm308, %v6006, 0.0
      %6095 = vadd.xlane.f32.xlu0 %v6094
      %v6096 = vpop.xlane.xlu0 %6095
      %v6097 = vsel %vm308, %v6007, 0.0
      %6098 = vadd.xlane.f32.xlu0 %v6097
      %v6099 = vpop.xlane.xlu0 %6098
      %v6100 = vsel %vm308, %v6008, 0.0
      %6101 = vadd.xlane.f32.xlu0 %v6100
      %v6102 = vpop.xlane.xlu0 %6101
      %v6103 = vsel %vm308, %v6009, 0.0
      %6104 = vadd.xlane.f32.xlu0 %v6103
      %v6105 = vpop.xlane.xlu0 %6104
      %v6106 = vsel %vm308, %v6010, 0.0
      %6107 = vadd.xlane.f32.xlu0 %v6106
      %v6108 = vpop.xlane.xlu0 %6107
      %v6109 = vsel %vm308, %v6011, 0.0
      %6110 = vadd.xlane.f32.xlu0 %v6109
      %v6111 = vpop.xlane.xlu0 %6110
      %v6112 = vsel %vm308, %v6012, 0.0
      %6113 = vadd.xlane.f32.xlu0 %v6112
      %v6114 = vpop.xlane.xlu0 %6113
      %v6115 = vsel %vm308, %v6013, 0.0
      %6116 = vadd.xlane.f32.xlu0 %v6115
      %v6117 = vpop.xlane.xlu0 %6116
      %v6118 = vsel %vm308, %v6014, 0.0
      %6119 = vadd.xlane.f32.xlu0 %v6118
      %v6120 = vpop.xlane.xlu0 %6119
      %v6121 = vsel %vm308, %v6015, 0.0
      %6122 = vadd.xlane.f32.xlu0 %v6121
      %v6123 = vpop.xlane.xlu0 %6122
      %v6124 = vld [vmem:[#allocation4] sm:$0x1]
      %v6126 = vlaneseq
      %v6127 = vshrl.u32 %v6126, 7
      %v6128 = vsub.s32 0, %v6127
      %v6129 = vrot.slane %v6124, %v6128
      %v6131 = vadd.f32 %v6018, %v6129
      %v6132 = vadd.f32 %v6021, %v6129
      %v6133 = vadd.f32 %v6024, %v6129
      %v6134 = vadd.f32 %v6027, %v6129
      %v6135 = vadd.f32 %v6030, %v6129
      %v6136 = vadd.f32 %v6033, %v6129
      %v6137 = vadd.f32 %v6036, %v6129
      %v6138 = vadd.f32 %v6039, %v6129
      %v6139 = vadd.f32 %v6042, %v6129
      %v6140 = vadd.f32 %v6045, %v6129
      %v6141 = vadd.f32 %v6048, %v6129
      %v6142 = vadd.f32 %v6051, %v6129
      %v6143 = vadd.f32 %v6054, %v6129
      %v6144 = vadd.f32 %v6057, %v6129
      %v6145 = vadd.f32 %v6060, %v6129
      %v6146 = vadd.f32 %v6063, %v6129
      %v6147 = vadd.f32 %v6066, %v6129
      %v6148 = vadd.f32 %v6069, %v6129
      %v6149 = vadd.f32 %v6072, %v6129
      %v6150 = vadd.f32 %v6075, %v6129
      %v6151 = vadd.f32 %v6078, %v6129
      %v6152 = vadd.f32 %v6081, %v6129
      %v6153 = vadd.f32 %v6084, %v6129
      %v6154 = vadd.f32 %v6087, %v6129
      %v6155 = vadd.f32 %v6090, %v6129
      %v6156 = vadd.f32 %v6093, %v6129
      %v6157 = vadd.f32 %v6096, %v6129
      %v6158 = vadd.f32 %v6099, %v6129
      %v6159 = vadd.f32 %v6102, %v6129
      %v6160 = vadd.f32 %v6105, %v6129
      %v6161 = vadd.f32 %v6108, %v6129
      %v6162 = vadd.f32 %v6111, %v6129
      %v6163 = vadd.f32 %v6114, %v6129
      %v6164 = vadd.f32 %v6117, %v6129
      %v6165 = vadd.f32 %v6120, %v6129
      %v6166 = vadd.f32 %v6123, %v6129
      %v6167 = vxor.u32 %v6131, 2147483648
      %v6168 = vxor.u32 %v6132, 2147483648
      %v6169 = vxor.u32 %v6133, 2147483648
      %v6170 = vxor.u32 %v6134, 2147483648
      %v6171 = vxor.u32 %v6135, 2147483648
      %v6172 = vxor.u32 %v6136, 2147483648
      %v6173 = vxor.u32 %v6137, 2147483648
      %v6174 = vxor.u32 %v6138, 2147483648
      %v6175 = vxor.u32 %v6139, 2147483648
      %v6176 = vxor.u32 %v6140, 2147483648
      %v6177 = vxor.u32 %v6141, 2147483648
      %v6178 = vxor.u32 %v6142, 2147483648
      %v6179 = vxor.u32 %v6143, 2147483648
      %v6180 = vxor.u32 %v6144, 2147483648
      %v6181 = vxor.u32 %v6145, 2147483648
      %v6182 = vxor.u32 %v6146, 2147483648
      %v6183 = vxor.u32 %v6147, 2147483648
      %v6184 = vxor.u32 %v6148, 2147483648
      %v6185 = vxor.u32 %v6149, 2147483648
      %v6186 = vxor.u32 %v6150, 2147483648
      %v6187 = vxor.u32 %v6151, 2147483648
      %v6188 = vxor.u32 %v6152, 2147483648
      %v6189 = vxor.u32 %v6153, 2147483648
      %v6190 = vxor.u32 %v6154, 2147483648
      %v6191 = vxor.u32 %v6155, 2147483648
      %v6192 = vxor.u32 %v6156, 2147483648
      %v6193 = vxor.u32 %v6157, 2147483648
      %v6194 = vxor.u32 %v6158, 2147483648
      %v6195 = vxor.u32 %v6159, 2147483648
      %v6196 = vxor.u32 %v6160, 2147483648
      %v6197 = vxor.u32 %v6161, 2147483648
      %v6198 = vxor.u32 %v6162, 2147483648
      %v6199 = vxor.u32 %v6163, 2147483648
      %v6200 = vxor.u32 %v6164, 2147483648
      %v6201 = vxor.u32 %v6165, 2147483648
      %v6202 = vxor.u32 %v6166, 2147483648
      %v6203 = vmul.f32 %v6167, 1.442695
      %v6204 = vpow.pop %v6203
      %v6205 = vmul.f32 %v6168, 1.442695
      %v6206 = vpow.pop %v6205
      %v6207 = vmul.f32 %v6169, 1.442695
      %v6208 = vpow.pop %v6207
      %v6209 = vmul.f32 %v6170, 1.442695
      %v6210 = vpow.pop %v6209
      %v6211 = vmul.f32 %v6171, 1.442695
      %v6212 = vpow.pop %v6211
      %v6213 = vmul.f32 %v6172, 1.442695
      %v6214 = vpow.pop %v6213
      %v6215 = vmul.f32 %v6173, 1.442695
      %v6216 = vpow.pop %v6215
      %v6217 = vmul.f32 %v6174, 1.442695
      %v6218 = vpow.pop %v6217
      %v6219 = vmul.f32 %v6175, 1.442695
      %v6220 = vpow.pop %v6219
      %v6221 = vmul.f32 %v6176, 1.442695
      %v6222 = vpow.pop %v6221
      %v6223 = vmul.f32 %v6177, 1.442695
      %v6224 = vpow.pop %v6223
      %v6225 = vmul.f32 %v6178, 1.442695
      %v6226 = vpow.pop %v6225
      %v6227 = vmul.f32 %v6179, 1.442695
      %v6228 = vpow.pop %v6227
      %v6229 = vmul.f32 %v6180, 1.442695
      %v6230 = vpow.pop %v6229
      %v6231 = vmul.f32 %v6181, 1.442695
      %v6232 = vpow.pop %v6231
      %v6233 = vmul.f32 %v6182, 1.442695
      %v6234 = vpow.pop %v6233
      %v6235 = vmul.f32 %v6183, 1.442695
      %v6236 = vpow.pop %v6235
      %v6237 = vmul.f32 %v6184, 1.442695
      %v6238 = vpow.pop %v6237
      %v6239 = vmul.f32 %v6185, 1.442695
      %v6240 = vpow.pop %v6239
      %v6241 = vmul.f32 %v6186, 1.442695
      %v6242 = vpow.pop %v6241
      %v6243 = vmul.f32 %v6187, 1.442695
      %v6244 = vpow.pop %v6243
      %v6245 = vmul.f32 %v6188, 1.442695
      %v6246 = vpow.pop %v6245
      %v6247 = vmul.f32 %v6189, 1.442695
      %v6248 = vpow.pop %v6247
      %v6249 = vmul.f32 %v6190, 1.442695
      %v6250 = vpow.pop %v6249
      %v6251 = vmul.f32 %v6191, 1.442695
      %v6252 = vpow.pop %v6251
      %v6253 = vmul.f32 %v6192, 1.442695
      %v6254 = vpow.pop %v6253
      %v6255 = vmul.f32 %v6193, 1.442695
      %v6256 = vpow.pop %v6255
      %v6257 = vmul.f32 %v6194, 1.442695
      %v6258 = vpow.pop %v6257
      %v6259 = vmul.f32 %v6195, 1.442695
      %v6260 = vpow.pop %v6259
      %v6261 = vmul.f32 %v6196, 1.442695
      %v6262 = vpow.pop %v6261
      %v6263 = vmul.f32 %v6197, 1.442695
      %v6264 = vpow.pop %v6263
      %v6265 = vmul.f32 %v6198, 1.442695
      %v6266 = vpow.pop %v6265
      %v6267 = vmul.f32 %v6199, 1.442695
      %v6268 = vpow.pop %v6267
      %v6269 = vmul.f32 %v6200, 1.442695
      %v6270 = vpow.pop %v6269
      %v6271 = vmul.f32 %v6201, 1.442695
      %v6272 = vpow.pop %v6271
      %v6273 = vmul.f32 %v6202, 1.442695
      %v6274 = vpow.pop %v6273
      %v6275 = vadd.f32 %v6204, 1.0
      %v6276 = vadd.f32 %v6206, 1.0
      %v6277 = vadd.f32 %v6208, 1.0
      %v6278 = vadd.f32 %v6210, 1.0
      %v6279 = vadd.f32 %v6212, 1.0
      %v6280 = vadd.f32 %v6214, 1.0
      %v6281 = vadd.f32 %v6216, 1.0
      %v6282 = vadd.f32 %v6218, 1.0
      %v6283 = vadd.f32 %v6220, 1.0
      %v6284 = vadd.f32 %v6222, 1.0
      %v6285 = vadd.f32 %v6224, 1.0
      %v6286 = vadd.f32 %v6226, 1.0
      %v6287 = vadd.f32 %v6228, 1.0
      %v6288 = vadd.f32 %v6230, 1.0
      %v6289 = vadd.f32 %v6232, 1.0
      %v6290 = vadd.f32 %v6234, 1.0
      %v6291 = vadd.f32 %v6236, 1.0
      %v6292 = vadd.f32 %v6238, 1.0
      %v6293 = vadd.f32 %v6240, 1.0
      %v6294 = vadd.f32 %v6242, 1.0
      %v6295 = vadd.f32 %v6244, 1.0
      %v6296 = vadd.f32 %v6246, 1.0
      %v6297 = vadd.f32 %v6248, 1.0
      %v6298 = vadd.f32 %v6250, 1.0
      %v6299 = vadd.f32 %v6252, 1.0
      %v6300 = vadd.f32 %v6254, 1.0
      %v6301 = vadd.f32 %v6256, 1.0
      %v6302 = vadd.f32 %v6258, 1.0
      %v6303 = vadd.f32 %v6260, 1.0
      %v6304 = vadd.f32 %v6262, 1.0
      %v6305 = vadd.f32 %v6264, 1.0
      %v6306 = vadd.f32 %v6266, 1.0
      %v6307 = vadd.f32 %v6268, 1.0
      %v6308 = vadd.f32 %v6270, 1.0
      %v6309 = vadd.f32 %v6272, 1.0
      %v6310 = vadd.f32 %v6274, 1.0
      %v6311 = vrcp.pop %v6275
      %v6312 = vmul.f32 1.0, %v6311
      %v6313 = vrcp.pop %v6276
      %v6314 = vmul.f32 1.0, %v6313
      %v6315 = vrcp.pop %v6277
      %v6316 = vmul.f32 1.0, %v6315
      %v6317 = vrcp.pop %v6278
      %v6318 = vmul.f32 1.0, %v6317
      %v6319 = vrcp.pop %v6279
      %v6320 = vmul.f32 1.0, %v6319
      %v6321 = vrcp.pop %v6280
      %v6322 = vmul.f32 1.0, %v6321
      %v6323 = vrcp.pop %v6281
      %v6324 = vmul.f32 1.0, %v6323
      %v6325 = vrcp.pop %v6282
      %v6326 = vmul.f32 1.0, %v6325
      %v6327 = vrcp.pop %v6283
      %v6328 = vmul.f32 1.0, %v6327
      %v6329 = vrcp.pop %v6284
      %v6330 = vmul.f32 1.0, %v6329
      %v6331 = vrcp.pop %v6285
      %v6332 = vmul.f32 1.0, %v6331
      %v6333 = vrcp.pop %v6286
      %v6334 = vmul.f32 1.0, %v6333
      %v6335 = vrcp.pop %v6287
      %v6336 = vmul.f32 1.0, %v6335
      %v6337 = vrcp.pop %v6288
      %v6338 = vmul.f32 1.0, %v6337
      %v6339 = vrcp.pop %v6289
      %v6340 = vmul.f32 1.0, %v6339
      %v6341 = vrcp.pop %v6290
      %v6342 = vmul.f32 1.0, %v6341
      %v6343 = vrcp.pop %v6291
      %v6344 = vmul.f32 1.0, %v6343
      %v6345 = vrcp.pop %v6292
      %v6346 = vmul.f32 1.0, %v6345
      %v6347 = vrcp.pop %v6293
      %v6348 = vmul.f32 1.0, %v6347
      %v6349 = vrcp.pop %v6294
      %v6350 = vmul.f32 1.0, %v6349
      %v6351 = vrcp.pop %v6295
      %v6352 = vmul.f32 1.0, %v6351
      %v6353 = vrcp.pop %v6296
      %v6354 = vmul.f32 1.0, %v6353
      %v6355 = vrcp.pop %v6297
      %v6356 = vmul.f32 1.0, %v6355
      %v6357 = vrcp.pop %v6298
      %v6358 = vmul.f32 1.0, %v6357
      %v6359 = vrcp.pop %v6299
      %v6360 = vmul.f32 1.0, %v6359
      %v6361 = vrcp.pop %v6300
      %v6362 = vmul.f32 1.0, %v6361
      %v6363 = vrcp.pop %v6301
      %v6364 = vmul.f32 1.0, %v6363
      %v6365 = vrcp.pop %v6302
      %v6366 = vmul.f32 1.0, %v6365
      %v6367 = vrcp.pop %v6303
      %v6368 = vmul.f32 1.0, %v6367
      %v6369 = vrcp.pop %v6304
      %v6370 = vmul.f32 1.0, %v6369
      %v6371 = vrcp.pop %v6305
      %v6372 = vmul.f32 1.0, %v6371
      %v6373 = vrcp.pop %v6306
      %v6374 = vmul.f32 1.0, %v6373
      %v6375 = vrcp.pop %v6307
      %v6376 = vmul.f32 1.0, %v6375
      %v6377 = vrcp.pop %v6308
      %v6378 = vmul.f32 1.0, %v6377
      %v6379 = vrcp.pop %v6309
      %v6380 = vmul.f32 1.0, %v6379
      %v6381 = vrcp.pop %v6310
      %v6382 = vmul.f32 1.0, %v6381
      %vm6383 = vcmask 7168
      %6384 = vst.msk [vmem:[%s307] sm:$0xff] %vm6383, %v6312
      %6385 = vst.msk [vmem:[%s307 + $0x8] sm:$0xff] %vm6383, %v6314
      %6386 = vst.msk [vmem:[%s307 + $0x10] sm:$0xff] %vm6383, %v6316
      %6387 = vst.msk [vmem:[%s307 + $0x18] sm:$0xff] %vm6383, %v6318
      %6388 = vst.msk [vmem:[%s307 + $0x20] sm:$0xff] %vm6383, %v6320
      %6389 = vst.msk [vmem:[%s307 + $0x28] sm:$0xff] %vm6383, %v6322
      %6390 = vst.msk [vmem:[%s307 + $0x30] sm:$0xff] %vm6383, %v6324
      %6391 = vst.msk [vmem:[%s307 + $0x38] sm:$0xff] %vm6383, %v6326
      %6392 = vst.msk [vmem:[%s307 + $0x40] sm:$0xff] %vm6383, %v6328
      %6393 = vst.msk [vmem:[%s307 + $0x48] sm:$0xff] %vm6383, %v6330
      %6394 = vst.msk [vmem:[%s307 + $0x50] sm:$0xff] %vm6383, %v6332
      %6395 = vst.msk [vmem:[%s307 + $0x58] sm:$0xff] %vm6383, %v6334
      %6396 = vst.msk [vmem:[%s307 + $0x60] sm:$0xff] %vm6383, %v6336
      %6397 = vst.msk [vmem:[%s307 + $0x68] sm:$0xff] %vm6383, %v6338
      %6398 = vst.msk [vmem:[%s307 + $0x70] sm:$0xff] %vm6383, %v6340
      %6399 = vst.msk [vmem:[%s307 + $0x78] sm:$0xff] %vm6383, %v6342
      %6400 = vst.msk [vmem:[%s307 + $0x80] sm:$0xff] %vm6383, %v6344
      %6401 = vst.msk [vmem:[%s307 + $0x88] sm:$0xff] %vm6383, %v6346
      %6402 = vst.msk [vmem:[%s307 + $0x90] sm:$0xff] %vm6383, %v6348
      %6403 = vst.msk [vmem:[%s307 + $0x98] sm:$0xff] %vm6383, %v6350
      %6404 = vst.msk [vmem:[%s307 + $0xa0] sm:$0xff] %vm6383, %v6352
      %6405 = vst.msk [vmem:[%s307 + $0xa8] sm:$0xff] %vm6383, %v6354
      %6406 = vst.msk [vmem:[%s307 + $0xb0] sm:$0xff] %vm6383, %v6356
      %6407 = vst.msk [vmem:[%s307 + $0xb8] sm:$0xff] %vm6383, %v6358
      %6408 = vst.msk [vmem:[%s307 + $0xc0] sm:$0xff] %vm6383, %v6360
      %6409 = vst.msk [vmem:[%s307 + $0xc8] sm:$0xff] %vm6383, %v6362
      %6410 = vst.msk [vmem:[%s307 + $0xd0] sm:$0xff] %vm6383, %v6364
      %6411 = vst.msk [vmem:[%s307 + $0xd8] sm:$0xff] %vm6383, %v6366
      %6412 = vst.msk [vmem:[%s307 + $0xe0] sm:$0xff] %vm6383, %v6368
      %6413 = vst.msk [vmem:[%s307 + $0xe8] sm:$0xff] %vm6383, %v6370
      %6414 = vst.msk [vmem:[%s307 + $0xf0] sm:$0xff] %vm6383, %v6372
      %6415 = vst.msk [vmem:[%s307 + $0xf8] sm:$0xff] %vm6383, %v6374
      %6416 = vst.msk [vmem:[%s307 + $0x100] sm:$0xff] %vm6383, %v6376
      %6417 = vst.msk [vmem:[%s307 + $0x108] sm:$0xff] %vm6383, %v6378
      %6418 = vst.msk [vmem:[%s307 + $0x110] sm:$0xff] %vm6383, %v6380
      %6419 = vst.msk [vmem:[%s307 + $0x118] sm:$0xff] %vm6383, %v6382
      %p6420 = scmp.lt.s32.totalorder %s21, 1
      %s6421 = scalar_select %p6420, %s21, 1
      %s6422 = smul.addr %s6421, 36
      %s6423 = smul.addr %s6422, 8
      %s6424 = scalar_lea.vmem %s8, %s6423
      // Predicated region
      $region53: #{tpu_custom_call.1} parent=51 // pred_check
        %p6425 = pneg %p212
      $region54: #{tpu_custom_call.1} parent=51 // pred_check_branch
        %6427 = sbr.rel (%p6425) target = $region56
      $region55: #{tpu_custom_call.1} parent=51 // pred_region
        _
      $region56: #{tpu_custom_call.1} parent=51 // pred_fallthru
        _
    $region52: #{tpu_custom_call.1} parent=5 // pred_fallthru
      _
    %p6428 = scmp.le.s32.totalorder 2, %s16
    // Predicated region
    $region57: #{tpu_custom_call.1} parent=5 // pred_check
      %p6429 = pneg %p6428
    $region58: #{tpu_custom_call.1} parent=5 // pred_check_branch
      %6431 = sbr.rel (%p6429) target = $region60
    $region59: #{tpu_custom_call.1} parent=5 // pred_region
      %s6432 = ssub.s32 %s16, 2
      // Predicated region
      $region61: #{tpu_custom_call.1} parent=59 // pred_check
        %p6433 = pneg %p218
      $region62: #{tpu_custom_call.1} parent=59 // pred_check_branch
        %6435 = sbr.rel (%p6433) target = $region64
      $region63: #{tpu_custom_call.1} parent=59 // pred_region
        %p6436 = scmp.lt.s32.totalorder %s22, 1
        %s6437 = scalar_select %p6436, %s22, 1
        %s6438 = smul.addr %s6437, 36
        %s6439 = smul.addr %s6438, 8
        %s6440 = scalar_lea.vmem %s8, %s6439
      $region64: #{tpu_custom_call.1} parent=59 // pred_fallthru
        _
    $region60: #{tpu_custom_call.1} parent=5 // pred_fallthru
      _
  $region6: #{tpu_custom_call.1} parent=0 // loop_footer
    %s20 = sadd.s32 1, %s16
  $region7: #{tpu_custom_call.1} parent=0 // loop_footer_branch
    %15 = sbr.rel target = $region3
  $region8: #{tpu_custom_call.1} parent=0 // loop_exit
    _

</llo_original>
